<compile_context>
chip_gen: v6e
topology: v6e:2x2x1
jax: 0.10.0
libtpu: 0.0.40
codegen_flags: <defaults>
</compile_context>

<pallas_src>
import math

import jax
import jax.numpy as jnp
from jax import lax
from jax.experimental import pallas as pl
from jax.experimental.pallas import tpu as pltpu


# ------------------------------ Pallas kernels ------------------------------ #

def _conv_relu_pool_kernel(p_ref, w_ref, b_ref, o_ref):
    """One conv layer (im2col matmul) + bias + ReLU + 2x2/2 max-pool (floor).

    p_ref : (1, 4, M, K)  phase-ordered patches of this tower (phase = position
                          inside the 2x2 pooling window), f32
    w_ref : (1, K, C)     conv weights in im2col layout, bf16
    b_ref : (1, 1, C)     conv bias, f32
    o_ref : (1, M, C)     pooled activations; rows ordered (b, i, j), channels last
    """
    w = w_ref[0]
    m = None
    for ph in range(p_ref.shape[1]):
        y = jnp.dot(p_ref[0, ph].astype(jnp.bfloat16), w,
                    preferred_element_type=jnp.float32)
        m = y if m is None else jnp.maximum(m, y)
    # max-pool commutes with the per-channel bias add and with ReLU.
    o_ref[0] = jnp.maximum(m + b_ref[0], 0.0)


def _fused_fc_head_kernel(feat_ref, w1, b1, w2, b2, w3, b3, w4, b4,
                          hw1, hb1, hw2, hb2, hw3, hb3, hw4, hb4,
                          out_ref, acc_ref):
    """Per-tower FC stack + block-wise head_fc1 accumulation; head epilogue on
    the last tower grid step."""
    t = pl.program_id(0)

    def dense_t(x, w_ref, b_ref, relu):
        y = jnp.dot(x, w_ref[0], preferred_element_type=jnp.float32) + b_ref[0]
        if relu:
            y = jnp.maximum(y, 0.0)
        return y.astype(jnp.bfloat16)

    # LeNet tower fc1..fc4 (Dropout = identity at inference).
    # TODO(synk): training-mode dropout is not implemented.
    x = feat_ref[0].astype(jnp.bfloat16)
    x = dense_t(x, w1, b1, True)
    x = dense_t(x, w2, b2, True)
    x = dense_t(x, w3, b3, True)
    x = dense_t(x, w4, b4, False)                       # (B, 512) tower output

    @pl.when(t == 0)
    def _():
        acc_ref[...] = jnp.zeros_like(acc_ref)

    # head_fc1 applied block-wise: cat([o1,o2,o3], 1) @ W  ==  sum_t o_t @ W_t
    acc_ref[...] += jnp.dot(x, hw1[0], preferred_element_type=jnp.float32)

    @pl.when(t == pl.num_programs(0) - 1)
    def _():
        def dense_h(x, w_ref, b_ref, relu):
            y = jnp.dot(x, w_ref[...], preferred_element_type=jnp.float32) + b_ref[...]
            if relu:
                y = jnp.maximum(y, 0.0)
            return y.astype(jnp.bfloat16)

        # Eval-mode BatchNorm1d layers are folded into the following Linear.
        h = jnp.maximum(acc_ref[...] + hb1[...], 0.0).astype(jnp.bfloat16)
        h = dense_h(h, hw2, hb2, True)
        h = dense_h(h, hw3, hb3, True)
        z = jnp.dot(h, hw4[...], preferred_element_type=jnp.float32) + hb4[...]
        out_ref[...] = (1.0 / (1.0 + jnp.exp(-z))).astype(out_ref.dtype)


# ------------------------------ call wrappers ------------------------------- #

def _tower_spec(arr):
    nd = arr.ndim
    return pl.BlockSpec((1,) + arr.shape[1:], lambda t: (t,) + (0,) * (nd - 1))


def _full_spec(arr):
    nd = arr.ndim
    return pl.BlockSpec(arr.shape, lambda t: (0,) * nd)


def conv_relu_pool(patches, w, b):
    T, _, M, _ = patches.shape
    C = w.shape[-1]
    return pl.pallas_call(
        _conv_relu_pool_kernel,
        out_shape=jax.ShapeDtypeStruct((T, M, C), jnp.float32),
        grid=(T,),
        in_specs=[_tower_spec(patches), _tower_spec(w), _tower_spec(b)],
        out_specs=pl.BlockSpec((1, M, C), lambda t: (t, 0, 0)),
        compiler_params=pltpu.CompilerParams(
            dimension_semantics=("parallel",)),
    )(patches, w, b)


def fused_fc_head(feats, p):
    T, B, _ = feats.shape
    L = p["h1_w"].shape[-1]
    n_out = p["h4_w"].shape[-1]

    tower_args = [feats, p["fc1_w"], p["fc1_b"], p["fc2_w"], p["fc2_b"],
                  p["fc3_w"], p["fc3_b"], p["fc4_w"], p["fc4_b"], p["h1_w"]]
    head_args = [p["h1_b"], p["h2_w"], p["h2_b"], p["h3_w"], p["h3_b"],
                 p["h4_w"], p["h4_b"]]
    in_specs = ([_tower_spec(a) for a in tower_args]
                + [_full_spec(a) for a in head_args])

    return pl.pallas_call(
        _fused_fc_head_kernel,
        out_shape=jax.ShapeDtypeStruct((B, n_out), jnp.float32),
        grid=(T,),
        in_specs=in_specs,
        out_specs=pl.BlockSpec((B, n_out), lambda t: (0, 0)),
        scratch_shapes=[pltpu.VMEM((B, L), jnp.float32)],
        compiler_params=pltpu.CompilerParams(
            # Tower axis accumulates into the shared head scratch -> "arbitrary".
            dimension_semantics=("arbitrary",),
            vmem_limit_bytes=48 * 1024 * 1024),
    )(*tower_args, *head_args)


# --------------------------------- JAX glue --------------------------------- #

def phase_patches(x, k):
    """Phase-ordered im2col patches for conv(k) followed by 2x2/2 max-pool.

    x: (T, B, H, W, C) channel-last.
    Returns ((T, 4, B*Hp*Wp, C*k*k), (Hp, Wp)); rows ordered (b, i, j); phase
    (di, dj) holds the patch of conv-output position (2i+di, 2j+dj).
    """
    T, B, H, W, C = x.shape
    patches = lax.conv_general_dilated_patches(
        x.reshape(T * B, H, W, C), filter_shape=(k, k), window_strides=(1, 1),
        padding="VALID", dimension_numbers=("NHWC", "HWIO", "NHWC"))
    K = patches.shape[-1]
    Ho, Wo = H - k + 1, W - k + 1
    Hp, Wp = Ho // 2, Wo // 2
    pp = patches.reshape(T, B, Ho, Wo, K)[:, :, :2 * Hp, :2 * Wp, :]
    pp = pp.reshape(T, B, Hp, 2, Wp, 2, K)
    pp = pp.transpose(0, 3, 5, 1, 2, 4, 6)          # (T, 2, 2, B, Hp, Wp, K)
    return pp.reshape(T, 4, B * Hp * Wp, K), (Hp, Wp)


def multimodal_forward(x1, x2, x3, params):
    # Stack the three equally-shaped modalities on a leading tower axis (NHWC).
    x = jnp.stack([x1, x2, x3], axis=0)              # (3, B, 1, H, W)
    x = jnp.transpose(x, (0, 1, 3, 4, 2))            # (3, B, H, W, 1) channel-last
    T, B = x.shape[0], x.shape[1]

    p1, (hp1, wp1) = phase_patches(x, 5)
    a1 = conv_relu_pool(p1, params["conv1_w"], params["conv1_b"])
    a1 = a1.reshape(T, B, hp1, wp1, a1.shape[-1])

    p2, (_, _) = phase_patches(a1, 5)
    a2 = conv_relu_pool(p2, params["conv2_w"], params["conv2_b"])
    feats = a2.reshape(T, B, -1)                      # channel-last flatten (matches fc1 init)

    return fused_fc_head(feats, params)


# ------------------------------ initialization ------------------------------ #

def fc_shape(n, k=5):
    n = (n - k + 1 - 2) // 2 + 1
    n = (n - k + 1 - 2) // 2 + 1
    return n


def _uniform(key, shape, bound):
    return jax.random.uniform(key, shape, jnp.float32, -bound, bound)


def _init_linear(key, fan_in, fan_out):
    kw, kb = jax.random.split(key)
    bound = 1.0 / math.sqrt(fan_in)
    return _uniform(kw, (fan_in, fan_out), bound), _uniform(kb, (1, fan_out), bound)


def _fold_bn(scale, shift, w, b):
    """BatchNorm1d (eval) followed by Linear(w, b):  (x*scale + shift) @ w + b."""
    return w * scale[:, None], b + shift[None, :] @ w


def init_params(key, in1, in2, in3, seq, lenet_output=512, eps=1e-5):
    # TODO(synk): the fused tower kernels assume the three modalities have equal
    # sizes (true here); unequal sizes would need per-tower (unstacked) calls.
    assert in1 == in2 == in3
    h = int(in1 // seq)
    flat = 16 * fc_shape(h) * fc_shape(seq)
    L = lenet_output

    k_tow, k_head = jax.random.split(key)
    tower_keys = jax.random.split(k_tow, 3)

    def init_tower(tkey):
        ks = jax.random.split(tkey, 6)
        return (*_init_linear(ks[0], 1 * 5 * 5, 6),       # conv1 (im2col layout)
                *_init_linear(ks[1], 6 * 5 * 5, 16),      # conv2 (im2col layout)
                *_init_linear(ks[2], flat, 1024),
                *_init_linear(ks[3], 1024, 1024),
                *_init_linear(ks[4], 1024, 512),
                *_init_linear(ks[5], 512, L))

    towers = [init_tower(k) for k in tower_keys]

    def stk(i, dtype):
        return jnp.stack([tw[i] for tw in towers]).astype(dtype)

    params = {}
    for j, name in enumerate(["conv1", "conv2", "fc1", "fc2", "fc3", "fc4"]):
        params[name + "_w"] = stk(2 * j, jnp.bfloat16)
        params[name + "_b"] = stk(2 * j + 1, jnp.float32)

    hk = jax.random.split(k_head, 4)
    h1w, h1b = _init_linear(hk[0], 3 * L, L)
    h2w, h2b = _init_linear(hk[1], L, 256)
    h3w, h3b = _init_linear(hk[2], 256, 84)
    h4w, h4b = _init_linear(hk[3], 84, 6)

    def bn_affine(dim):
        gamma = jnp.ones((dim,), jnp.float32)
        beta = jnp.zeros((dim,), jnp.float32)
        mean = jnp.zeros((dim,), jnp.float32)
        var = jnp.ones((dim,), jnp.float32)
        scale = gamma / jnp.sqrt(var + eps)
        return scale, beta - mean * scale

    # Fold each eval-mode BatchNorm1d into the Linear that follows it.
    h2w, h2b = _fold_bn(*bn_affine(L), h2w, h2b)
    h3w, h3b = _fold_bn(*bn_affine(256), h3w, h3b)
    h4w, h4b = _fold_bn(*bn_affine(84), h4w, h4b)

    params.update({
        "h1_w": h1w.reshape(3, L, L).astype(jnp.bfloat16), "h1_b": h1b,
        "h2_w": h2w.astype(jnp.bfloat16), "h2_b": h2b,
        "h3_w": h3w.astype(jnp.bfloat16), "h3_b": h3b,
        "h4_w": h4w.astype(jnp.bfloat16), "h4_b": h4b,
    })
    return params


# ----------------------------------- main ------------------------------------ #

if __name__ == "__main__":
    B = 2
    seq = 16
    in1 = in2 = in3 = 256          # in_i / seq = 16 -> per-modality input (B, 1, 16, 16)
    key = jax.random.PRNGKey(0)
    kp, k1, k2, k3 = jax.random.split(key, 4)
    params = init_params(kp, in1, in2, in3, seq, lenet_output=512)

    x1 = jax.random.normal(k1, (B, 1, in1 // seq, seq), jnp.float32)
    x2 = jax.random.normal(k2, (B, 1, in2 // seq, seq), jnp.float32)
    x3 = jax.random.normal(k3, (B, 1, in3 // seq, seq), jnp.float32)

    fwd = jax.jit(multimodal_forward)
    out = jax.block_until_ready(fwd(x1, x2, x3, params))
    assert out.shape == (B, 6)
    assert bool(jnp.all(jnp.isfinite(out)))
    assert bool(jnp.all((out >= 0.0) & (out <= 1.0)))  # sigmoid output range
    print("KERNEL_OK")
</pallas_src>

<mosaic_0001>
module attributes {stable_mosaic.version = 11 : i64} {
  func.func @_conv_relu_pool_kernel(%arg0: i32, %arg1: memref<1x4x72x25xf32, #tpu.memory_space<vmem>>, %arg2: memref<1x25x6xbf16, #tpu.memory_space<vmem>>, %arg3: memref<1x1x6xf32, #tpu.memory_space<vmem>>, %arg4: memref<1x72x6xf32, #tpu.memory_space<vmem>>) attributes {dimension_semantics = [#tpu.dimension_semantics<parallel>], iteration_bounds = array<i64: 3>, scalar_prefetch = 0 : i64, scratch_operands = 0 : i64, tpu.core_type = #tpu.core_type<tc>, window_params = [{transform_indices = @transform_0, window_bounds = array<i64: 1, 4, 72, 25>}, {transform_indices = @transform_1, window_bounds = array<i64: 1, 25, 6>}, {transform_indices = @transform_2, window_bounds = array<i64: 1, 1, 6>}, {transform_indices = @transform_3, window_bounds = array<i64: 1, 72, 6>}]} {
    %c0 = arith.constant 0 : index
    %c0_0 = arith.constant 0 : index
    %c0_1 = arith.constant 0 : index
    %0 = vector.load %arg2[%c0, %c0_0, %c0_1] : memref<1x25x6xbf16, #tpu.memory_space<vmem>>, vector<1x25x6xbf16>
    %1 = vector.shape_cast %0 : vector<1x25x6xbf16> to vector<25x6xbf16>
    %c0_2 = arith.constant 0 : index
    %c0_3 = arith.constant 0 : index
    %c0_4 = arith.constant 0 : index
    %c0_5 = arith.constant 0 : index
    %2 = vector.load %arg1[%c0_2, %c0_3, %c0_4, %c0_5] : memref<1x4x72x25xf32, #tpu.memory_space<vmem>>, vector<1x1x72x25xf32>
    %3 = vector.shape_cast %2 : vector<1x1x72x25xf32> to vector<72x25xf32>
    %4 = arith.truncf %3 : vector<72x25xf32> to vector<72x25xbf16>
    %cst = arith.constant dense<0.000000e+00> : vector<72x6xf32>
    %5 = tpu.matmul %4, %1, %cst {dimension_numbers = #tpu.dot_dimension_numbers<[1], [0], [0], [1], [0, 0, 1, 1], [], []>} : vector<72x25xbf16>, vector<25x6xbf16>, vector<72x6xf32> -> vector<72x6xf32>
    %c0_6 = arith.constant 0 : index
    %c1 = arith.constant 1 : index
    %c0_7 = arith.constant 0 : index
    %c0_8 = arith.constant 0 : index
    %6 = vector.load %arg1[%c0_6, %c1, %c0_7, %c0_8] : memref<1x4x72x25xf32, #tpu.memory_space<vmem>>, vector<1x1x72x25xf32>
    %7 = vector.shape_cast %6 : vector<1x1x72x25xf32> to vector<72x25xf32>
    %8 = arith.truncf %7 : vector<72x25xf32> to vector<72x25xbf16>
    %cst_9 = arith.constant dense<0.000000e+00> : vector<72x6xf32>
    %9 = tpu.matmul %8, %1, %cst_9 {dimension_numbers = #tpu.dot_dimension_numbers<[1], [0], [0], [1], [0, 0, 1, 1], [], []>} : vector<72x25xbf16>, vector<25x6xbf16>, vector<72x6xf32> -> vector<72x6xf32>
    %10 = arith.maximumf %5, %9 : vector<72x6xf32>
    %c0_10 = arith.constant 0 : index
    %c2 = arith.constant 2 : index
    %c0_11 = arith.constant 0 : index
    %c0_12 = arith.constant 0 : index
    %11 = vector.load %arg1[%c0_10, %c2, %c0_11, %c0_12] : memref<1x4x72x25xf32, #tpu.memory_space<vmem>>, vector<1x1x72x25xf32>
    %12 = vector.shape_cast %11 : vector<1x1x72x25xf32> to vector<72x25xf32>
    %13 = arith.truncf %12 : vector<72x25xf32> to vector<72x25xbf16>
    %cst_13 = arith.constant dense<0.000000e+00> : vector<72x6xf32>
    %14 = tpu.matmul %13, %1, %cst_13 {dimension_numbers = #tpu.dot_dimension_numbers<[1], [0], [0], [1], [0, 0, 1, 1], [], []>} : vector<72x25xbf16>, vector<25x6xbf16>, vector<72x6xf32> -> vector<72x6xf32>
    %15 = arith.maximumf %10, %14 : vector<72x6xf32>
    %c0_14 = arith.constant 0 : index
    %c3 = arith.constant 3 : index
    %c0_15 = arith.constant 0 : index
    %c0_16 = arith.constant 0 : index
    %16 = vector.load %arg1[%c0_14, %c3, %c0_15, %c0_16] : memref<1x4x72x25xf32, #tpu.memory_space<vmem>>, vector<1x1x72x25xf32>
    %17 = vector.shape_cast %16 : vector<1x1x72x25xf32> to vector<72x25xf32>
    %18 = arith.truncf %17 : vector<72x25xf32> to vector<72x25xbf16>
    %cst_17 = arith.constant dense<0.000000e+00> : vector<72x6xf32>
    %19 = tpu.matmul %18, %1, %cst_17 {dimension_numbers = #tpu.dot_dimension_numbers<[1], [0], [0], [1], [0, 0, 1, 1], [], []>} : vector<72x25xbf16>, vector<25x6xbf16>, vector<72x6xf32> -> vector<72x6xf32>
    %20 = arith.maximumf %15, %19 : vector<72x6xf32>
    %c0_18 = arith.constant 0 : index
    %c0_19 = arith.constant 0 : index
    %c0_20 = arith.constant 0 : index
    %21 = vector.load %arg3[%c0_18, %c0_19, %c0_20] : memref<1x1x6xf32, #tpu.memory_space<vmem>>, vector<1x1x6xf32>
    %22 = vector.shape_cast %21 : vector<1x1x6xf32> to vector<1x6xf32>
    %23 = vector.broadcast %22 : vector<1x6xf32> to vector<72x6xf32>
    %24 = arith.addf %20, %23 : vector<72x6xf32>
    %cst_21 = arith.constant 0.000000e+00 : f32
    %25 = vector.broadcast %cst_21 : f32 to vector<72x6xf32>
    %26 = arith.maximumf %24, %25 : vector<72x6xf32>
    %c0_22 = arith.constant 0 : index
    %c0_23 = arith.constant 0 : index
    %c0_24 = arith.constant 0 : index
    %27 = vector.load %arg4[%c0_22, %c0_23, %c0_24] : memref<1x72x6xf32, #tpu.memory_space<vmem>>, vector<1x72x6xf32>
    %28 = vector.shape_cast %27 : vector<1x72x6xf32> to vector<72x6xf32>
    %29 = vector.shape_cast %26 : vector<72x6xf32> to vector<1x72x6xf32>
    tpu.vector_store %arg4[%c0_22, %c0_23, %c0_24], %29 {strides = array<i32>} : memref<1x72x6xf32, #tpu.memory_space<vmem>>, vector<1x72x6xf32>,
    return
  }
  func.func @transform_0(%arg0: i32) -> (i32, i32, i32, i32) {
    %c0_i32 = arith.constant 0 : i32
    %c0_i32_0 = arith.constant 0 : i32
    %c0_i32_1 = arith.constant 0 : i32
    %c0_i32_2 = arith.constant 0 : i32
    return %arg0, %c0_i32, %c0_i32_0, %c0_i32_1 : i32, i32, i32, i32
  }
  func.func @transform_1(%arg0: i32) -> (i32, i32, i32) {
    %c0_i32 = arith.constant 0 : i32
    %c0_i32_0 = arith.constant 0 : i32
    %c0_i32_1 = arith.constant 0 : i32
    return %arg0, %c0_i32, %c0_i32_0 : i32, i32, i32
  }
  func.func @transform_2(%arg0: i32) -> (i32, i32, i32) {
    %c0_i32 = arith.constant 0 : i32
    %c0_i32_0 = arith.constant 0 : i32
    %c0_i32_1 = arith.constant 0 : i32
    return %arg0, %c0_i32, %c0_i32_0 : i32, i32, i32
  }
  func.func @transform_3(%arg0: i32) -> (i32, i32, i32) {
    %c0_i32 = arith.constant 0 : i32
    %c0_i32_0 = arith.constant 0 : i32
    %c0_i32_1 = arith.constant 0 : i32
    return %arg0, %c0_i32, %c0_i32_0 : i32, i32, i32
  }
}

module attributes {stable_mosaic.version = 11 : i64} {
  func.func @_conv_relu_pool_kernel(%arg0: i32, %arg1: memref<1x4x2x150xf32, #tpu.memory_space<vmem>>, %arg2: memref<1x150x16xbf16, #tpu.memory_space<vmem>>, %arg3: memref<1x1x16xf32, #tpu.memory_space<vmem>>, %arg4: memref<1x2x16xf32, #tpu.memory_space<vmem>>) attributes {dimension_semantics = [#tpu.dimension_semantics<parallel>], iteration_bounds = array<i64: 3>, scalar_prefetch = 0 : i64, scratch_operands = 0 : i64, tpu.core_type = #tpu.core_type<tc>, window_params = [{transform_indices = @transform_0, window_bounds = array<i64: 1, 4, 2, 150>}, {transform_indices = @transform_1, window_bounds = array<i64: 1, 150, 16>}, {transform_indices = @transform_2, window_bounds = array<i64: 1, 1, 16>}, {transform_indices = @transform_3, window_bounds = array<i64: 1, 2, 16>}]} {
    %c0 = arith.constant 0 : index
    %c0_0 = arith.constant 0 : index
    %c0_1 = arith.constant 0 : index
    %0 = vector.load %arg2[%c0, %c0_0, %c0_1] : memref<1x150x16xbf16, #tpu.memory_space<vmem>>, vector<1x150x16xbf16>
    %1 = vector.shape_cast %0 : vector<1x150x16xbf16> to vector<150x16xbf16>
    %c0_2 = arith.constant 0 : index
    %c0_3 = arith.constant 0 : index
    %c0_4 = arith.constant 0 : index
    %c0_5 = arith.constant 0 : index
    %2 = vector.load %arg1[%c0_2, %c0_3, %c0_4, %c0_5] : memref<1x4x2x150xf32, #tpu.memory_space<vmem>>, vector<1x1x2x150xf32>
    %3 = vector.shape_cast %2 : vector<1x1x2x150xf32> to vector<2x150xf32>
    %4 = arith.truncf %3 : vector<2x150xf32> to vector<2x150xbf16>
    %cst = arith.constant dense<0.000000e+00> : vector<2x16xf32>
    %5 = tpu.matmul %4, %1, %cst {dimension_numbers = #tpu.dot_dimension_numbers<[1], [0], [0], [1], [0, 0, 1, 1], [], []>} : vector<2x150xbf16>, vector<150x16xbf16>, vector<2x16xf32> -> vector<2x16xf32>
    %c0_6 = arith.constant 0 : index
    %c1 = arith.constant 1 : index
    %c0_7 = arith.constant 0 : index
    %c0_8 = arith.constant 0 : index
    %6 = vector.load %arg1[%c0_6, %c1, %c0_7, %c0_8] : memref<1x4x2x150xf32, #tpu.memory_space<vmem>>, vector<1x1x2x150xf32>
    %7 = vector.shape_cast %6 : vector<1x1x2x150xf32> to vector<2x150xf32>
    %8 = arith.truncf %7 : vector<2x150xf32> to vector<2x150xbf16>
    %cst_9 = arith.constant dense<0.000000e+00> : vector<2x16xf32>
    %9 = tpu.matmul %8, %1, %cst_9 {dimension_numbers = #tpu.dot_dimension_numbers<[1], [0], [0], [1], [0, 0, 1, 1], [], []>} : vector<2x150xbf16>, vector<150x16xbf16>, vector<2x16xf32> -> vector<2x16xf32>
    %10 = arith.maximumf %5, %9 : vector<2x16xf32>
    %c0_10 = arith.constant 0 : index
    %c2 = arith.constant 2 : index
    %c0_11 = arith.constant 0 : index
    %c0_12 = arith.constant 0 : index
    %11 = vector.load %arg1[%c0_10, %c2, %c0_11, %c0_12] : memref<1x4x2x150xf32, #tpu.memory_space<vmem>>, vector<1x1x2x150xf32>
    %12 = vector.shape_cast %11 : vector<1x1x2x150xf32> to vector<2x150xf32>
    %13 = arith.truncf %12 : vector<2x150xf32> to vector<2x150xbf16>
    %cst_13 = arith.constant dense<0.000000e+00> : vector<2x16xf32>
    %14 = tpu.matmul %13, %1, %cst_13 {dimension_numbers = #tpu.dot_dimension_numbers<[1], [0], [0], [1], [0, 0, 1, 1], [], []>} : vector<2x150xbf16>, vector<150x16xbf16>, vector<2x16xf32> -> vector<2x16xf32>
    %15 = arith.maximumf %10, %14 : vector<2x16xf32>
    %c0_14 = arith.constant 0 : index
    %c3 = arith.constant 3 : index
    %c0_15 = arith.constant 0 : index
    %c0_16 = arith.constant 0 : index
    %16 = vector.load %arg1[%c0_14, %c3, %c0_15, %c0_16] : memref<1x4x2x150xf32, #tpu.memory_space<vmem>>, vector<1x1x2x150xf32>
    %17 = vector.shape_cast %16 : vector<1x1x2x150xf32> to vector<2x150xf32>
    %18 = arith.truncf %17 : vector<2x150xf32> to vector<2x150xbf16>
    %cst_17 = arith.constant dense<0.000000e+00> : vector<2x16xf32>
    %19 = tpu.matmul %18, %1, %cst_17 {dimension_numbers = #tpu.dot_dimension_numbers<[1], [0], [0], [1], [0, 0, 1, 1], [], []>} : vector<2x150xbf16>, vector<150x16xbf16>, vector<2x16xf32> -> vector<2x16xf32>
    %20 = arith.maximumf %15, %19 : vector<2x16xf32>
    %c0_18 = arith.constant 0 : index
    %c0_19 = arith.constant 0 : index
    %c0_20 = arith.constant 0 : index
    %21 = vector.load %arg3[%c0_18, %c0_19, %c0_20] : memref<1x1x16xf32, #tpu.memory_space<vmem>>, vector<1x1x16xf32>
    %22 = vector.shape_cast %21 : vector<1x1x16xf32> to vector<1x16xf32>
    %23 = vector.broadcast %22 : vector<1x16xf32> to vector<2x16xf32>
    %24 = arith.addf %20, %23 : vector<2x16xf32>
    %cst_21 = arith.constant 0.000000e+00 : f32
    %25 = vector.broadcast %cst_21 : f32 to vector<2x16xf32>
    %26 = arith.maximumf %24, %25 : vector<2x16xf32>
    %c0_22 = arith.constant 0 : index
    %c0_23 = arith.constant 0 : index
    %c0_24 = arith.constant 0 : index
    %27 = vector.load %arg4[%c0_22, %c0_23, %c0_24] : memref<1x2x16xf32, #tpu.memory_space<vmem>>, vector<1x2x16xf32>
    %28 = vector.shape_cast %27 : vector<1x2x16xf32> to vector<2x16xf32>
    %29 = vector.shape_cast %26 : vector<2x16xf32> to vector<1x2x16xf32>
    tpu.vector_store %arg4[%c0_22, %c0_23, %c0_24], %29 {strides = array<i32>} : memref<1x2x16xf32, #tpu.memory_space<vmem>>, vector<1x2x16xf32>,
    return
  }
  func.func @transform_0(%arg0: i32) -> (i32, i32, i32, i32) {
    %c0_i32 = arith.constant 0 : i32
    %c0_i32_0 = arith.constant 0 : i32
    %c0_i32_1 = arith.constant 0 : i32
    %c0_i32_2 = arith.constant 0 : i32
    return %arg0, %c0_i32, %c0_i32_0, %c0_i32_1 : i32, i32, i32, i32
  }
  func.func @transform_1(%arg0: i32) -> (i32, i32, i32) {
    %c0_i32 = arith.constant 0 : i32
    %c0_i32_0 = arith.constant 0 : i32
    %c0_i32_1 = arith.constant 0 : i32
    return %arg0, %c0_i32, %c0_i32_0 : i32, i32, i32
  }
  func.func @transform_2(%arg0: i32) -> (i32, i32, i32) {
    %c0_i32 = arith.constant 0 : i32
    %c0_i32_0 = arith.constant 0 : i32
    %c0_i32_1 = arith.constant 0 : i32
    return %arg0, %c0_i32, %c0_i32_0 : i32, i32, i32
  }
  func.func @transform_3(%arg0: i32) -> (i32, i32, i32) {
    %c0_i32 = arith.constant 0 : i32
    %c0_i32_0 = arith.constant 0 : i32
    %c0_i32_1 = arith.constant 0 : i32
    return %arg0, %c0_i32, %c0_i32_0 : i32, i32, i32
  }
}

module attributes {stable_mosaic.version = 11 : i64} {
  func.func @_fused_fc_head_kernel(%arg0: i32, %arg1: memref<1x2x16xf32, #tpu.memory_space<vmem>>, %arg2: memref<1x16x1024xbf16, #tpu.memory_space<vmem>>, %arg3: memref<1x1x1024xf32, #tpu.memory_space<vmem>>, %arg4: memref<1x1024x1024xbf16, #tpu.memory_space<vmem>>, %arg5: memref<1x1x1024xf32, #tpu.memory_space<vmem>>, %arg6: memref<1x1024x512xbf16, #tpu.memory_space<vmem>>, %arg7: memref<1x1x512xf32, #tpu.memory_space<vmem>>, %arg8: memref<1x512x512xbf16, #tpu.memory_space<vmem>>, %arg9: memref<1x1x512xf32, #tpu.memory_space<vmem>>, %arg10: memref<1x512x512xbf16, #tpu.memory_space<vmem>>, %arg11: memref<1x512xf32, #tpu.memory_space<vmem>>, %arg12: memref<512x256xbf16, #tpu.memory_space<vmem>>, %arg13: memref<1x256xf32, #tpu.memory_space<vmem>>, %arg14: memref<256x84xbf16, #tpu.memory_space<vmem>>, %arg15: memref<1x84xf32, #tpu.memory_space<vmem>>, %arg16: memref<84x6xbf16, #tpu.memory_space<vmem>>, %arg17: memref<1x6xf32, #tpu.memory_space<vmem>>, %arg18: memref<2x6xf32, #tpu.memory_space<vmem>>, %arg19: memref<2x512xf32, #tpu.memory_space<vmem>>) attributes {dimension_semantics = [#tpu.dimension_semantics<arbitrary>], iteration_bounds = array<i64: 3>, scalar_prefetch = 0 : i64, scratch_operands = 1 : i64, tpu.core_type = #tpu.core_type<tc>, window_params = [{transform_indices = @transform_0, window_bounds = array<i64: 1, 2, 16>}, {transform_indices = @transform_1, window_bounds = array<i64: 1, 16, 1024>}, {transform_indices = @transform_2, window_bounds = array<i64: 1, 1, 1024>}, {transform_indices = @transform_3, window_bounds = array<i64: 1, 1024, 1024>}, {transform_indices = @transform_4, window_bounds = array<i64: 1, 1, 1024>}, {transform_indices = @transform_5, window_bounds = array<i64: 1, 1024, 512>}, {transform_indices = @transform_6, window_bounds = array<i64: 1, 1, 512>}, {transform_indices = @transform_7, window_bounds = array<i64: 1, 512, 512>}, {transform_indices = @transform_8, window_bounds = array<i64: 1, 1, 512>}, {transform_indices = @transform_9, window_bounds = array<i64: 1, 512, 512>}, {pipeline_mode = #tpu.pipeline_mode<synchronous>, transform_indices = @transform_10, window_bounds = array<i64: 1, 512>}, {pipeline_mode = #tpu.pipeline_mode<synchronous>, transform_indices = @transform_11, window_bounds = array<i64: 512, 256>}, {pipeline_mode = #tpu.pipeline_mode<synchronous>, transform_indices = @transform_12, window_bounds = array<i64: 1, 256>}, {pipeline_mode = #tpu.pipeline_mode<synchronous>, transform_indices = @transform_13, window_bounds = array<i64: 256, 84>}, {pipeline_mode = #tpu.pipeline_mode<synchronous>, transform_indices = @transform_14, window_bounds = array<i64: 1, 84>}, {pipeline_mode = #tpu.pipeline_mode<synchronous>, transform_indices = @transform_15, window_bounds = array<i64: 84, 6>}, {pipeline_mode = #tpu.pipeline_mode<synchronous>, transform_indices = @transform_16, window_bounds = array<i64: 1, 6>}, {pipeline_mode = #tpu.pipeline_mode<synchronous>, transform_indices = @transform_17, window_bounds = array<i64: 2, 6>}]} {
    %c0 = arith.constant 0 : index
    %c0_0 = arith.constant 0 : index
    %c0_1 = arith.constant 0 : index
    %0 = vector.load %arg1[%c0, %c0_0, %c0_1] : memref<1x2x16xf32, #tpu.memory_space<vmem>>, vector<1x2x16xf32>
    %1 = vector.shape_cast %0 : vector<1x2x16xf32> to vector<2x16xf32>
    %2 = arith.truncf %1 : vector<2x16xf32> to vector<2x16xbf16>
    %c0_2 = arith.constant 0 : index
    %c0_3 = arith.constant 0 : index
    %c0_4 = arith.constant 0 : index
    %3 = vector.load %arg2[%c0_2, %c0_3, %c0_4] : memref<1x16x1024xbf16, #tpu.memory_space<vmem>>, vector<1x16x1024xbf16>
    %4 = vector.shape_cast %3 : vector<1x16x1024xbf16> to vector<16x1024xbf16>
    %cst = arith.constant dense<0.000000e+00> : vector<2x1024xf32>
    %5 = tpu.matmul %2, %4, %cst {dimension_numbers = #tpu.dot_dimension_numbers<[1], [0], [0], [1], [0, 0, 1, 1], [], []>} : vector<2x16xbf16>, vector<16x1024xbf16>, vector<2x1024xf32> -> vector<2x1024xf32>
    %c0_5 = arith.constant 0 : index
    %c0_6 = arith.constant 0 : index
    %c0_7 = arith.constant 0 : index
    %6 = vector.load %arg3[%c0_5, %c0_6, %c0_7] : memref<1x1x1024xf32, #tpu.memory_space<vmem>>, vector<1x1x1024xf32>
    %7 = vector.shape_cast %6 : vector<1x1x1024xf32> to vector<1x1024xf32>
    %8 = vector.broadcast %7 : vector<1x1024xf32> to vector<2x1024xf32>
    %9 = arith.addf %5, %8 : vector<2x1024xf32>
    %cst_8 = arith.constant 0.000000e+00 : f32
    %10 = vector.broadcast %cst_8 : f32 to vector<2x1024xf32>
    %11 = arith.maximumf %9, %10 : vector<2x1024xf32>
    %12 = arith.truncf %11 : vector<2x1024xf32> to vector<2x1024xbf16>
    %c0_9 = arith.constant 0 : index
    %c0_10 = arith.constant 0 : index
    %c0_11 = arith.constant 0 : index
    %13 = vector.load %arg4[%c0_9, %c0_10, %c0_11] : memref<1x1024x1024xbf16, #tpu.memory_space<vmem>>, vector<1x1024x1024xbf16>
    %14 = vector.shape_cast %13 : vector<1x1024x1024xbf16> to vector<1024x1024xbf16>
    %cst_12 = arith.constant dense<0.000000e+00> : vector<2x1024xf32>
    %15 = tpu.matmul %12, %14, %cst_12 {dimension_numbers = #tpu.dot_dimension_numbers<[1], [0], [0], [1], [0, 0, 1, 1], [], []>} : vector<2x1024xbf16>, vector<1024x1024xbf16>, vector<2x1024xf32> -> vector<2x1024xf32>
    %c0_13 = arith.constant 0 : index
    %c0_14 = arith.constant 0 : index
    %c0_15 = arith.constant 0 : index
    %16 = vector.load %arg5[%c0_13, %c0_14, %c0_15] : memref<1x1x1024xf32, #tpu.memory_space<vmem>>, vector<1x1x1024xf32>
    %17 = vector.shape_cast %16 : vector<1x1x1024xf32> to vector<1x1024xf32>
    %18 = vector.broadcast %17 : vector<1x1024xf32> to vector<2x1024xf32>
    %19 = arith.addf %15, %18 : vector<2x1024xf32>
    %cst_16 = arith.constant 0.000000e+00 : f32
    %20 = vector.broadcast %cst_16 : f32 to vector<2x1024xf32>
    %21 = arith.maximumf %19, %20 : vector<2x1024xf32>
    %22 = arith.truncf %21 : vector<2x1024xf32> to vector<2x1024xbf16>
    %c0_17 = arith.constant 0 : index
    %c0_18 = arith.constant 0 : index
    %c0_19 = arith.constant 0 : index
    %23 = vector.load %arg6[%c0_17, %c0_18, %c0_19] : memref<1x1024x512xbf16, #tpu.memory_space<vmem>>, vector<1x1024x512xbf16>
    %24 = vector.shape_cast %23 : vector<1x1024x512xbf16> to vector<1024x512xbf16>
    %cst_20 = arith.constant dense<0.000000e+00> : vector<2x512xf32>
    %25 = tpu.matmul %22, %24, %cst_20 {dimension_numbers = #tpu.dot_dimension_numbers<[1], [0], [0], [1], [0, 0, 1, 1], [], []>} : vector<2x1024xbf16>, vector<1024x512xbf16>, vector<2x512xf32> -> vector<2x512xf32>
    %c0_21 = arith.constant 0 : index
    %c0_22 = arith.constant 0 : index
    %c0_23 = arith.constant 0 : index
    %26 = vector.load %arg7[%c0_21, %c0_22, %c0_23] : memref<1x1x512xf32, #tpu.memory_space<vmem>>, vector<1x1x512xf32>
    %27 = vector.shape_cast %26 : vector<1x1x512xf32> to vector<1x512xf32>
    %28 = vector.broadcast %27 : vector<1x512xf32> to vector<2x512xf32>
    %29 = arith.addf %25, %28 : vector<2x512xf32>
    %cst_24 = arith.constant 0.000000e+00 : f32
    %30 = vector.broadcast %cst_24 : f32 to vector<2x512xf32>
    %31 = arith.maximumf %29, %30 : vector<2x512xf32>
    %32 = arith.truncf %31 : vector<2x512xf32> to vector<2x512xbf16>
    %c0_25 = arith.constant 0 : index
    %c0_26 = arith.constant 0 : index
    %c0_27 = arith.constant 0 : index
    %33 = vector.load %arg8[%c0_25, %c0_26, %c0_27] : memref<1x512x512xbf16, #tpu.memory_space<vmem>>, vector<1x512x512xbf16>
    %34 = vector.shape_cast %33 : vector<1x512x512xbf16> to vector<512x512xbf16>
    %cst_28 = arith.constant dense<0.000000e+00> : vector<2x512xf32>
    %35 = tpu.matmul %32, %34, %cst_28 {dimension_numbers = #tpu.dot_dimension_numbers<[1], [0], [0], [1], [0, 0, 1, 1], [], []>} : vector<2x512xbf16>, vector<512x512xbf16>, vector<2x512xf32> -> vector<2x512xf32>
    %c0_29 = arith.constant 0 : index
    %c0_30 = arith.constant 0 : index
    %c0_31 = arith.constant 0 : index
    %36 = vector.load %arg9[%c0_29, %c0_30, %c0_31] : memref<1x1x512xf32, #tpu.memory_space<vmem>>, vector<1x1x512xf32>
    %37 = vector.shape_cast %36 : vector<1x1x512xf32> to vector<1x512xf32>
    %38 = vector.broadcast %37 : vector<1x512xf32> to vector<2x512xf32>
    %39 = arith.addf %35, %38 : vector<2x512xf32>
    %40 = arith.truncf %39 : vector<2x512xf32> to vector<2x512xbf16>
    %c0_i32 = arith.constant 0 : i32
    %41 = arith.cmpi eq, %arg0, %c0_i32 : i32
    %42 = arith.extui %41 : i1 to i32
    %c0_i32_32 = arith.constant 0 : i32
    %43 = arith.cmpi ne, %42, %c0_i32_32 : i32
    scf.if %43 {
      %cst_42 = arith.constant 0.000000e+00 : f32
      %53 = vector.broadcast %cst_42 : f32 to vector<2x512xf32>
      %c0_43 = arith.constant 0 : index
      %c0_44 = arith.constant 0 : index
      %54 = vector.load %arg19[%c0_43, %c0_44] : memref<2x512xf32, #tpu.memory_space<vmem>>, vector<2x512xf32>
      tpu.vector_store %arg19[%c0_43, %c0_44], %53 {strides = array<i32>} : memref<2x512xf32, #tpu.memory_space<vmem>>, vector<2x512xf32>,
    } else {
    }
    %c0_33 = arith.constant 0 : index
    %c0_34 = arith.constant 0 : index
    %44 = vector.load %arg19[%c0_33, %c0_34] : memref<2x512xf32, #tpu.memory_space<vmem>>, vector<2x512xf32>
    %c0_35 = arith.constant 0 : index
    %c0_36 = arith.constant 0 : index
    %c0_37 = arith.constant 0 : index
    %45 = vector.load %arg10[%c0_35, %c0_36, %c0_37] : memref<1x512x512xbf16, #tpu.memory_space<vmem>>, vector<1x512x512xbf16>
    %46 = vector.shape_cast %45 : vector<1x512x512xbf16> to vector<512x512xbf16>
    %cst_38 = arith.constant dense<0.000000e+00> : vector<2x512xf32>
    %47 = tpu.matmul %40, %46, %cst_38 {dimension_numbers = #tpu.dot_dimension_numbers<[1], [0], [0], [1], [0, 0, 1, 1], [], []>} : vector<2x512xbf16>, vector<512x512xbf16>, vector<2x512xf32> -> vector<2x512xf32>
    %48 = arith.addf %44, %47 : vector<2x512xf32>
    %c0_39 = arith.constant 0 : index
    %c0_40 = arith.constant 0 : index
    %49 = vector.load %arg19[%c0_39, %c0_40] : memref<2x512xf32, #tpu.memory_space<vmem>>, vector<2x512xf32>
    tpu.vector_store %arg19[%c0_39, %c0_40], %48 {strides = array<i32>} : memref<2x512xf32, #tpu.memory_space<vmem>>, vector<2x512xf32>,
    %c2_i32 = arith.constant 2 : i32
    %50 = arith.cmpi eq, %arg0, %c2_i32 : i32
    %51 = arith.extui %50 : i1 to i32
    %c0_i32_41 = arith.constant 0 : i32
    %52 = arith.cmpi ne, %51, %c0_i32_41 : i32
    scf.if %52 {
      %c0_42 = arith.constant 0 : index
      %c0_43 = arith.constant 0 : index
      %53 = vector.load %arg19[%c0_42, %c0_43] : memref<2x512xf32, #tpu.memory_space<vmem>>, vector<2x512xf32>
      %c0_44 = arith.constant 0 : index
      %c0_45 = arith.constant 0 : index
      %54 = vector.load %arg11[%c0_44, %c0_45] : memref<1x512xf32, #tpu.memory_space<vmem>>, vector<1x512xf32>
      %55 = vector.broadcast %54 : vector<1x512xf32> to vector<2x512xf32>
      %56 = arith.addf %53, %55 : vector<2x512xf32>
      %cst_46 = arith.constant 0.000000e+00 : f32
      %57 = vector.broadcast %cst_46 : f32 to vector<2x512xf32>
      %58 = arith.maximumf %56, %57 : vector<2x512xf32>
      %59 = arith.truncf %58 : vector<2x512xf32> to vector<2x512xbf16>
      %c0_47 = arith.constant 0 : index
      %c0_48 = arith.constant 0 : index
      %60 = vector.load %arg12[%c0_47, %c0_48] : memref<512x256xbf16, #tpu.memory_space<vmem>>, vector<512x256xbf16>
      %cst_49 = arith.constant dense<0.000000e+00> : vector<2x256xf32>
      %61 = tpu.matmul %59, %60, %cst_49 {dimension_numbers = #tpu.dot_dimension_numbers<[1], [0], [0], [1], [0, 0, 1, 1], [], []>} : vector<2x512xbf16>, vector<512x256xbf16>, vector<2x256xf32> -> vector<2x256xf32>
      %c0_50 = arith.constant 0 : index
      %c0_51 = arith.constant 0 : index
      %62 = vector.load %arg13[%c0_50, %c0_51] : memref<1x256xf32, #tpu.memory_space<vmem>>, vector<1x256xf32>
      %63 = vector.broadcast %62 : vector<1x256xf32> to vector<2x256xf32>
      %64 = arith.addf %61, %63 : vector<2x256xf32>
      %cst_52 = arith.constant 0.000000e+00 : f32
      %65 = vector.broadcast %cst_52 : f32 to vector<2x256xf32>
      %66 = arith.maximumf %64, %65 : vector<2x256xf32>
      %67 = arith.truncf %66 : vector<2x256xf32> to vector<2x256xbf16>
      %c0_53 = arith.constant 0 : index
      %c0_54 = arith.constant 0 : index
      %68 = vector.load %arg14[%c0_53, %c0_54] : memref<256x84xbf16, #tpu.memory_space<vmem>>, vector<256x84xbf16>
      %cst_55 = arith.constant dense<0.000000e+00> : vector<2x84xf32>
      %69 = tpu.matmul %67, %68, %cst_55 {dimension_numbers = #tpu.dot_dimension_numbers<[1], [0], [0], [1], [0, 0, 1, 1], [], []>} : vector<2x256xbf16>, vector<256x84xbf16>, vector<2x84xf32> -> vector<2x84xf32>
      %c0_56 = arith.constant 0 : index
      %c0_57 = arith.constant 0 : index
      %70 = vector.load %arg15[%c0_56, %c0_57] : memref<1x84xf32, #tpu.memory_space<vmem>>, vector<1x84xf32>
      %71 = vector.broadcast %70 : vector<1x84xf32> to vector<2x84xf32>
      %72 = arith.addf %69, %71 : vector<2x84xf32>
      %cst_58 = arith.constant 0.000000e+00 : f32
      %73 = vector.broadcast %cst_58 : f32 to vector<2x84xf32>
      %74 = arith.maximumf %72, %73 : vector<2x84xf32>
      %75 = arith.truncf %74 : vector<2x84xf32> to vector<2x84xbf16>
      %c0_59 = arith.constant 0 : index
      %c0_60 = arith.constant 0 : index
      %76 = vector.load %arg16[%c0_59, %c0_60] : memref<84x6xbf16, #tpu.memory_space<vmem>>, vector<84x6xbf16>
      %cst_61 = arith.constant dense<0.000000e+00> : vector<2x6xf32>
      %77 = tpu.matmul %75, %76, %cst_61 {dimension_numbers = #tpu.dot_dimension_numbers<[1], [0], [0], [1], [0, 0, 1, 1], [], []>} : vector<2x84xbf16>, vector<84x6xbf16>, vector<2x6xf32> -> vector<2x6xf32>
      %c0_62 = arith.constant 0 : index
      %c0_63 = arith.constant 0 : index
      %78 = vector.load %arg17[%c0_62, %c0_63] : memref<1x6xf32, #tpu.memory_space<vmem>>, vector<1x6xf32>
      %79 = vector.broadcast %78 : vector<1x6xf32> to vector<2x6xf32>
      %80 = arith.addf %77, %79 : vector<2x6xf32>
      %cst_64 = arith.constant 0.000000e+00 : f32
      %81 = vector.broadcast %cst_64 : f32 to vector<2x6xf32>
      %82 = arith.subf %81, %80 : vector<2x6xf32>
      %83 = math.exp %82 : vector<2x6xf32>
      %cst_65 = arith.constant 1.000000e+00 : f32
      %84 = vector.broadcast %cst_65 : f32 to vector<2x6xf32>
      %85 = arith.addf %84, %83 : vector<2x6xf32>
      %cst_66 = arith.constant 1.000000e+00 : f32
      %86 = vector.broadcast %cst_66 : f32 to vector<2x6xf32>
      %87 = arith.divf %86, %85 : vector<2x6xf32>
      %c0_67 = arith.constant 0 : index
      %c0_68 = arith.constant 0 : index
      %88 = vector.load %arg18[%c0_67, %c0_68] : memref<2x6xf32, #tpu.memory_space<vmem>>, vector<2x6xf32>
      tpu.vector_store %arg18[%c0_67, %c0_68], %87 {strides = array<i32>} : memref<2x6xf32, #tpu.memory_space<vmem>>, vector<2x6xf32>,
    } else {
    }
    return
  }
  func.func @transform_0(%arg0: i32) -> (i32, i32, i32) {
    %c0_i32 = arith.constant 0 : i32
    %c0_i32_0 = arith.constant 0 : i32
    %c0_i32_1 = arith.constant 0 : i32
    return %arg0, %c0_i32, %c0_i32_0 : i32, i32, i32
  }
  func.func @transform_1(%arg0: i32) -> (i32, i32, i32) {
    %c0_i32 = arith.constant 0 : i32
    %c0_i32_0 = arith.constant 0 : i32
    %c0_i32_1 = arith.constant 0 : i32
    return %arg0, %c0_i32, %c0_i32_0 : i32, i32, i32
  }
  func.func @transform_2(%arg0: i32) -> (i32, i32, i32) {
    %c0_i32 = arith.constant 0 : i32
    %c0_i32_0 = arith.constant 0 : i32
    %c0_i32_1 = arith.constant 0 : i32
    return %arg0, %c0_i32, %c0_i32_0 : i32, i32, i32
  }
  func.func @transform_3(%arg0: i32) -> (i32, i32, i32) {
    %c0_i32 = arith.constant 0 : i32
    %c0_i32_0 = arith.constant 0 : i32
    %c0_i32_1 = arith.constant 0 : i32
    return %arg0, %c0_i32, %c0_i32_0 : i32, i32, i32
  }
  func.func @transform_4(%arg0: i32) -> (i32, i32, i32) {
    %c0_i32 = arith.constant 0 : i32
    %c0_i32_0 = arith.constant 0 : i32
    %c0_i32_1 = arith.constant 0 : i32
    return %arg0, %c0_i32, %c0_i32_0 : i32, i32, i32
  }
  func.func @transform_5(%arg0: i32) -> (i32, i32, i32) {
    %c0_i32 = arith.constant 0 : i32
    %c0_i32_0 = arith.constant 0 : i32
    %c0_i32_1 = arith.constant 0 : i32
    return %arg0, %c0_i32, %c0_i32_0 : i32, i32, i32
  }
  func.func @transform_6(%arg0: i32) -> (i32, i32, i32) {
    %c0_i32 = arith.constant 0 : i32
    %c0_i32_0 = arith.constant 0 : i32
    %c0_i32_1 = arith.constant 0 : i32
    return %arg0, %c0_i32, %c0_i32_0 : i32, i32, i32
  }
  func.func @transform_7(%arg0: i32) -> (i32, i32, i32) {
    %c0_i32 = arith.constant 0 : i32
    %c0_i32_0 = arith.constant 0 : i32
    %c0_i32_1 = arith.constant 0 : i32
    return %arg0, %c0_i32, %c0_i32_0 : i32, i32, i32
  }
  func.func @transform_8(%arg0: i32) -> (i32, i32, i32) {
    %c0_i32 = arith.constant 0 : i32
    %c0_i32_0 = arith.constant 0 : i32
    %c0_i32_1 = arith.constant 0 : i32
    return %arg0, %c0_i32, %c0_i32_0 : i32, i32, i32
  }
  func.func @transform_9(%arg0: i32) -> (i32, i32, i32) {
    %c0_i32 = arith.constant 0 : i32
    %c0_i32_0 = arith.constant 0 : i32
    %c0_i32_1 = arith.constant 0 : i32
    return %arg0, %c0_i32, %c0_i32_0 : i32, i32, i32
  }
  func.func @transform_10(%arg0: i32) -> (i32, i32) {
    %c0_i32 = arith.constant 0 : i32
    %c0_i32_0 = arith.constant 0 : i32
    %c0_i32_1 = arith.constant 0 : i32
    return %c0_i32, %c0_i32_0 : i32, i32
  }
  func.func @transform_11(%arg0: i32) -> (i32, i32) {
    %c0_i32 = arith.constant 0 : i32
    %c0_i32_0 = arith.constant 0 : i32
    %c0_i32_1 = arith.constant 0 : i32
    return %c0_i32, %c0_i32_0 : i32, i32
  }
  func.func @transform_12(%arg0: i32) -> (i32, i32) {
    %c0_i32 = arith.constant 0 : i32
    %c0_i32_0 = arith.constant 0 : i32
    %c0_i32_1 = arith.constant 0 : i32
    return %c0_i32, %c0_i32_0 : i32, i32
  }
  func.func @transform_13(%arg0: i32) -> (i32, i32) {
    %c0_i32 = arith.constant 0 : i32
    %c0_i32_0 = arith.constant 0 : i32
    %c0_i32_1 = arith.constant 0 : i32
    return %c0_i32, %c0_i32_0 : i32, i32
  }
  func.func @transform_14(%arg0: i32) -> (i32, i32) {
    %c0_i32 = arith.constant 0 : i32
    %c0_i32_0 = arith.constant 0 : i32
    %c0_i32_1 = arith.constant 0 : i32
    return %c0_i32, %c0_i32_0 : i32, i32
  }
  func.func @transform_15(%arg0: i32) -> (i32, i32) {
    %c0_i32 = arith.constant 0 : i32
    %c0_i32_0 = arith.constant 0 : i32
    %c0_i32_1 = arith.constant 0 : i32
    return %c0_i32, %c0_i32_0 : i32, i32
  }
  func.func @transform_16(%arg0: i32) -> (i32, i32) {
    %c0_i32 = arith.constant 0 : i32
    %c0_i32_0 = arith.constant 0 : i32
    %c0_i32_1 = arith.constant 0 : i32
    return %c0_i32, %c0_i32_0 : i32, i32
  }
  func.func @transform_17(%arg0: i32) -> (i32, i32) {
    %c0_i32 = arith.constant 0 : i32
    %c0_i32_0 = arith.constant 0 : i32
    %c0_i32_1 = arith.constant 0 : i32
    return %c0_i32, %c0_i32_0 : i32, i32
  }
}

</mosaic_0001>

<llo_original>
// kernel: multimodal_forward.3
$region0: #{multimodal_forward.3}
  #allocation0 [shape = 'u32[]', space=smem, size = 0x4, offset = 0x4, fixed_abs, tag = 'smem constant byte address 0x4 - core index']
  #allocation1 [shape = 'u32[144,128]{1,0:T(1,128)}', space=vmem, size = 0x12000, scoped, tag = 'internal scratch']
  %s0 = inlined_call_operand.vmem [shape: f32[3,4,72,25], index: 0, kind: input, shape index: {}]
  %s1 = inlined_call_operand.vmem [shape: bf16[3,25,6], index: 1, kind: input, shape index: {}]
  %s2 = inlined_call_operand.hbm [shape: f32[3,1,6], index: 2, kind: input, shape index: {}]
  %s3 = inlined_call_operand.vmem [shape: f32[3,72,6], index: 3, kind: output, shape index: {}]
  %s4 = sld [smem:[#allocation0]]
  $region49: #{multimodal_forward.3} parent=0
    _
  %s6 = ssub.s32 1, %s4
  %s7 = scalar_select 0, %s6, %s4
  $region1: #{multimodal_forward.3} parent=0
    #allocation2 [shape = 'u8[1024]{0}', space=vmem, size = 0x400, scoped, tag = 'input window, operand 2']
    #allocation3 [shape = 's32[2]{0}', space=sflag, size = 0x8, scoped, tag = 'scoped memory for multimodal_forward.3']
    %8 = vsyncpa [#allocation3], 0
    %s9 = scalar_lea.sflag [#allocation3], 1
    %10 = vsyncpa %s9, 0
    loop: start=0, step=1, limit=5
    $region2: #{multimodal_forward.3} parent=1 // loop_pre_header
      _
    $region3: #{multimodal_forward.3} parent=1 // loop_header
      %s12 = sphi 0, %s16
      %p13 = scmp.ge.s32.totalorder %s12, 5
      %s22 = sphi 0, %s24
      %s25 = sphi 0, %s22
      %s26 = sphi 0, %s25
      %s42 = sphi 0, %s26
      %s48 = sphi 0, %s50
      %s51 = sphi 0, %s48
      %s52 = sphi 0, %s51
      %s68 = sphi 0, %s52
      %s74 = sphi 0, %s76
      %s77 = sphi 0, %s74
      %s78 = sphi 0, %s77
      %s94 = sphi 0, %s78
      %s100 = sphi 0, %s102
      %s103 = sphi 0, %s100
      %s104 = sphi 0, %s103
      %s120 = sphi 0, %s104
    $region4: #{multimodal_forward.3} parent=1 // loop_header_branch
      %15 = sbr.rel (%p13) target = $region8
    $region5: #{multimodal_forward.3} parent=1 // loop_body
      %s17 = ssub.s32 %s12, 1
      %s18 = ssub.s32 %s12, 2
      %s19 = sadd.s32 %s12, 1
      %s20 = ssub.s32 %s12, %s19
      %p21 = scmp.eq.s32.totalorder %s20, 0
      %s23 = sadd.s32 %s22, 1
      %s24 = scalar_select %p21, %s22, %s23
      %p27 = pneg %p21
      %p28 = scmp.eq.s32.totalorder %s12, 2
      %p29 = por %p27, %p28
      %p30 = scmp.ne.s32.totalorder %s22, %s25
      %p31 = scmp.eq.s32.totalorder %s12, 0
      %p32 = por %p30, %p31
      %p33 = scmp.ne.s32.totalorder %s22, %s25
      %p34 = scmp.eq.s32.totalorder %s17, 2
      %p35 = por %p33, %p34
      %p36 = scmp.ne.s32.totalorder %s25, %s26
      %p37 = scmp.eq.s32.totalorder %s17, 0
      %p38 = por %p36, %p37
      %p39 = scmp.ne.s32.totalorder %s25, %s26
      %p40 = scmp.eq.s32.totalorder %s18, 2
      %p41 = por %p39, %p40
      %p43 = scmp.ne.s32.totalorder %s26, %s42
      %p44 = scmp.eq.s32.totalorder %s18, 0
      %p45 = por %p43, %p44
      %s46 = ssub.s32 %s12, %s19
      %p47 = scmp.eq.s32.totalorder %s46, 0
      %s49 = sadd.s32 %s48, 1
      %s50 = scalar_select %p47, %s48, %s49
      %p53 = pneg %p47
      %p54 = scmp.eq.s32.totalorder %s12, 2
      %p55 = por %p53, %p54
      %p56 = scmp.ne.s32.totalorder %s48, %s51
      %p57 = scmp.eq.s32.totalorder %s12, 0
      %p58 = por %p56, %p57
      %p59 = scmp.ne.s32.totalorder %s48, %s51
      %p60 = scmp.eq.s32.totalorder %s17, 2
      %p61 = por %p59, %p60
      %p62 = scmp.ne.s32.totalorder %s51, %s52
      %p63 = scmp.eq.s32.totalorder %s17, 0
      %p64 = por %p62, %p63
      %p65 = scmp.ne.s32.totalorder %s51, %s52
      %p66 = scmp.eq.s32.totalorder %s18, 2
      %p67 = por %p65, %p66
      %p69 = scmp.ne.s32.totalorder %s52, %s68
      %p70 = scmp.eq.s32.totalorder %s18, 0
      %p71 = por %p69, %p70
      %s72 = ssub.s32 %s12, %s19
      %p73 = scmp.eq.s32.totalorder %s72, 0
      %s75 = sadd.s32 %s74, 1
      %s76 = scalar_select %p73, %s74, %s75
      %p79 = pneg %p73
      %p80 = scmp.eq.s32.totalorder %s12, 2
      %p81 = por %p79, %p80
      %p82 = scmp.ne.s32.totalorder %s74, %s77
      %p83 = scmp.eq.s32.totalorder %s12, 0
      %p84 = por %p82, %p83
      %p85 = scmp.ne.s32.totalorder %s74, %s77
      %p86 = scmp.eq.s32.totalorder %s17, 2
      %p87 = por %p85, %p86
      %p88 = scmp.ne.s32.totalorder %s77, %s78
      %p89 = scmp.eq.s32.totalorder %s17, 0
      %p90 = por %p88, %p89
      %p91 = scmp.ne.s32.totalorder %s77, %s78
      %p92 = scmp.eq.s32.totalorder %s18, 2
      %p93 = por %p91, %p92
      %p95 = scmp.ne.s32.totalorder %s78, %s94
      %p96 = scmp.eq.s32.totalorder %s18, 0
      %p97 = por %p95, %p96
      %s98 = ssub.s32 %s12, %s19
      %p99 = scmp.eq.s32.totalorder %s98, 0
      %s101 = sadd.s32 %s100, 1
      %s102 = scalar_select %p99, %s100, %s101
      %p105 = pneg %p99
      %p106 = scmp.eq.s32.totalorder %s12, 2
      %p107 = por %p105, %p106
      %p108 = scmp.ne.s32.totalorder %s100, %s103
      %p109 = scmp.eq.s32.totalorder %s12, 0
      %p110 = por %p108, %p109
      %p111 = scmp.ne.s32.totalorder %s100, %s103
      %p112 = scmp.eq.s32.totalorder %s17, 2
      %p113 = por %p111, %p112
      %p114 = scmp.ne.s32.totalorder %s103, %s104
      %p115 = scmp.eq.s32.totalorder %s17, 0
      %p116 = por %p114, %p115
      %p117 = scmp.ne.s32.totalorder %s103, %s104
      %p118 = scmp.eq.s32.totalorder %s18, 2
      %p119 = por %p117, %p118
      %p121 = scmp.ne.s32.totalorder %s104, %s120
      %p122 = scmp.eq.s32.totalorder %s18, 0
      %p123 = por %p121, %p122
      %p124 = scmp.le.s32.totalorder 1, %s12
      %p125 = scmp.lt.s32.totalorder %s12, 4
      %p126 = pnand %p124, %p125
      %p127 = pneg %p126
      // Predicated region
      $region9: #{multimodal_forward.3} parent=5 // pred_check
        _
      $region10: #{multimodal_forward.3} parent=5 // pred_check_branch
        %129 = sbr.rel (%p126) target = $region12
      $region11: #{multimodal_forward.3} parent=5 // pred_region
        %s130 = ssub.s32 %s12, 1
      $region12: #{multimodal_forward.3} parent=5 // pred_fallthru
        _
      %p131 = scmp.lt.s32.totalorder %s12, 3
      // Predicated region
      $region13: #{multimodal_forward.3} parent=5 // pred_check
        %p132 = pneg %p131
      $region14: #{multimodal_forward.3} parent=5 // pred_check_branch
        %134 = sbr.rel (%p132) target = $region16
      $region15: #{multimodal_forward.3} parent=5 // pred_region
        // Predicated region
        $region17: #{multimodal_forward.3} parent=15 // pred_check
          %p135 = pneg %p32
        $region18: #{multimodal_forward.3} parent=15 // pred_check_branch
          %137 = sbr.rel (%p135) target = $region20
        $region19: #{multimodal_forward.3} parent=15 // pred_region
          %p138 = scmp.lt.s32.totalorder %s12, 2
          %s139 = scalar_select %p138, %s12, 2
          %s140 = smul.addr %s139, 36
          %s141 = smul.addr %s140, 8
          %s142 = scalar_lea.vmem %s0, %s141
        $region20: #{multimodal_forward.3} parent=15 // pred_fallthru
          _
        // Predicated region
        $region21: #{multimodal_forward.3} parent=15 // pred_check
          %p143 = pneg %p58
        $region22: #{multimodal_forward.3} parent=15 // pred_check_branch
          %145 = sbr.rel (%p143) target = $region24
        $region23: #{multimodal_forward.3} parent=15 // pred_region
          %p146 = scmp.lt.s32.totalorder %s12, 2
          %s147 = scalar_select %p146, %s12, 2
          %s148 = smul.addr %s147, 4
          %s149 = smul.addr %s148, 4
          %s150 = scalar_lea.vmem %s1, %s149
        $region24: #{multimodal_forward.3} parent=15 // pred_fallthru
          _
        // Predicated region
        $region25: #{multimodal_forward.3} parent=15 // pred_check
          %p151 = pneg %p84
        $region26: #{multimodal_forward.3} parent=15 // pred_check_branch
          %153 = sbr.rel (%p151) target = $region28
        $region27: #{multimodal_forward.3} parent=15 // pred_region
          %s154 = sand.u32 %s74, 1
          %s155 = scalar_lea.sflag [#allocation3], %s154
          %s156 = sand.u32 %s74, 1
          %s157 = scalar_lea.vmem [#allocation2], %s156
          %s159 = ssub.s32 16, 16
          %160 = vsyncadd %s155, %s159
          %s161 = smul.addr %s12, 16
          %s162 = scalar_lea.hbm %s2, %s161
          %s164 = sshll.u32 %s157, 4
          %s165 = int_to_ptr.vmem [resolvable:$true] %s164
          %167 = dma.hbm_to_vmem [thread:$0]  %s162, 16, %s165, %s155
        $region28: #{multimodal_forward.3} parent=15 // pred_fallthru
          _
      $region16: #{multimodal_forward.3} parent=5 // pred_fallthru
        _
      %p168 = scmp.le.s32.totalorder 1, %s12
      %p169 = scmp.lt.s32.totalorder %s12, 4
      %p170 = pnand %p168, %p169
      %p171 = pneg %p170
      // Predicated region
      $region29: #{multimodal_forward.3} parent=5 // pred_check
        _
      $region30: #{multimodal_forward.3} parent=5 // pred_check_branch
        %173 = sbr.rel (%p170) target = $region32
      $region31: #{multimodal_forward.3} parent=5 // pred_region
        %s174 = ssub.s32 %s12, 1
        %s175 = sand.u32 %s77, 1
        %s176 = scalar_lea.sflag [#allocation3], %s175
        %s177 = sand.u32 %s77, 1
        %s178 = scalar_lea.vmem [#allocation2], %s177
        // Predicated region
        $region33: #{multimodal_forward.3} parent=31 // pred_check
          %p179 = pneg %p90
        $region34: #{multimodal_forward.3} parent=31 // pred_check_branch
          %181 = sbr.rel (%p179) target = $region36
        $region35: #{multimodal_forward.3} parent=31 // pred_region
          %182 = dma.done %s176, 16
        $region36: #{multimodal_forward.3} parent=31 // pred_fallthru
          _
        %p183 = scmp.lt.s32.totalorder %s17, 2
        %s184 = scalar_select %p183, %s17, 2
        %s185 = smul.addr %s184, 36
        %s186 = smul.addr %s185, 8
        %s187 = scalar_lea.vmem %s0, %s186
        %p188 = pneg %p38
        %p189 = pneg %p35
        %p190 = scmp.lt.s32.totalorder %s17, 2
        %s191 = scalar_select %p190, %s17, 2
        %s192 = smul.addr %s191, 4
        %s193 = smul.addr %s192, 4
        %s194 = scalar_lea.vmem %s1, %s193
        %p195 = pneg %p64
        %p196 = pneg %p61
        %s197 = sand.u32 %s77, 1
        %s198 = scalar_lea.sflag [#allocation3], %s197
        %s199 = sand.u32 %s77, 1
        %s200 = scalar_lea.vmem [#allocation2], %s199
        %p201 = pneg %p90
        %p202 = pneg %p87
        %p203 = pneg %p116
        %p204 = pneg %p113
        %p205 = scmp.lt.s32.totalorder %s17, 2
        %s206 = scalar_select %p205, %s17, 2
        %s207 = smul.addr %s206, 9
        %s208 = smul.addr %s207, 8
        %s209 = scalar_lea.vmem %s3, %s208
        %p210 = scmp.lt.s32.totalorder %s17, 2
        %s211 = scalar_select %p210, %s17, 2
        %s212 = smul.addr %s211, 36
        %s213 = smul.addr %s212, 8
        %s214 = scalar_lea.vmem %s0, %s213
        %p215 = scmp.lt.s32.totalorder %s17, 2
        %s216 = scalar_select %p215, %s17, 2
        %s217 = smul.addr %s216, 4
        %s218 = smul.addr %s217, 4
        %s219 = scalar_lea.vmem %s1, %s218
        %p220 = scmp.lt.s32.totalorder %s17, 2
        %s221 = scalar_select %p220, %s17, 2
        %s222 = smul.addr %s221, 9
        %s223 = smul.addr %s222, 8
        %s224 = scalar_lea.vmem %s3, %s223
        %v226 = vld [vmem:[%s219] sm:$0xf]
        %v227 = vld [vmem:[%s219 + $0x4] sm:$0xf]
        %v228 = vld [vmem:[%s219 + $0x8] sm:$0xf]
        %v229 = vld [vmem:[%s219 + $0xc] sm:$0x1]
        %v230 = vld [vmem:[%s214] sm:$0xff]
        %v231 = vld [vmem:[%s214 + $0x8] sm:$0xff]
        %v232 = vld [vmem:[%s214 + $0x10] sm:$0xff]
        %v233 = vld [vmem:[%s214 + $0x18] sm:$0xff]
        %v234 = vld [vmem:[%s214 + $0x20] sm:$0xff]
        %v235 = vld [vmem:[%s214 + $0x28] sm:$0xff]
        %v236 = vld [vmem:[%s214 + $0x30] sm:$0xff]
        %v237 = vld [vmem:[%s214 + $0x38] sm:$0xff]
        %v238 = vld [vmem:[%s214 + $0x40] sm:$0xff]
        %v239 = vpack.c.bf16 %v231, %v230
        %v240 = vpack.c.bf16 %v233, %v232
        %v241 = vpack.c.bf16 %v235, %v234
        %v242 = vpack.c.bf16 %v237, %v236
        %v243 = vpack.c.bf16 %v238, %v238
        %v248 = vunpack.c.l.b16 %v226
        %v249 = vunpack.c.l.b16 %v227
        %v250 = vunpack.c.l.b16 %v228
        %v251 = vunpack.c.l.b16 %v229
        %v252 = vpack.c.b16 %v249, %v248
        %v253 = vpack.c.b16 %v251, %v250
        %vm255 = vcmask 203776
        %v257 = vsel %vm255, %v239, 0
        %v260 = vsel %vm255, %v240, 0
        %v263 = vsel %vm255, %v241, 0
        %v266 = vsel %vm255, %v242, 0
        %v269 = vsel %vm255, %v243, 0
        %vm271 = vcmask 1043456
        %vm272 = vcmask 1044480
        %v273 = vsel %vm271, 4294967295, 65535
        %v274 = vsel %vm272, %v273, 0
        %v276 = vand.u32 %v253, %v274
        %278 = vmatprep.subr.bf16.mxu0 0
        %279 = vmatpush1.bf16.msra.mxu0 0
        %280 = vmatprep.subr.bf16.mxu0 0
        %281 = vmatpush1.bf16.msra.mxu0 0
        %282 = vmatprep.subr.bf16.mxu0 0
        %283 = vmatpush1.bf16.msra.mxu0 0
        %284 = vmatprep.subr.bf16.mxu0 0
        %285 = vmatpush1.bf16.msra.mxu0 0
        %286 = vmatprep.subr.bf16.mxu0 0
        %287 = vmatpush1.bf16.msra.mxu0 0
        %288 = vmatprep.subr.bf16.mxu0 0
        %289 = vmatpush1.bf16.msra.mxu0 0
        %290 = vmatprep.subr.bf16.mxu0 0
        %291 = vmatpush1.bf16.msra.mxu0 %v276
        %292 = vmatprep.subr.bf16.mxu0 0
        %293 = vmatpush1.bf16.msra.mxu0 %v252
        %294 = vmatprep.subr.bf16.mxu0 0
        %295 = vmatpush2.bf16.msra.mxu0 0
        %296 = vmatprep.subr.bf16.mxu0 0
        %297 = vmatpush2.bf16.msra.mxu0 0
        %298 = vmatprep.subr.bf16.mxu0 0
        %299 = vmatpush2.bf16.msra.mxu0 0
        %300 = vmatprep.subr.bf16.mxu0 0
        %301 = vmatpush2.bf16.msra.mxu0 0
        %302 = vmatprep.subr.bf16.mxu0 0
        %303 = vmatpush2.bf16.msra.mxu0 0
        %304 = vmatprep.subr.bf16.mxu0 0
        %305 = vmatpush2.bf16.msra.mxu0 0
        %306 = vmatprep.subr.bf16.mxu0 0
        %307 = vmatpush2.bf16.msra.mxu0 0
        %308 = vmatprep.subr.bf16.mxu0 0
        %309 = vmatpush2.bf16.msra.mxu0 0
        %310 = vmatprep.mubr.bf16.mxu0 0
        %311 = vmatmul.mubr.bf16.gmra.mxu0 %v257
        %v312 = vpop.f32.mrf.mxu0
        %v313 = vadd.f32 0.0, %v312
        %v314 = vpop.f32.mrf.mxu0
        %v315 = vpop.f32.mrf.mxu0
        %v316 = vadd.f32 0.0, %v315
        %v317 = vpop.f32.mrf.mxu0
        %318 = vmatprep.mubr.bf16.mxu0 0
        %319 = vmatmul.mubr.bf16.gmra.mxu0 %v260
        %v320 = vpop.f32.mrf.mxu0
        %v321 = vadd.f32 0.0, %v320
        %v322 = vpop.f32.mrf.mxu0
        %v323 = vpop.f32.mrf.mxu0
        %v324 = vadd.f32 0.0, %v323
        %v325 = vpop.f32.mrf.mxu0
        %326 = vmatprep.mubr.bf16.mxu0 0
        %327 = vmatmul.mubr.bf16.gmra.mxu0 %v263
        %v328 = vpop.f32.mrf.mxu0
        %v329 = vadd.f32 0.0, %v328
        %v330 = vpop.f32.mrf.mxu0
        %v331 = vpop.f32.mrf.mxu0
        %v332 = vadd.f32 0.0, %v331
        %v333 = vpop.f32.mrf.mxu0
        %334 = vmatprep.mubr.bf16.mxu0 0
        %335 = vmatmul.mubr.bf16.gmra.mxu0 %v266
        %v336 = vpop.f32.mrf.mxu0
        %v337 = vadd.f32 0.0, %v336
        %v338 = vpop.f32.mrf.mxu0
        %v339 = vpop.f32.mrf.mxu0
        %v340 = vadd.f32 0.0, %v339
        %v341 = vpop.f32.mrf.mxu0
        %342 = vmatprep.mubr.bf16.mxu0 0
        %343 = vmatmul.mubr.bf16.gmra.mxu0 %v269
        %v344 = vpop.f32.mrf.mxu0
        %v345 = vadd.f32 0.0, %v344
        %v346 = vpop.f32.mrf.mxu0
        %v347 = vpop.f32.mrf.mxu0
        %v348 = vpop.f32.mrf.mxu0
        %349 = vdwg.mxu0
        %s350 = scalar_lea.vmem %s214, 72
        %v351 = vld [vmem:[%s350] sm:$0xff]
        %v352 = vld [vmem:[%s350 + $0x8] sm:$0xff]
        %v353 = vld [vmem:[%s350 + $0x10] sm:$0xff]
        %v354 = vld [vmem:[%s350 + $0x18] sm:$0xff]
        %v355 = vld [vmem:[%s350 + $0x20] sm:$0xff]
        %v356 = vld [vmem:[%s350 + $0x28] sm:$0xff]
        %v357 = vld [vmem:[%s350 + $0x30] sm:$0xff]
        %v358 = vld [vmem:[%s350 + $0x38] sm:$0xff]
        %v359 = vld [vmem:[%s350 + $0x40] sm:$0xff]
        %v360 = vpack.c.bf16 %v352, %v351
        %v361 = vpack.c.bf16 %v354, %v353
        %v362 = vpack.c.bf16 %v356, %v355
        %v363 = vpack.c.bf16 %v358, %v357
        %v364 = vpack.c.bf16 %v359, %v359
        %v366 = vsel %vm255, %v360, 0
        %v369 = vsel %vm255, %v361, 0
        %v372 = vsel %vm255, %v362, 0
        %v375 = vsel %vm255, %v363, 0
        %v378 = vsel %vm255, %v364, 0
        %380 = vmatprep.subr.bf16.mxu0 0
        %381 = vmatpush1.bf16.msra.mxu0 0
        %382 = vmatprep.subr.bf16.mxu0 0
        %383 = vmatpush1.bf16.msra.mxu0 0
        %384 = vmatprep.subr.bf16.mxu0 0
        %385 = vmatpush1.bf16.msra.mxu0 0
        %386 = vmatprep.subr.bf16.mxu0 0
        %387 = vmatpush1.bf16.msra.mxu0 0
        %388 = vmatprep.subr.bf16.mxu0 0
        %389 = vmatpush1.bf16.msra.mxu0 0
        %390 = vmatprep.subr.bf16.mxu0 0
        %391 = vmatpush1.bf16.msra.mxu0 0
        %392 = vmatprep.subr.bf16.mxu0 0
        %393 = vmatpush1.bf16.msra.mxu0 %v276
        %394 = vmatprep.subr.bf16.mxu0 0
        %395 = vmatpush1.bf16.msra.mxu0 %v252
        %396 = vmatprep.subr.bf16.mxu0 0
        %397 = vmatpush2.bf16.msra.mxu0 0
        %398 = vmatprep.subr.bf16.mxu0 0
        %399 = vmatpush2.bf16.msra.mxu0 0
        %400 = vmatprep.subr.bf16.mxu0 0
        %401 = vmatpush2.bf16.msra.mxu0 0
        %402 = vmatprep.subr.bf16.mxu0 0
        %403 = vmatpush2.bf16.msra.mxu0 0
        %404 = vmatprep.subr.bf16.mxu0 0
        %405 = vmatpush2.bf16.msra.mxu0 0
        %406 = vmatprep.subr.bf16.mxu0 0
        %407 = vmatpush2.bf16.msra.mxu0 0
        %408 = vmatprep.subr.bf16.mxu0 0
        %409 = vmatpush2.bf16.msra.mxu0 0
        %410 = vmatprep.subr.bf16.mxu0 0
        %411 = vmatpush2.bf16.msra.mxu0 0
        %412 = vmatprep.mubr.bf16.mxu0 0
        %413 = vmatmul.mubr.bf16.gmra.mxu0 %v366
        %v414 = vpop.f32.mrf.mxu0
        %v415 = vadd.f32 0.0, %v414
        %v416 = vpop.f32.mrf.mxu0
        %v417 = vpop.f32.mrf.mxu0
        %v418 = vadd.f32 0.0, %v417
        %v419 = vpop.f32.mrf.mxu0
        %420 = vmatprep.mubr.bf16.mxu0 0
        %421 = vmatmul.mubr.bf16.gmra.mxu0 %v369
        %v422 = vpop.f32.mrf.mxu0
        %v423 = vadd.f32 0.0, %v422
        %v424 = vpop.f32.mrf.mxu0
        %v425 = vpop.f32.mrf.mxu0
        %v426 = vadd.f32 0.0, %v425
        %v427 = vpop.f32.mrf.mxu0
        %428 = vmatprep.mubr.bf16.mxu0 0
        %429 = vmatmul.mubr.bf16.gmra.mxu0 %v372
        %v430 = vpop.f32.mrf.mxu0
        %v431 = vadd.f32 0.0, %v430
        %v432 = vpop.f32.mrf.mxu0
        %v433 = vpop.f32.mrf.mxu0
        %v434 = vadd.f32 0.0, %v433
        %v435 = vpop.f32.mrf.mxu0
        %436 = vmatprep.mubr.bf16.mxu0 0
        %437 = vmatmul.mubr.bf16.gmra.mxu0 %v375
        %v438 = vpop.f32.mrf.mxu0
        %v439 = vadd.f32 0.0, %v438
        %v440 = vpop.f32.mrf.mxu0
        %v441 = vpop.f32.mrf.mxu0
        %v442 = vadd.f32 0.0, %v441
        %v443 = vpop.f32.mrf.mxu0
        %444 = vmatprep.mubr.bf16.mxu0 0
        %445 = vmatmul.mubr.bf16.gmra.mxu0 %v378
        %v446 = vpop.f32.mrf.mxu0
        %v447 = vadd.f32 0.0, %v446
        %v448 = vpop.f32.mrf.mxu0
        %v449 = vpop.f32.mrf.mxu0
        %v450 = vpop.f32.mrf.mxu0
        %451 = vdwg.mxu0
        %v452 = vmax.f32 %v313, %v415
        %v453 = vmax.f32 %v316, %v418
        %v454 = vmax.f32 %v321, %v423
        %v455 = vmax.f32 %v324, %v426
        %v456 = vmax.f32 %v329, %v431
        %v457 = vmax.f32 %v332, %v434
        %v458 = vmax.f32 %v337, %v439
        %v459 = vmax.f32 %v340, %v442
        %v460 = vmax.f32 %v345, %v447
        %s461 = scalar_lea.vmem %s214, 144
        %v462 = vld [vmem:[%s461] sm:$0xff]
        %v463 = vld [vmem:[%s461 + $0x8] sm:$0xff]
        %v464 = vld [vmem:[%s461 + $0x10] sm:$0xff]
        %v465 = vld [vmem:[%s461 + $0x18] sm:$0xff]
        %v466 = vld [vmem:[%s461 + $0x20] sm:$0xff]
        %v467 = vld [vmem:[%s461 + $0x28] sm:$0xff]
        %v468 = vld [vmem:[%s461 + $0x30] sm:$0xff]
        %v469 = vld [vmem:[%s461 + $0x38] sm:$0xff]
        %v470 = vld [vmem:[%s461 + $0x40] sm:$0xff]
        %v471 = vpack.c.bf16 %v463, %v462
        %v472 = vpack.c.bf16 %v465, %v464
        %v473 = vpack.c.bf16 %v467, %v466
        %v474 = vpack.c.bf16 %v469, %v468
        %v475 = vpack.c.bf16 %v470, %v470
        %v477 = vsel %vm255, %v471, 0
        %v480 = vsel %vm255, %v472, 0
        %v483 = vsel %vm255, %v473, 0
        %v486 = vsel %vm255, %v474, 0
        %v489 = vsel %vm255, %v475, 0
        %491 = vmatprep.subr.bf16.mxu0 0
        %492 = vmatpush1.bf16.msra.mxu0 0
        %493 = vmatprep.subr.bf16.mxu0 0
        %494 = vmatpush1.bf16.msra.mxu0 0
        %495 = vmatprep.subr.bf16.mxu0 0
        %496 = vmatpush1.bf16.msra.mxu0 0
        %497 = vmatprep.subr.bf16.mxu0 0
        %498 = vmatpush1.bf16.msra.mxu0 0
        %499 = vmatprep.subr.bf16.mxu0 0
        %500 = vmatpush1.bf16.msra.mxu0 0
        %501 = vmatprep.subr.bf16.mxu0 0
        %502 = vmatpush1.bf16.msra.mxu0 0
        %503 = vmatprep.subr.bf16.mxu0 0
        %504 = vmatpush1.bf16.msra.mxu0 %v276
        %505 = vmatprep.subr.bf16.mxu0 0
        %506 = vmatpush1.bf16.msra.mxu0 %v252
        %507 = vmatprep.subr.bf16.mxu0 0
        %508 = vmatpush2.bf16.msra.mxu0 0
        %509 = vmatprep.subr.bf16.mxu0 0
        %510 = vmatpush2.bf16.msra.mxu0 0
        %511 = vmatprep.subr.bf16.mxu0 0
        %512 = vmatpush2.bf16.msra.mxu0 0
        %513 = vmatprep.subr.bf16.mxu0 0
        %514 = vmatpush2.bf16.msra.mxu0 0
        %515 = vmatprep.subr.bf16.mxu0 0
        %516 = vmatpush2.bf16.msra.mxu0 0
        %517 = vmatprep.subr.bf16.mxu0 0
        %518 = vmatpush2.bf16.msra.mxu0 0
        %519 = vmatprep.subr.bf16.mxu0 0
        %520 = vmatpush2.bf16.msra.mxu0 0
        %521 = vmatprep.subr.bf16.mxu0 0
        %522 = vmatpush2.bf16.msra.mxu0 0
        %523 = vmatprep.mubr.bf16.mxu0 0
        %524 = vmatmul.mubr.bf16.gmra.mxu0 %v477
        %v525 = vpop.f32.mrf.mxu0
        %v526 = vadd.f32 0.0, %v525
        %v527 = vpop.f32.mrf.mxu0
        %v528 = vpop.f32.mrf.mxu0
        %v529 = vadd.f32 0.0, %v528
        %v530 = vpop.f32.mrf.mxu0
        %531 = vmatprep.mubr.bf16.mxu0 0
        %532 = vmatmul.mubr.bf16.gmra.mxu0 %v480
        %v533 = vpop.f32.mrf.mxu0
        %v534 = vadd.f32 0.0, %v533
        %v535 = vpop.f32.mrf.mxu0
        %v536 = vpop.f32.mrf.mxu0
        %v537 = vadd.f32 0.0, %v536
        %v538 = vpop.f32.mrf.mxu0
        %539 = vmatprep.mubr.bf16.mxu0 0
        %540 = vmatmul.mubr.bf16.gmra.mxu0 %v483
        %v541 = vpop.f32.mrf.mxu0
        %v542 = vadd.f32 0.0, %v541
        %v543 = vpop.f32.mrf.mxu0
        %v544 = vpop.f32.mrf.mxu0
        %v545 = vadd.f32 0.0, %v544
        %v546 = vpop.f32.mrf.mxu0
        %547 = vmatprep.mubr.bf16.mxu0 0
        %548 = vmatmul.mubr.bf16.gmra.mxu0 %v486
        %v549 = vpop.f32.mrf.mxu0
        %v550 = vadd.f32 0.0, %v549
        %v551 = vpop.f32.mrf.mxu0
        %v552 = vpop.f32.mrf.mxu0
        %v553 = vadd.f32 0.0, %v552
        %v554 = vpop.f32.mrf.mxu0
        %555 = vmatprep.mubr.bf16.mxu0 0
        %556 = vmatmul.mubr.bf16.gmra.mxu0 %v489
        %v557 = vpop.f32.mrf.mxu0
        %v558 = vadd.f32 0.0, %v557
        %v559 = vpop.f32.mrf.mxu0
        %v560 = vpop.f32.mrf.mxu0
        %v561 = vpop.f32.mrf.mxu0
        %562 = vdwg.mxu0
        %v563 = vmax.f32 %v452, %v526
        %v564 = vmax.f32 %v453, %v529
        %v565 = vmax.f32 %v454, %v534
        %v566 = vmax.f32 %v455, %v537
        %v567 = vmax.f32 %v456, %v542
        %v568 = vmax.f32 %v457, %v545
        %v569 = vmax.f32 %v458, %v550
        %v570 = vmax.f32 %v459, %v553
        %v571 = vmax.f32 %v460, %v558
        %s572 = scalar_lea.vmem %s214, 216
        %v573 = vld [vmem:[%s572] sm:$0xff]
        %v574 = vld [vmem:[%s572 + $0x8] sm:$0xff]
        %v575 = vld [vmem:[%s572 + $0x10] sm:$0xff]
        %v576 = vld [vmem:[%s572 + $0x18] sm:$0xff]
        %v577 = vld [vmem:[%s572 + $0x20] sm:$0xff]
        %v578 = vld [vmem:[%s572 + $0x28] sm:$0xff]
        %v579 = vld [vmem:[%s572 + $0x30] sm:$0xff]
        %v580 = vld [vmem:[%s572 + $0x38] sm:$0xff]
        %v581 = vld [vmem:[%s572 + $0x40] sm:$0xff]
        %v582 = vpack.c.bf16 %v574, %v573
        %v583 = vpack.c.bf16 %v576, %v575
        %v584 = vpack.c.bf16 %v578, %v577
        %v585 = vpack.c.bf16 %v580, %v579
        %v586 = vpack.c.bf16 %v581, %v581
        %v588 = vsel %vm255, %v582, 0
        %v591 = vsel %vm255, %v583, 0
        %v594 = vsel %vm255, %v584, 0
        %v597 = vsel %vm255, %v585, 0
        %v600 = vsel %vm255, %v586, 0
        %602 = vmatprep.subr.bf16.mxu0 0
        %603 = vmatpush1.bf16.msra.mxu0 0
        %604 = vmatprep.subr.bf16.mxu0 0
        %605 = vmatpush1.bf16.msra.mxu0 0
        %606 = vmatprep.subr.bf16.mxu0 0
        %607 = vmatpush1.bf16.msra.mxu0 0
        %608 = vmatprep.subr.bf16.mxu0 0
        %609 = vmatpush1.bf16.msra.mxu0 0
        %610 = vmatprep.subr.bf16.mxu0 0
        %611 = vmatpush1.bf16.msra.mxu0 0
        %612 = vmatprep.subr.bf16.mxu0 0
        %613 = vmatpush1.bf16.msra.mxu0 0
        %614 = vmatprep.subr.bf16.mxu0 0
        %615 = vmatpush1.bf16.msra.mxu0 %v276
        %616 = vmatprep.subr.bf16.mxu0 0
        %617 = vmatpush1.bf16.msra.mxu0 %v252
        %618 = vmatprep.subr.bf16.mxu0 0
        %619 = vmatpush2.bf16.msra.mxu0 0
        %620 = vmatprep.subr.bf16.mxu0 0
        %621 = vmatpush2.bf16.msra.mxu0 0
        %622 = vmatprep.subr.bf16.mxu0 0
        %623 = vmatpush2.bf16.msra.mxu0 0
        %624 = vmatprep.subr.bf16.mxu0 0
        %625 = vmatpush2.bf16.msra.mxu0 0
        %626 = vmatprep.subr.bf16.mxu0 0
        %627 = vmatpush2.bf16.msra.mxu0 0
        %628 = vmatprep.subr.bf16.mxu0 0
        %629 = vmatpush2.bf16.msra.mxu0 0
        %630 = vmatprep.subr.bf16.mxu0 0
        %631 = vmatpush2.bf16.msra.mxu0 0
        %632 = vmatprep.subr.bf16.mxu0 0
        %633 = vmatpush2.bf16.msra.mxu0 0
        %634 = vmatprep.mubr.bf16.mxu0 0
        %635 = vmatmul.mubr.bf16.gmra.mxu0 %v588
        %v636 = vpop.f32.mrf.mxu0
        %v637 = vadd.f32 0.0, %v636
        %v638 = vpop.f32.mrf.mxu0
        %v639 = vpop.f32.mrf.mxu0
        %v640 = vadd.f32 0.0, %v639
        %v641 = vpop.f32.mrf.mxu0
        %642 = vmatprep.mubr.bf16.mxu0 0
        %643 = vmatmul.mubr.bf16.gmra.mxu0 %v591
        %v644 = vpop.f32.mrf.mxu0
        %v645 = vadd.f32 0.0, %v644
        %v646 = vpop.f32.mrf.mxu0
        %v647 = vpop.f32.mrf.mxu0
        %v648 = vadd.f32 0.0, %v647
        %v649 = vpop.f32.mrf.mxu0
        %650 = vmatprep.mubr.bf16.mxu0 0
        %651 = vmatmul.mubr.bf16.gmra.mxu0 %v594
        %v652 = vpop.f32.mrf.mxu0
        %v653 = vadd.f32 0.0, %v652
        %v654 = vpop.f32.mrf.mxu0
        %v655 = vpop.f32.mrf.mxu0
        %v656 = vadd.f32 0.0, %v655
        %v657 = vpop.f32.mrf.mxu0
        %658 = vmatprep.mubr.bf16.mxu0 0
        %659 = vmatmul.mubr.bf16.gmra.mxu0 %v597
        %v660 = vpop.f32.mrf.mxu0
        %v661 = vadd.f32 0.0, %v660
        %v662 = vpop.f32.mrf.mxu0
        %v663 = vpop.f32.mrf.mxu0
        %v664 = vadd.f32 0.0, %v663
        %v665 = vpop.f32.mrf.mxu0
        %666 = vmatprep.mubr.bf16.mxu0 0
        %667 = vmatmul.mubr.bf16.gmra.mxu0 %v600
        %v668 = vpop.f32.mrf.mxu0
        %v669 = vadd.f32 0.0, %v668
        %v670 = vpop.f32.mrf.mxu0
        %v671 = vpop.f32.mrf.mxu0
        %v672 = vpop.f32.mrf.mxu0
        %673 = vdwg.mxu0
        %v674 = vmax.f32 %v563, %v637
        %v675 = vmax.f32 %v564, %v640
        %v676 = vmax.f32 %v565, %v645
        %v677 = vmax.f32 %v566, %v648
        %v678 = vmax.f32 %v567, %v653
        %v679 = vmax.f32 %v568, %v656
        %v680 = vmax.f32 %v569, %v661
        %v681 = vmax.f32 %v570, %v664
        %v682 = vmax.f32 %v571, %v669
        %v683 = vld [vmem:[%s178] sm:$0x1]
        %v685 = vlaneseq
        %v686 = vshrl.u32 %v685, 7
        %v687 = vsub.s32 0, %v686
        %v688 = vrot.slane %v683, %v687
        %v690 = vadd.f32 %v674, %v688
        %v691 = vadd.f32 %v675, %v688
        %v692 = vadd.f32 %v676, %v688
        %v693 = vadd.f32 %v677, %v688
        %v694 = vadd.f32 %v678, %v688
        %v695 = vadd.f32 %v679, %v688
        %v696 = vadd.f32 %v680, %v688
        %v697 = vadd.f32 %v681, %v688
        %v698 = vadd.f32 %v682, %v688
        %v699 = vmax.f32 %v690, 0.0
        %v700 = vmax.f32 %v691, 0.0
        %v701 = vmax.f32 %v692, 0.0
        %v702 = vmax.f32 %v693, 0.0
        %v703 = vmax.f32 %v694, 0.0
        %v704 = vmax.f32 %v695, 0.0
        %v705 = vmax.f32 %v696, 0.0
        %v706 = vmax.f32 %v697, 0.0
        %v707 = vmax.f32 %v698, 0.0
        %vm708 = vcmask 48128
        %709 = vst.msk [vmem:[%s224] sm:$0xff] %vm708, %v699
        %710 = vst.msk [vmem:[%s224 + $0x8] sm:$0xff] %vm708, %v700
        %711 = vst.msk [vmem:[%s224 + $0x10] sm:$0xff] %vm708, %v701
        %712 = vst.msk [vmem:[%s224 + $0x18] sm:$0xff] %vm708, %v702
        %713 = vst.msk [vmem:[%s224 + $0x20] sm:$0xff] %vm708, %v703
        %714 = vst.msk [vmem:[%s224 + $0x28] sm:$0xff] %vm708, %v704
        %715 = vst.msk [vmem:[%s224 + $0x30] sm:$0xff] %vm708, %v705
        %716 = vst.msk [vmem:[%s224 + $0x38] sm:$0xff] %vm708, %v706
        %717 = vst.msk [vmem:[%s224 + $0x40] sm:$0xff] %vm708, %v707
        %p718 = scmp.lt.s32.totalorder %s17, 2
        %s719 = scalar_select %p718, %s17, 2
        %s720 = smul.addr %s719, 9
        %s721 = smul.addr %s720, 8
        %s722 = scalar_lea.vmem %s3, %s721
        // Predicated region
        $region37: #{multimodal_forward.3} parent=31 // pred_check
          %p723 = pneg %p113
        $region38: #{multimodal_forward.3} parent=31 // pred_check_branch
          %725 = sbr.rel (%p723) target = $region40
        $region39: #{multimodal_forward.3} parent=31 // pred_region
          _
        $region40: #{multimodal_forward.3} parent=31 // pred_fallthru
          _
      $region32: #{multimodal_forward.3} parent=5 // pred_fallthru
        _
      %p726 = scmp.le.s32.totalorder 2, %s12
      // Predicated region
      $region41: #{multimodal_forward.3} parent=5 // pred_check
        %p727 = pneg %p726
      $region42: #{multimodal_forward.3} parent=5 // pred_check_branch
        %729 = sbr.rel (%p727) target = $region44
      $region43: #{multimodal_forward.3} parent=5 // pred_region
        %s730 = ssub.s32 %s12, 2
        // Predicated region
        $region45: #{multimodal_forward.3} parent=43 // pred_check
          %p731 = pneg %p119
        $region46: #{multimodal_forward.3} parent=43 // pred_check_branch
          %733 = sbr.rel (%p731) target = $region48
        $region47: #{multimodal_forward.3} parent=43 // pred_region
          %p734 = scmp.lt.s32.totalorder %s18, 2
          %s735 = scalar_select %p734, %s18, 2
          %s736 = smul.addr %s735, 9
          %s737 = smul.addr %s736, 8
          %s738 = scalar_lea.vmem %s3, %s737
        $region48: #{multimodal_forward.3} parent=43 // pred_fallthru
          _
      $region44: #{multimodal_forward.3} parent=5 // pred_fallthru
        _
    $region6: #{multimodal_forward.3} parent=1 // loop_footer
      %s16 = sadd.s32 1, %s12
    $region7: #{multimodal_forward.3} parent=1 // loop_footer_branch
      %11 = sbr.rel target = $region3
    $region8: #{multimodal_forward.3} parent=1 // loop_exit
      _
    %739 = vsyncpa [#allocation3], 1
    %s740 = scalar_lea.sflag [#allocation3], 1
    %741 = vsyncpa %s740, 1

// kernel: multimodal_forward.4
$region0: #{multimodal_forward.4}
  #allocation0 [shape = 'u32[]', space=smem, size = 0x4, offset = 0x4, fixed_abs, tag = 'smem constant byte address 0x4 - core index']
  #allocation1 [shape = 'u32[144,128]{1,0:T(1,128)}', space=vmem, size = 0x12000, scoped, tag = 'internal scratch']
  %s0 = inlined_call_operand.vmem [shape: f32[3,4,2,150], index: 0, kind: input, shape index: {}]
  %s1 = inlined_call_operand.vmem [shape: bf16[3,150,16], index: 1, kind: input, shape index: {}]
  %s2 = inlined_call_operand.hbm [shape: f32[3,1,16], index: 2, kind: input, shape index: {}]
  %s3 = inlined_call_operand.vmem [shape: f32[3,2,16], index: 3, kind: output, shape index: {}]
  %s4 = sld [smem:[#allocation0]]
  $region49: #{multimodal_forward.4} parent=0
    _
  %s6 = ssub.s32 1, %s4
  %s7 = scalar_select 0, %s6, %s4
  $region1: #{multimodal_forward.4} parent=0
    #allocation2 [shape = 'u8[1024]{0}', space=vmem, size = 0x400, scoped, tag = 'input window, operand 2']
    #allocation3 [shape = 's32[2]{0}', space=sflag, size = 0x8, scoped, tag = 'scoped memory for multimodal_forward.4']
    %8 = vsyncpa [#allocation3], 0
    %s9 = scalar_lea.sflag [#allocation3], 1
    %10 = vsyncpa %s9, 0
    loop: start=0, step=1, limit=5
    $region2: #{multimodal_forward.4} parent=1 // loop_pre_header
      _
    $region3: #{multimodal_forward.4} parent=1 // loop_header
      %s12 = sphi 0, %s16
      %p13 = scmp.ge.s32.totalorder %s12, 5
      %s22 = sphi 0, %s24
      %s25 = sphi 0, %s22
      %s26 = sphi 0, %s25
      %s42 = sphi 0, %s26
      %s48 = sphi 0, %s50
      %s51 = sphi 0, %s48
      %s52 = sphi 0, %s51
      %s68 = sphi 0, %s52
      %s74 = sphi 0, %s76
      %s77 = sphi 0, %s74
      %s78 = sphi 0, %s77
      %s94 = sphi 0, %s78
      %s100 = sphi 0, %s102
      %s103 = sphi 0, %s100
      %s104 = sphi 0, %s103
      %s120 = sphi 0, %s104
    $region4: #{multimodal_forward.4} parent=1 // loop_header_branch
      %15 = sbr.rel (%p13) target = $region8
    $region5: #{multimodal_forward.4} parent=1 // loop_body
      %s17 = ssub.s32 %s12, 1
      %s18 = ssub.s32 %s12, 2
      %s19 = sadd.s32 %s12, 1
      %s20 = ssub.s32 %s12, %s19
      %p21 = scmp.eq.s32.totalorder %s20, 0
      %s23 = sadd.s32 %s22, 1
      %s24 = scalar_select %p21, %s22, %s23
      %p27 = pneg %p21
      %p28 = scmp.eq.s32.totalorder %s12, 2
      %p29 = por %p27, %p28
      %p30 = scmp.ne.s32.totalorder %s22, %s25
      %p31 = scmp.eq.s32.totalorder %s12, 0
      %p32 = por %p30, %p31
      %p33 = scmp.ne.s32.totalorder %s22, %s25
      %p34 = scmp.eq.s32.totalorder %s17, 2
      %p35 = por %p33, %p34
      %p36 = scmp.ne.s32.totalorder %s25, %s26
      %p37 = scmp.eq.s32.totalorder %s17, 0
      %p38 = por %p36, %p37
      %p39 = scmp.ne.s32.totalorder %s25, %s26
      %p40 = scmp.eq.s32.totalorder %s18, 2
      %p41 = por %p39, %p40
      %p43 = scmp.ne.s32.totalorder %s26, %s42
      %p44 = scmp.eq.s32.totalorder %s18, 0
      %p45 = por %p43, %p44
      %s46 = ssub.s32 %s12, %s19
      %p47 = scmp.eq.s32.totalorder %s46, 0
      %s49 = sadd.s32 %s48, 1
      %s50 = scalar_select %p47, %s48, %s49
      %p53 = pneg %p47
      %p54 = scmp.eq.s32.totalorder %s12, 2
      %p55 = por %p53, %p54
      %p56 = scmp.ne.s32.totalorder %s48, %s51
      %p57 = scmp.eq.s32.totalorder %s12, 0
      %p58 = por %p56, %p57
      %p59 = scmp.ne.s32.totalorder %s48, %s51
      %p60 = scmp.eq.s32.totalorder %s17, 2
      %p61 = por %p59, %p60
      %p62 = scmp.ne.s32.totalorder %s51, %s52
      %p63 = scmp.eq.s32.totalorder %s17, 0
      %p64 = por %p62, %p63
      %p65 = scmp.ne.s32.totalorder %s51, %s52
      %p66 = scmp.eq.s32.totalorder %s18, 2
      %p67 = por %p65, %p66
      %p69 = scmp.ne.s32.totalorder %s52, %s68
      %p70 = scmp.eq.s32.totalorder %s18, 0
      %p71 = por %p69, %p70
      %s72 = ssub.s32 %s12, %s19
      %p73 = scmp.eq.s32.totalorder %s72, 0
      %s75 = sadd.s32 %s74, 1
      %s76 = scalar_select %p73, %s74, %s75
      %p79 = pneg %p73
      %p80 = scmp.eq.s32.totalorder %s12, 2
      %p81 = por %p79, %p80
      %p82 = scmp.ne.s32.totalorder %s74, %s77
      %p83 = scmp.eq.s32.totalorder %s12, 0
      %p84 = por %p82, %p83
      %p85 = scmp.ne.s32.totalorder %s74, %s77
      %p86 = scmp.eq.s32.totalorder %s17, 2
      %p87 = por %p85, %p86
      %p88 = scmp.ne.s32.totalorder %s77, %s78
      %p89 = scmp.eq.s32.totalorder %s17, 0
      %p90 = por %p88, %p89
      %p91 = scmp.ne.s32.totalorder %s77, %s78
      %p92 = scmp.eq.s32.totalorder %s18, 2
      %p93 = por %p91, %p92
      %p95 = scmp.ne.s32.totalorder %s78, %s94
      %p96 = scmp.eq.s32.totalorder %s18, 0
      %p97 = por %p95, %p96
      %s98 = ssub.s32 %s12, %s19
      %p99 = scmp.eq.s32.totalorder %s98, 0
      %s101 = sadd.s32 %s100, 1
      %s102 = scalar_select %p99, %s100, %s101
      %p105 = pneg %p99
      %p106 = scmp.eq.s32.totalorder %s12, 2
      %p107 = por %p105, %p106
      %p108 = scmp.ne.s32.totalorder %s100, %s103
      %p109 = scmp.eq.s32.totalorder %s12, 0
      %p110 = por %p108, %p109
      %p111 = scmp.ne.s32.totalorder %s100, %s103
      %p112 = scmp.eq.s32.totalorder %s17, 2
      %p113 = por %p111, %p112
      %p114 = scmp.ne.s32.totalorder %s103, %s104
      %p115 = scmp.eq.s32.totalorder %s17, 0
      %p116 = por %p114, %p115
      %p117 = scmp.ne.s32.totalorder %s103, %s104
      %p118 = scmp.eq.s32.totalorder %s18, 2
      %p119 = por %p117, %p118
      %p121 = scmp.ne.s32.totalorder %s104, %s120
      %p122 = scmp.eq.s32.totalorder %s18, 0
      %p123 = por %p121, %p122
      %p124 = scmp.le.s32.totalorder 1, %s12
      %p125 = scmp.lt.s32.totalorder %s12, 4
      %p126 = pnand %p124, %p125
      %p127 = pneg %p126
      // Predicated region
      $region9: #{multimodal_forward.4} parent=5 // pred_check
        _
      $region10: #{multimodal_forward.4} parent=5 // pred_check_branch
        %129 = sbr.rel (%p126) target = $region12
      $region11: #{multimodal_forward.4} parent=5 // pred_region
        %s130 = ssub.s32 %s12, 1
      $region12: #{multimodal_forward.4} parent=5 // pred_fallthru
        _
      %p131 = scmp.lt.s32.totalorder %s12, 3
      // Predicated region
      $region13: #{multimodal_forward.4} parent=5 // pred_check
        %p132 = pneg %p131
      $region14: #{multimodal_forward.4} parent=5 // pred_check_branch
        %134 = sbr.rel (%p132) target = $region16
      $region15: #{multimodal_forward.4} parent=5 // pred_region
        // Predicated region
        $region17: #{multimodal_forward.4} parent=15 // pred_check
          %p135 = pneg %p32
        $region18: #{multimodal_forward.4} parent=15 // pred_check_branch
          %137 = sbr.rel (%p135) target = $region20
        $region19: #{multimodal_forward.4} parent=15 // pred_region
          %p138 = scmp.lt.s32.totalorder %s12, 2
          %s139 = scalar_select %p138, %s12, 2
          %s140 = smul.addr %s139, 8
          %s141 = smul.addr %s140, 2
          %s142 = scalar_lea.vmem %s0, %s141
        $region20: #{multimodal_forward.4} parent=15 // pred_fallthru
          _
        // Predicated region
        $region21: #{multimodal_forward.4} parent=15 // pred_check
          %p143 = pneg %p58
        $region22: #{multimodal_forward.4} parent=15 // pred_check_branch
          %145 = sbr.rel (%p143) target = $region24
        $region23: #{multimodal_forward.4} parent=15 // pred_region
          %p146 = scmp.lt.s32.totalorder %s12, 2
          %s147 = scalar_select %p146, %s12, 2
          %s148 = smul.addr %s147, 19
          %s149 = smul.addr %s148, 4
          %s150 = scalar_lea.vmem %s1, %s149
        $region24: #{multimodal_forward.4} parent=15 // pred_fallthru
          _
        // Predicated region
        $region25: #{multimodal_forward.4} parent=15 // pred_check
          %p151 = pneg %p84
        $region26: #{multimodal_forward.4} parent=15 // pred_check_branch
          %153 = sbr.rel (%p151) target = $region28
        $region27: #{multimodal_forward.4} parent=15 // pred_region
          %s154 = sand.u32 %s74, 1
          %s155 = scalar_lea.sflag [#allocation3], %s154
          %s156 = sand.u32 %s74, 1
          %s157 = scalar_lea.vmem [#allocation2], %s156
          %s159 = ssub.s32 16, 16
          %160 = vsyncadd %s155, %s159
          %s161 = smul.addr %s12, 16
          %s162 = scalar_lea.hbm %s2, %s161
          %s164 = sshll.u32 %s157, 4
          %s165 = int_to_ptr.vmem [resolvable:$true] %s164
          %167 = dma.hbm_to_vmem [thread:$0]  %s162, 16, %s165, %s155
        $region28: #{multimodal_forward.4} parent=15 // pred_fallthru
          _
      $region16: #{multimodal_forward.4} parent=5 // pred_fallthru
        _
      %p168 = scmp.le.s32.totalorder 1, %s12
      %p169 = scmp.lt.s32.totalorder %s12, 4
      %p170 = pnand %p168, %p169
      %p171 = pneg %p170
      // Predicated region
      $region29: #{multimodal_forward.4} parent=5 // pred_check
        _
      $region30: #{multimodal_forward.4} parent=5 // pred_check_branch
        %173 = sbr.rel (%p170) target = $region32
      $region31: #{multimodal_forward.4} parent=5 // pred_region
        %s174 = ssub.s32 %s12, 1
        %s175 = sand.u32 %s77, 1
        %s176 = scalar_lea.sflag [#allocation3], %s175
        %s177 = sand.u32 %s77, 1
        %s178 = scalar_lea.vmem [#allocation2], %s177
        // Predicated region
        $region33: #{multimodal_forward.4} parent=31 // pred_check
          %p179 = pneg %p90
        $region34: #{multimodal_forward.4} parent=31 // pred_check_branch
          %181 = sbr.rel (%p179) target = $region36
        $region35: #{multimodal_forward.4} parent=31 // pred_region
          %182 = dma.done %s176, 16
        $region36: #{multimodal_forward.4} parent=31 // pred_fallthru
          _
        %p183 = scmp.lt.s32.totalorder %s17, 2
        %s184 = scalar_select %p183, %s17, 2
        %s185 = smul.addr %s184, 8
        %s186 = smul.addr %s185, 2
        %s187 = scalar_lea.vmem %s0, %s186
        %p188 = pneg %p38
        %p189 = pneg %p35
        %p190 = scmp.lt.s32.totalorder %s17, 2
        %s191 = scalar_select %p190, %s17, 2
        %s192 = smul.addr %s191, 19
        %s193 = smul.addr %s192, 4
        %s194 = scalar_lea.vmem %s1, %s193
        %p195 = pneg %p64
        %p196 = pneg %p61
        %s197 = sand.u32 %s77, 1
        %s198 = scalar_lea.sflag [#allocation3], %s197
        %s199 = sand.u32 %s77, 1
        %s200 = scalar_lea.vmem [#allocation2], %s199
        %p201 = pneg %p90
        %p202 = pneg %p87
        %p203 = pneg %p116
        %p204 = pneg %p113
        %p205 = scmp.lt.s32.totalorder %s17, 2
        %s206 = scalar_select %p205, %s17, 2
        %s207 = smul.addr %s206, 2
        %s208 = scalar_lea.vmem %s3, %s207
        %p209 = scmp.lt.s32.totalorder %s17, 2
        %s210 = scalar_select %p209, %s17, 2
        %s211 = smul.addr %s210, 8
        %s212 = smul.addr %s211, 2
        %s213 = scalar_lea.vmem %s0, %s212
        %p214 = scmp.lt.s32.totalorder %s17, 2
        %s215 = scalar_select %p214, %s17, 2
        %s216 = smul.addr %s215, 19
        %s217 = smul.addr %s216, 4
        %s218 = scalar_lea.vmem %s1, %s217
        %p219 = scmp.lt.s32.totalorder %s17, 2
        %s220 = scalar_select %p219, %s17, 2
        %s221 = smul.addr %s220, 2
        %s222 = scalar_lea.vmem %s3, %s221
        %v224 = vld [vmem:[%s218] sm:$0xf]
        %v225 = vld [vmem:[%s218 + $0x4] sm:$0xf]
        %v226 = vld [vmem:[%s218 + $0x8] sm:$0xf]
        %v227 = vld [vmem:[%s218 + $0xc] sm:$0xf]
        %v228 = vld [vmem:[%s218 + $0x10] sm:$0xf]
        %v229 = vld [vmem:[%s218 + $0x14] sm:$0xf]
        %v230 = vld [vmem:[%s218 + $0x18] sm:$0xf]
        %v231 = vld [vmem:[%s218 + $0x1c] sm:$0xf]
        %v232 = vld [vmem:[%s218 + $0x20] sm:$0xf]
        %v233 = vld [vmem:[%s218 + $0x24] sm:$0xf]
        %v234 = vld [vmem:[%s218 + $0x28] sm:$0xf]
        %v235 = vld [vmem:[%s218 + $0x2c] sm:$0xf]
        %v236 = vld [vmem:[%s218 + $0x30] sm:$0xf]
        %v237 = vld [vmem:[%s218 + $0x34] sm:$0xf]
        %v238 = vld [vmem:[%s218 + $0x38] sm:$0xf]
        %v239 = vld [vmem:[%s218 + $0x3c] sm:$0xf]
        %v240 = vld [vmem:[%s218 + $0x40] sm:$0xf]
        %v241 = vld [vmem:[%s218 + $0x44] sm:$0xf]
        %v242 = vld [vmem:[%s218 + $0x48] sm:$0x7]
        %v243 = vld [vmem:[%s213] sm:$0xf]
        %v246 = vunpack.c.l.s4 1983009808
        %v247 = vunpack.c.0.s8 %v246
        %v248 = vlaneseq
        %v249 = vshrl.u32 %v248, 7
        %v250 = vsub.s32 %v247, %v249
        %v251 = vrot.slane %v243, %v250
        %v252 = vcombine.high %v251, %v251
        %v255 = vpack.c.bf16 %v251, %v251
        %v256 = vpack.c.bf16 %v252, %v252
        %v276 = vunpack.c.l.b16 %v224
        %v277 = vunpack.c.l.b16 %v225
        %v278 = vunpack.c.l.b16 %v226
        %v279 = vunpack.c.l.b16 %v227
        %v280 = vunpack.c.l.b16 %v228
        %v281 = vunpack.c.l.b16 %v229
        %v282 = vunpack.c.l.b16 %v230
        %v283 = vunpack.c.l.b16 %v231
        %v284 = vunpack.c.l.b16 %v232
        %v285 = vunpack.c.l.b16 %v233
        %v286 = vunpack.c.l.b16 %v234
        %v287 = vunpack.c.l.b16 %v235
        %v288 = vunpack.c.l.b16 %v236
        %v289 = vunpack.c.l.b16 %v237
        %v290 = vunpack.c.l.b16 %v238
        %v291 = vunpack.c.l.b16 %v239
        %v292 = vunpack.c.l.b16 %v240
        %v293 = vunpack.c.l.b16 %v241
        %v294 = vunpack.c.l.b16 %v242
        %v295 = vpack.c.b16 %v277, %v276
        %v296 = vpack.c.b16 %v279, %v278
        %v297 = vpack.c.b16 %v281, %v280
        %v298 = vpack.c.b16 %v283, %v282
        %v299 = vpack.c.b16 %v285, %v284
        %v300 = vpack.c.b16 %v287, %v286
        %v301 = vpack.c.b16 %v289, %v288
        %v302 = vpack.c.b16 %v291, %v290
        %v303 = vpack.c.b16 %v293, %v292
        %v304 = vpack.c.b16 %v294, %v294
        %vm314 = vcmask 179200
        %v316 = vsel %vm314, %v256, 0
        %vm318 = vcmask 1042432
        %v320 = vsel %vm318, %v304, 0
        %322 = vmatprep.subr.bf16.mxu0 0
        %323 = vmatpush1.bf16.msra.mxu0 %v302
        %324 = vmatprep.subr.bf16.mxu0 0
        %325 = vmatpush1.bf16.msra.mxu0 %v301
        %326 = vmatprep.subr.bf16.mxu0 0
        %327 = vmatpush1.bf16.msra.mxu0 %v300
        %328 = vmatprep.subr.bf16.mxu0 0
        %329 = vmatpush1.bf16.msra.mxu0 %v299
        %330 = vmatprep.subr.bf16.mxu0 0
        %331 = vmatpush1.bf16.msra.mxu0 %v298
        %332 = vmatprep.subr.bf16.mxu0 0
        %333 = vmatpush1.bf16.msra.mxu0 %v297
        %334 = vmatprep.subr.bf16.mxu0 0
        %335 = vmatpush1.bf16.msra.mxu0 %v296
        %336 = vmatprep.subr.bf16.mxu0 0
        %337 = vmatpush1.bf16.msra.mxu0 %v295
        %338 = vmatprep.subr.bf16.mxu0 0
        %339 = vmatpush2.bf16.msra.mxu0 0
        %340 = vmatprep.subr.bf16.mxu0 0
        %341 = vmatpush2.bf16.msra.mxu0 0
        %342 = vmatprep.subr.bf16.mxu0 0
        %343 = vmatpush2.bf16.msra.mxu0 0
        %344 = vmatprep.subr.bf16.mxu0 0
        %345 = vmatpush2.bf16.msra.mxu0 0
        %346 = vmatprep.subr.bf16.mxu0 0
        %347 = vmatpush2.bf16.msra.mxu0 0
        %348 = vmatprep.subr.bf16.mxu0 0
        %349 = vmatpush2.bf16.msra.mxu0 0
        %350 = vmatprep.subr.bf16.mxu0 0
        %351 = vmatpush2.bf16.msra.mxu0 %v320
        %352 = vmatprep.subr.bf16.mxu0 0
        %353 = vmatpush2.bf16.msra.mxu0 %v303
        %354 = vmatprep.mubr.bf16.mxu0 %v316
        %355 = vmatmul.mubr.bf16.gmra.mxu0 %v255
        %v356 = vpop.f32.mrf.mxu0
        %v357 = vadd.f32 0.0, %v356
        %v358 = vpop.f32.mrf.mxu0
        %v359 = vpop.f32.mrf.mxu0
        %v360 = vpop.f32.mrf.mxu0
        %361 = vdwg.mxu0
        %s362 = scalar_lea.vmem %s213, 4
        %v363 = vld [vmem:[%s362] sm:$0xf]
        %v366 = vunpack.c.l.s4 1983009808
        %v367 = vunpack.c.0.s8 %v366
        %v368 = vlaneseq
        %v369 = vshrl.u32 %v368, 7
        %v370 = vsub.s32 %v367, %v369
        %v371 = vrot.slane %v363, %v370
        %v372 = vcombine.high %v371, %v371
        %v375 = vpack.c.bf16 %v371, %v371
        %v376 = vpack.c.bf16 %v372, %v372
        %v378 = vsel %vm314, %v376, 0
        %380 = vmatprep.subr.bf16.mxu0 0
        %381 = vmatpush1.bf16.msra.mxu0 %v302
        %382 = vmatprep.subr.bf16.mxu0 0
        %383 = vmatpush1.bf16.msra.mxu0 %v301
        %384 = vmatprep.subr.bf16.mxu0 0
        %385 = vmatpush1.bf16.msra.mxu0 %v300
        %386 = vmatprep.subr.bf16.mxu0 0
        %387 = vmatpush1.bf16.msra.mxu0 %v299
        %388 = vmatprep.subr.bf16.mxu0 0
        %389 = vmatpush1.bf16.msra.mxu0 %v298
        %390 = vmatprep.subr.bf16.mxu0 0
        %391 = vmatpush1.bf16.msra.mxu0 %v297
        %392 = vmatprep.subr.bf16.mxu0 0
        %393 = vmatpush1.bf16.msra.mxu0 %v296
        %394 = vmatprep.subr.bf16.mxu0 0
        %395 = vmatpush1.bf16.msra.mxu0 %v295
        %396 = vmatprep.subr.bf16.mxu0 0
        %397 = vmatpush2.bf16.msra.mxu0 0
        %398 = vmatprep.subr.bf16.mxu0 0
        %399 = vmatpush2.bf16.msra.mxu0 0
        %400 = vmatprep.subr.bf16.mxu0 0
        %401 = vmatpush2.bf16.msra.mxu0 0
        %402 = vmatprep.subr.bf16.mxu0 0
        %403 = vmatpush2.bf16.msra.mxu0 0
        %404 = vmatprep.subr.bf16.mxu0 0
        %405 = vmatpush2.bf16.msra.mxu0 0
        %406 = vmatprep.subr.bf16.mxu0 0
        %407 = vmatpush2.bf16.msra.mxu0 0
        %408 = vmatprep.subr.bf16.mxu0 0
        %409 = vmatpush2.bf16.msra.mxu0 %v320
        %410 = vmatprep.subr.bf16.mxu0 0
        %411 = vmatpush2.bf16.msra.mxu0 %v303
        %412 = vmatprep.mubr.bf16.mxu0 %v378
        %413 = vmatmul.mubr.bf16.gmra.mxu0 %v375
        %v414 = vpop.f32.mrf.mxu0
        %v415 = vadd.f32 0.0, %v414
        %v416 = vpop.f32.mrf.mxu0
        %v417 = vpop.f32.mrf.mxu0
        %v418 = vpop.f32.mrf.mxu0
        %419 = vdwg.mxu0
        %v420 = vmax.f32 %v357, %v415
        %s421 = scalar_lea.vmem %s213, 8
        %v422 = vld [vmem:[%s421] sm:$0xf]
        %v425 = vunpack.c.l.s4 1983009808
        %v426 = vunpack.c.0.s8 %v425
        %v427 = vlaneseq
        %v428 = vshrl.u32 %v427, 7
        %v429 = vsub.s32 %v426, %v428
        %v430 = vrot.slane %v422, %v429
        %v431 = vcombine.high %v430, %v430
        %v434 = vpack.c.bf16 %v430, %v430
        %v435 = vpack.c.bf16 %v431, %v431
        %v437 = vsel %vm314, %v435, 0
        %439 = vmatprep.subr.bf16.mxu0 0
        %440 = vmatpush1.bf16.msra.mxu0 %v302
        %441 = vmatprep.subr.bf16.mxu0 0
        %442 = vmatpush1.bf16.msra.mxu0 %v301
        %443 = vmatprep.subr.bf16.mxu0 0
        %444 = vmatpush1.bf16.msra.mxu0 %v300
        %445 = vmatprep.subr.bf16.mxu0 0
        %446 = vmatpush1.bf16.msra.mxu0 %v299
        %447 = vmatprep.subr.bf16.mxu0 0
        %448 = vmatpush1.bf16.msra.mxu0 %v298
        %449 = vmatprep.subr.bf16.mxu0 0
        %450 = vmatpush1.bf16.msra.mxu0 %v297
        %451 = vmatprep.subr.bf16.mxu0 0
        %452 = vmatpush1.bf16.msra.mxu0 %v296
        %453 = vmatprep.subr.bf16.mxu0 0
        %454 = vmatpush1.bf16.msra.mxu0 %v295
        %455 = vmatprep.subr.bf16.mxu0 0
        %456 = vmatpush2.bf16.msra.mxu0 0
        %457 = vmatprep.subr.bf16.mxu0 0
        %458 = vmatpush2.bf16.msra.mxu0 0
        %459 = vmatprep.subr.bf16.mxu0 0
        %460 = vmatpush2.bf16.msra.mxu0 0
        %461 = vmatprep.subr.bf16.mxu0 0
        %462 = vmatpush2.bf16.msra.mxu0 0
        %463 = vmatprep.subr.bf16.mxu0 0
        %464 = vmatpush2.bf16.msra.mxu0 0
        %465 = vmatprep.subr.bf16.mxu0 0
        %466 = vmatpush2.bf16.msra.mxu0 0
        %467 = vmatprep.subr.bf16.mxu0 0
        %468 = vmatpush2.bf16.msra.mxu0 %v320
        %469 = vmatprep.subr.bf16.mxu0 0
        %470 = vmatpush2.bf16.msra.mxu0 %v303
        %471 = vmatprep.mubr.bf16.mxu0 %v437
        %472 = vmatmul.mubr.bf16.gmra.mxu0 %v434
        %v473 = vpop.f32.mrf.mxu0
        %v474 = vadd.f32 0.0, %v473
        %v475 = vpop.f32.mrf.mxu0
        %v476 = vpop.f32.mrf.mxu0
        %v477 = vpop.f32.mrf.mxu0
        %478 = vdwg.mxu0
        %v479 = vmax.f32 %v420, %v474
        %s480 = scalar_lea.vmem %s213, 12
        %v481 = vld [vmem:[%s480] sm:$0xf]
        %v484 = vunpack.c.l.s4 1983009808
        %v485 = vunpack.c.0.s8 %v484
        %v486 = vlaneseq
        %v487 = vshrl.u32 %v486, 7
        %v488 = vsub.s32 %v485, %v487
        %v489 = vrot.slane %v481, %v488
        %v490 = vcombine.high %v489, %v489
        %v493 = vpack.c.bf16 %v489, %v489
        %v494 = vpack.c.bf16 %v490, %v490
        %v496 = vsel %vm314, %v494, 0
        %498 = vmatprep.subr.bf16.mxu0 0
        %499 = vmatpush1.bf16.msra.mxu0 %v302
        %500 = vmatprep.subr.bf16.mxu0 0
        %501 = vmatpush1.bf16.msra.mxu0 %v301
        %502 = vmatprep.subr.bf16.mxu0 0
        %503 = vmatpush1.bf16.msra.mxu0 %v300
        %504 = vmatprep.subr.bf16.mxu0 0
        %505 = vmatpush1.bf16.msra.mxu0 %v299
        %506 = vmatprep.subr.bf16.mxu0 0
        %507 = vmatpush1.bf16.msra.mxu0 %v298
        %508 = vmatprep.subr.bf16.mxu0 0
        %509 = vmatpush1.bf16.msra.mxu0 %v297
        %510 = vmatprep.subr.bf16.mxu0 0
        %511 = vmatpush1.bf16.msra.mxu0 %v296
        %512 = vmatprep.subr.bf16.mxu0 0
        %513 = vmatpush1.bf16.msra.mxu0 %v295
        %514 = vmatprep.subr.bf16.mxu0 0
        %515 = vmatpush2.bf16.msra.mxu0 0
        %516 = vmatprep.subr.bf16.mxu0 0
        %517 = vmatpush2.bf16.msra.mxu0 0
        %518 = vmatprep.subr.bf16.mxu0 0
        %519 = vmatpush2.bf16.msra.mxu0 0
        %520 = vmatprep.subr.bf16.mxu0 0
        %521 = vmatpush2.bf16.msra.mxu0 0
        %522 = vmatprep.subr.bf16.mxu0 0
        %523 = vmatpush2.bf16.msra.mxu0 0
        %524 = vmatprep.subr.bf16.mxu0 0
        %525 = vmatpush2.bf16.msra.mxu0 0
        %526 = vmatprep.subr.bf16.mxu0 0
        %527 = vmatpush2.bf16.msra.mxu0 %v320
        %528 = vmatprep.subr.bf16.mxu0 0
        %529 = vmatpush2.bf16.msra.mxu0 %v303
        %530 = vmatprep.mubr.bf16.mxu0 %v496
        %531 = vmatmul.mubr.bf16.gmra.mxu0 %v493
        %v532 = vpop.f32.mrf.mxu0
        %v533 = vadd.f32 0.0, %v532
        %v534 = vpop.f32.mrf.mxu0
        %v535 = vpop.f32.mrf.mxu0
        %v536 = vpop.f32.mrf.mxu0
        %537 = vdwg.mxu0
        %v538 = vmax.f32 %v479, %v533
        %v539 = vld [vmem:[%s178] sm:$0x1]
        %v541 = vlaneseq
        %v542 = vshrl.u32 %v541, 7
        %v543 = vsub.s32 0, %v542
        %v544 = vrot.slane %v539, %v543
        %v546 = vadd.f32 %v538, %v544
        %v547 = vmax.f32 %v546, 0.0
        %vm548 = vcmask 123904
        %549 = vst.msk [vmem:[%s222] sm:$0x3] %vm548, %v547
        %p550 = scmp.lt.s32.totalorder %s17, 2
        %s551 = scalar_select %p550, %s17, 2
        %s552 = smul.addr %s551, 2
        %s553 = scalar_lea.vmem %s3, %s552
        // Predicated region
        $region37: #{multimodal_forward.4} parent=31 // pred_check
          %p554 = pneg %p113
        $region38: #{multimodal_forward.4} parent=31 // pred_check_branch
          %556 = sbr.rel (%p554) target = $region40
        $region39: #{multimodal_forward.4} parent=31 // pred_region
          _
        $region40: #{multimodal_forward.4} parent=31 // pred_fallthru
          _
      $region32: #{multimodal_forward.4} parent=5 // pred_fallthru
        _
      %p557 = scmp.le.s32.totalorder 2, %s12
      // Predicated region
      $region41: #{multimodal_forward.4} parent=5 // pred_check
        %p558 = pneg %p557
      $region42: #{multimodal_forward.4} parent=5 // pred_check_branch
        %560 = sbr.rel (%p558) target = $region44
      $region43: #{multimodal_forward.4} parent=5 // pred_region
        %s561 = ssub.s32 %s12, 2
        // Predicated region
        $region45: #{multimodal_forward.4} parent=43 // pred_check
          %p562 = pneg %p119
        $region46: #{multimodal_forward.4} parent=43 // pred_check_branch
          %564 = sbr.rel (%p562) target = $region48
        $region47: #{multimodal_forward.4} parent=43 // pred_region
          %p565 = scmp.lt.s32.totalorder %s18, 2
          %s566 = scalar_select %p565, %s18, 2
          %s567 = smul.addr %s566, 2
          %s568 = scalar_lea.vmem %s3, %s567
        $region48: #{multimodal_forward.4} parent=43 // pred_fallthru
          _
      $region44: #{multimodal_forward.4} parent=5 // pred_fallthru
        _
    $region6: #{multimodal_forward.4} parent=1 // loop_footer
      %s16 = sadd.s32 1, %s12
    $region7: #{multimodal_forward.4} parent=1 // loop_footer_branch
      %11 = sbr.rel target = $region3
    $region8: #{multimodal_forward.4} parent=1 // loop_exit
      _
    %569 = vsyncpa [#allocation3], 1
    %s570 = scalar_lea.sflag [#allocation3], 1
    %571 = vsyncpa %s570, 1

// kernel: multimodal_forward.5
$region0: #{multimodal_forward.5}
  #allocation0 [shape = 'u32[]', space=smem, size = 0x4, offset = 0x4, fixed_abs, tag = 'smem constant byte address 0x4 - core index']
  #allocation1 [shape = 'u32[144,128]{1,0:T(1,128)}', space=vmem, size = 0x12000, scoped, tag = 'internal scratch']
  #allocation2 [shape = 'f32[2,512]{1,0:T(2,128)}', space=vmem, size = 0x1000, scoped, tag = 'scratch operand']
  %s0 = inlined_call_operand.vmem [shape: f32[3,2,16], index: 0, kind: input, shape index: {}]
  %s1 = inlined_call_operand.hbm [shape: bf16[3,16,1024], index: 1, kind: input, shape index: {}]
  %s2 = inlined_call_operand.vmem [shape: f32[3,1,1024], index: 2, kind: input, shape index: {}]
  %s3 = inlined_call_operand.vmem [shape: bf16[3,1024,1024], index: 3, kind: input, shape index: {}]
  %s4 = inlined_call_operand.hbm [shape: f32[3,1,1024], index: 4, kind: input, shape index: {}]
  %s5 = inlined_call_operand.hbm [shape: bf16[3,1024,512], index: 5, kind: input, shape index: {}]
  %s6 = inlined_call_operand.vmem [shape: f32[3,1,512], index: 6, kind: input, shape index: {}]
  %s7 = inlined_call_operand.vmem [shape: bf16[3,512,512], index: 7, kind: input, shape index: {}]
  %s8 = inlined_call_operand.hbm [shape: f32[3,1,512], index: 8, kind: input, shape index: {}]
  %s9 = inlined_call_operand.hbm [shape: bf16[3,512,512], index: 9, kind: input, shape index: {}]
  %s10 = inlined_call_operand.vmem [shape: f32[1,512], index: 10, kind: input, shape index: {}]
  %s11 = inlined_call_operand.hbm [shape: bf16[512,256], index: 11, kind: input, shape index: {}]
  %s12 = inlined_call_operand.hbm [shape: f32[1,256], index: 12, kind: input, shape index: {}]
  %s13 = inlined_call_operand.vmem [shape: bf16[256,84], index: 13, kind: input, shape index: {}]
  %s14 = inlined_call_operand.hbm [shape: f32[1,84], index: 14, kind: input, shape index: {}]
  %s15 = inlined_call_operand.vmem [shape: bf16[84,6], index: 15, kind: input, shape index: {}]
  %s16 = inlined_call_operand.hbm [shape: f32[1,6], index: 16, kind: input, shape index: {}]
  %s17 = inlined_call_operand.hbm [shape: f32[2,6], index: 17, kind: output, shape index: {}]
  %s18 = sld [smem:[#allocation0]]
  $region145: #{multimodal_forward.5} parent=0
    _
  %s20 = ssub.s32 1, %s18
  %s21 = scalar_select 0, %s20, %s18
  $region1: #{multimodal_forward.5} parent=0
    #allocation3 [shape = 'u8[65536]{0}', space=vmem, size = 0x10000, scoped, tag = 'input window, operand 1']
    #allocation4 [shape = 's32[2]{0}', space=sflag, size = 0x8, scoped, tag = 'scoped memory for multimodal_forward.5']
    #allocation5 [shape = 's32[2]{0}', space=sflag, size = 0x8, scoped, tag = 'scoped memory for multimodal_forward.5']
    #allocation6 [shape = 'u8[8192]{0}', space=vmem, size = 0x2000, scoped, tag = 'input window, operand 4']
    #allocation7 [shape = 's32[2]{0}', space=sflag, size = 0x8, scoped, tag = 'scoped memory for multimodal_forward.5']
    #allocation8 [shape = 'u8[2097152]{0}', space=vmem, size = 0x200000, scoped, tag = 'input window, operand 5']
    #allocation9 [shape = 'u8[4096]{0}', space=vmem, size = 0x1000, scoped, tag = 'input window, operand 8']
    #allocation10 [shape = 's32[2]{0}', space=sflag, size = 0x8, scoped, tag = 'scoped memory for multimodal_forward.5']
    #allocation11 [shape = 'u8[1048576]{0}', space=vmem, size = 0x100000, scoped, tag = 'input window, operand 9']
    #allocation12 [shape = 'u8[262144]{0}', space=vmem, size = 0x40000, scoped, tag = 'input window, operand 11, single buffered']
    #allocation13 [shape = 's32[1]{0}', space=sflag, size = 0x4, scoped, tag = 'scoped memory for multimodal_forward.5']
    #allocation14 [shape = 'u8[1024]{0}', space=vmem, size = 0x400, scoped, tag = 'input window, operand 12, single buffered']
    #allocation15 [shape = 'u8[512]{0}', space=vmem, size = 0x400, scoped, tag = 'input window, operand 14, single buffered']
    #allocation16 [shape = 's32[1]{0}', space=sflag, size = 0x4, scoped, tag = 'scoped memory for multimodal_forward.5']
    #allocation17 [shape = 'u8[512]{0}', space=vmem, size = 0x400, scoped, tag = 'input window, operand 16, single buffered']
    #allocation18 [shape = 'u8[1024]{0}', space=vmem, size = 0x400, scoped, tag = 'output window, operand 0, single buffered']
    %22 = vsyncpa [#allocation4], 0
    %s23 = scalar_lea.sflag [#allocation4], 1
    %24 = vsyncpa %s23, 0
    %25 = vsyncpa [#allocation7], 0
    %s26 = scalar_lea.sflag [#allocation7], 1
    %27 = vsyncpa %s26, 0
    %28 = vsyncpa [#allocation10], 0
    %s29 = scalar_lea.sflag [#allocation10], 1
    %30 = vsyncpa %s29, 0
    %31 = vsyncpa [#allocation13], 0
    %32 = vsyncpa [#allocation16], 0
    %33 = vsyncpa [#allocation5], 0
    loop: start=0, step=1, limit=5
    $region2: #{multimodal_forward.5} parent=1 // loop_pre_header
      _
    $region3: #{multimodal_forward.5} parent=1 // loop_header
      %s35 = sphi 0, %s39
      %p36 = scmp.ge.s32.totalorder %s35, 5
      %s45 = sphi 0, %s47
      %s48 = sphi 0, %s45
      %s49 = sphi 0, %s48
      %s65 = sphi 0, %s49
      %s71 = sphi 0, %s73
      %s74 = sphi 0, %s71
      %s75 = sphi 0, %s74
      %s91 = sphi 0, %s75
      %s97 = sphi 0, %s99
      %s100 = sphi 0, %s97
      %s101 = sphi 0, %s100
      %s117 = sphi 0, %s101
      %s123 = sphi 0, %s125
      %s126 = sphi 0, %s123
      %s127 = sphi 0, %s126
      %s143 = sphi 0, %s127
      %s149 = sphi 0, %s151
      %s152 = sphi 0, %s149
      %s153 = sphi 0, %s152
      %s169 = sphi 0, %s153
      %s175 = sphi 0, %s177
      %s178 = sphi 0, %s175
      %s179 = sphi 0, %s178
      %s195 = sphi 0, %s179
      %s201 = sphi 0, %s203
      %s204 = sphi 0, %s201
      %s205 = sphi 0, %s204
      %s221 = sphi 0, %s205
      %s227 = sphi 0, %s229
      %s230 = sphi 0, %s227
      %s231 = sphi 0, %s230
      %s247 = sphi 0, %s231
      %s253 = sphi 0, %s255
      %s256 = sphi 0, %s253
      %s257 = sphi 0, %s256
      %s273 = sphi 0, %s257
      %s279 = sphi 0, %s281
      %s282 = sphi 0, %s279
      %s283 = sphi 0, %s282
      %s299 = sphi 0, %s283
      %s303 = sphi 0, %s303
      %s305 = sphi 0, %s303
      %s306 = sphi 0, %s305
      %s320 = sphi 0, %s306
      %s324 = sphi 0, %s324
      %s326 = sphi 0, %s324
      %s327 = sphi 0, %s326
      %s341 = sphi 0, %s327
      %s345 = sphi 0, %s345
      %s347 = sphi 0, %s345
      %s348 = sphi 0, %s347
      %s362 = sphi 0, %s348
      %s366 = sphi 0, %s366
      %s368 = sphi 0, %s366
      %s369 = sphi 0, %s368
      %s383 = sphi 0, %s369
      %s387 = sphi 0, %s387
      %s389 = sphi 0, %s387
      %s390 = sphi 0, %s389
      %s404 = sphi 0, %s390
      %s408 = sphi 0, %s408
      %s410 = sphi 0, %s408
      %s411 = sphi 0, %s410
      %s425 = sphi 0, %s411
      %s429 = sphi 0, %s429
      %s431 = sphi 0, %s429
      %s432 = sphi 0, %s431
      %s446 = sphi 0, %s432
      %s450 = sphi 0, %s450
      %s452 = sphi 0, %s450
      %s453 = sphi 0, %s452
      %s467 = sphi 0, %s453
    $region4: #{multimodal_forward.5} parent=1 // loop_header_branch
      %38 = sbr.rel (%p36) target = $region8
    $region5: #{multimodal_forward.5} parent=1 // loop_body
      %s40 = ssub.s32 %s35, 1
      %s41 = ssub.s32 %s35, 2
      %s42 = sadd.s32 %s35, 1
      %s43 = ssub.s32 %s35, %s42
      %p44 = scmp.eq.s32.totalorder %s43, 0
      %s46 = sadd.s32 %s45, 1
      %s47 = scalar_select %p44, %s45, %s46
      %p50 = pneg %p44
      %p51 = scmp.eq.s32.totalorder %s35, 2
      %p52 = por %p50, %p51
      %p53 = scmp.ne.s32.totalorder %s45, %s48
      %p54 = scmp.eq.s32.totalorder %s35, 0
      %p55 = por %p53, %p54
      %p56 = scmp.ne.s32.totalorder %s45, %s48
      %p57 = scmp.eq.s32.totalorder %s40, 2
      %p58 = por %p56, %p57
      %p59 = scmp.ne.s32.totalorder %s48, %s49
      %p60 = scmp.eq.s32.totalorder %s40, 0
      %p61 = por %p59, %p60
      %p62 = scmp.ne.s32.totalorder %s48, %s49
      %p63 = scmp.eq.s32.totalorder %s41, 2
      %p64 = por %p62, %p63
      %p66 = scmp.ne.s32.totalorder %s49, %s65
      %p67 = scmp.eq.s32.totalorder %s41, 0
      %p68 = por %p66, %p67
      %s69 = ssub.s32 %s35, %s42
      %p70 = scmp.eq.s32.totalorder %s69, 0
      %s72 = sadd.s32 %s71, 1
      %s73 = scalar_select %p70, %s71, %s72
      %p76 = pneg %p70
      %p77 = scmp.eq.s32.totalorder %s35, 2
      %p78 = por %p76, %p77
      %p79 = scmp.ne.s32.totalorder %s71, %s74
      %p80 = scmp.eq.s32.totalorder %s35, 0
      %p81 = por %p79, %p80
      %p82 = scmp.ne.s32.totalorder %s71, %s74
      %p83 = scmp.eq.s32.totalorder %s40, 2
      %p84 = por %p82, %p83
      %p85 = scmp.ne.s32.totalorder %s74, %s75
      %p86 = scmp.eq.s32.totalorder %s40, 0
      %p87 = por %p85, %p86
      %p88 = scmp.ne.s32.totalorder %s74, %s75
      %p89 = scmp.eq.s32.totalorder %s41, 2
      %p90 = por %p88, %p89
      %p92 = scmp.ne.s32.totalorder %s75, %s91
      %p93 = scmp.eq.s32.totalorder %s41, 0
      %p94 = por %p92, %p93
      %s95 = ssub.s32 %s35, %s42
      %p96 = scmp.eq.s32.totalorder %s95, 0
      %s98 = sadd.s32 %s97, 1
      %s99 = scalar_select %p96, %s97, %s98
      %p102 = pneg %p96
      %p103 = scmp.eq.s32.totalorder %s35, 2
      %p104 = por %p102, %p103
      %p105 = scmp.ne.s32.totalorder %s97, %s100
      %p106 = scmp.eq.s32.totalorder %s35, 0
      %p107 = por %p105, %p106
      %p108 = scmp.ne.s32.totalorder %s97, %s100
      %p109 = scmp.eq.s32.totalorder %s40, 2
      %p110 = por %p108, %p109
      %p111 = scmp.ne.s32.totalorder %s100, %s101
      %p112 = scmp.eq.s32.totalorder %s40, 0
      %p113 = por %p111, %p112
      %p114 = scmp.ne.s32.totalorder %s100, %s101
      %p115 = scmp.eq.s32.totalorder %s41, 2
      %p116 = por %p114, %p115
      %p118 = scmp.ne.s32.totalorder %s101, %s117
      %p119 = scmp.eq.s32.totalorder %s41, 0
      %p120 = por %p118, %p119
      %s121 = ssub.s32 %s35, %s42
      %p122 = scmp.eq.s32.totalorder %s121, 0
      %s124 = sadd.s32 %s123, 1
      %s125 = scalar_select %p122, %s123, %s124
      %p128 = pneg %p122
      %p129 = scmp.eq.s32.totalorder %s35, 2
      %p130 = por %p128, %p129
      %p131 = scmp.ne.s32.totalorder %s123, %s126
      %p132 = scmp.eq.s32.totalorder %s35, 0
      %p133 = por %p131, %p132
      %p134 = scmp.ne.s32.totalorder %s123, %s126
      %p135 = scmp.eq.s32.totalorder %s40, 2
      %p136 = por %p134, %p135
      %p137 = scmp.ne.s32.totalorder %s126, %s127
      %p138 = scmp.eq.s32.totalorder %s40, 0
      %p139 = por %p137, %p138
      %p140 = scmp.ne.s32.totalorder %s126, %s127
      %p141 = scmp.eq.s32.totalorder %s41, 2
      %p142 = por %p140, %p141
      %p144 = scmp.ne.s32.totalorder %s127, %s143
      %p145 = scmp.eq.s32.totalorder %s41, 0
      %p146 = por %p144, %p145
      %s147 = ssub.s32 %s35, %s42
      %p148 = scmp.eq.s32.totalorder %s147, 0
      %s150 = sadd.s32 %s149, 1
      %s151 = scalar_select %p148, %s149, %s150
      %p154 = pneg %p148
      %p155 = scmp.eq.s32.totalorder %s35, 2
      %p156 = por %p154, %p155
      %p157 = scmp.ne.s32.totalorder %s149, %s152
      %p158 = scmp.eq.s32.totalorder %s35, 0
      %p159 = por %p157, %p158
      %p160 = scmp.ne.s32.totalorder %s149, %s152
      %p161 = scmp.eq.s32.totalorder %s40, 2
      %p162 = por %p160, %p161
      %p163 = scmp.ne.s32.totalorder %s152, %s153
      %p164 = scmp.eq.s32.totalorder %s40, 0
      %p165 = por %p163, %p164
      %p166 = scmp.ne.s32.totalorder %s152, %s153
      %p167 = scmp.eq.s32.totalorder %s41, 2
      %p168 = por %p166, %p167
      %p170 = scmp.ne.s32.totalorder %s153, %s169
      %p171 = scmp.eq.s32.totalorder %s41, 0
      %p172 = por %p170, %p171
      %s173 = ssub.s32 %s35, %s42
      %p174 = scmp.eq.s32.totalorder %s173, 0
      %s176 = sadd.s32 %s175, 1
      %s177 = scalar_select %p174, %s175, %s176
      %p180 = pneg %p174
      %p181 = scmp.eq.s32.totalorder %s35, 2
      %p182 = por %p180, %p181
      %p183 = scmp.ne.s32.totalorder %s175, %s178
      %p184 = scmp.eq.s32.totalorder %s35, 0
      %p185 = por %p183, %p184
      %p186 = scmp.ne.s32.totalorder %s175, %s178
      %p187 = scmp.eq.s32.totalorder %s40, 2
      %p188 = por %p186, %p187
      %p189 = scmp.ne.s32.totalorder %s178, %s179
      %p190 = scmp.eq.s32.totalorder %s40, 0
      %p191 = por %p189, %p190
      %p192 = scmp.ne.s32.totalorder %s178, %s179
      %p193 = scmp.eq.s32.totalorder %s41, 2
      %p194 = por %p192, %p193
      %p196 = scmp.ne.s32.totalorder %s179, %s195
      %p197 = scmp.eq.s32.totalorder %s41, 0
      %p198 = por %p196, %p197
      %s199 = ssub.s32 %s35, %s42
      %p200 = scmp.eq.s32.totalorder %s199, 0
      %s202 = sadd.s32 %s201, 1
      %s203 = scalar_select %p200, %s201, %s202
      %p206 = pneg %p200
      %p207 = scmp.eq.s32.totalorder %s35, 2
      %p208 = por %p206, %p207
      %p209 = scmp.ne.s32.totalorder %s201, %s204
      %p210 = scmp.eq.s32.totalorder %s35, 0
      %p211 = por %p209, %p210
      %p212 = scmp.ne.s32.totalorder %s201, %s204
      %p213 = scmp.eq.s32.totalorder %s40, 2
      %p214 = por %p212, %p213
      %p215 = scmp.ne.s32.totalorder %s204, %s205
      %p216 = scmp.eq.s32.totalorder %s40, 0
      %p217 = por %p215, %p216
      %p218 = scmp.ne.s32.totalorder %s204, %s205
      %p219 = scmp.eq.s32.totalorder %s41, 2
      %p220 = por %p218, %p219
      %p222 = scmp.ne.s32.totalorder %s205, %s221
      %p223 = scmp.eq.s32.totalorder %s41, 0
      %p224 = por %p222, %p223
      %s225 = ssub.s32 %s35, %s42
      %p226 = scmp.eq.s32.totalorder %s225, 0
      %s228 = sadd.s32 %s227, 1
      %s229 = scalar_select %p226, %s227, %s228
      %p232 = pneg %p226
      %p233 = scmp.eq.s32.totalorder %s35, 2
      %p234 = por %p232, %p233
      %p235 = scmp.ne.s32.totalorder %s227, %s230
      %p236 = scmp.eq.s32.totalorder %s35, 0
      %p237 = por %p235, %p236
      %p238 = scmp.ne.s32.totalorder %s227, %s230
      %p239 = scmp.eq.s32.totalorder %s40, 2
      %p240 = por %p238, %p239
      %p241 = scmp.ne.s32.totalorder %s230, %s231
      %p242 = scmp.eq.s32.totalorder %s40, 0
      %p243 = por %p241, %p242
      %p244 = scmp.ne.s32.totalorder %s230, %s231
      %p245 = scmp.eq.s32.totalorder %s41, 2
      %p246 = por %p244, %p245
      %p248 = scmp.ne.s32.totalorder %s231, %s247
      %p249 = scmp.eq.s32.totalorder %s41, 0
      %p250 = por %p248, %p249
      %s251 = ssub.s32 %s35, %s42
      %p252 = scmp.eq.s32.totalorder %s251, 0
      %s254 = sadd.s32 %s253, 1
      %s255 = scalar_select %p252, %s253, %s254
      %p258 = pneg %p252
      %p259 = scmp.eq.s32.totalorder %s35, 2
      %p260 = por %p258, %p259
      %p261 = scmp.ne.s32.totalorder %s253, %s256
      %p262 = scmp.eq.s32.totalorder %s35, 0
      %p263 = por %p261, %p262
      %p264 = scmp.ne.s32.totalorder %s253, %s256
      %p265 = scmp.eq.s32.totalorder %s40, 2
      %p266 = por %p264, %p265
      %p267 = scmp.ne.s32.totalorder %s256, %s257
      %p268 = scmp.eq.s32.totalorder %s40, 0
      %p269 = por %p267, %p268
      %p270 = scmp.ne.s32.totalorder %s256, %s257
      %p271 = scmp.eq.s32.totalorder %s41, 2
      %p272 = por %p270, %p271
      %p274 = scmp.ne.s32.totalorder %s257, %s273
      %p275 = scmp.eq.s32.totalorder %s41, 0
      %p276 = por %p274, %p275
      %s277 = ssub.s32 %s35, %s42
      %p278 = scmp.eq.s32.totalorder %s277, 0
      %s280 = sadd.s32 %s279, 1
      %s281 = scalar_select %p278, %s279, %s280
      %p284 = pneg %p278
      %p285 = scmp.eq.s32.totalorder %s35, 2
      %p286 = por %p284, %p285
      %p287 = scmp.ne.s32.totalorder %s279, %s282
      %p288 = scmp.eq.s32.totalorder %s35, 0
      %p289 = por %p287, %p288
      %p290 = scmp.ne.s32.totalorder %s279, %s282
      %p291 = scmp.eq.s32.totalorder %s40, 2
      %p292 = por %p290, %p291
      %p293 = scmp.ne.s32.totalorder %s282, %s283
      %p294 = scmp.eq.s32.totalorder %s40, 0
      %p295 = por %p293, %p294
      %p296 = scmp.ne.s32.totalorder %s282, %s283
      %p297 = scmp.eq.s32.totalorder %s41, 2
      %p298 = por %p296, %p297
      %p300 = scmp.ne.s32.totalorder %s283, %s299
      %p301 = scmp.eq.s32.totalorder %s41, 0
      %p302 = por %p300, %p301
      %s304 = sadd.s32 %s303, 1
      %p307 = scmp.eq.s32.totalorder %s35, 2
      %p308 = scmp.ne.s32.totalorder %s303, %s305
      %p309 = scmp.eq.s32.totalorder %s35, 0
      %p310 = por %p308, %p309
      %p311 = scmp.ne.s32.totalorder %s303, %s305
      %p312 = scmp.eq.s32.totalorder %s40, 2
      %p313 = por %p311, %p312
      %p314 = scmp.ne.s32.totalorder %s305, %s306
      %p315 = scmp.eq.s32.totalorder %s40, 0
      %p316 = por %p314, %p315
      %p317 = scmp.ne.s32.totalorder %s305, %s306
      %p318 = scmp.eq.s32.totalorder %s41, 2
      %p319 = por %p317, %p318
      %p321 = scmp.ne.s32.totalorder %s306, %s320
      %p322 = scmp.eq.s32.totalorder %s41, 0
      %p323 = por %p321, %p322
      %s325 = sadd.s32 %s324, 1
      %p328 = scmp.eq.s32.totalorder %s35, 2
      %p329 = scmp.ne.s32.totalorder %s324, %s326
      %p330 = scmp.eq.s32.totalorder %s35, 0
      %p331 = por %p329, %p330
      %p332 = scmp.ne.s32.totalorder %s324, %s326
      %p333 = scmp.eq.s32.totalorder %s40, 2
      %p334 = por %p332, %p333
      %p335 = scmp.ne.s32.totalorder %s326, %s327
      %p336 = scmp.eq.s32.totalorder %s40, 0
      %p337 = por %p335, %p336
      %p338 = scmp.ne.s32.totalorder %s326, %s327
      %p339 = scmp.eq.s32.totalorder %s41, 2
      %p340 = por %p338, %p339
      %p342 = scmp.ne.s32.totalorder %s327, %s341
      %p343 = scmp.eq.s32.totalorder %s41, 0
      %p344 = por %p342, %p343
      %s346 = sadd.s32 %s345, 1
      %p349 = scmp.eq.s32.totalorder %s35, 2
      %p350 = scmp.ne.s32.totalorder %s345, %s347
      %p351 = scmp.eq.s32.totalorder %s35, 0
      %p352 = por %p350, %p351
      %p353 = scmp.ne.s32.totalorder %s345, %s347
      %p354 = scmp.eq.s32.totalorder %s40, 2
      %p355 = por %p353, %p354
      %p356 = scmp.ne.s32.totalorder %s347, %s348
      %p357 = scmp.eq.s32.totalorder %s40, 0
      %p358 = por %p356, %p357
      %p359 = scmp.ne.s32.totalorder %s347, %s348
      %p360 = scmp.eq.s32.totalorder %s41, 2
      %p361 = por %p359, %p360
      %p363 = scmp.ne.s32.totalorder %s348, %s362
      %p364 = scmp.eq.s32.totalorder %s41, 0
      %p365 = por %p363, %p364
      %s367 = sadd.s32 %s366, 1
      %p370 = scmp.eq.s32.totalorder %s35, 2
      %p371 = scmp.ne.s32.totalorder %s366, %s368
      %p372 = scmp.eq.s32.totalorder %s35, 0
      %p373 = por %p371, %p372
      %p374 = scmp.ne.s32.totalorder %s366, %s368
      %p375 = scmp.eq.s32.totalorder %s40, 2
      %p376 = por %p374, %p375
      %p377 = scmp.ne.s32.totalorder %s368, %s369
      %p378 = scmp.eq.s32.totalorder %s40, 0
      %p379 = por %p377, %p378
      %p380 = scmp.ne.s32.totalorder %s368, %s369
      %p381 = scmp.eq.s32.totalorder %s41, 2
      %p382 = por %p380, %p381
      %p384 = scmp.ne.s32.totalorder %s369, %s383
      %p385 = scmp.eq.s32.totalorder %s41, 0
      %p386 = por %p384, %p385
      %s388 = sadd.s32 %s387, 1
      %p391 = scmp.eq.s32.totalorder %s35, 2
      %p392 = scmp.ne.s32.totalorder %s387, %s389
      %p393 = scmp.eq.s32.totalorder %s35, 0
      %p394 = por %p392, %p393
      %p395 = scmp.ne.s32.totalorder %s387, %s389
      %p396 = scmp.eq.s32.totalorder %s40, 2
      %p397 = por %p395, %p396
      %p398 = scmp.ne.s32.totalorder %s389, %s390
      %p399 = scmp.eq.s32.totalorder %s40, 0
      %p400 = por %p398, %p399
      %p401 = scmp.ne.s32.totalorder %s389, %s390
      %p402 = scmp.eq.s32.totalorder %s41, 2
      %p403 = por %p401, %p402
      %p405 = scmp.ne.s32.totalorder %s390, %s404
      %p406 = scmp.eq.s32.totalorder %s41, 0
      %p407 = por %p405, %p406
      %s409 = sadd.s32 %s408, 1
      %p412 = scmp.eq.s32.totalorder %s35, 2
      %p413 = scmp.ne.s32.totalorder %s408, %s410
      %p414 = scmp.eq.s32.totalorder %s35, 0
      %p415 = por %p413, %p414
      %p416 = scmp.ne.s32.totalorder %s408, %s410
      %p417 = scmp.eq.s32.totalorder %s40, 2
      %p418 = por %p416, %p417
      %p419 = scmp.ne.s32.totalorder %s410, %s411
      %p420 = scmp.eq.s32.totalorder %s40, 0
      %p421 = por %p419, %p420
      %p422 = scmp.ne.s32.totalorder %s410, %s411
      %p423 = scmp.eq.s32.totalorder %s41, 2
      %p424 = por %p422, %p423
      %p426 = scmp.ne.s32.totalorder %s411, %s425
      %p427 = scmp.eq.s32.totalorder %s41, 0
      %p428 = por %p426, %p427
      %s430 = sadd.s32 %s429, 1
      %p433 = scmp.eq.s32.totalorder %s35, 2
      %p434 = scmp.ne.s32.totalorder %s429, %s431
      %p435 = scmp.eq.s32.totalorder %s35, 0
      %p436 = por %p434, %p435
      %p437 = scmp.ne.s32.totalorder %s429, %s431
      %p438 = scmp.eq.s32.totalorder %s40, 2
      %p439 = por %p437, %p438
      %p440 = scmp.ne.s32.totalorder %s431, %s432
      %p441 = scmp.eq.s32.totalorder %s40, 0
      %p442 = por %p440, %p441
      %p443 = scmp.ne.s32.totalorder %s431, %s432
      %p444 = scmp.eq.s32.totalorder %s41, 2
      %p445 = por %p443, %p444
      %p447 = scmp.ne.s32.totalorder %s432, %s446
      %p448 = scmp.eq.s32.totalorder %s41, 0
      %p449 = por %p447, %p448
      %s451 = sadd.s32 %s450, 1
      %p454 = scmp.eq.s32.totalorder %s35, 2
      %p455 = scmp.ne.s32.totalorder %s450, %s452
      %p456 = scmp.eq.s32.totalorder %s35, 0
      %p457 = por %p455, %p456
      %p458 = scmp.ne.s32.totalorder %s450, %s452
      %p459 = scmp.eq.s32.totalorder %s40, 2
      %p460 = por %p458, %p459
      %p461 = scmp.ne.s32.totalorder %s452, %s453
      %p462 = scmp.eq.s32.totalorder %s40, 0
      %p463 = por %p461, %p462
      %p464 = scmp.ne.s32.totalorder %s452, %s453
      %p465 = scmp.eq.s32.totalorder %s41, 2
      %p466 = por %p464, %p465
      %p468 = scmp.ne.s32.totalorder %s453, %s467
      %p469 = scmp.eq.s32.totalorder %s41, 0
      %p470 = por %p468, %p469
      %p471 = scmp.le.s32.totalorder 1, %s35
      %p472 = scmp.lt.s32.totalorder %s35, 4
      %p473 = pnand %p471, %p472
      %p474 = pneg %p473
      // Predicated region
      $region9: #{multimodal_forward.5} parent=5 // pred_check
        _
      $region10: #{multimodal_forward.5} parent=5 // pred_check_branch
        %476 = sbr.rel (%p473) target = $region12
      $region11: #{multimodal_forward.5} parent=5 // pred_region
        %s477 = ssub.s32 %s35, 1
        // Predicated region
        $region13: #{multimodal_forward.5} parent=11 // pred_check
          %p478 = pneg %p316
        $region14: #{multimodal_forward.5} parent=11 // pred_check_branch
          %480 = sbr.rel (%p478) target = $region16
        $region15: #{multimodal_forward.5} parent=11 // pred_region
          _
        $region16: #{multimodal_forward.5} parent=11 // pred_fallthru
          _
        // Predicated region
        $region17: #{multimodal_forward.5} parent=11 // pred_check
          %p481 = pneg %p337
        $region18: #{multimodal_forward.5} parent=11 // pred_check_branch
          %483 = sbr.rel (%p481) target = $region20
        $region19: #{multimodal_forward.5} parent=11 // pred_region
          %s485 = ssub.s32 8192, 8192
          %486 = vsyncadd [#allocation13], %s485
          %s487 = sshll.u32 [#allocation12], 4
          %s488 = int_to_ptr.vmem [resolvable:$true] %s487
          %493 = dma.hbm_to_vmem [thread:$0]  %s11, 8192, %s488, [#allocation13], 128, 128, 8
        $region20: #{multimodal_forward.5} parent=11 // pred_fallthru
          _
        // Predicated region
        $region21: #{multimodal_forward.5} parent=11 // pred_check
          %p494 = pneg %p358
        $region22: #{multimodal_forward.5} parent=11 // pred_check_branch
          %496 = sbr.rel (%p494) target = $region24
        $region23: #{multimodal_forward.5} parent=11 // pred_region
          %s498 = ssub.s32 32, 32
          %499 = vsyncadd [#allocation13], %s498
          %s501 = sshll.u32 [#allocation14], 4
          %s502 = int_to_ptr.vmem [resolvable:$true] %s501
          %504 = dma.hbm_to_vmem [thread:$0]  %s12, 32, %s502, [#allocation13]
        $region24: #{multimodal_forward.5} parent=11 // pred_fallthru
          _
        // Predicated region
        $region25: #{multimodal_forward.5} parent=11 // pred_check
          %p505 = pneg %p379
        $region26: #{multimodal_forward.5} parent=11 // pred_check_branch
          %507 = sbr.rel (%p505) target = $region28
        $region27: #{multimodal_forward.5} parent=11 // pred_region
          _
        $region28: #{multimodal_forward.5} parent=11 // pred_fallthru
          _
        // Predicated region
        $region29: #{multimodal_forward.5} parent=11 // pred_check
          %p508 = pneg %p400
        $region30: #{multimodal_forward.5} parent=11 // pred_check_branch
          %510 = sbr.rel (%p508) target = $region32
        $region31: #{multimodal_forward.5} parent=11 // pred_region
          %s512 = ssub.s32 16, 16
          %513 = vsyncadd [#allocation16], %s512
          %s515 = sshll.u32 [#allocation15], 4
          %s516 = int_to_ptr.vmem [resolvable:$true] %s515
          %518 = dma.hbm_to_vmem [thread:$0]  %s14, 16, %s516, [#allocation16]
        $region32: #{multimodal_forward.5} parent=11 // pred_fallthru
          _
        // Predicated region
        $region33: #{multimodal_forward.5} parent=11 // pred_check
          %p519 = pneg %p421
        $region34: #{multimodal_forward.5} parent=11 // pred_check_branch
          %521 = sbr.rel (%p519) target = $region36
        $region35: #{multimodal_forward.5} parent=11 // pred_region
          _
        $region36: #{multimodal_forward.5} parent=11 // pred_fallthru
          _
        // Predicated region
        $region37: #{multimodal_forward.5} parent=11 // pred_check
          %p522 = pneg %p442
        $region38: #{multimodal_forward.5} parent=11 // pred_check_branch
          %524 = sbr.rel (%p522) target = $region40
        $region39: #{multimodal_forward.5} parent=11 // pred_region
          %s526 = ssub.s32 16, 16
          %527 = vsyncadd [#allocation16], %s526
          %s529 = sshll.u32 [#allocation17], 4
          %s530 = int_to_ptr.vmem [resolvable:$true] %s529
          %532 = dma.hbm_to_vmem [thread:$0]  %s16, 16, %s530, [#allocation16]
        $region40: #{multimodal_forward.5} parent=11 // pred_fallthru
          _
      $region12: #{multimodal_forward.5} parent=5 // pred_fallthru
        _
      %p533 = scmp.lt.s32.totalorder %s35, 3
      // Predicated region
      $region41: #{multimodal_forward.5} parent=5 // pred_check
        %p534 = pneg %p533
      $region42: #{multimodal_forward.5} parent=5 // pred_check_branch
        %536 = sbr.rel (%p534) target = $region44
      $region43: #{multimodal_forward.5} parent=5 // pred_region
        // Predicated region
        $region45: #{multimodal_forward.5} parent=43 // pred_check
          %p537 = pneg %p55
        $region46: #{multimodal_forward.5} parent=43 // pred_check_branch
          %539 = sbr.rel (%p537) target = $region48
        $region47: #{multimodal_forward.5} parent=43 // pred_region
          %p540 = scmp.lt.s32.totalorder %s35, 2
          %s541 = scalar_select %p540, %s35, 2
          %s542 = smul.addr %s541, 2
          %s543 = scalar_lea.vmem %s0, %s542
        $region48: #{multimodal_forward.5} parent=43 // pred_fallthru
          _
        // Predicated region
        $region49: #{multimodal_forward.5} parent=43 // pred_check
          %p544 = pneg %p81
        $region50: #{multimodal_forward.5} parent=43 // pred_check_branch
          %546 = sbr.rel (%p544) target = $region52
        $region51: #{multimodal_forward.5} parent=43 // pred_region
          %s547 = sand.u32 %s71, 1
          %s548 = scalar_lea.sflag [#allocation4], %s547
          %s549 = sand.u32 %s71, 1
          %s550 = smul.addr %s549, 64
          %s551 = scalar_lea.vmem [#allocation3], %s550
          %s553 = ssub.s32 1024, 1024
          %554 = vsyncadd %s548, %s553
          %s555 = smul.addr %s35, 16
          %s556 = smul.addr %s555, 64
          %s557 = scalar_lea.hbm %s1, %s556
          %s558 = sshll.u32 %s551, 4
          %s559 = int_to_ptr.vmem [resolvable:$true] %s558
          %564 = dma.hbm_to_vmem [thread:$0]  %s557, 1024, %s559, %s548, 512, 512, 32
        $region52: #{multimodal_forward.5} parent=43 // pred_fallthru
          _
        // Predicated region
        $region53: #{multimodal_forward.5} parent=43 // pred_check
          %p565 = pneg %p107
        $region54: #{multimodal_forward.5} parent=43 // pred_check_branch
          %567 = sbr.rel (%p565) target = $region56
        $region55: #{multimodal_forward.5} parent=43 // pred_region
          %p568 = scmp.lt.s32.totalorder %s35, 2
          %s569 = scalar_select %p568, %s35, 2
          %s570 = smul.addr %s569, 8
          %s571 = scalar_lea.vmem %s2, %s570
        $region56: #{multimodal_forward.5} parent=43 // pred_fallthru
          _
        // Predicated region
        $region57: #{multimodal_forward.5} parent=43 // pred_check
          %p572 = pneg %p133
        $region58: #{multimodal_forward.5} parent=43 // pred_check_branch
          %574 = sbr.rel (%p572) target = $region60
        $region59: #{multimodal_forward.5} parent=43 // pred_region
          %p575 = scmp.lt.s32.totalorder %s35, 2
          %s576 = scalar_select %p575, %s35, 2
          %s577 = smul.addr %s576, 1024
          %s578 = smul.addr %s577, 4
          %s579 = scalar_lea.vmem %s3, %s578
        $region60: #{multimodal_forward.5} parent=43 // pred_fallthru
          _
        // Predicated region
        $region61: #{multimodal_forward.5} parent=43 // pred_check
          %p580 = pneg %p159
        $region62: #{multimodal_forward.5} parent=43 // pred_check_branch
          %582 = sbr.rel (%p580) target = $region64
        $region63: #{multimodal_forward.5} parent=43 // pred_region
          %s583 = sand.u32 %s35, 1
          %s584 = scalar_lea.sflag [#allocation7], %s583
          %s585 = sand.u32 %s149, 1
          %s586 = smul.addr %s585, 8
          %s587 = scalar_lea.vmem [#allocation6], %s586
          %s589 = ssub.s32 128, 128
          %590 = vsyncadd %s584, %s589
          %s591 = smul.addr %s35, 8
          %s592 = smul.addr %s591, 16
          %s593 = scalar_lea.hbm %s4, %s592
          %s595 = sshll.u32 %s587, 4
          %s596 = int_to_ptr.vmem [resolvable:$true] %s595
          %598 = dma.hbm_to_vmem [thread:$0]  %s593, 128, %s596, %s584
        $region64: #{multimodal_forward.5} parent=43 // pred_fallthru
          _
        // Predicated region
        $region65: #{multimodal_forward.5} parent=43 // pred_check
          %p599 = pneg %p185
        $region66: #{multimodal_forward.5} parent=43 // pred_check_branch
          %601 = sbr.rel (%p599) target = $region68
        $region67: #{multimodal_forward.5} parent=43 // pred_region
          %s602 = sand.u32 %s35, 1
          %s603 = scalar_lea.sflag [#allocation7], %s602
          %s604 = sand.u32 %s175, 1
          %s605 = smul.addr %s604, 2048
          %s606 = scalar_lea.vmem [#allocation8], %s605
          %s608 = ssub.s32 32768, 32768
          %609 = vsyncadd %s603, %s608
          %s610 = smul.addr %s35, 512
          %s611 = smul.addr %s610, 64
          %s612 = scalar_lea.hbm %s5, %s611
          %s613 = sshll.u32 %s606, 4
          %s614 = int_to_ptr.vmem [resolvable:$true] %s613
          %619 = dma.hbm_to_vmem [thread:$0]  %s612, 32768, %s614, %s603, 256, 256, 16
        $region68: #{multimodal_forward.5} parent=43 // pred_fallthru
          _
        // Predicated region
        $region69: #{multimodal_forward.5} parent=43 // pred_check
          %p620 = pneg %p211
        $region70: #{multimodal_forward.5} parent=43 // pred_check_branch
          %622 = sbr.rel (%p620) target = $region72
        $region71: #{multimodal_forward.5} parent=43 // pred_region
          %p623 = scmp.lt.s32.totalorder %s35, 2
          %s624 = scalar_select %p623, %s35, 2
          %s625 = smul.addr %s624, 4
          %s626 = scalar_lea.vmem %s6, %s625
        $region72: #{multimodal_forward.5} parent=43 // pred_fallthru
          _
        // Predicated region
        $region73: #{multimodal_forward.5} parent=43 // pred_check
          %p627 = pneg %p237
        $region74: #{multimodal_forward.5} parent=43 // pred_check_branch
          %629 = sbr.rel (%p627) target = $region76
        $region75: #{multimodal_forward.5} parent=43 // pred_region
          %p630 = scmp.lt.s32.totalorder %s35, 2
          %s631 = scalar_select %p630, %s35, 2
          %s632 = smul.addr %s631, 256
          %s633 = smul.addr %s632, 4
          %s634 = scalar_lea.vmem %s7, %s633
        $region76: #{multimodal_forward.5} parent=43 // pred_fallthru
          _
        // Predicated region
        $region77: #{multimodal_forward.5} parent=43 // pred_check
          %p635 = pneg %p263
        $region78: #{multimodal_forward.5} parent=43 // pred_check_branch
          %637 = sbr.rel (%p635) target = $region80
        $region79: #{multimodal_forward.5} parent=43 // pred_region
          %s638 = sand.u32 %s35, 1
          %s639 = scalar_lea.sflag [#allocation10], %s638
          %s640 = sand.u32 %s253, 1
          %s641 = smul.addr %s640, 4
          %s642 = scalar_lea.vmem [#allocation9], %s641
          %s644 = ssub.s32 64, 64
          %645 = vsyncadd %s639, %s644
          %s646 = smul.addr %s35, 4
          %s647 = smul.addr %s646, 16
          %s648 = scalar_lea.hbm %s8, %s647
          %s650 = sshll.u32 %s642, 4
          %s651 = int_to_ptr.vmem [resolvable:$true] %s650
          %653 = dma.hbm_to_vmem [thread:$0]  %s648, 64, %s651, %s639
        $region80: #{multimodal_forward.5} parent=43 // pred_fallthru
          _
        // Predicated region
        $region81: #{multimodal_forward.5} parent=43 // pred_check
          %p654 = pneg %p289
        $region82: #{multimodal_forward.5} parent=43 // pred_check_branch
          %656 = sbr.rel (%p654) target = $region84
        $region83: #{multimodal_forward.5} parent=43 // pred_region
          %s657 = sand.u32 %s35, 1
          %s658 = scalar_lea.sflag [#allocation10], %s657
          %s659 = sand.u32 %s279, 1
          %s660 = smul.addr %s659, 1024
          %s661 = scalar_lea.vmem [#allocation11], %s660
          %s663 = ssub.s32 16384, 16384
          %664 = vsyncadd %s658, %s663
          %s665 = smul.addr %s35, 256
          %s666 = smul.addr %s665, 64
          %s667 = scalar_lea.hbm %s9, %s666
          %s668 = sshll.u32 %s661, 4
          %s669 = int_to_ptr.vmem [resolvable:$true] %s668
          %674 = dma.hbm_to_vmem [thread:$0]  %s667, 16384, %s669, %s658, 256, 256, 16
        $region84: #{multimodal_forward.5} parent=43 // pred_fallthru
          _
      $region44: #{multimodal_forward.5} parent=5 // pred_fallthru
        _
      %p675 = scmp.le.s32.totalorder 1, %s35
      %p676 = scmp.lt.s32.totalorder %s35, 4
      %p677 = pnand %p675, %p676
      %p678 = pneg %p677
      // Predicated region
      $region85: #{multimodal_forward.5} parent=5 // pred_check
        _
      $region86: #{multimodal_forward.5} parent=5 // pred_check_branch
        %680 = sbr.rel (%p677) target = $region88
      $region87: #{multimodal_forward.5} parent=5 // pred_region
        %s681 = ssub.s32 %s35, 1
        %s682 = sand.u32 %s74, 1
        %s683 = scalar_lea.sflag [#allocation4], %s682
        %s684 = sand.u32 %s74, 1
        %s685 = smul.addr %s684, 64
        %s686 = scalar_lea.vmem [#allocation3], %s685
        // Predicated region
        $region89: #{multimodal_forward.5} parent=87 // pred_check
          %p687 = pneg %p87
        $region90: #{multimodal_forward.5} parent=87 // pred_check_branch
          %689 = sbr.rel (%p687) target = $region92
        $region91: #{multimodal_forward.5} parent=87 // pred_region
          %690 = dma.done %s683, 1024
        $region92: #{multimodal_forward.5} parent=87 // pred_fallthru
          _
        %s691 = sand.u32 %s40, 1
        %s692 = scalar_lea.sflag [#allocation7], %s691
        %s693 = sand.u32 %s152, 1
        %s694 = smul.addr %s693, 8
        %s695 = scalar_lea.vmem [#allocation6], %s694
        // Predicated region
        $region93: #{multimodal_forward.5} parent=87 // pred_check
          %p696 = pneg %p165
        $region94: #{multimodal_forward.5} parent=87 // pred_check_branch
          %698 = sbr.rel (%p696) target = $region96
        $region95: #{multimodal_forward.5} parent=87 // pred_region
          %699 = dma.done %s692, 128
        $region96: #{multimodal_forward.5} parent=87 // pred_fallthru
          _
        %s700 = sand.u32 %s40, 1
        %s701 = scalar_lea.sflag [#allocation7], %s700
        %s702 = sand.u32 %s178, 1
        %s703 = smul.addr %s702, 2048
        %s704 = scalar_lea.vmem [#allocation8], %s703
        // Predicated region
        $region97: #{multimodal_forward.5} parent=87 // pred_check
          %p705 = pneg %p191
        $region98: #{multimodal_forward.5} parent=87 // pred_check_branch
          %707 = sbr.rel (%p705) target = $region100
        $region99: #{multimodal_forward.5} parent=87 // pred_region
          %708 = dma.done %s701, 32768
        $region100: #{multimodal_forward.5} parent=87 // pred_fallthru
          _
        %s709 = sand.u32 %s40, 1
        %s710 = scalar_lea.sflag [#allocation10], %s709
        %s711 = sand.u32 %s256, 1
        %s712 = smul.addr %s711, 4
        %s713 = scalar_lea.vmem [#allocation9], %s712
        // Predicated region
        $region101: #{multimodal_forward.5} parent=87 // pred_check
          %p714 = pneg %p269
        $region102: #{multimodal_forward.5} parent=87 // pred_check_branch
          %716 = sbr.rel (%p714) target = $region104
        $region103: #{multimodal_forward.5} parent=87 // pred_region
          %717 = dma.done %s710, 64
        $region104: #{multimodal_forward.5} parent=87 // pred_fallthru
          _
        %s718 = sand.u32 %s40, 1
        %s719 = scalar_lea.sflag [#allocation10], %s718
        %s720 = sand.u32 %s282, 1
        %s721 = smul.addr %s720, 1024
        %s722 = scalar_lea.vmem [#allocation11], %s721
        // Predicated region
        $region105: #{multimodal_forward.5} parent=87 // pred_check
          %p723 = pneg %p295
        $region106: #{multimodal_forward.5} parent=87 // pred_check_branch
          %725 = sbr.rel (%p723) target = $region108
        $region107: #{multimodal_forward.5} parent=87 // pred_region
          %726 = dma.done %s719, 16384
        $region108: #{multimodal_forward.5} parent=87 // pred_fallthru
          _
        // Predicated region
        $region109: #{multimodal_forward.5} parent=87 // pred_check
          %p727 = pneg %p337
        $region110: #{multimodal_forward.5} parent=87 // pred_check_branch
          %729 = sbr.rel (%p727) target = $region112
        $region111: #{multimodal_forward.5} parent=87 // pred_region
          %730 = dma.done [#allocation13], 8192
        $region112: #{multimodal_forward.5} parent=87 // pred_fallthru
          _
        // Predicated region
        $region113: #{multimodal_forward.5} parent=87 // pred_check
          %p731 = pneg %p358
        $region114: #{multimodal_forward.5} parent=87 // pred_check_branch
          %733 = sbr.rel (%p731) target = $region116
        $region115: #{multimodal_forward.5} parent=87 // pred_region
          %734 = dma.done [#allocation13], 32
        $region116: #{multimodal_forward.5} parent=87 // pred_fallthru
          _
        // Predicated region
        $region117: #{multimodal_forward.5} parent=87 // pred_check
          %p735 = pneg %p400
        $region118: #{multimodal_forward.5} parent=87 // pred_check_branch
          %737 = sbr.rel (%p735) target = $region120
        $region119: #{multimodal_forward.5} parent=87 // pred_region
          %738 = dma.done [#allocation16], 16
        $region120: #{multimodal_forward.5} parent=87 // pred_fallthru
          _
        // Predicated region
        $region121: #{multimodal_forward.5} parent=87 // pred_check
          %p739 = pneg %p442
        $region122: #{multimodal_forward.5} parent=87 // pred_check_branch
          %741 = sbr.rel (%p739) target = $region124
        $region123: #{multimodal_forward.5} parent=87 // pred_region
          %742 = dma.done [#allocation16], 16
        $region124: #{multimodal_forward.5} parent=87 // pred_fallthru
          _
        %p743 = scmp.lt.s32.totalorder %s40, 2
        %s744 = scalar_select %p743, %s40, 2
        %s745 = smul.addr %s744, 2
        %s746 = scalar_lea.vmem %s0, %s745
        %p747 = pneg %p61
        %p748 = pneg %p58
        %s749 = sand.u32 %s74, 1
        %s750 = scalar_lea.sflag [#allocation4], %s749
        %s751 = sand.u32 %s74, 1
        %s752 = smul.addr %s751, 64
        %s753 = scalar_lea.vmem [#allocation3], %s752
        %p754 = pneg %p87
        %p755 = pneg %p84
        %p756 = scmp.lt.s32.totalorder %s40, 2
        %s757 = scalar_select %p756, %s40, 2
        %s758 = smul.addr %s757, 8
        %s759 = scalar_lea.vmem %s2, %s758
        %p760 = pneg %p113
        %p761 = pneg %p110
        %p762 = scmp.lt.s32.totalorder %s40, 2
        %s763 = scalar_select %p762, %s40, 2
        %s764 = smul.addr %s763, 1024
        %s765 = smul.addr %s764, 4
        %s766 = scalar_lea.vmem %s3, %s765
        %p767 = pneg %p139
        %p768 = pneg %p136
        %s769 = sand.u32 %s40, 1
        %s770 = scalar_lea.sflag [#allocation7], %s769
        %s771 = sand.u32 %s152, 1
        %s772 = smul.addr %s771, 8
        %s773 = scalar_lea.vmem [#allocation6], %s772
        %p774 = pneg %p165
        %p775 = pneg %p162
        %s776 = sand.u32 %s40, 1
        %s777 = scalar_lea.sflag [#allocation7], %s776
        %s778 = sand.u32 %s178, 1
        %s779 = smul.addr %s778, 2048
        %s780 = scalar_lea.vmem [#allocation8], %s779
        %p781 = pneg %p191
        %p782 = pneg %p188
        %p783 = scmp.lt.s32.totalorder %s40, 2
        %s784 = scalar_select %p783, %s40, 2
        %s785 = smul.addr %s784, 4
        %s786 = scalar_lea.vmem %s6, %s785
        %p787 = pneg %p217
        %p788 = pneg %p214
        %p789 = scmp.lt.s32.totalorder %s40, 2
        %s790 = scalar_select %p789, %s40, 2
        %s791 = smul.addr %s790, 256
        %s792 = smul.addr %s791, 4
        %s793 = scalar_lea.vmem %s7, %s792
        %p794 = pneg %p243
        %p795 = pneg %p240
        %s796 = sand.u32 %s40, 1
        %s797 = scalar_lea.sflag [#allocation10], %s796
        %s798 = sand.u32 %s256, 1
        %s799 = smul.addr %s798, 4
        %s800 = scalar_lea.vmem [#allocation9], %s799
        %p801 = pneg %p269
        %p802 = pneg %p266
        %s803 = sand.u32 %s40, 1
        %s804 = scalar_lea.sflag [#allocation10], %s803
        %s805 = sand.u32 %s282, 1
        %s806 = smul.addr %s805, 1024
        %s807 = scalar_lea.vmem [#allocation11], %s806
        %p808 = pneg %p295
        %p809 = pneg %p292
        %p810 = pneg %p316
        %p811 = pneg %p313
        %p812 = pneg %p337
        %p813 = pneg %p334
        %p814 = pneg %p358
        %p815 = pneg %p355
        %p816 = pneg %p379
        %p817 = pneg %p376
        %p818 = pneg %p400
        %p819 = pneg %p397
        %p820 = pneg %p421
        %p821 = pneg %p418
        %p822 = pneg %p442
        %p823 = pneg %p439
        %p824 = pneg %p463
        %p825 = pneg %p460
        %p826 = scmp.lt.s32.totalorder %s40, 2
        %s827 = scalar_select %p826, %s40, 2
        %s828 = smul.addr %s827, 2
        %s829 = scalar_lea.vmem %s0, %s828
        %p830 = scmp.lt.s32.totalorder %s40, 2
        %s831 = scalar_select %p830, %s40, 2
        %s832 = smul.addr %s831, 8
        %s833 = scalar_lea.vmem %s2, %s832
        %p834 = scmp.lt.s32.totalorder %s40, 2
        %s835 = scalar_select %p834, %s40, 2
        %s836 = smul.addr %s835, 1024
        %s837 = smul.addr %s836, 4
        %s838 = scalar_lea.vmem %s3, %s837
        %p839 = scmp.lt.s32.totalorder %s40, 2
        %s840 = scalar_select %p839, %s40, 2
        %s841 = smul.addr %s840, 4
        %s842 = scalar_lea.vmem %s6, %s841
        %p843 = scmp.lt.s32.totalorder %s40, 2
        %s844 = scalar_select %p843, %s40, 2
        %s845 = smul.addr %s844, 256
        %s846 = smul.addr %s845, 4
        %s847 = scalar_lea.vmem %s7, %s846
        %v849 = vld [vmem:[%s829] sm:$0x3]
        %v850 = vpack.c.bf16 %v849, %v849
        %v851 = vld [vmem:[%s686] sm:$0xff]
        %v852 = vld [vmem:[%s686 + $0x8] sm:$0xff]
        %v853 = vld [vmem:[%s686 + $0x10] sm:$0xff]
        %v854 = vld [vmem:[%s686 + $0x18] sm:$0xff]
        %v855 = vld [vmem:[%s686 + $0x20] sm:$0xff]
        %v856 = vld [vmem:[%s686 + $0x28] sm:$0xff]
        %v857 = vld [vmem:[%s686 + $0x30] sm:$0xff]
        %v858 = vld [vmem:[%s686 + $0x38] sm:$0xff]
        %v859 = vld [vmem:[%s833] sm:$0xff]
        %v861 = vlaneseq
        %v862 = vshrl.u32 %v861, 7
        %v863 = vsub.s32 0, %v862
        %v864 = vrot.slane %v859, %v863
        %v865 = vlaneseq
        %v866 = vshrl.u32 %v865, 7
        %v867 = vsub.s32 1, %v866
        %v868 = vrot.slane %v859, %v867
        %v869 = vlaneseq
        %v870 = vshrl.u32 %v869, 7
        %v871 = vsub.s32 2, %v870
        %v872 = vrot.slane %v859, %v871
        %v873 = vlaneseq
        %v874 = vshrl.u32 %v873, 7
        %v875 = vsub.s32 3, %v874
        %v876 = vrot.slane %v859, %v875
        %v877 = vlaneseq
        %v878 = vshrl.u32 %v877, 7
        %v879 = vsub.s32 4, %v878
        %v880 = vrot.slane %v859, %v879
        %v881 = vlaneseq
        %v882 = vshrl.u32 %v881, 7
        %v883 = vsub.s32 5, %v882
        %v884 = vrot.slane %v859, %v883
        %v885 = vlaneseq
        %v886 = vshrl.u32 %v885, 7
        %v887 = vsub.s32 6, %v886
        %v888 = vrot.slane %v859, %v887
        %v889 = vlaneseq
        %v890 = vshrl.u32 %v889, 7
        %v891 = vsub.s32 7, %v890
        %v892 = vrot.slane %v859, %v891
        %v909 = vunpack.c.l.b16 %v851
        %v910 = vunpack.c.h.b16 %v851
        %v911 = vunpack.c.l.b16 %v852
        %v912 = vunpack.c.h.b16 %v852
        %v913 = vunpack.c.l.b16 %v853
        %v914 = vunpack.c.h.b16 %v853
        %v915 = vunpack.c.l.b16 %v854
        %v916 = vunpack.c.h.b16 %v854
        %v917 = vunpack.c.l.b16 %v855
        %v918 = vunpack.c.h.b16 %v855
        %v919 = vunpack.c.l.b16 %v856
        %v920 = vunpack.c.h.b16 %v856
        %v921 = vunpack.c.l.b16 %v857
        %v922 = vunpack.c.h.b16 %v857
        %v923 = vunpack.c.l.b16 %v858
        %v924 = vunpack.c.h.b16 %v858
        %v925 = vpack.c.b16 %v917, %v909
        %v926 = vpack.c.b16 %v918, %v910
        %v927 = vpack.c.b16 %v919, %v911
        %v928 = vpack.c.b16 %v920, %v912
        %v929 = vpack.c.b16 %v921, %v913
        %v930 = vpack.c.b16 %v922, %v914
        %v931 = vpack.c.b16 %v923, %v915
        %v932 = vpack.c.b16 %v924, %v916
        %vm941 = vcmask 130048
        %v943 = vsel %vm941, %v850, 0
        %945 = vmatprep.subr.bf16.mxu0 0
        %946 = vmatpush1.bf16.msra.mxu0 0
        %947 = vmatprep.subr.bf16.mxu0 0
        %948 = vmatpush1.bf16.msra.mxu0 0
        %949 = vmatprep.subr.bf16.mxu0 0
        %950 = vmatpush1.bf16.msra.mxu0 0
        %951 = vmatprep.subr.bf16.mxu0 0
        %952 = vmatpush1.bf16.msra.mxu0 0
        %953 = vmatprep.subr.bf16.mxu0 0
        %954 = vmatpush1.bf16.msra.mxu0 0
        %955 = vmatprep.subr.bf16.mxu0 0
        %956 = vmatpush1.bf16.msra.mxu0 0
        %957 = vmatprep.subr.bf16.mxu0 0
        %958 = vmatpush1.bf16.msra.mxu0 0
        %959 = vmatprep.subr.bf16.mxu0 %v926
        %960 = vmatpush1.bf16.msra.mxu0 %v925
        %961 = vmatprep.subr.bf16.mxu0 0
        %962 = vmatpush2.bf16.msra.mxu0 0
        %963 = vmatprep.subr.bf16.mxu0 0
        %964 = vmatpush2.bf16.msra.mxu0 0
        %965 = vmatprep.subr.bf16.mxu0 0
        %966 = vmatpush2.bf16.msra.mxu0 0
        %967 = vmatprep.subr.bf16.mxu0 0
        %968 = vmatpush2.bf16.msra.mxu0 0
        %969 = vmatprep.subr.bf16.mxu0 0
        %970 = vmatpush2.bf16.msra.mxu0 0
        %971 = vmatprep.subr.bf16.mxu0 0
        %972 = vmatpush2.bf16.msra.mxu0 0
        %973 = vmatprep.subr.bf16.mxu0 0
        %974 = vmatpush2.bf16.msra.mxu0 0
        %975 = vmatprep.subr.bf16.mxu0 0
        %976 = vmatpush2.bf16.msra.mxu0 0
        %977 = vmatprep.mubr.bf16.mxu0 0
        %978 = vmatmul.mubr.bf16.gmra.mxu0 %v943
        %v979 = vpop.f32.mrf.mxu0
        %v980 = vadd.f32 %v864, %v979
        %v981 = vpop.f32.mrf.mxu0
        %v982 = vadd.f32 %v868, %v981
        %v983 = vpop.f32.mrf.mxu0
        %v984 = vpop.f32.mrf.mxu0
        %985 = vdwg.mxu0
        %986 = vmatprep.subr.bf16.mxu0 0
        %987 = vmatpush1.bf16.msra.mxu0 0
        %988 = vmatprep.subr.bf16.mxu0 0
        %989 = vmatpush1.bf16.msra.mxu0 0
        %990 = vmatprep.subr.bf16.mxu0 0
        %991 = vmatpush1.bf16.msra.mxu0 0
        %992 = vmatprep.subr.bf16.mxu0 0
        %993 = vmatpush1.bf16.msra.mxu0 0
        %994 = vmatprep.subr.bf16.mxu0 0
        %995 = vmatpush1.bf16.msra.mxu0 0
        %996 = vmatprep.subr.bf16.mxu0 0
        %997 = vmatpush1.bf16.msra.mxu0 0
        %998 = vmatprep.subr.bf16.mxu0 0
        %999 = vmatpush1.bf16.msra.mxu0 0
        %1000 = vmatprep.subr.bf16.mxu0 %v928
        %1001 = vmatpush1.bf16.msra.mxu0 %v927
        %1002 = vmatprep.subr.bf16.mxu0 0
        %1003 = vmatpush2.bf16.msra.mxu0 0
        %1004 = vmatprep.subr.bf16.mxu0 0
        %1005 = vmatpush2.bf16.msra.mxu0 0
        %1006 = vmatprep.subr.bf16.mxu0 0
        %1007 = vmatpush2.bf16.msra.mxu0 0
        %1008 = vmatprep.subr.bf16.mxu0 0
        %1009 = vmatpush2.bf16.msra.mxu0 0
        %1010 = vmatprep.subr.bf16.mxu0 0
        %1011 = vmatpush2.bf16.msra.mxu0 0
        %1012 = vmatprep.subr.bf16.mxu0 0
        %1013 = vmatpush2.bf16.msra.mxu0 0
        %1014 = vmatprep.subr.bf16.mxu0 0
        %1015 = vmatpush2.bf16.msra.mxu0 0
        %1016 = vmatprep.subr.bf16.mxu0 0
        %1017 = vmatpush2.bf16.msra.mxu0 0
        %1018 = vmatprep.mubr.bf16.mxu0 0
        %1019 = vmatmul.mubr.bf16.gmra.mxu0 %v943
        %v1020 = vpop.f32.mrf.mxu0
        %v1021 = vadd.f32 %v872, %v1020
        %v1022 = vpop.f32.mrf.mxu0
        %v1023 = vadd.f32 %v876, %v1022
        %v1024 = vpop.f32.mrf.mxu0
        %v1025 = vpop.f32.mrf.mxu0
        %1026 = vdwg.mxu0
        %1027 = vmatprep.subr.bf16.mxu0 0
        %1028 = vmatpush1.bf16.msra.mxu0 0
        %1029 = vmatprep.subr.bf16.mxu0 0
        %1030 = vmatpush1.bf16.msra.mxu0 0
        %1031 = vmatprep.subr.bf16.mxu0 0
        %1032 = vmatpush1.bf16.msra.mxu0 0
        %1033 = vmatprep.subr.bf16.mxu0 0
        %1034 = vmatpush1.bf16.msra.mxu0 0
        %1035 = vmatprep.subr.bf16.mxu0 0
        %1036 = vmatpush1.bf16.msra.mxu0 0
        %1037 = vmatprep.subr.bf16.mxu0 0
        %1038 = vmatpush1.bf16.msra.mxu0 0
        %1039 = vmatprep.subr.bf16.mxu0 0
        %1040 = vmatpush1.bf16.msra.mxu0 0
        %1041 = vmatprep.subr.bf16.mxu0 %v930
        %1042 = vmatpush1.bf16.msra.mxu0 %v929
        %1043 = vmatprep.subr.bf16.mxu0 0
        %1044 = vmatpush2.bf16.msra.mxu0 0
        %1045 = vmatprep.subr.bf16.mxu0 0
        %1046 = vmatpush2.bf16.msra.mxu0 0
        %1047 = vmatprep.subr.bf16.mxu0 0
        %1048 = vmatpush2.bf16.msra.mxu0 0
        %1049 = vmatprep.subr.bf16.mxu0 0
        %1050 = vmatpush2.bf16.msra.mxu0 0
        %1051 = vmatprep.subr.bf16.mxu0 0
        %1052 = vmatpush2.bf16.msra.mxu0 0
        %1053 = vmatprep.subr.bf16.mxu0 0
        %1054 = vmatpush2.bf16.msra.mxu0 0
        %1055 = vmatprep.subr.bf16.mxu0 0
        %1056 = vmatpush2.bf16.msra.mxu0 0
        %1057 = vmatprep.subr.bf16.mxu0 0
        %1058 = vmatpush2.bf16.msra.mxu0 0
        %1059 = vmatprep.mubr.bf16.mxu0 0
        %1060 = vmatmul.mubr.bf16.gmra.mxu0 %v943
        %v1061 = vpop.f32.mrf.mxu0
        %v1062 = vadd.f32 %v880, %v1061
        %v1063 = vpop.f32.mrf.mxu0
        %v1064 = vadd.f32 %v884, %v1063
        %v1065 = vpop.f32.mrf.mxu0
        %v1066 = vpop.f32.mrf.mxu0
        %1067 = vdwg.mxu0
        %1068 = vmatprep.subr.bf16.mxu0 0
        %1069 = vmatpush1.bf16.msra.mxu0 0
        %1070 = vmatprep.subr.bf16.mxu0 0
        %1071 = vmatpush1.bf16.msra.mxu0 0
        %1072 = vmatprep.subr.bf16.mxu0 0
        %1073 = vmatpush1.bf16.msra.mxu0 0
        %1074 = vmatprep.subr.bf16.mxu0 0
        %1075 = vmatpush1.bf16.msra.mxu0 0
        %1076 = vmatprep.subr.bf16.mxu0 0
        %1077 = vmatpush1.bf16.msra.mxu0 0
        %1078 = vmatprep.subr.bf16.mxu0 0
        %1079 = vmatpush1.bf16.msra.mxu0 0
        %1080 = vmatprep.subr.bf16.mxu0 0
        %1081 = vmatpush1.bf16.msra.mxu0 0
        %1082 = vmatprep.subr.bf16.mxu0 %v932
        %1083 = vmatpush1.bf16.msra.mxu0 %v931
        %1084 = vmatprep.subr.bf16.mxu0 0
        %1085 = vmatpush2.bf16.msra.mxu0 0
        %1086 = vmatprep.subr.bf16.mxu0 0
        %1087 = vmatpush2.bf16.msra.mxu0 0
        %1088 = vmatprep.subr.bf16.mxu0 0
        %1089 = vmatpush2.bf16.msra.mxu0 0
        %1090 = vmatprep.subr.bf16.mxu0 0
        %1091 = vmatpush2.bf16.msra.mxu0 0
        %1092 = vmatprep.subr.bf16.mxu0 0
        %1093 = vmatpush2.bf16.msra.mxu0 0
        %1094 = vmatprep.subr.bf16.mxu0 0
        %1095 = vmatpush2.bf16.msra.mxu0 0
        %1096 = vmatprep.subr.bf16.mxu0 0
        %1097 = vmatpush2.bf16.msra.mxu0 0
        %1098 = vmatprep.subr.bf16.mxu0 0
        %1099 = vmatpush2.bf16.msra.mxu0 0
        %1100 = vmatprep.mubr.bf16.mxu0 0
        %1101 = vmatmul.mubr.bf16.gmra.mxu0 %v943
        %v1102 = vpop.f32.mrf.mxu0
        %v1103 = vadd.f32 %v888, %v1102
        %v1104 = vpop.f32.mrf.mxu0
        %v1105 = vadd.f32 %v892, %v1104
        %v1106 = vpop.f32.mrf.mxu0
        %v1107 = vpop.f32.mrf.mxu0
        %1108 = vdwg.mxu0
        %v1109 = vmax.f32 %v980, 0.0
        %v1110 = vmax.f32 %v982, 0.0
        %v1111 = vmax.f32 %v1021, 0.0
        %v1112 = vmax.f32 %v1023, 0.0
        %v1113 = vmax.f32 %v1062, 0.0
        %v1114 = vmax.f32 %v1064, 0.0
        %v1115 = vmax.f32 %v1103, 0.0
        %v1116 = vmax.f32 %v1105, 0.0
        %v1117 = vpack.c.bf16 %v1109, %v1109
        %v1118 = vpack.c.bf16 %v1110, %v1110
        %v1119 = vpack.c.bf16 %v1111, %v1111
        %v1120 = vpack.c.bf16 %v1112, %v1112
        %v1121 = vpack.c.bf16 %v1113, %v1113
        %v1122 = vpack.c.bf16 %v1114, %v1114
        %v1123 = vpack.c.bf16 %v1115, %v1115
        %v1124 = vpack.c.bf16 %v1116, %v1116
        %v1125 = vld [vmem:[%s838] sm:$0xff]
        %v1126 = vld [vmem:[%s838 + $0x8] sm:$0xff]
        %v1127 = vld [vmem:[%s838 + $0x10] sm:$0xff]
        %v1128 = vld [vmem:[%s838 + $0x18] sm:$0xff]
        %v1129 = vld [vmem:[%s838 + $0x20] sm:$0xff]
        %v1130 = vld [vmem:[%s838 + $0x28] sm:$0xff]
        %v1131 = vld [vmem:[%s838 + $0x30] sm:$0xff]
        %v1132 = vld [vmem:[%s838 + $0x38] sm:$0xff]
        %v1133 = vld [vmem:[%s838 + $0x40] sm:$0xff]
        %v1134 = vld [vmem:[%s838 + $0x48] sm:$0xff]
        %v1135 = vld [vmem:[%s838 + $0x50] sm:$0xff]
        %v1136 = vld [vmem:[%s838 + $0x58] sm:$0xff]
        %v1137 = vld [vmem:[%s838 + $0x60] sm:$0xff]
        %v1138 = vld [vmem:[%s838 + $0x68] sm:$0xff]
        %v1139 = vld [vmem:[%s838 + $0x70] sm:$0xff]
        %v1140 = vld [vmem:[%s838 + $0x78] sm:$0xff]
        %v1141 = vld [vmem:[%s838 + $0x80] sm:$0xff]
        %v1142 = vld [vmem:[%s838 + $0x88] sm:$0xff]
        %v1143 = vld [vmem:[%s838 + $0x90] sm:$0xff]
        %v1144 = vld [vmem:[%s838 + $0x98] sm:$0xff]
        %v1145 = vld [vmem:[%s838 + $0xa0] sm:$0xff]
        %v1146 = vld [vmem:[%s838 + $0xa8] sm:$0xff]
        %v1147 = vld [vmem:[%s838 + $0xb0] sm:$0xff]
        %v1148 = vld [vmem:[%s838 + $0xb8] sm:$0xff]
        %v1149 = vld [vmem:[%s838 + $0xc0] sm:$0xff]
        %v1150 = vld [vmem:[%s838 + $0xc8] sm:$0xff]
        %v1151 = vld [vmem:[%s838 + $0xd0] sm:$0xff]
        %v1152 = vld [vmem:[%s838 + $0xd8] sm:$0xff]
        %v1153 = vld [vmem:[%s838 + $0xe0] sm:$0xff]
        %v1154 = vld [vmem:[%s838 + $0xe8] sm:$0xff]
        %v1155 = vld [vmem:[%s838 + $0xf0] sm:$0xff]
        %v1156 = vld [vmem:[%s838 + $0xf8] sm:$0xff]
        %v1157 = vld [vmem:[%s838 + $0x100] sm:$0xff]
        %v1158 = vld [vmem:[%s838 + $0x108] sm:$0xff]
        %v1159 = vld [vmem:[%s838 + $0x110] sm:$0xff]
        %v1160 = vld [vmem:[%s838 + $0x118] sm:$0xff]
        %v1161 = vld [vmem:[%s838 + $0x120] sm:$0xff]
        %v1162 = vld [vmem:[%s838 + $0x128] sm:$0xff]
        %v1163 = vld [vmem:[%s838 + $0x130] sm:$0xff]
        %v1164 = vld [vmem:[%s838 + $0x138] sm:$0xff]
        %v1165 = vld [vmem:[%s838 + $0x140] sm:$0xff]
        %v1166 = vld [vmem:[%s838 + $0x148] sm:$0xff]
        %v1167 = vld [vmem:[%s838 + $0x150] sm:$0xff]
        %v1168 = vld [vmem:[%s838 + $0x158] sm:$0xff]
        %v1169 = vld [vmem:[%s838 + $0x160] sm:$0xff]
        %v1170 = vld [vmem:[%s838 + $0x168] sm:$0xff]
        %v1171 = vld [vmem:[%s838 + $0x170] sm:$0xff]
        %v1172 = vld [vmem:[%s838 + $0x178] sm:$0xff]
        %v1173 = vld [vmem:[%s838 + $0x180] sm:$0xff]
        %v1174 = vld [vmem:[%s838 + $0x188] sm:$0xff]
        %v1175 = vld [vmem:[%s838 + $0x190] sm:$0xff]
        %v1176 = vld [vmem:[%s838 + $0x198] sm:$0xff]
        %v1177 = vld [vmem:[%s838 + $0x1a0] sm:$0xff]
        %v1178 = vld [vmem:[%s838 + $0x1a8] sm:$0xff]
        %v1179 = vld [vmem:[%s838 + $0x1b0] sm:$0xff]
        %v1180 = vld [vmem:[%s838 + $0x1b8] sm:$0xff]
        %v1181 = vld [vmem:[%s838 + $0x1c0] sm:$0xff]
        %v1182 = vld [vmem:[%s838 + $0x1c8] sm:$0xff]
        %v1183 = vld [vmem:[%s838 + $0x1d0] sm:$0xff]
        %v1184 = vld [vmem:[%s838 + $0x1d8] sm:$0xff]
        %v1185 = vld [vmem:[%s838 + $0x1e0] sm:$0xff]
        %v1186 = vld [vmem:[%s838 + $0x1e8] sm:$0xff]
        %v1187 = vld [vmem:[%s838 + $0x1f0] sm:$0xff]
        %v1188 = vld [vmem:[%s838 + $0x1f8] sm:$0xff]
        %v1189 = vld [vmem:[%s838 + $0x200] sm:$0xff]
        %v1190 = vld [vmem:[%s838 + $0x208] sm:$0xff]
        %v1191 = vld [vmem:[%s838 + $0x210] sm:$0xff]
        %v1192 = vld [vmem:[%s838 + $0x218] sm:$0xff]
        %v1193 = vld [vmem:[%s838 + $0x220] sm:$0xff]
        %v1194 = vld [vmem:[%s838 + $0x228] sm:$0xff]
        %v1195 = vld [vmem:[%s838 + $0x230] sm:$0xff]
        %v1196 = vld [vmem:[%s838 + $0x238] sm:$0xff]
        %v1197 = vld [vmem:[%s838 + $0x240] sm:$0xff]
        %v1198 = vld [vmem:[%s838 + $0x248] sm:$0xff]
        %v1199 = vld [vmem:[%s838 + $0x250] sm:$0xff]
        %v1200 = vld [vmem:[%s838 + $0x258] sm:$0xff]
        %v1201 = vld [vmem:[%s838 + $0x260] sm:$0xff]
        %v1202 = vld [vmem:[%s838 + $0x268] sm:$0xff]
        %v1203 = vld [vmem:[%s838 + $0x270] sm:$0xff]
        %v1204 = vld [vmem:[%s838 + $0x278] sm:$0xff]
        %v1205 = vld [vmem:[%s838 + $0x280] sm:$0xff]
        %v1206 = vld [vmem:[%s838 + $0x288] sm:$0xff]
        %v1207 = vld [vmem:[%s838 + $0x290] sm:$0xff]
        %v1208 = vld [vmem:[%s838 + $0x298] sm:$0xff]
        %v1209 = vld [vmem:[%s838 + $0x2a0] sm:$0xff]
        %v1210 = vld [vmem:[%s838 + $0x2a8] sm:$0xff]
        %v1211 = vld [vmem:[%s838 + $0x2b0] sm:$0xff]
        %v1212 = vld [vmem:[%s838 + $0x2b8] sm:$0xff]
        %v1213 = vld [vmem:[%s838 + $0x2c0] sm:$0xff]
        %v1214 = vld [vmem:[%s838 + $0x2c8] sm:$0xff]
        %v1215 = vld [vmem:[%s838 + $0x2d0] sm:$0xff]
        %v1216 = vld [vmem:[%s838 + $0x2d8] sm:$0xff]
        %v1217 = vld [vmem:[%s838 + $0x2e0] sm:$0xff]
        %v1218 = vld [vmem:[%s838 + $0x2e8] sm:$0xff]
        %v1219 = vld [vmem:[%s838 + $0x2f0] sm:$0xff]
        %v1220 = vld [vmem:[%s838 + $0x2f8] sm:$0xff]
        %v1221 = vld [vmem:[%s838 + $0x300] sm:$0xff]
        %v1222 = vld [vmem:[%s838 + $0x308] sm:$0xff]
        %v1223 = vld [vmem:[%s838 + $0x310] sm:$0xff]
        %v1224 = vld [vmem:[%s838 + $0x318] sm:$0xff]
        %v1225 = vld [vmem:[%s838 + $0x320] sm:$0xff]
        %v1226 = vld [vmem:[%s838 + $0x328] sm:$0xff]
        %v1227 = vld [vmem:[%s838 + $0x330] sm:$0xff]
        %v1228 = vld [vmem:[%s838 + $0x338] sm:$0xff]
        %v1229 = vld [vmem:[%s838 + $0x340] sm:$0xff]
        %v1230 = vld [vmem:[%s838 + $0x348] sm:$0xff]
        %v1231 = vld [vmem:[%s838 + $0x350] sm:$0xff]
        %v1232 = vld [vmem:[%s838 + $0x358] sm:$0xff]
        %v1233 = vld [vmem:[%s838 + $0x360] sm:$0xff]
        %v1234 = vld [vmem:[%s838 + $0x368] sm:$0xff]
        %v1235 = vld [vmem:[%s838 + $0x370] sm:$0xff]
        %v1236 = vld [vmem:[%s838 + $0x378] sm:$0xff]
        %v1237 = vld [vmem:[%s838 + $0x380] sm:$0xff]
        %v1238 = vld [vmem:[%s838 + $0x388] sm:$0xff]
        %v1239 = vld [vmem:[%s838 + $0x390] sm:$0xff]
        %v1240 = vld [vmem:[%s838 + $0x398] sm:$0xff]
        %v1241 = vld [vmem:[%s838 + $0x3a0] sm:$0xff]
        %v1242 = vld [vmem:[%s838 + $0x3a8] sm:$0xff]
        %v1243 = vld [vmem:[%s838 + $0x3b0] sm:$0xff]
        %v1244 = vld [vmem:[%s838 + $0x3b8] sm:$0xff]
        %v1245 = vld [vmem:[%s838 + $0x3c0] sm:$0xff]
        %v1246 = vld [vmem:[%s838 + $0x3c8] sm:$0xff]
        %v1247 = vld [vmem:[%s838 + $0x3d0] sm:$0xff]
        %v1248 = vld [vmem:[%s838 + $0x3d8] sm:$0xff]
        %v1249 = vld [vmem:[%s838 + $0x3e0] sm:$0xff]
        %v1250 = vld [vmem:[%s838 + $0x3e8] sm:$0xff]
        %v1251 = vld [vmem:[%s838 + $0x3f0] sm:$0xff]
        %v1252 = vld [vmem:[%s838 + $0x3f8] sm:$0xff]
        %v1253 = vld [vmem:[%s838 + $0x400] sm:$0xff]
        %v1254 = vld [vmem:[%s838 + $0x408] sm:$0xff]
        %v1255 = vld [vmem:[%s838 + $0x410] sm:$0xff]
        %v1256 = vld [vmem:[%s838 + $0x418] sm:$0xff]
        %v1257 = vld [vmem:[%s838 + $0x420] sm:$0xff]
        %v1258 = vld [vmem:[%s838 + $0x428] sm:$0xff]
        %v1259 = vld [vmem:[%s838 + $0x430] sm:$0xff]
        %v1260 = vld [vmem:[%s838 + $0x438] sm:$0xff]
        %v1261 = vld [vmem:[%s838 + $0x440] sm:$0xff]
        %v1262 = vld [vmem:[%s838 + $0x448] sm:$0xff]
        %v1263 = vld [vmem:[%s838 + $0x450] sm:$0xff]
        %v1264 = vld [vmem:[%s838 + $0x458] sm:$0xff]
        %v1265 = vld [vmem:[%s838 + $0x460] sm:$0xff]
        %v1266 = vld [vmem:[%s838 + $0x468] sm:$0xff]
        %v1267 = vld [vmem:[%s838 + $0x470] sm:$0xff]
        %v1268 = vld [vmem:[%s838 + $0x478] sm:$0xff]
        %v1269 = vld [vmem:[%s838 + $0x480] sm:$0xff]
        %v1270 = vld [vmem:[%s838 + $0x488] sm:$0xff]
        %v1271 = vld [vmem:[%s838 + $0x490] sm:$0xff]
        %v1272 = vld [vmem:[%s838 + $0x498] sm:$0xff]
        %v1273 = vld [vmem:[%s838 + $0x4a0] sm:$0xff]
        %v1274 = vld [vmem:[%s838 + $0x4a8] sm:$0xff]
        %v1275 = vld [vmem:[%s838 + $0x4b0] sm:$0xff]
        %v1276 = vld [vmem:[%s838 + $0x4b8] sm:$0xff]
        %v1277 = vld [vmem:[%s838 + $0x4c0] sm:$0xff]
        %v1278 = vld [vmem:[%s838 + $0x4c8] sm:$0xff]
        %v1279 = vld [vmem:[%s838 + $0x4d0] sm:$0xff]
        %v1280 = vld [vmem:[%s838 + $0x4d8] sm:$0xff]
        %v1281 = vld [vmem:[%s838 + $0x4e0] sm:$0xff]
        %v1282 = vld [vmem:[%s838 + $0x4e8] sm:$0xff]
        %v1283 = vld [vmem:[%s838 + $0x4f0] sm:$0xff]
        %v1284 = vld [vmem:[%s838 + $0x4f8] sm:$0xff]
        %v1285 = vld [vmem:[%s838 + $0x500] sm:$0xff]
        %v1286 = vld [vmem:[%s838 + $0x508] sm:$0xff]
        %v1287 = vld [vmem:[%s838 + $0x510] sm:$0xff]
        %v1288 = vld [vmem:[%s838 + $0x518] sm:$0xff]
        %v1289 = vld [vmem:[%s838 + $0x520] sm:$0xff]
        %v1290 = vld [vmem:[%s838 + $0x528] sm:$0xff]
        %v1291 = vld [vmem:[%s838 + $0x530] sm:$0xff]
        %v1292 = vld [vmem:[%s838 + $0x538] sm:$0xff]
        %v1293 = vld [vmem:[%s838 + $0x540] sm:$0xff]
        %v1294 = vld [vmem:[%s838 + $0x548] sm:$0xff]
        %v1295 = vld [vmem:[%s838 + $0x550] sm:$0xff]
        %v1296 = vld [vmem:[%s838 + $0x558] sm:$0xff]
        %v1297 = vld [vmem:[%s838 + $0x560] sm:$0xff]
        %v1298 = vld [vmem:[%s838 + $0x568] sm:$0xff]
        %v1299 = vld [vmem:[%s838 + $0x570] sm:$0xff]
        %v1300 = vld [vmem:[%s838 + $0x578] sm:$0xff]
        %v1301 = vld [vmem:[%s838 + $0x580] sm:$0xff]
        %v1302 = vld [vmem:[%s838 + $0x588] sm:$0xff]
        %v1303 = vld [vmem:[%s838 + $0x590] sm:$0xff]
        %v1304 = vld [vmem:[%s838 + $0x598] sm:$0xff]
        %v1305 = vld [vmem:[%s838 + $0x5a0] sm:$0xff]
        %v1306 = vld [vmem:[%s838 + $0x5a8] sm:$0xff]
        %v1307 = vld [vmem:[%s838 + $0x5b0] sm:$0xff]
        %v1308 = vld [vmem:[%s838 + $0x5b8] sm:$0xff]
        %v1309 = vld [vmem:[%s838 + $0x5c0] sm:$0xff]
        %v1310 = vld [vmem:[%s838 + $0x5c8] sm:$0xff]
        %v1311 = vld [vmem:[%s838 + $0x5d0] sm:$0xff]
        %v1312 = vld [vmem:[%s838 + $0x5d8] sm:$0xff]
        %v1313 = vld [vmem:[%s838 + $0x5e0] sm:$0xff]
        %v1314 = vld [vmem:[%s838 + $0x5e8] sm:$0xff]
        %v1315 = vld [vmem:[%s838 + $0x5f0] sm:$0xff]
        %v1316 = vld [vmem:[%s838 + $0x5f8] sm:$0xff]
        %v1317 = vld [vmem:[%s838 + $0x600] sm:$0xff]
        %v1318 = vld [vmem:[%s838 + $0x608] sm:$0xff]
        %v1319 = vld [vmem:[%s838 + $0x610] sm:$0xff]
        %v1320 = vld [vmem:[%s838 + $0x618] sm:$0xff]
        %v1321 = vld [vmem:[%s838 + $0x620] sm:$0xff]
        %v1322 = vld [vmem:[%s838 + $0x628] sm:$0xff]
        %v1323 = vld [vmem:[%s838 + $0x630] sm:$0xff]
        %v1324 = vld [vmem:[%s838 + $0x638] sm:$0xff]
        %v1325 = vld [vmem:[%s838 + $0x640] sm:$0xff]
        %v1326 = vld [vmem:[%s838 + $0x648] sm:$0xff]
        %v1327 = vld [vmem:[%s838 + $0x650] sm:$0xff]
        %v1328 = vld [vmem:[%s838 + $0x658] sm:$0xff]
        %v1329 = vld [vmem:[%s838 + $0x660] sm:$0xff]
        %v1330 = vld [vmem:[%s838 + $0x668] sm:$0xff]
        %v1331 = vld [vmem:[%s838 + $0x670] sm:$0xff]
        %v1332 = vld [vmem:[%s838 + $0x678] sm:$0xff]
        %v1333 = vld [vmem:[%s838 + $0x680] sm:$0xff]
        %v1334 = vld [vmem:[%s838 + $0x688] sm:$0xff]
        %v1335 = vld [vmem:[%s838 + $0x690] sm:$0xff]
        %v1336 = vld [vmem:[%s838 + $0x698] sm:$0xff]
        %v1337 = vld [vmem:[%s838 + $0x6a0] sm:$0xff]
        %v1338 = vld [vmem:[%s838 + $0x6a8] sm:$0xff]
        %v1339 = vld [vmem:[%s838 + $0x6b0] sm:$0xff]
        %v1340 = vld [vmem:[%s838 + $0x6b8] sm:$0xff]
        %v1341 = vld [vmem:[%s838 + $0x6c0] sm:$0xff]
        %v1342 = vld [vmem:[%s838 + $0x6c8] sm:$0xff]
        %v1343 = vld [vmem:[%s838 + $0x6d0] sm:$0xff]
        %v1344 = vld [vmem:[%s838 + $0x6d8] sm:$0xff]
        %v1345 = vld [vmem:[%s838 + $0x6e0] sm:$0xff]
        %v1346 = vld [vmem:[%s838 + $0x6e8] sm:$0xff]
        %v1347 = vld [vmem:[%s838 + $0x6f0] sm:$0xff]
        %v1348 = vld [vmem:[%s838 + $0x6f8] sm:$0xff]
        %v1349 = vld [vmem:[%s838 + $0x700] sm:$0xff]
        %v1350 = vld [vmem:[%s838 + $0x708] sm:$0xff]
        %v1351 = vld [vmem:[%s838 + $0x710] sm:$0xff]
        %v1352 = vld [vmem:[%s838 + $0x718] sm:$0xff]
        %v1353 = vld [vmem:[%s838 + $0x720] sm:$0xff]
        %v1354 = vld [vmem:[%s838 + $0x728] sm:$0xff]
        %v1355 = vld [vmem:[%s838 + $0x730] sm:$0xff]
        %v1356 = vld [vmem:[%s838 + $0x738] sm:$0xff]
        %v1357 = vld [vmem:[%s838 + $0x740] sm:$0xff]
        %v1358 = vld [vmem:[%s838 + $0x748] sm:$0xff]
        %v1359 = vld [vmem:[%s838 + $0x750] sm:$0xff]
        %v1360 = vld [vmem:[%s838 + $0x758] sm:$0xff]
        %v1361 = vld [vmem:[%s838 + $0x760] sm:$0xff]
        %v1362 = vld [vmem:[%s838 + $0x768] sm:$0xff]
        %v1363 = vld [vmem:[%s838 + $0x770] sm:$0xff]
        %v1364 = vld [vmem:[%s838 + $0x778] sm:$0xff]
        %v1365 = vld [vmem:[%s838 + $0x780] sm:$0xff]
        %v1366 = vld [vmem:[%s838 + $0x788] sm:$0xff]
        %v1367 = vld [vmem:[%s838 + $0x790] sm:$0xff]
        %v1368 = vld [vmem:[%s838 + $0x798] sm:$0xff]
        %v1369 = vld [vmem:[%s838 + $0x7a0] sm:$0xff]
        %v1370 = vld [vmem:[%s838 + $0x7a8] sm:$0xff]
        %v1371 = vld [vmem:[%s838 + $0x7b0] sm:$0xff]
        %v1372 = vld [vmem:[%s838 + $0x7b8] sm:$0xff]
        %v1373 = vld [vmem:[%s838 + $0x7c0] sm:$0xff]
        %v1374 = vld [vmem:[%s838 + $0x7c8] sm:$0xff]
        %v1375 = vld [vmem:[%s838 + $0x7d0] sm:$0xff]
        %v1376 = vld [vmem:[%s838 + $0x7d8] sm:$0xff]
        %v1377 = vld [vmem:[%s838 + $0x7e0] sm:$0xff]
        %v1378 = vld [vmem:[%s838 + $0x7e8] sm:$0xff]
        %v1379 = vld [vmem:[%s838 + $0x7f0] sm:$0xff]
        %v1380 = vld [vmem:[%s838 + $0x7f8] sm:$0xff]
        %v1381 = vld [vmem:[%s838 + $0x800] sm:$0xff]
        %v1382 = vld [vmem:[%s838 + $0x808] sm:$0xff]
        %v1383 = vld [vmem:[%s838 + $0x810] sm:$0xff]
        %v1384 = vld [vmem:[%s838 + $0x818] sm:$0xff]
        %v1385 = vld [vmem:[%s838 + $0x820] sm:$0xff]
        %v1386 = vld [vmem:[%s838 + $0x828] sm:$0xff]
        %v1387 = vld [vmem:[%s838 + $0x830] sm:$0xff]
        %v1388 = vld [vmem:[%s838 + $0x838] sm:$0xff]
        %v1389 = vld [vmem:[%s838 + $0x840] sm:$0xff]
        %v1390 = vld [vmem:[%s838 + $0x848] sm:$0xff]
        %v1391 = vld [vmem:[%s838 + $0x850] sm:$0xff]
        %v1392 = vld [vmem:[%s838 + $0x858] sm:$0xff]
        %v1393 = vld [vmem:[%s838 + $0x860] sm:$0xff]
        %v1394 = vld [vmem:[%s838 + $0x868] sm:$0xff]
        %v1395 = vld [vmem:[%s838 + $0x870] sm:$0xff]
        %v1396 = vld [vmem:[%s838 + $0x878] sm:$0xff]
        %v1397 = vld [vmem:[%s838 + $0x880] sm:$0xff]
        %v1398 = vld [vmem:[%s838 + $0x888] sm:$0xff]
        %v1399 = vld [vmem:[%s838 + $0x890] sm:$0xff]
        %v1400 = vld [vmem:[%s838 + $0x898] sm:$0xff]
        %v1401 = vld [vmem:[%s838 + $0x8a0] sm:$0xff]
        %v1402 = vld [vmem:[%s838 + $0x8a8] sm:$0xff]
        %v1403 = vld [vmem:[%s838 + $0x8b0] sm:$0xff]
        %v1404 = vld [vmem:[%s838 + $0x8b8] sm:$0xff]
        %v1405 = vld [vmem:[%s838 + $0x8c0] sm:$0xff]
        %v1406 = vld [vmem:[%s838 + $0x8c8] sm:$0xff]
        %v1407 = vld [vmem:[%s838 + $0x8d0] sm:$0xff]
        %v1408 = vld [vmem:[%s838 + $0x8d8] sm:$0xff]
        %v1409 = vld [vmem:[%s838 + $0x8e0] sm:$0xff]
        %v1410 = vld [vmem:[%s838 + $0x8e8] sm:$0xff]
        %v1411 = vld [vmem:[%s838 + $0x8f0] sm:$0xff]
        %v1412 = vld [vmem:[%s838 + $0x8f8] sm:$0xff]
        %v1413 = vld [vmem:[%s838 + $0x900] sm:$0xff]
        %v1414 = vld [vmem:[%s838 + $0x908] sm:$0xff]
        %v1415 = vld [vmem:[%s838 + $0x910] sm:$0xff]
        %v1416 = vld [vmem:[%s838 + $0x918] sm:$0xff]
        %v1417 = vld [vmem:[%s838 + $0x920] sm:$0xff]
        %v1418 = vld [vmem:[%s838 + $0x928] sm:$0xff]
        %v1419 = vld [vmem:[%s838 + $0x930] sm:$0xff]
        %v1420 = vld [vmem:[%s838 + $0x938] sm:$0xff]
        %v1421 = vld [vmem:[%s838 + $0x940] sm:$0xff]
        %v1422 = vld [vmem:[%s838 + $0x948] sm:$0xff]
        %v1423 = vld [vmem:[%s838 + $0x950] sm:$0xff]
        %v1424 = vld [vmem:[%s838 + $0x958] sm:$0xff]
        %v1425 = vld [vmem:[%s838 + $0x960] sm:$0xff]
        %v1426 = vld [vmem:[%s838 + $0x968] sm:$0xff]
        %v1427 = vld [vmem:[%s838 + $0x970] sm:$0xff]
        %v1428 = vld [vmem:[%s838 + $0x978] sm:$0xff]
        %v1429 = vld [vmem:[%s838 + $0x980] sm:$0xff]
        %v1430 = vld [vmem:[%s838 + $0x988] sm:$0xff]
        %v1431 = vld [vmem:[%s838 + $0x990] sm:$0xff]
        %v1432 = vld [vmem:[%s838 + $0x998] sm:$0xff]
        %v1433 = vld [vmem:[%s838 + $0x9a0] sm:$0xff]
        %v1434 = vld [vmem:[%s838 + $0x9a8] sm:$0xff]
        %v1435 = vld [vmem:[%s838 + $0x9b0] sm:$0xff]
        %v1436 = vld [vmem:[%s838 + $0x9b8] sm:$0xff]
        %v1437 = vld [vmem:[%s838 + $0x9c0] sm:$0xff]
        %v1438 = vld [vmem:[%s838 + $0x9c8] sm:$0xff]
        %v1439 = vld [vmem:[%s838 + $0x9d0] sm:$0xff]
        %v1440 = vld [vmem:[%s838 + $0x9d8] sm:$0xff]
        %v1441 = vld [vmem:[%s838 + $0x9e0] sm:$0xff]
        %v1442 = vld [vmem:[%s838 + $0x9e8] sm:$0xff]
        %v1443 = vld [vmem:[%s838 + $0x9f0] sm:$0xff]
        %v1444 = vld [vmem:[%s838 + $0x9f8] sm:$0xff]
        %v1445 = vld [vmem:[%s838 + $0xa00] sm:$0xff]
        %v1446 = vld [vmem:[%s838 + $0xa08] sm:$0xff]
        %v1447 = vld [vmem:[%s838 + $0xa10] sm:$0xff]
        %v1448 = vld [vmem:[%s838 + $0xa18] sm:$0xff]
        %v1449 = vld [vmem:[%s838 + $0xa20] sm:$0xff]
        %v1450 = vld [vmem:[%s838 + $0xa28] sm:$0xff]
        %v1451 = vld [vmem:[%s838 + $0xa30] sm:$0xff]
        %v1452 = vld [vmem:[%s838 + $0xa38] sm:$0xff]
        %v1453 = vld [vmem:[%s838 + $0xa40] sm:$0xff]
        %v1454 = vld [vmem:[%s838 + $0xa48] sm:$0xff]
        %v1455 = vld [vmem:[%s838 + $0xa50] sm:$0xff]
        %v1456 = vld [vmem:[%s838 + $0xa58] sm:$0xff]
        %v1457 = vld [vmem:[%s838 + $0xa60] sm:$0xff]
        %v1458 = vld [vmem:[%s838 + $0xa68] sm:$0xff]
        %v1459 = vld [vmem:[%s838 + $0xa70] sm:$0xff]
        %v1460 = vld [vmem:[%s838 + $0xa78] sm:$0xff]
        %v1461 = vld [vmem:[%s838 + $0xa80] sm:$0xff]
        %v1462 = vld [vmem:[%s838 + $0xa88] sm:$0xff]
        %v1463 = vld [vmem:[%s838 + $0xa90] sm:$0xff]
        %v1464 = vld [vmem:[%s838 + $0xa98] sm:$0xff]
        %v1465 = vld [vmem:[%s838 + $0xaa0] sm:$0xff]
        %v1466 = vld [vmem:[%s838 + $0xaa8] sm:$0xff]
        %v1467 = vld [vmem:[%s838 + $0xab0] sm:$0xff]
        %v1468 = vld [vmem:[%s838 + $0xab8] sm:$0xff]
        %v1469 = vld [vmem:[%s838 + $0xac0] sm:$0xff]
        %v1470 = vld [vmem:[%s838 + $0xac8] sm:$0xff]
        %v1471 = vld [vmem:[%s838 + $0xad0] sm:$0xff]
        %v1472 = vld [vmem:[%s838 + $0xad8] sm:$0xff]
        %v1473 = vld [vmem:[%s838 + $0xae0] sm:$0xff]
        %v1474 = vld [vmem:[%s838 + $0xae8] sm:$0xff]
        %v1475 = vld [vmem:[%s838 + $0xaf0] sm:$0xff]
        %v1476 = vld [vmem:[%s838 + $0xaf8] sm:$0xff]
        %v1477 = vld [vmem:[%s838 + $0xb00] sm:$0xff]
        %v1478 = vld [vmem:[%s838 + $0xb08] sm:$0xff]
        %v1479 = vld [vmem:[%s838 + $0xb10] sm:$0xff]
        %v1480 = vld [vmem:[%s838 + $0xb18] sm:$0xff]
        %v1481 = vld [vmem:[%s838 + $0xb20] sm:$0xff]
        %v1482 = vld [vmem:[%s838 + $0xb28] sm:$0xff]
        %v1483 = vld [vmem:[%s838 + $0xb30] sm:$0xff]
        %v1484 = vld [vmem:[%s838 + $0xb38] sm:$0xff]
        %v1485 = vld [vmem:[%s838 + $0xb40] sm:$0xff]
        %v1486 = vld [vmem:[%s838 + $0xb48] sm:$0xff]
        %v1487 = vld [vmem:[%s838 + $0xb50] sm:$0xff]
        %v1488 = vld [vmem:[%s838 + $0xb58] sm:$0xff]
        %v1489 = vld [vmem:[%s838 + $0xb60] sm:$0xff]
        %v1490 = vld [vmem:[%s838 + $0xb68] sm:$0xff]
        %v1491 = vld [vmem:[%s838 + $0xb70] sm:$0xff]
        %v1492 = vld [vmem:[%s838 + $0xb78] sm:$0xff]
        %v1493 = vld [vmem:[%s838 + $0xb80] sm:$0xff]
        %v1494 = vld [vmem:[%s838 + $0xb88] sm:$0xff]
        %v1495 = vld [vmem:[%s838 + $0xb90] sm:$0xff]
        %v1496 = vld [vmem:[%s838 + $0xb98] sm:$0xff]
        %v1497 = vld [vmem:[%s838 + $0xba0] sm:$0xff]
        %v1498 = vld [vmem:[%s838 + $0xba8] sm:$0xff]
        %v1499 = vld [vmem:[%s838 + $0xbb0] sm:$0xff]
        %v1500 = vld [vmem:[%s838 + $0xbb8] sm:$0xff]
        %v1501 = vld [vmem:[%s838 + $0xbc0] sm:$0xff]
        %v1502 = vld [vmem:[%s838 + $0xbc8] sm:$0xff]
        %v1503 = vld [vmem:[%s838 + $0xbd0] sm:$0xff]
        %v1504 = vld [vmem:[%s838 + $0xbd8] sm:$0xff]
        %v1505 = vld [vmem:[%s838 + $0xbe0] sm:$0xff]
        %v1506 = vld [vmem:[%s838 + $0xbe8] sm:$0xff]
        %v1507 = vld [vmem:[%s838 + $0xbf0] sm:$0xff]
        %v1508 = vld [vmem:[%s838 + $0xbf8] sm:$0xff]
        %v1509 = vld [vmem:[%s838 + $0xc00] sm:$0xff]
        %v1510 = vld [vmem:[%s838 + $0xc08] sm:$0xff]
        %v1511 = vld [vmem:[%s838 + $0xc10] sm:$0xff]
        %v1512 = vld [vmem:[%s838 + $0xc18] sm:$0xff]
        %v1513 = vld [vmem:[%s838 + $0xc20] sm:$0xff]
        %v1514 = vld [vmem:[%s838 + $0xc28] sm:$0xff]
        %v1515 = vld [vmem:[%s838 + $0xc30] sm:$0xff]
        %v1516 = vld [vmem:[%s838 + $0xc38] sm:$0xff]
        %v1517 = vld [vmem:[%s838 + $0xc40] sm:$0xff]
        %v1518 = vld [vmem:[%s838 + $0xc48] sm:$0xff]
        %v1519 = vld [vmem:[%s838 + $0xc50] sm:$0xff]
        %v1520 = vld [vmem:[%s838 + $0xc58] sm:$0xff]
        %v1521 = vld [vmem:[%s838 + $0xc60] sm:$0xff]
        %v1522 = vld [vmem:[%s838 + $0xc68] sm:$0xff]
        %v1523 = vld [vmem:[%s838 + $0xc70] sm:$0xff]
        %v1524 = vld [vmem:[%s838 + $0xc78] sm:$0xff]
        %v1525 = vld [vmem:[%s838 + $0xc80] sm:$0xff]
        %v1526 = vld [vmem:[%s838 + $0xc88] sm:$0xff]
        %v1527 = vld [vmem:[%s838 + $0xc90] sm:$0xff]
        %v1528 = vld [vmem:[%s838 + $0xc98] sm:$0xff]
        %v1529 = vld [vmem:[%s838 + $0xca0] sm:$0xff]
        %v1530 = vld [vmem:[%s838 + $0xca8] sm:$0xff]
        %v1531 = vld [vmem:[%s838 + $0xcb0] sm:$0xff]
        %v1532 = vld [vmem:[%s838 + $0xcb8] sm:$0xff]
        %v1533 = vld [vmem:[%s838 + $0xcc0] sm:$0xff]
        %v1534 = vld [vmem:[%s838 + $0xcc8] sm:$0xff]
        %v1535 = vld [vmem:[%s838 + $0xcd0] sm:$0xff]
        %v1536 = vld [vmem:[%s838 + $0xcd8] sm:$0xff]
        %v1537 = vld [vmem:[%s838 + $0xce0] sm:$0xff]
        %v1538 = vld [vmem:[%s838 + $0xce8] sm:$0xff]
        %v1539 = vld [vmem:[%s838 + $0xcf0] sm:$0xff]
        %v1540 = vld [vmem:[%s838 + $0xcf8] sm:$0xff]
        %v1541 = vld [vmem:[%s838 + $0xd00] sm:$0xff]
        %v1542 = vld [vmem:[%s838 + $0xd08] sm:$0xff]
        %v1543 = vld [vmem:[%s838 + $0xd10] sm:$0xff]
        %v1544 = vld [vmem:[%s838 + $0xd18] sm:$0xff]
        %v1545 = vld [vmem:[%s838 + $0xd20] sm:$0xff]
        %v1546 = vld [vmem:[%s838 + $0xd28] sm:$0xff]
        %v1547 = vld [vmem:[%s838 + $0xd30] sm:$0xff]
        %v1548 = vld [vmem:[%s838 + $0xd38] sm:$0xff]
        %v1549 = vld [vmem:[%s838 + $0xd40] sm:$0xff]
        %v1550 = vld [vmem:[%s838 + $0xd48] sm:$0xff]
        %v1551 = vld [vmem:[%s838 + $0xd50] sm:$0xff]
        %v1552 = vld [vmem:[%s838 + $0xd58] sm:$0xff]
        %v1553 = vld [vmem:[%s838 + $0xd60] sm:$0xff]
        %v1554 = vld [vmem:[%s838 + $0xd68] sm:$0xff]
        %v1555 = vld [vmem:[%s838 + $0xd70] sm:$0xff]
        %v1556 = vld [vmem:[%s838 + $0xd78] sm:$0xff]
        %v1557 = vld [vmem:[%s838 + $0xd80] sm:$0xff]
        %v1558 = vld [vmem:[%s838 + $0xd88] sm:$0xff]
        %v1559 = vld [vmem:[%s838 + $0xd90] sm:$0xff]
        %v1560 = vld [vmem:[%s838 + $0xd98] sm:$0xff]
        %v1561 = vld [vmem:[%s838 + $0xda0] sm:$0xff]
        %v1562 = vld [vmem:[%s838 + $0xda8] sm:$0xff]
        %v1563 = vld [vmem:[%s838 + $0xdb0] sm:$0xff]
        %v1564 = vld [vmem:[%s838 + $0xdb8] sm:$0xff]
        %v1565 = vld [vmem:[%s838 + $0xdc0] sm:$0xff]
        %v1566 = vld [vmem:[%s838 + $0xdc8] sm:$0xff]
        %v1567 = vld [vmem:[%s838 + $0xdd0] sm:$0xff]
        %v1568 = vld [vmem:[%s838 + $0xdd8] sm:$0xff]
        %v1569 = vld [vmem:[%s838 + $0xde0] sm:$0xff]
        %v1570 = vld [vmem:[%s838 + $0xde8] sm:$0xff]
        %v1571 = vld [vmem:[%s838 + $0xdf0] sm:$0xff]
        %v1572 = vld [vmem:[%s838 + $0xdf8] sm:$0xff]
        %v1573 = vld [vmem:[%s838 + $0xe00] sm:$0xff]
        %v1574 = vld [vmem:[%s838 + $0xe08] sm:$0xff]
        %v1575 = vld [vmem:[%s838 + $0xe10] sm:$0xff]
        %v1576 = vld [vmem:[%s838 + $0xe18] sm:$0xff]
        %v1577 = vld [vmem:[%s838 + $0xe20] sm:$0xff]
        %v1578 = vld [vmem:[%s838 + $0xe28] sm:$0xff]
        %v1579 = vld [vmem:[%s838 + $0xe30] sm:$0xff]
        %v1580 = vld [vmem:[%s838 + $0xe38] sm:$0xff]
        %v1581 = vld [vmem:[%s838 + $0xe40] sm:$0xff]
        %v1582 = vld [vmem:[%s838 + $0xe48] sm:$0xff]
        %v1583 = vld [vmem:[%s838 + $0xe50] sm:$0xff]
        %v1584 = vld [vmem:[%s838 + $0xe58] sm:$0xff]
        %v1585 = vld [vmem:[%s838 + $0xe60] sm:$0xff]
        %v1586 = vld [vmem:[%s838 + $0xe68] sm:$0xff]
        %v1587 = vld [vmem:[%s838 + $0xe70] sm:$0xff]
        %v1588 = vld [vmem:[%s838 + $0xe78] sm:$0xff]
        %v1589 = vld [vmem:[%s838 + $0xe80] sm:$0xff]
        %v1590 = vld [vmem:[%s838 + $0xe88] sm:$0xff]
        %v1591 = vld [vmem:[%s838 + $0xe90] sm:$0xff]
        %v1592 = vld [vmem:[%s838 + $0xe98] sm:$0xff]
        %v1593 = vld [vmem:[%s838 + $0xea0] sm:$0xff]
        %v1594 = vld [vmem:[%s838 + $0xea8] sm:$0xff]
        %v1595 = vld [vmem:[%s838 + $0xeb0] sm:$0xff]
        %v1596 = vld [vmem:[%s838 + $0xeb8] sm:$0xff]
        %v1597 = vld [vmem:[%s838 + $0xec0] sm:$0xff]
        %v1598 = vld [vmem:[%s838 + $0xec8] sm:$0xff]
        %v1599 = vld [vmem:[%s838 + $0xed0] sm:$0xff]
        %v1600 = vld [vmem:[%s838 + $0xed8] sm:$0xff]
        %v1601 = vld [vmem:[%s838 + $0xee0] sm:$0xff]
        %v1602 = vld [vmem:[%s838 + $0xee8] sm:$0xff]
        %v1603 = vld [vmem:[%s838 + $0xef0] sm:$0xff]
        %v1604 = vld [vmem:[%s838 + $0xef8] sm:$0xff]
        %v1605 = vld [vmem:[%s838 + $0xf00] sm:$0xff]
        %v1606 = vld [vmem:[%s838 + $0xf08] sm:$0xff]
        %v1607 = vld [vmem:[%s838 + $0xf10] sm:$0xff]
        %v1608 = vld [vmem:[%s838 + $0xf18] sm:$0xff]
        %v1609 = vld [vmem:[%s838 + $0xf20] sm:$0xff]
        %v1610 = vld [vmem:[%s838 + $0xf28] sm:$0xff]
        %v1611 = vld [vmem:[%s838 + $0xf30] sm:$0xff]
        %v1612 = vld [vmem:[%s838 + $0xf38] sm:$0xff]
        %v1613 = vld [vmem:[%s838 + $0xf40] sm:$0xff]
        %v1614 = vld [vmem:[%s838 + $0xf48] sm:$0xff]
        %v1615 = vld [vmem:[%s838 + $0xf50] sm:$0xff]
        %v1616 = vld [vmem:[%s838 + $0xf58] sm:$0xff]
        %v1617 = vld [vmem:[%s838 + $0xf60] sm:$0xff]
        %v1618 = vld [vmem:[%s838 + $0xf68] sm:$0xff]
        %v1619 = vld [vmem:[%s838 + $0xf70] sm:$0xff]
        %v1620 = vld [vmem:[%s838 + $0xf78] sm:$0xff]
        %v1621 = vld [vmem:[%s838 + $0xf80] sm:$0xff]
        %v1622 = vld [vmem:[%s838 + $0xf88] sm:$0xff]
        %v1623 = vld [vmem:[%s838 + $0xf90] sm:$0xff]
        %v1624 = vld [vmem:[%s838 + $0xf98] sm:$0xff]
        %v1625 = vld [vmem:[%s838 + $0xfa0] sm:$0xff]
        %v1626 = vld [vmem:[%s838 + $0xfa8] sm:$0xff]
        %v1627 = vld [vmem:[%s838 + $0xfb0] sm:$0xff]
        %v1628 = vld [vmem:[%s838 + $0xfb8] sm:$0xff]
        %v1629 = vld [vmem:[%s838 + $0xfc0] sm:$0xff]
        %v1630 = vld [vmem:[%s838 + $0xfc8] sm:$0xff]
        %v1631 = vld [vmem:[%s838 + $0xfd0] sm:$0xff]
        %v1632 = vld [vmem:[%s838 + $0xfd8] sm:$0xff]
        %v1633 = vld [vmem:[%s838 + $0xfe0] sm:$0xff]
        %v1634 = vld [vmem:[%s838 + $0xfe8] sm:$0xff]
        %v1635 = vld [vmem:[%s838 + $0xff0] sm:$0xff]
        %v1636 = vld [vmem:[%s838 + $0xff8] sm:$0xff]
        %v1637 = vld [vmem:[%s695] sm:$0xff]
        %v1639 = vlaneseq
        %v1640 = vshrl.u32 %v1639, 7
        %v1641 = vsub.s32 0, %v1640
        %v1642 = vrot.slane %v1637, %v1641
        %v1643 = vlaneseq
        %v1644 = vshrl.u32 %v1643, 7
        %v1645 = vsub.s32 1, %v1644
        %v1646 = vrot.slane %v1637, %v1645
        %v1647 = vlaneseq
        %v1648 = vshrl.u32 %v1647, 7
        %v1649 = vsub.s32 2, %v1648
        %v1650 = vrot.slane %v1637, %v1649
        %v1651 = vlaneseq
        %v1652 = vshrl.u32 %v1651, 7
        %v1653 = vsub.s32 3, %v1652
        %v1654 = vrot.slane %v1637, %v1653
        %v1655 = vlaneseq
        %v1656 = vshrl.u32 %v1655, 7
        %v1657 = vsub.s32 4, %v1656
        %v1658 = vrot.slane %v1637, %v1657
        %v1659 = vlaneseq
        %v1660 = vshrl.u32 %v1659, 7
        %v1661 = vsub.s32 5, %v1660
        %v1662 = vrot.slane %v1637, %v1661
        %v1663 = vlaneseq
        %v1664 = vshrl.u32 %v1663, 7
        %v1665 = vsub.s32 6, %v1664
        %v1666 = vrot.slane %v1637, %v1665
        %v1667 = vlaneseq
        %v1668 = vshrl.u32 %v1667, 7
        %v1669 = vsub.s32 7, %v1668
        %v1670 = vrot.slane %v1637, %v1669
        %v2191 = vunpack.c.l.b16 %v1125
        %v2192 = vunpack.c.h.b16 %v1125
        %v2193 = vunpack.c.l.b16 %v1126
        %v2194 = vunpack.c.h.b16 %v1126
        %v2195 = vunpack.c.l.b16 %v1127
        %v2196 = vunpack.c.h.b16 %v1127
        %v2197 = vunpack.c.l.b16 %v1128
        %v2198 = vunpack.c.h.b16 %v1128
        %v2199 = vunpack.c.l.b16 %v1129
        %v2200 = vunpack.c.h.b16 %v1129
        %v2201 = vunpack.c.l.b16 %v1130
        %v2202 = vunpack.c.h.b16 %v1130
        %v2203 = vunpack.c.l.b16 %v1131
        %v2204 = vunpack.c.h.b16 %v1131
        %v2205 = vunpack.c.l.b16 %v1132
        %v2206 = vunpack.c.h.b16 %v1132
        %v2207 = vunpack.c.l.b16 %v1133
        %v2208 = vunpack.c.h.b16 %v1133
        %v2209 = vunpack.c.l.b16 %v1134
        %v2210 = vunpack.c.h.b16 %v1134
        %v2211 = vunpack.c.l.b16 %v1135
        %v2212 = vunpack.c.h.b16 %v1135
        %v2213 = vunpack.c.l.b16 %v1136
        %v2214 = vunpack.c.h.b16 %v1136
        %v2215 = vunpack.c.l.b16 %v1137
        %v2216 = vunpack.c.h.b16 %v1137
        %v2217 = vunpack.c.l.b16 %v1138
        %v2218 = vunpack.c.h.b16 %v1138
        %v2219 = vunpack.c.l.b16 %v1139
        %v2220 = vunpack.c.h.b16 %v1139
        %v2221 = vunpack.c.l.b16 %v1140
        %v2222 = vunpack.c.h.b16 %v1140
        %v2223 = vunpack.c.l.b16 %v1141
        %v2224 = vunpack.c.h.b16 %v1141
        %v2225 = vunpack.c.l.b16 %v1142
        %v2226 = vunpack.c.h.b16 %v1142
        %v2227 = vunpack.c.l.b16 %v1143
        %v2228 = vunpack.c.h.b16 %v1143
        %v2229 = vunpack.c.l.b16 %v1144
        %v2230 = vunpack.c.h.b16 %v1144
        %v2231 = vunpack.c.l.b16 %v1145
        %v2232 = vunpack.c.h.b16 %v1145
        %v2233 = vunpack.c.l.b16 %v1146
        %v2234 = vunpack.c.h.b16 %v1146
        %v2235 = vunpack.c.l.b16 %v1147
        %v2236 = vunpack.c.h.b16 %v1147
        %v2237 = vunpack.c.l.b16 %v1148
        %v2238 = vunpack.c.h.b16 %v1148
        %v2239 = vunpack.c.l.b16 %v1149
        %v2240 = vunpack.c.h.b16 %v1149
        %v2241 = vunpack.c.l.b16 %v1150
        %v2242 = vunpack.c.h.b16 %v1150
        %v2243 = vunpack.c.l.b16 %v1151
        %v2244 = vunpack.c.h.b16 %v1151
        %v2245 = vunpack.c.l.b16 %v1152
        %v2246 = vunpack.c.h.b16 %v1152
        %v2247 = vunpack.c.l.b16 %v1153
        %v2248 = vunpack.c.h.b16 %v1153
        %v2249 = vunpack.c.l.b16 %v1154
        %v2250 = vunpack.c.h.b16 %v1154
        %v2251 = vunpack.c.l.b16 %v1155
        %v2252 = vunpack.c.h.b16 %v1155
        %v2253 = vunpack.c.l.b16 %v1156
        %v2254 = vunpack.c.h.b16 %v1156
        %v2255 = vunpack.c.l.b16 %v1157
        %v2256 = vunpack.c.h.b16 %v1157
        %v2257 = vunpack.c.l.b16 %v1158
        %v2258 = vunpack.c.h.b16 %v1158
        %v2259 = vunpack.c.l.b16 %v1159
        %v2260 = vunpack.c.h.b16 %v1159
        %v2261 = vunpack.c.l.b16 %v1160
        %v2262 = vunpack.c.h.b16 %v1160
        %v2263 = vunpack.c.l.b16 %v1161
        %v2264 = vunpack.c.h.b16 %v1161
        %v2265 = vunpack.c.l.b16 %v1162
        %v2266 = vunpack.c.h.b16 %v1162
        %v2267 = vunpack.c.l.b16 %v1163
        %v2268 = vunpack.c.h.b16 %v1163
        %v2269 = vunpack.c.l.b16 %v1164
        %v2270 = vunpack.c.h.b16 %v1164
        %v2271 = vunpack.c.l.b16 %v1165
        %v2272 = vunpack.c.h.b16 %v1165
        %v2273 = vunpack.c.l.b16 %v1166
        %v2274 = vunpack.c.h.b16 %v1166
        %v2275 = vunpack.c.l.b16 %v1167
        %v2276 = vunpack.c.h.b16 %v1167
        %v2277 = vunpack.c.l.b16 %v1168
        %v2278 = vunpack.c.h.b16 %v1168
        %v2279 = vunpack.c.l.b16 %v1169
        %v2280 = vunpack.c.h.b16 %v1169
        %v2281 = vunpack.c.l.b16 %v1170
        %v2282 = vunpack.c.h.b16 %v1170
        %v2283 = vunpack.c.l.b16 %v1171
        %v2284 = vunpack.c.h.b16 %v1171
        %v2285 = vunpack.c.l.b16 %v1172
        %v2286 = vunpack.c.h.b16 %v1172
        %v2287 = vunpack.c.l.b16 %v1173
        %v2288 = vunpack.c.h.b16 %v1173
        %v2289 = vunpack.c.l.b16 %v1174
        %v2290 = vunpack.c.h.b16 %v1174
        %v2291 = vunpack.c.l.b16 %v1175
        %v2292 = vunpack.c.h.b16 %v1175
        %v2293 = vunpack.c.l.b16 %v1176
        %v2294 = vunpack.c.h.b16 %v1176
        %v2295 = vunpack.c.l.b16 %v1177
        %v2296 = vunpack.c.h.b16 %v1177
        %v2297 = vunpack.c.l.b16 %v1178
        %v2298 = vunpack.c.h.b16 %v1178
        %v2299 = vunpack.c.l.b16 %v1179
        %v2300 = vunpack.c.h.b16 %v1179
        %v2301 = vunpack.c.l.b16 %v1180
        %v2302 = vunpack.c.h.b16 %v1180
        %v2303 = vunpack.c.l.b16 %v1181
        %v2304 = vunpack.c.h.b16 %v1181
        %v2305 = vunpack.c.l.b16 %v1182
        %v2306 = vunpack.c.h.b16 %v1182
        %v2307 = vunpack.c.l.b16 %v1183
        %v2308 = vunpack.c.h.b16 %v1183
        %v2309 = vunpack.c.l.b16 %v1184
        %v2310 = vunpack.c.h.b16 %v1184
        %v2311 = vunpack.c.l.b16 %v1185
        %v2312 = vunpack.c.h.b16 %v1185
        %v2313 = vunpack.c.l.b16 %v1186
        %v2314 = vunpack.c.h.b16 %v1186
        %v2315 = vunpack.c.l.b16 %v1187
        %v2316 = vunpack.c.h.b16 %v1187
        %v2317 = vunpack.c.l.b16 %v1188
        %v2318 = vunpack.c.h.b16 %v1188
        %v2319 = vunpack.c.l.b16 %v1189
        %v2320 = vunpack.c.h.b16 %v1189
        %v2321 = vunpack.c.l.b16 %v1190
        %v2322 = vunpack.c.h.b16 %v1190
        %v2323 = vunpack.c.l.b16 %v1191
        %v2324 = vunpack.c.h.b16 %v1191
        %v2325 = vunpack.c.l.b16 %v1192
        %v2326 = vunpack.c.h.b16 %v1192
        %v2327 = vunpack.c.l.b16 %v1193
        %v2328 = vunpack.c.h.b16 %v1193
        %v2329 = vunpack.c.l.b16 %v1194
        %v2330 = vunpack.c.h.b16 %v1194
        %v2331 = vunpack.c.l.b16 %v1195
        %v2332 = vunpack.c.h.b16 %v1195
        %v2333 = vunpack.c.l.b16 %v1196
        %v2334 = vunpack.c.h.b16 %v1196
        %v2335 = vunpack.c.l.b16 %v1197
        %v2336 = vunpack.c.h.b16 %v1197
        %v2337 = vunpack.c.l.b16 %v1198
        %v2338 = vunpack.c.h.b16 %v1198
        %v2339 = vunpack.c.l.b16 %v1199
        %v2340 = vunpack.c.h.b16 %v1199
        %v2341 = vunpack.c.l.b16 %v1200
        %v2342 = vunpack.c.h.b16 %v1200
        %v2343 = vunpack.c.l.b16 %v1201
        %v2344 = vunpack.c.h.b16 %v1201
        %v2345 = vunpack.c.l.b16 %v1202
        %v2346 = vunpack.c.h.b16 %v1202
        %v2347 = vunpack.c.l.b16 %v1203
        %v2348 = vunpack.c.h.b16 %v1203
        %v2349 = vunpack.c.l.b16 %v1204
        %v2350 = vunpack.c.h.b16 %v1204
        %v2351 = vunpack.c.l.b16 %v1205
        %v2352 = vunpack.c.h.b16 %v1205
        %v2353 = vunpack.c.l.b16 %v1206
        %v2354 = vunpack.c.h.b16 %v1206
        %v2355 = vunpack.c.l.b16 %v1207
        %v2356 = vunpack.c.h.b16 %v1207
        %v2357 = vunpack.c.l.b16 %v1208
        %v2358 = vunpack.c.h.b16 %v1208
        %v2359 = vunpack.c.l.b16 %v1209
        %v2360 = vunpack.c.h.b16 %v1209
        %v2361 = vunpack.c.l.b16 %v1210
        %v2362 = vunpack.c.h.b16 %v1210
        %v2363 = vunpack.c.l.b16 %v1211
        %v2364 = vunpack.c.h.b16 %v1211
        %v2365 = vunpack.c.l.b16 %v1212
        %v2366 = vunpack.c.h.b16 %v1212
        %v2367 = vunpack.c.l.b16 %v1213
        %v2368 = vunpack.c.h.b16 %v1213
        %v2369 = vunpack.c.l.b16 %v1214
        %v2370 = vunpack.c.h.b16 %v1214
        %v2371 = vunpack.c.l.b16 %v1215
        %v2372 = vunpack.c.h.b16 %v1215
        %v2373 = vunpack.c.l.b16 %v1216
        %v2374 = vunpack.c.h.b16 %v1216
        %v2375 = vunpack.c.l.b16 %v1217
        %v2376 = vunpack.c.h.b16 %v1217
        %v2377 = vunpack.c.l.b16 %v1218
        %v2378 = vunpack.c.h.b16 %v1218
        %v2379 = vunpack.c.l.b16 %v1219
        %v2380 = vunpack.c.h.b16 %v1219
        %v2381 = vunpack.c.l.b16 %v1220
        %v2382 = vunpack.c.h.b16 %v1220
        %v2383 = vunpack.c.l.b16 %v1221
        %v2384 = vunpack.c.h.b16 %v1221
        %v2385 = vunpack.c.l.b16 %v1222
        %v2386 = vunpack.c.h.b16 %v1222
        %v2387 = vunpack.c.l.b16 %v1223
        %v2388 = vunpack.c.h.b16 %v1223
        %v2389 = vunpack.c.l.b16 %v1224
        %v2390 = vunpack.c.h.b16 %v1224
        %v2391 = vunpack.c.l.b16 %v1225
        %v2392 = vunpack.c.h.b16 %v1225
        %v2393 = vunpack.c.l.b16 %v1226
        %v2394 = vunpack.c.h.b16 %v1226
        %v2395 = vunpack.c.l.b16 %v1227
        %v2396 = vunpack.c.h.b16 %v1227
        %v2397 = vunpack.c.l.b16 %v1228
        %v2398 = vunpack.c.h.b16 %v1228
        %v2399 = vunpack.c.l.b16 %v1229
        %v2400 = vunpack.c.h.b16 %v1229
        %v2401 = vunpack.c.l.b16 %v1230
        %v2402 = vunpack.c.h.b16 %v1230
        %v2403 = vunpack.c.l.b16 %v1231
        %v2404 = vunpack.c.h.b16 %v1231
        %v2405 = vunpack.c.l.b16 %v1232
        %v2406 = vunpack.c.h.b16 %v1232
        %v2407 = vunpack.c.l.b16 %v1233
        %v2408 = vunpack.c.h.b16 %v1233
        %v2409 = vunpack.c.l.b16 %v1234
        %v2410 = vunpack.c.h.b16 %v1234
        %v2411 = vunpack.c.l.b16 %v1235
        %v2412 = vunpack.c.h.b16 %v1235
        %v2413 = vunpack.c.l.b16 %v1236
        %v2414 = vunpack.c.h.b16 %v1236
        %v2415 = vunpack.c.l.b16 %v1237
        %v2416 = vunpack.c.h.b16 %v1237
        %v2417 = vunpack.c.l.b16 %v1238
        %v2418 = vunpack.c.h.b16 %v1238
        %v2419 = vunpack.c.l.b16 %v1239
        %v2420 = vunpack.c.h.b16 %v1239
        %v2421 = vunpack.c.l.b16 %v1240
        %v2422 = vunpack.c.h.b16 %v1240
        %v2423 = vunpack.c.l.b16 %v1241
        %v2424 = vunpack.c.h.b16 %v1241
        %v2425 = vunpack.c.l.b16 %v1242
        %v2426 = vunpack.c.h.b16 %v1242
        %v2427 = vunpack.c.l.b16 %v1243
        %v2428 = vunpack.c.h.b16 %v1243
        %v2429 = vunpack.c.l.b16 %v1244
        %v2430 = vunpack.c.h.b16 %v1244
        %v2431 = vunpack.c.l.b16 %v1245
        %v2432 = vunpack.c.h.b16 %v1245
        %v2433 = vunpack.c.l.b16 %v1246
        %v2434 = vunpack.c.h.b16 %v1246
        %v2435 = vunpack.c.l.b16 %v1247
        %v2436 = vunpack.c.h.b16 %v1247
        %v2437 = vunpack.c.l.b16 %v1248
        %v2438 = vunpack.c.h.b16 %v1248
        %v2439 = vunpack.c.l.b16 %v1249
        %v2440 = vunpack.c.h.b16 %v1249
        %v2441 = vunpack.c.l.b16 %v1250
        %v2442 = vunpack.c.h.b16 %v1250
        %v2443 = vunpack.c.l.b16 %v1251
        %v2444 = vunpack.c.h.b16 %v1251
        %v2445 = vunpack.c.l.b16 %v1252
        %v2446 = vunpack.c.h.b16 %v1252
        %v2447 = vunpack.c.l.b16 %v1253
        %v2448 = vunpack.c.h.b16 %v1253
        %v2449 = vunpack.c.l.b16 %v1254
        %v2450 = vunpack.c.h.b16 %v1254
        %v2451 = vunpack.c.l.b16 %v1255
        %v2452 = vunpack.c.h.b16 %v1255
        %v2453 = vunpack.c.l.b16 %v1256
        %v2454 = vunpack.c.h.b16 %v1256
        %v2455 = vunpack.c.l.b16 %v1257
        %v2456 = vunpack.c.h.b16 %v1257
        %v2457 = vunpack.c.l.b16 %v1258
        %v2458 = vunpack.c.h.b16 %v1258
        %v2459 = vunpack.c.l.b16 %v1259
        %v2460 = vunpack.c.h.b16 %v1259
        %v2461 = vunpack.c.l.b16 %v1260
        %v2462 = vunpack.c.h.b16 %v1260
        %v2463 = vunpack.c.l.b16 %v1261
        %v2464 = vunpack.c.h.b16 %v1261
        %v2465 = vunpack.c.l.b16 %v1262
        %v2466 = vunpack.c.h.b16 %v1262
        %v2467 = vunpack.c.l.b16 %v1263
        %v2468 = vunpack.c.h.b16 %v1263
        %v2469 = vunpack.c.l.b16 %v1264
        %v2470 = vunpack.c.h.b16 %v1264
        %v2471 = vunpack.c.l.b16 %v1265
        %v2472 = vunpack.c.h.b16 %v1265
        %v2473 = vunpack.c.l.b16 %v1266
        %v2474 = vunpack.c.h.b16 %v1266
        %v2475 = vunpack.c.l.b16 %v1267
        %v2476 = vunpack.c.h.b16 %v1267
        %v2477 = vunpack.c.l.b16 %v1268
        %v2478 = vunpack.c.h.b16 %v1268
        %v2479 = vunpack.c.l.b16 %v1269
        %v2480 = vunpack.c.h.b16 %v1269
        %v2481 = vunpack.c.l.b16 %v1270
        %v2482 = vunpack.c.h.b16 %v1270
        %v2483 = vunpack.c.l.b16 %v1271
        %v2484 = vunpack.c.h.b16 %v1271
        %v2485 = vunpack.c.l.b16 %v1272
        %v2486 = vunpack.c.h.b16 %v1272
        %v2487 = vunpack.c.l.b16 %v1273
        %v2488 = vunpack.c.h.b16 %v1273
        %v2489 = vunpack.c.l.b16 %v1274
        %v2490 = vunpack.c.h.b16 %v1274
        %v2491 = vunpack.c.l.b16 %v1275
        %v2492 = vunpack.c.h.b16 %v1275
        %v2493 = vunpack.c.l.b16 %v1276
        %v2494 = vunpack.c.h.b16 %v1276
        %v2495 = vunpack.c.l.b16 %v1277
        %v2496 = vunpack.c.h.b16 %v1277
        %v2497 = vunpack.c.l.b16 %v1278
        %v2498 = vunpack.c.h.b16 %v1278
        %v2499 = vunpack.c.l.b16 %v1279
        %v2500 = vunpack.c.h.b16 %v1279
        %v2501 = vunpack.c.l.b16 %v1280
        %v2502 = vunpack.c.h.b16 %v1280
        %v2503 = vunpack.c.l.b16 %v1281
        %v2504 = vunpack.c.h.b16 %v1281
        %v2505 = vunpack.c.l.b16 %v1282
        %v2506 = vunpack.c.h.b16 %v1282
        %v2507 = vunpack.c.l.b16 %v1283
        %v2508 = vunpack.c.h.b16 %v1283
        %v2509 = vunpack.c.l.b16 %v1284
        %v2510 = vunpack.c.h.b16 %v1284
        %v2511 = vunpack.c.l.b16 %v1285
        %v2512 = vunpack.c.h.b16 %v1285
        %v2513 = vunpack.c.l.b16 %v1286
        %v2514 = vunpack.c.h.b16 %v1286
        %v2515 = vunpack.c.l.b16 %v1287
        %v2516 = vunpack.c.h.b16 %v1287
        %v2517 = vunpack.c.l.b16 %v1288
        %v2518 = vunpack.c.h.b16 %v1288
        %v2519 = vunpack.c.l.b16 %v1289
        %v2520 = vunpack.c.h.b16 %v1289
        %v2521 = vunpack.c.l.b16 %v1290
        %v2522 = vunpack.c.h.b16 %v1290
        %v2523 = vunpack.c.l.b16 %v1291
        %v2524 = vunpack.c.h.b16 %v1291
        %v2525 = vunpack.c.l.b16 %v1292
        %v2526 = vunpack.c.h.b16 %v1292
        %v2527 = vunpack.c.l.b16 %v1293
        %v2528 = vunpack.c.h.b16 %v1293
        %v2529 = vunpack.c.l.b16 %v1294
        %v2530 = vunpack.c.h.b16 %v1294
        %v2531 = vunpack.c.l.b16 %v1295
        %v2532 = vunpack.c.h.b16 %v1295
        %v2533 = vunpack.c.l.b16 %v1296
        %v2534 = vunpack.c.h.b16 %v1296
        %v2535 = vunpack.c.l.b16 %v1297
        %v2536 = vunpack.c.h.b16 %v1297
        %v2537 = vunpack.c.l.b16 %v1298
        %v2538 = vunpack.c.h.b16 %v1298
        %v2539 = vunpack.c.l.b16 %v1299
        %v2540 = vunpack.c.h.b16 %v1299
        %v2541 = vunpack.c.l.b16 %v1300
        %v2542 = vunpack.c.h.b16 %v1300
        %v2543 = vunpack.c.l.b16 %v1301
        %v2544 = vunpack.c.h.b16 %v1301
        %v2545 = vunpack.c.l.b16 %v1302
        %v2546 = vunpack.c.h.b16 %v1302
        %v2547 = vunpack.c.l.b16 %v1303
        %v2548 = vunpack.c.h.b16 %v1303
        %v2549 = vunpack.c.l.b16 %v1304
        %v2550 = vunpack.c.h.b16 %v1304
        %v2551 = vunpack.c.l.b16 %v1305
        %v2552 = vunpack.c.h.b16 %v1305
        %v2553 = vunpack.c.l.b16 %v1306
        %v2554 = vunpack.c.h.b16 %v1306
        %v2555 = vunpack.c.l.b16 %v1307
        %v2556 = vunpack.c.h.b16 %v1307
        %v2557 = vunpack.c.l.b16 %v1308
        %v2558 = vunpack.c.h.b16 %v1308
        %v2559 = vunpack.c.l.b16 %v1309
        %v2560 = vunpack.c.h.b16 %v1309
        %v2561 = vunpack.c.l.b16 %v1310
        %v2562 = vunpack.c.h.b16 %v1310
        %v2563 = vunpack.c.l.b16 %v1311
        %v2564 = vunpack.c.h.b16 %v1311
        %v2565 = vunpack.c.l.b16 %v1312
        %v2566 = vunpack.c.h.b16 %v1312
        %v2567 = vunpack.c.l.b16 %v1313
        %v2568 = vunpack.c.h.b16 %v1313
        %v2569 = vunpack.c.l.b16 %v1314
        %v2570 = vunpack.c.h.b16 %v1314
        %v2571 = vunpack.c.l.b16 %v1315
        %v2572 = vunpack.c.h.b16 %v1315
        %v2573 = vunpack.c.l.b16 %v1316
        %v2574 = vunpack.c.h.b16 %v1316
        %v2575 = vunpack.c.l.b16 %v1317
        %v2576 = vunpack.c.h.b16 %v1317
        %v2577 = vunpack.c.l.b16 %v1318
        %v2578 = vunpack.c.h.b16 %v1318
        %v2579 = vunpack.c.l.b16 %v1319
        %v2580 = vunpack.c.h.b16 %v1319
        %v2581 = vunpack.c.l.b16 %v1320
        %v2582 = vunpack.c.h.b16 %v1320
        %v2583 = vunpack.c.l.b16 %v1321
        %v2584 = vunpack.c.h.b16 %v1321
        %v2585 = vunpack.c.l.b16 %v1322
        %v2586 = vunpack.c.h.b16 %v1322
        %v2587 = vunpack.c.l.b16 %v1323
        %v2588 = vunpack.c.h.b16 %v1323
        %v2589 = vunpack.c.l.b16 %v1324
        %v2590 = vunpack.c.h.b16 %v1324
        %v2591 = vunpack.c.l.b16 %v1325
        %v2592 = vunpack.c.h.b16 %v1325
        %v2593 = vunpack.c.l.b16 %v1326
        %v2594 = vunpack.c.h.b16 %v1326
        %v2595 = vunpack.c.l.b16 %v1327
        %v2596 = vunpack.c.h.b16 %v1327
        %v2597 = vunpack.c.l.b16 %v1328
        %v2598 = vunpack.c.h.b16 %v1328
        %v2599 = vunpack.c.l.b16 %v1329
        %v2600 = vunpack.c.h.b16 %v1329
        %v2601 = vunpack.c.l.b16 %v1330
        %v2602 = vunpack.c.h.b16 %v1330
        %v2603 = vunpack.c.l.b16 %v1331
        %v2604 = vunpack.c.h.b16 %v1331
        %v2605 = vunpack.c.l.b16 %v1332
        %v2606 = vunpack.c.h.b16 %v1332
        %v2607 = vunpack.c.l.b16 %v1333
        %v2608 = vunpack.c.h.b16 %v1333
        %v2609 = vunpack.c.l.b16 %v1334
        %v2610 = vunpack.c.h.b16 %v1334
        %v2611 = vunpack.c.l.b16 %v1335
        %v2612 = vunpack.c.h.b16 %v1335
        %v2613 = vunpack.c.l.b16 %v1336
        %v2614 = vunpack.c.h.b16 %v1336
        %v2615 = vunpack.c.l.b16 %v1337
        %v2616 = vunpack.c.h.b16 %v1337
        %v2617 = vunpack.c.l.b16 %v1338
        %v2618 = vunpack.c.h.b16 %v1338
        %v2619 = vunpack.c.l.b16 %v1339
        %v2620 = vunpack.c.h.b16 %v1339
        %v2621 = vunpack.c.l.b16 %v1340
        %v2622 = vunpack.c.h.b16 %v1340
        %v2623 = vunpack.c.l.b16 %v1341
        %v2624 = vunpack.c.h.b16 %v1341
        %v2625 = vunpack.c.l.b16 %v1342
        %v2626 = vunpack.c.h.b16 %v1342
        %v2627 = vunpack.c.l.b16 %v1343
        %v2628 = vunpack.c.h.b16 %v1343
        %v2629 = vunpack.c.l.b16 %v1344
        %v2630 = vunpack.c.h.b16 %v1344
        %v2631 = vunpack.c.l.b16 %v1345
        %v2632 = vunpack.c.h.b16 %v1345
        %v2633 = vunpack.c.l.b16 %v1346
        %v2634 = vunpack.c.h.b16 %v1346
        %v2635 = vunpack.c.l.b16 %v1347
        %v2636 = vunpack.c.h.b16 %v1347
        %v2637 = vunpack.c.l.b16 %v1348
        %v2638 = vunpack.c.h.b16 %v1348
        %v2639 = vunpack.c.l.b16 %v1349
        %v2640 = vunpack.c.h.b16 %v1349
        %v2641 = vunpack.c.l.b16 %v1350
        %v2642 = vunpack.c.h.b16 %v1350
        %v2643 = vunpack.c.l.b16 %v1351
        %v2644 = vunpack.c.h.b16 %v1351
        %v2645 = vunpack.c.l.b16 %v1352
        %v2646 = vunpack.c.h.b16 %v1352
        %v2647 = vunpack.c.l.b16 %v1353
        %v2648 = vunpack.c.h.b16 %v1353
        %v2649 = vunpack.c.l.b16 %v1354
        %v2650 = vunpack.c.h.b16 %v1354
        %v2651 = vunpack.c.l.b16 %v1355
        %v2652 = vunpack.c.h.b16 %v1355
        %v2653 = vunpack.c.l.b16 %v1356
        %v2654 = vunpack.c.h.b16 %v1356
        %v2655 = vunpack.c.l.b16 %v1357
        %v2656 = vunpack.c.h.b16 %v1357
        %v2657 = vunpack.c.l.b16 %v1358
        %v2658 = vunpack.c.h.b16 %v1358
        %v2659 = vunpack.c.l.b16 %v1359
        %v2660 = vunpack.c.h.b16 %v1359
        %v2661 = vunpack.c.l.b16 %v1360
        %v2662 = vunpack.c.h.b16 %v1360
        %v2663 = vunpack.c.l.b16 %v1361
        %v2664 = vunpack.c.h.b16 %v1361
        %v2665 = vunpack.c.l.b16 %v1362
        %v2666 = vunpack.c.h.b16 %v1362
        %v2667 = vunpack.c.l.b16 %v1363
        %v2668 = vunpack.c.h.b16 %v1363
        %v2669 = vunpack.c.l.b16 %v1364
        %v2670 = vunpack.c.h.b16 %v1364
        %v2671 = vunpack.c.l.b16 %v1365
        %v2672 = vunpack.c.h.b16 %v1365
        %v2673 = vunpack.c.l.b16 %v1366
        %v2674 = vunpack.c.h.b16 %v1366
        %v2675 = vunpack.c.l.b16 %v1367
        %v2676 = vunpack.c.h.b16 %v1367
        %v2677 = vunpack.c.l.b16 %v1368
        %v2678 = vunpack.c.h.b16 %v1368
        %v2679 = vunpack.c.l.b16 %v1369
        %v2680 = vunpack.c.h.b16 %v1369
        %v2681 = vunpack.c.l.b16 %v1370
        %v2682 = vunpack.c.h.b16 %v1370
        %v2683 = vunpack.c.l.b16 %v1371
        %v2684 = vunpack.c.h.b16 %v1371
        %v2685 = vunpack.c.l.b16 %v1372
        %v2686 = vunpack.c.h.b16 %v1372
        %v2687 = vunpack.c.l.b16 %v1373
        %v2688 = vunpack.c.h.b16 %v1373
        %v2689 = vunpack.c.l.b16 %v1374
        %v2690 = vunpack.c.h.b16 %v1374
        %v2691 = vunpack.c.l.b16 %v1375
        %v2692 = vunpack.c.h.b16 %v1375
        %v2693 = vunpack.c.l.b16 %v1376
        %v2694 = vunpack.c.h.b16 %v1376
        %v2695 = vunpack.c.l.b16 %v1377
        %v2696 = vunpack.c.h.b16 %v1377
        %v2697 = vunpack.c.l.b16 %v1378
        %v2698 = vunpack.c.h.b16 %v1378
        %v2699 = vunpack.c.l.b16 %v1379
        %v2700 = vunpack.c.h.b16 %v1379
        %v2701 = vunpack.c.l.b16 %v1380
        %v2702 = vunpack.c.h.b16 %v1380
        %v2703 = vunpack.c.l.b16 %v1381
        %v2704 = vunpack.c.h.b16 %v1381
        %v2705 = vunpack.c.l.b16 %v1382
        %v2706 = vunpack.c.h.b16 %v1382
        %v2707 = vunpack.c.l.b16 %v1383
        %v2708 = vunpack.c.h.b16 %v1383
        %v2709 = vunpack.c.l.b16 %v1384
        %v2710 = vunpack.c.h.b16 %v1384
        %v2711 = vunpack.c.l.b16 %v1385
        %v2712 = vunpack.c.h.b16 %v1385
        %v2713 = vunpack.c.l.b16 %v1386
        %v2714 = vunpack.c.h.b16 %v1386
        %v2715 = vunpack.c.l.b16 %v1387
        %v2716 = vunpack.c.h.b16 %v1387
        %v2717 = vunpack.c.l.b16 %v1388
        %v2718 = vunpack.c.h.b16 %v1388
        %v2719 = vunpack.c.l.b16 %v1389
        %v2720 = vunpack.c.h.b16 %v1389
        %v2721 = vunpack.c.l.b16 %v1390
        %v2722 = vunpack.c.h.b16 %v1390
        %v2723 = vunpack.c.l.b16 %v1391
        %v2724 = vunpack.c.h.b16 %v1391
        %v2725 = vunpack.c.l.b16 %v1392
        %v2726 = vunpack.c.h.b16 %v1392
        %v2727 = vunpack.c.l.b16 %v1393
        %v2728 = vunpack.c.h.b16 %v1393
        %v2729 = vunpack.c.l.b16 %v1394
        %v2730 = vunpack.c.h.b16 %v1394
        %v2731 = vunpack.c.l.b16 %v1395
        %v2732 = vunpack.c.h.b16 %v1395
        %v2733 = vunpack.c.l.b16 %v1396
        %v2734 = vunpack.c.h.b16 %v1396
        %v2735 = vunpack.c.l.b16 %v1397
        %v2736 = vunpack.c.h.b16 %v1397
        %v2737 = vunpack.c.l.b16 %v1398
        %v2738 = vunpack.c.h.b16 %v1398
        %v2739 = vunpack.c.l.b16 %v1399
        %v2740 = vunpack.c.h.b16 %v1399
        %v2741 = vunpack.c.l.b16 %v1400
        %v2742 = vunpack.c.h.b16 %v1400
        %v2743 = vunpack.c.l.b16 %v1401
        %v2744 = vunpack.c.h.b16 %v1401
        %v2745 = vunpack.c.l.b16 %v1402
        %v2746 = vunpack.c.h.b16 %v1402
        %v2747 = vunpack.c.l.b16 %v1403
        %v2748 = vunpack.c.h.b16 %v1403
        %v2749 = vunpack.c.l.b16 %v1404
        %v2750 = vunpack.c.h.b16 %v1404
        %v2751 = vunpack.c.l.b16 %v1405
        %v2752 = vunpack.c.h.b16 %v1405
        %v2753 = vunpack.c.l.b16 %v1406
        %v2754 = vunpack.c.h.b16 %v1406
        %v2755 = vunpack.c.l.b16 %v1407
        %v2756 = vunpack.c.h.b16 %v1407
        %v2757 = vunpack.c.l.b16 %v1408
        %v2758 = vunpack.c.h.b16 %v1408
        %v2759 = vunpack.c.l.b16 %v1409
        %v2760 = vunpack.c.h.b16 %v1409
        %v2761 = vunpack.c.l.b16 %v1410
        %v2762 = vunpack.c.h.b16 %v1410
        %v2763 = vunpack.c.l.b16 %v1411
        %v2764 = vunpack.c.h.b16 %v1411
        %v2765 = vunpack.c.l.b16 %v1412
        %v2766 = vunpack.c.h.b16 %v1412
        %v2767 = vunpack.c.l.b16 %v1413
        %v2768 = vunpack.c.h.b16 %v1413
        %v2769 = vunpack.c.l.b16 %v1414
        %v2770 = vunpack.c.h.b16 %v1414
        %v2771 = vunpack.c.l.b16 %v1415
        %v2772 = vunpack.c.h.b16 %v1415
        %v2773 = vunpack.c.l.b16 %v1416
        %v2774 = vunpack.c.h.b16 %v1416
        %v2775 = vunpack.c.l.b16 %v1417
        %v2776 = vunpack.c.h.b16 %v1417
        %v2777 = vunpack.c.l.b16 %v1418
        %v2778 = vunpack.c.h.b16 %v1418
        %v2779 = vunpack.c.l.b16 %v1419
        %v2780 = vunpack.c.h.b16 %v1419
        %v2781 = vunpack.c.l.b16 %v1420
        %v2782 = vunpack.c.h.b16 %v1420
        %v2783 = vunpack.c.l.b16 %v1421
        %v2784 = vunpack.c.h.b16 %v1421
        %v2785 = vunpack.c.l.b16 %v1422
        %v2786 = vunpack.c.h.b16 %v1422
        %v2787 = vunpack.c.l.b16 %v1423
        %v2788 = vunpack.c.h.b16 %v1423
        %v2789 = vunpack.c.l.b16 %v1424
        %v2790 = vunpack.c.h.b16 %v1424
        %v2791 = vunpack.c.l.b16 %v1425
        %v2792 = vunpack.c.h.b16 %v1425
        %v2793 = vunpack.c.l.b16 %v1426
        %v2794 = vunpack.c.h.b16 %v1426
        %v2795 = vunpack.c.l.b16 %v1427
        %v2796 = vunpack.c.h.b16 %v1427
        %v2797 = vunpack.c.l.b16 %v1428
        %v2798 = vunpack.c.h.b16 %v1428
        %v2799 = vunpack.c.l.b16 %v1429
        %v2800 = vunpack.c.h.b16 %v1429
        %v2801 = vunpack.c.l.b16 %v1430
        %v2802 = vunpack.c.h.b16 %v1430
        %v2803 = vunpack.c.l.b16 %v1431
        %v2804 = vunpack.c.h.b16 %v1431
        %v2805 = vunpack.c.l.b16 %v1432
        %v2806 = vunpack.c.h.b16 %v1432
        %v2807 = vunpack.c.l.b16 %v1433
        %v2808 = vunpack.c.h.b16 %v1433
        %v2809 = vunpack.c.l.b16 %v1434
        %v2810 = vunpack.c.h.b16 %v1434
        %v2811 = vunpack.c.l.b16 %v1435
        %v2812 = vunpack.c.h.b16 %v1435
        %v2813 = vunpack.c.l.b16 %v1436
        %v2814 = vunpack.c.h.b16 %v1436
        %v2815 = vunpack.c.l.b16 %v1437
        %v2816 = vunpack.c.h.b16 %v1437
        %v2817 = vunpack.c.l.b16 %v1438
        %v2818 = vunpack.c.h.b16 %v1438
        %v2819 = vunpack.c.l.b16 %v1439
        %v2820 = vunpack.c.h.b16 %v1439
        %v2821 = vunpack.c.l.b16 %v1440
        %v2822 = vunpack.c.h.b16 %v1440
        %v2823 = vunpack.c.l.b16 %v1441
        %v2824 = vunpack.c.h.b16 %v1441
        %v2825 = vunpack.c.l.b16 %v1442
        %v2826 = vunpack.c.h.b16 %v1442
        %v2827 = vunpack.c.l.b16 %v1443
        %v2828 = vunpack.c.h.b16 %v1443
        %v2829 = vunpack.c.l.b16 %v1444
        %v2830 = vunpack.c.h.b16 %v1444
        %v2831 = vunpack.c.l.b16 %v1445
        %v2832 = vunpack.c.h.b16 %v1445
        %v2833 = vunpack.c.l.b16 %v1446
        %v2834 = vunpack.c.h.b16 %v1446
        %v2835 = vunpack.c.l.b16 %v1447
        %v2836 = vunpack.c.h.b16 %v1447
        %v2837 = vunpack.c.l.b16 %v1448
        %v2838 = vunpack.c.h.b16 %v1448
        %v2839 = vunpack.c.l.b16 %v1449
        %v2840 = vunpack.c.h.b16 %v1449
        %v2841 = vunpack.c.l.b16 %v1450
        %v2842 = vunpack.c.h.b16 %v1450
        %v2843 = vunpack.c.l.b16 %v1451
        %v2844 = vunpack.c.h.b16 %v1451
        %v2845 = vunpack.c.l.b16 %v1452
        %v2846 = vunpack.c.h.b16 %v1452
        %v2847 = vunpack.c.l.b16 %v1453
        %v2848 = vunpack.c.h.b16 %v1453
        %v2849 = vunpack.c.l.b16 %v1454
        %v2850 = vunpack.c.h.b16 %v1454
        %v2851 = vunpack.c.l.b16 %v1455
        %v2852 = vunpack.c.h.b16 %v1455
        %v2853 = vunpack.c.l.b16 %v1456
        %v2854 = vunpack.c.h.b16 %v1456
        %v2855 = vunpack.c.l.b16 %v1457
        %v2856 = vunpack.c.h.b16 %v1457
        %v2857 = vunpack.c.l.b16 %v1458
        %v2858 = vunpack.c.h.b16 %v1458
        %v2859 = vunpack.c.l.b16 %v1459
        %v2860 = vunpack.c.h.b16 %v1459
        %v2861 = vunpack.c.l.b16 %v1460
        %v2862 = vunpack.c.h.b16 %v1460
        %v2863 = vunpack.c.l.b16 %v1461
        %v2864 = vunpack.c.h.b16 %v1461
        %v2865 = vunpack.c.l.b16 %v1462
        %v2866 = vunpack.c.h.b16 %v1462
        %v2867 = vunpack.c.l.b16 %v1463
        %v2868 = vunpack.c.h.b16 %v1463
        %v2869 = vunpack.c.l.b16 %v1464
        %v2870 = vunpack.c.h.b16 %v1464
        %v2871 = vunpack.c.l.b16 %v1465
        %v2872 = vunpack.c.h.b16 %v1465
        %v2873 = vunpack.c.l.b16 %v1466
        %v2874 = vunpack.c.h.b16 %v1466
        %v2875 = vunpack.c.l.b16 %v1467
        %v2876 = vunpack.c.h.b16 %v1467
        %v2877 = vunpack.c.l.b16 %v1468
        %v2878 = vunpack.c.h.b16 %v1468
        %v2879 = vunpack.c.l.b16 %v1469
        %v2880 = vunpack.c.h.b16 %v1469
        %v2881 = vunpack.c.l.b16 %v1470
        %v2882 = vunpack.c.h.b16 %v1470
        %v2883 = vunpack.c.l.b16 %v1471
        %v2884 = vunpack.c.h.b16 %v1471
        %v2885 = vunpack.c.l.b16 %v1472
        %v2886 = vunpack.c.h.b16 %v1472
        %v2887 = vunpack.c.l.b16 %v1473
        %v2888 = vunpack.c.h.b16 %v1473
        %v2889 = vunpack.c.l.b16 %v1474
        %v2890 = vunpack.c.h.b16 %v1474
        %v2891 = vunpack.c.l.b16 %v1475
        %v2892 = vunpack.c.h.b16 %v1475
        %v2893 = vunpack.c.l.b16 %v1476
        %v2894 = vunpack.c.h.b16 %v1476
        %v2895 = vunpack.c.l.b16 %v1477
        %v2896 = vunpack.c.h.b16 %v1477
        %v2897 = vunpack.c.l.b16 %v1478
        %v2898 = vunpack.c.h.b16 %v1478
        %v2899 = vunpack.c.l.b16 %v1479
        %v2900 = vunpack.c.h.b16 %v1479
        %v2901 = vunpack.c.l.b16 %v1480
        %v2902 = vunpack.c.h.b16 %v1480
        %v2903 = vunpack.c.l.b16 %v1481
        %v2904 = vunpack.c.h.b16 %v1481
        %v2905 = vunpack.c.l.b16 %v1482
        %v2906 = vunpack.c.h.b16 %v1482
        %v2907 = vunpack.c.l.b16 %v1483
        %v2908 = vunpack.c.h.b16 %v1483
        %v2909 = vunpack.c.l.b16 %v1484
        %v2910 = vunpack.c.h.b16 %v1484
        %v2911 = vunpack.c.l.b16 %v1485
        %v2912 = vunpack.c.h.b16 %v1485
        %v2913 = vunpack.c.l.b16 %v1486
        %v2914 = vunpack.c.h.b16 %v1486
        %v2915 = vunpack.c.l.b16 %v1487
        %v2916 = vunpack.c.h.b16 %v1487
        %v2917 = vunpack.c.l.b16 %v1488
        %v2918 = vunpack.c.h.b16 %v1488
        %v2919 = vunpack.c.l.b16 %v1489
        %v2920 = vunpack.c.h.b16 %v1489
        %v2921 = vunpack.c.l.b16 %v1490
        %v2922 = vunpack.c.h.b16 %v1490
        %v2923 = vunpack.c.l.b16 %v1491
        %v2924 = vunpack.c.h.b16 %v1491
        %v2925 = vunpack.c.l.b16 %v1492
        %v2926 = vunpack.c.h.b16 %v1492
        %v2927 = vunpack.c.l.b16 %v1493
        %v2928 = vunpack.c.h.b16 %v1493
        %v2929 = vunpack.c.l.b16 %v1494
        %v2930 = vunpack.c.h.b16 %v1494
        %v2931 = vunpack.c.l.b16 %v1495
        %v2932 = vunpack.c.h.b16 %v1495
        %v2933 = vunpack.c.l.b16 %v1496
        %v2934 = vunpack.c.h.b16 %v1496
        %v2935 = vunpack.c.l.b16 %v1497
        %v2936 = vunpack.c.h.b16 %v1497
        %v2937 = vunpack.c.l.b16 %v1498
        %v2938 = vunpack.c.h.b16 %v1498
        %v2939 = vunpack.c.l.b16 %v1499
        %v2940 = vunpack.c.h.b16 %v1499
        %v2941 = vunpack.c.l.b16 %v1500
        %v2942 = vunpack.c.h.b16 %v1500
        %v2943 = vunpack.c.l.b16 %v1501
        %v2944 = vunpack.c.h.b16 %v1501
        %v2945 = vunpack.c.l.b16 %v1502
        %v2946 = vunpack.c.h.b16 %v1502
        %v2947 = vunpack.c.l.b16 %v1503
        %v2948 = vunpack.c.h.b16 %v1503
        %v2949 = vunpack.c.l.b16 %v1504
        %v2950 = vunpack.c.h.b16 %v1504
        %v2951 = vunpack.c.l.b16 %v1505
        %v2952 = vunpack.c.h.b16 %v1505
        %v2953 = vunpack.c.l.b16 %v1506
        %v2954 = vunpack.c.h.b16 %v1506
        %v2955 = vunpack.c.l.b16 %v1507
        %v2956 = vunpack.c.h.b16 %v1507
        %v2957 = vunpack.c.l.b16 %v1508
        %v2958 = vunpack.c.h.b16 %v1508
        %v2959 = vunpack.c.l.b16 %v1509
        %v2960 = vunpack.c.h.b16 %v1509
        %v2961 = vunpack.c.l.b16 %v1510
        %v2962 = vunpack.c.h.b16 %v1510
        %v2963 = vunpack.c.l.b16 %v1511
        %v2964 = vunpack.c.h.b16 %v1511
        %v2965 = vunpack.c.l.b16 %v1512
        %v2966 = vunpack.c.h.b16 %v1512
        %v2967 = vunpack.c.l.b16 %v1513
        %v2968 = vunpack.c.h.b16 %v1513
        %v2969 = vunpack.c.l.b16 %v1514
        %v2970 = vunpack.c.h.b16 %v1514
        %v2971 = vunpack.c.l.b16 %v1515
        %v2972 = vunpack.c.h.b16 %v1515
        %v2973 = vunpack.c.l.b16 %v1516
        %v2974 = vunpack.c.h.b16 %v1516
        %v2975 = vunpack.c.l.b16 %v1517
        %v2976 = vunpack.c.h.b16 %v1517
        %v2977 = vunpack.c.l.b16 %v1518
        %v2978 = vunpack.c.h.b16 %v1518
        %v2979 = vunpack.c.l.b16 %v1519
        %v2980 = vunpack.c.h.b16 %v1519
        %v2981 = vunpack.c.l.b16 %v1520
        %v2982 = vunpack.c.h.b16 %v1520
        %v2983 = vunpack.c.l.b16 %v1521
        %v2984 = vunpack.c.h.b16 %v1521
        %v2985 = vunpack.c.l.b16 %v1522
        %v2986 = vunpack.c.h.b16 %v1522
        %v2987 = vunpack.c.l.b16 %v1523
        %v2988 = vunpack.c.h.b16 %v1523
        %v2989 = vunpack.c.l.b16 %v1524
        %v2990 = vunpack.c.h.b16 %v1524
        %v2991 = vunpack.c.l.b16 %v1525
        %v2992 = vunpack.c.h.b16 %v1525
        %v2993 = vunpack.c.l.b16 %v1526
        %v2994 = vunpack.c.h.b16 %v1526
        %v2995 = vunpack.c.l.b16 %v1527
        %v2996 = vunpack.c.h.b16 %v1527
        %v2997 = vunpack.c.l.b16 %v1528
        %v2998 = vunpack.c.h.b16 %v1528
        %v2999 = vunpack.c.l.b16 %v1529
        %v3000 = vunpack.c.h.b16 %v1529
        %v3001 = vunpack.c.l.b16 %v1530
        %v3002 = vunpack.c.h.b16 %v1530
        %v3003 = vunpack.c.l.b16 %v1531
        %v3004 = vunpack.c.h.b16 %v1531
        %v3005 = vunpack.c.l.b16 %v1532
        %v3006 = vunpack.c.h.b16 %v1532
        %v3007 = vunpack.c.l.b16 %v1533
        %v3008 = vunpack.c.h.b16 %v1533
        %v3009 = vunpack.c.l.b16 %v1534
        %v3010 = vunpack.c.h.b16 %v1534
        %v3011 = vunpack.c.l.b16 %v1535
        %v3012 = vunpack.c.h.b16 %v1535
        %v3013 = vunpack.c.l.b16 %v1536
        %v3014 = vunpack.c.h.b16 %v1536
        %v3015 = vunpack.c.l.b16 %v1537
        %v3016 = vunpack.c.h.b16 %v1537
        %v3017 = vunpack.c.l.b16 %v1538
        %v3018 = vunpack.c.h.b16 %v1538
        %v3019 = vunpack.c.l.b16 %v1539
        %v3020 = vunpack.c.h.b16 %v1539
        %v3021 = vunpack.c.l.b16 %v1540
        %v3022 = vunpack.c.h.b16 %v1540
        %v3023 = vunpack.c.l.b16 %v1541
        %v3024 = vunpack.c.h.b16 %v1541
        %v3025 = vunpack.c.l.b16 %v1542
        %v3026 = vunpack.c.h.b16 %v1542
        %v3027 = vunpack.c.l.b16 %v1543
        %v3028 = vunpack.c.h.b16 %v1543
        %v3029 = vunpack.c.l.b16 %v1544
        %v3030 = vunpack.c.h.b16 %v1544
        %v3031 = vunpack.c.l.b16 %v1545
        %v3032 = vunpack.c.h.b16 %v1545
        %v3033 = vunpack.c.l.b16 %v1546
        %v3034 = vunpack.c.h.b16 %v1546
        %v3035 = vunpack.c.l.b16 %v1547
        %v3036 = vunpack.c.h.b16 %v1547
        %v3037 = vunpack.c.l.b16 %v1548
        %v3038 = vunpack.c.h.b16 %v1548
        %v3039 = vunpack.c.l.b16 %v1549
        %v3040 = vunpack.c.h.b16 %v1549
        %v3041 = vunpack.c.l.b16 %v1550
        %v3042 = vunpack.c.h.b16 %v1550
        %v3043 = vunpack.c.l.b16 %v1551
        %v3044 = vunpack.c.h.b16 %v1551
        %v3045 = vunpack.c.l.b16 %v1552
        %v3046 = vunpack.c.h.b16 %v1552
        %v3047 = vunpack.c.l.b16 %v1553
        %v3048 = vunpack.c.h.b16 %v1553
        %v3049 = vunpack.c.l.b16 %v1554
        %v3050 = vunpack.c.h.b16 %v1554
        %v3051 = vunpack.c.l.b16 %v1555
        %v3052 = vunpack.c.h.b16 %v1555
        %v3053 = vunpack.c.l.b16 %v1556
        %v3054 = vunpack.c.h.b16 %v1556
        %v3055 = vunpack.c.l.b16 %v1557
        %v3056 = vunpack.c.h.b16 %v1557
        %v3057 = vunpack.c.l.b16 %v1558
        %v3058 = vunpack.c.h.b16 %v1558
        %v3059 = vunpack.c.l.b16 %v1559
        %v3060 = vunpack.c.h.b16 %v1559
        %v3061 = vunpack.c.l.b16 %v1560
        %v3062 = vunpack.c.h.b16 %v1560
        %v3063 = vunpack.c.l.b16 %v1561
        %v3064 = vunpack.c.h.b16 %v1561
        %v3065 = vunpack.c.l.b16 %v1562
        %v3066 = vunpack.c.h.b16 %v1562
        %v3067 = vunpack.c.l.b16 %v1563
        %v3068 = vunpack.c.h.b16 %v1563
        %v3069 = vunpack.c.l.b16 %v1564
        %v3070 = vunpack.c.h.b16 %v1564
        %v3071 = vunpack.c.l.b16 %v1565
        %v3072 = vunpack.c.h.b16 %v1565
        %v3073 = vunpack.c.l.b16 %v1566
        %v3074 = vunpack.c.h.b16 %v1566
        %v3075 = vunpack.c.l.b16 %v1567
        %v3076 = vunpack.c.h.b16 %v1567
        %v3077 = vunpack.c.l.b16 %v1568
        %v3078 = vunpack.c.h.b16 %v1568
        %v3079 = vunpack.c.l.b16 %v1569
        %v3080 = vunpack.c.h.b16 %v1569
        %v3081 = vunpack.c.l.b16 %v1570
        %v3082 = vunpack.c.h.b16 %v1570
        %v3083 = vunpack.c.l.b16 %v1571
        %v3084 = vunpack.c.h.b16 %v1571
        %v3085 = vunpack.c.l.b16 %v1572
        %v3086 = vunpack.c.h.b16 %v1572
        %v3087 = vunpack.c.l.b16 %v1573
        %v3088 = vunpack.c.h.b16 %v1573
        %v3089 = vunpack.c.l.b16 %v1574
        %v3090 = vunpack.c.h.b16 %v1574
        %v3091 = vunpack.c.l.b16 %v1575
        %v3092 = vunpack.c.h.b16 %v1575
        %v3093 = vunpack.c.l.b16 %v1576
        %v3094 = vunpack.c.h.b16 %v1576
        %v3095 = vunpack.c.l.b16 %v1577
        %v3096 = vunpack.c.h.b16 %v1577
        %v3097 = vunpack.c.l.b16 %v1578
        %v3098 = vunpack.c.h.b16 %v1578
        %v3099 = vunpack.c.l.b16 %v1579
        %v3100 = vunpack.c.h.b16 %v1579
        %v3101 = vunpack.c.l.b16 %v1580
        %v3102 = vunpack.c.h.b16 %v1580
        %v3103 = vunpack.c.l.b16 %v1581
        %v3104 = vunpack.c.h.b16 %v1581
        %v3105 = vunpack.c.l.b16 %v1582
        %v3106 = vunpack.c.h.b16 %v1582
        %v3107 = vunpack.c.l.b16 %v1583
        %v3108 = vunpack.c.h.b16 %v1583
        %v3109 = vunpack.c.l.b16 %v1584
        %v3110 = vunpack.c.h.b16 %v1584
        %v3111 = vunpack.c.l.b16 %v1585
        %v3112 = vunpack.c.h.b16 %v1585
        %v3113 = vunpack.c.l.b16 %v1586
        %v3114 = vunpack.c.h.b16 %v1586
        %v3115 = vunpack.c.l.b16 %v1587
        %v3116 = vunpack.c.h.b16 %v1587
        %v3117 = vunpack.c.l.b16 %v1588
        %v3118 = vunpack.c.h.b16 %v1588
        %v3119 = vunpack.c.l.b16 %v1589
        %v3120 = vunpack.c.h.b16 %v1589
        %v3121 = vunpack.c.l.b16 %v1590
        %v3122 = vunpack.c.h.b16 %v1590
        %v3123 = vunpack.c.l.b16 %v1591
        %v3124 = vunpack.c.h.b16 %v1591
        %v3125 = vunpack.c.l.b16 %v1592
        %v3126 = vunpack.c.h.b16 %v1592
        %v3127 = vunpack.c.l.b16 %v1593
        %v3128 = vunpack.c.h.b16 %v1593
        %v3129 = vunpack.c.l.b16 %v1594
        %v3130 = vunpack.c.h.b16 %v1594
        %v3131 = vunpack.c.l.b16 %v1595
        %v3132 = vunpack.c.h.b16 %v1595
        %v3133 = vunpack.c.l.b16 %v1596
        %v3134 = vunpack.c.h.b16 %v1596
        %v3135 = vunpack.c.l.b16 %v1597
        %v3136 = vunpack.c.h.b16 %v1597
        %v3137 = vunpack.c.l.b16 %v1598
        %v3138 = vunpack.c.h.b16 %v1598
        %v3139 = vunpack.c.l.b16 %v1599
        %v3140 = vunpack.c.h.b16 %v1599
        %v3141 = vunpack.c.l.b16 %v1600
        %v3142 = vunpack.c.h.b16 %v1600
        %v3143 = vunpack.c.l.b16 %v1601
        %v3144 = vunpack.c.h.b16 %v1601
        %v3145 = vunpack.c.l.b16 %v1602
        %v3146 = vunpack.c.h.b16 %v1602
        %v3147 = vunpack.c.l.b16 %v1603
        %v3148 = vunpack.c.h.b16 %v1603
        %v3149 = vunpack.c.l.b16 %v1604
        %v3150 = vunpack.c.h.b16 %v1604
        %v3151 = vunpack.c.l.b16 %v1605
        %v3152 = vunpack.c.h.b16 %v1605
        %v3153 = vunpack.c.l.b16 %v1606
        %v3154 = vunpack.c.h.b16 %v1606
        %v3155 = vunpack.c.l.b16 %v1607
        %v3156 = vunpack.c.h.b16 %v1607
        %v3157 = vunpack.c.l.b16 %v1608
        %v3158 = vunpack.c.h.b16 %v1608
        %v3159 = vunpack.c.l.b16 %v1609
        %v3160 = vunpack.c.h.b16 %v1609
        %v3161 = vunpack.c.l.b16 %v1610
        %v3162 = vunpack.c.h.b16 %v1610
        %v3163 = vunpack.c.l.b16 %v1611
        %v3164 = vunpack.c.h.b16 %v1611
        %v3165 = vunpack.c.l.b16 %v1612
        %v3166 = vunpack.c.h.b16 %v1612
        %v3167 = vunpack.c.l.b16 %v1613
        %v3168 = vunpack.c.h.b16 %v1613
        %v3169 = vunpack.c.l.b16 %v1614
        %v3170 = vunpack.c.h.b16 %v1614
        %v3171 = vunpack.c.l.b16 %v1615
        %v3172 = vunpack.c.h.b16 %v1615
        %v3173 = vunpack.c.l.b16 %v1616
        %v3174 = vunpack.c.h.b16 %v1616
        %v3175 = vunpack.c.l.b16 %v1617
        %v3176 = vunpack.c.h.b16 %v1617
        %v3177 = vunpack.c.l.b16 %v1618
        %v3178 = vunpack.c.h.b16 %v1618
        %v3179 = vunpack.c.l.b16 %v1619
        %v3180 = vunpack.c.h.b16 %v1619
        %v3181 = vunpack.c.l.b16 %v1620
        %v3182 = vunpack.c.h.b16 %v1620
        %v3183 = vunpack.c.l.b16 %v1621
        %v3184 = vunpack.c.h.b16 %v1621
        %v3185 = vunpack.c.l.b16 %v1622
        %v3186 = vunpack.c.h.b16 %v1622
        %v3187 = vunpack.c.l.b16 %v1623
        %v3188 = vunpack.c.h.b16 %v1623
        %v3189 = vunpack.c.l.b16 %v1624
        %v3190 = vunpack.c.h.b16 %v1624
        %v3191 = vunpack.c.l.b16 %v1625
        %v3192 = vunpack.c.h.b16 %v1625
        %v3193 = vunpack.c.l.b16 %v1626
        %v3194 = vunpack.c.h.b16 %v1626
        %v3195 = vunpack.c.l.b16 %v1627
        %v3196 = vunpack.c.h.b16 %v1627
        %v3197 = vunpack.c.l.b16 %v1628
        %v3198 = vunpack.c.h.b16 %v1628
        %v3199 = vunpack.c.l.b16 %v1629
        %v3200 = vunpack.c.h.b16 %v1629
        %v3201 = vunpack.c.l.b16 %v1630
        %v3202 = vunpack.c.h.b16 %v1630
        %v3203 = vunpack.c.l.b16 %v1631
        %v3204 = vunpack.c.h.b16 %v1631
        %v3205 = vunpack.c.l.b16 %v1632
        %v3206 = vunpack.c.h.b16 %v1632
        %v3207 = vunpack.c.l.b16 %v1633
        %v3208 = vunpack.c.h.b16 %v1633
        %v3209 = vunpack.c.l.b16 %v1634
        %v3210 = vunpack.c.h.b16 %v1634
        %v3211 = vunpack.c.l.b16 %v1635
        %v3212 = vunpack.c.h.b16 %v1635
        %v3213 = vunpack.c.l.b16 %v1636
        %v3214 = vunpack.c.h.b16 %v1636
        %v3215 = vpack.c.b16 %v2199, %v2191
        %v3216 = vpack.c.b16 %v2200, %v2192
        %v3217 = vpack.c.b16 %v2201, %v2193
        %v3218 = vpack.c.b16 %v2202, %v2194
        %v3219 = vpack.c.b16 %v2203, %v2195
        %v3220 = vpack.c.b16 %v2204, %v2196
        %v3221 = vpack.c.b16 %v2205, %v2197
        %v3222 = vpack.c.b16 %v2206, %v2198
        %v3223 = vpack.c.b16 %v2215, %v2207
        %v3224 = vpack.c.b16 %v2216, %v2208
        %v3225 = vpack.c.b16 %v2217, %v2209
        %v3226 = vpack.c.b16 %v2218, %v2210
        %v3227 = vpack.c.b16 %v2219, %v2211
        %v3228 = vpack.c.b16 %v2220, %v2212
        %v3229 = vpack.c.b16 %v2221, %v2213
        %v3230 = vpack.c.b16 %v2222, %v2214
        %v3231 = vpack.c.b16 %v2231, %v2223
        %v3232 = vpack.c.b16 %v2232, %v2224
        %v3233 = vpack.c.b16 %v2233, %v2225
        %v3234 = vpack.c.b16 %v2234, %v2226
        %v3235 = vpack.c.b16 %v2235, %v2227
        %v3236 = vpack.c.b16 %v2236, %v2228
        %v3237 = vpack.c.b16 %v2237, %v2229
        %v3238 = vpack.c.b16 %v2238, %v2230
        %v3239 = vpack.c.b16 %v2247, %v2239
        %v3240 = vpack.c.b16 %v2248, %v2240
        %v3241 = vpack.c.b16 %v2249, %v2241
        %v3242 = vpack.c.b16 %v2250, %v2242
        %v3243 = vpack.c.b16 %v2251, %v2243
        %v3244 = vpack.c.b16 %v2252, %v2244
        %v3245 = vpack.c.b16 %v2253, %v2245
        %v3246 = vpack.c.b16 %v2254, %v2246
        %v3247 = vpack.c.b16 %v2263, %v2255
        %v3248 = vpack.c.b16 %v2264, %v2256
        %v3249 = vpack.c.b16 %v2265, %v2257
        %v3250 = vpack.c.b16 %v2266, %v2258
        %v3251 = vpack.c.b16 %v2267, %v2259
        %v3252 = vpack.c.b16 %v2268, %v2260
        %v3253 = vpack.c.b16 %v2269, %v2261
        %v3254 = vpack.c.b16 %v2270, %v2262
        %v3255 = vpack.c.b16 %v2279, %v2271
        %v3256 = vpack.c.b16 %v2280, %v2272
        %v3257 = vpack.c.b16 %v2281, %v2273
        %v3258 = vpack.c.b16 %v2282, %v2274
        %v3259 = vpack.c.b16 %v2283, %v2275
        %v3260 = vpack.c.b16 %v2284, %v2276
        %v3261 = vpack.c.b16 %v2285, %v2277
        %v3262 = vpack.c.b16 %v2286, %v2278
        %v3263 = vpack.c.b16 %v2295, %v2287
        %v3264 = vpack.c.b16 %v2296, %v2288
        %v3265 = vpack.c.b16 %v2297, %v2289
        %v3266 = vpack.c.b16 %v2298, %v2290
        %v3267 = vpack.c.b16 %v2299, %v2291
        %v3268 = vpack.c.b16 %v2300, %v2292
        %v3269 = vpack.c.b16 %v2301, %v2293
        %v3270 = vpack.c.b16 %v2302, %v2294
        %v3271 = vpack.c.b16 %v2311, %v2303
        %v3272 = vpack.c.b16 %v2312, %v2304
        %v3273 = vpack.c.b16 %v2313, %v2305
        %v3274 = vpack.c.b16 %v2314, %v2306
        %v3275 = vpack.c.b16 %v2315, %v2307
        %v3276 = vpack.c.b16 %v2316, %v2308
        %v3277 = vpack.c.b16 %v2317, %v2309
        %v3278 = vpack.c.b16 %v2318, %v2310
        %v3279 = vpack.c.b16 %v2327, %v2319
        %v3280 = vpack.c.b16 %v2328, %v2320
        %v3281 = vpack.c.b16 %v2329, %v2321
        %v3282 = vpack.c.b16 %v2330, %v2322
        %v3283 = vpack.c.b16 %v2331, %v2323
        %v3284 = vpack.c.b16 %v2332, %v2324
        %v3285 = vpack.c.b16 %v2333, %v2325
        %v3286 = vpack.c.b16 %v2334, %v2326
        %v3287 = vpack.c.b16 %v2343, %v2335
        %v3288 = vpack.c.b16 %v2344, %v2336
        %v3289 = vpack.c.b16 %v2345, %v2337
        %v3290 = vpack.c.b16 %v2346, %v2338
        %v3291 = vpack.c.b16 %v2347, %v2339
        %v3292 = vpack.c.b16 %v2348, %v2340
        %v3293 = vpack.c.b16 %v2349, %v2341
        %v3294 = vpack.c.b16 %v2350, %v2342
        %v3295 = vpack.c.b16 %v2359, %v2351
        %v3296 = vpack.c.b16 %v2360, %v2352
        %v3297 = vpack.c.b16 %v2361, %v2353
        %v3298 = vpack.c.b16 %v2362, %v2354
        %v3299 = vpack.c.b16 %v2363, %v2355
        %v3300 = vpack.c.b16 %v2364, %v2356
        %v3301 = vpack.c.b16 %v2365, %v2357
        %v3302 = vpack.c.b16 %v2366, %v2358
        %v3303 = vpack.c.b16 %v2375, %v2367
        %v3304 = vpack.c.b16 %v2376, %v2368
        %v3305 = vpack.c.b16 %v2377, %v2369
        %v3306 = vpack.c.b16 %v2378, %v2370
        %v3307 = vpack.c.b16 %v2379, %v2371
        %v3308 = vpack.c.b16 %v2380, %v2372
        %v3309 = vpack.c.b16 %v2381, %v2373
        %v3310 = vpack.c.b16 %v2382, %v2374
        %v3311 = vpack.c.b16 %v2391, %v2383
        %v3312 = vpack.c.b16 %v2392, %v2384
        %v3313 = vpack.c.b16 %v2393, %v2385
        %v3314 = vpack.c.b16 %v2394, %v2386
        %v3315 = vpack.c.b16 %v2395, %v2387
        %v3316 = vpack.c.b16 %v2396, %v2388
        %v3317 = vpack.c.b16 %v2397, %v2389
        %v3318 = vpack.c.b16 %v2398, %v2390
        %v3319 = vpack.c.b16 %v2407, %v2399
        %v3320 = vpack.c.b16 %v2408, %v2400
        %v3321 = vpack.c.b16 %v2409, %v2401
        %v3322 = vpack.c.b16 %v2410, %v2402
        %v3323 = vpack.c.b16 %v2411, %v2403
        %v3324 = vpack.c.b16 %v2412, %v2404
        %v3325 = vpack.c.b16 %v2413, %v2405
        %v3326 = vpack.c.b16 %v2414, %v2406
        %v3327 = vpack.c.b16 %v2423, %v2415
        %v3328 = vpack.c.b16 %v2424, %v2416
        %v3329 = vpack.c.b16 %v2425, %v2417
        %v3330 = vpack.c.b16 %v2426, %v2418
        %v3331 = vpack.c.b16 %v2427, %v2419
        %v3332 = vpack.c.b16 %v2428, %v2420
        %v3333 = vpack.c.b16 %v2429, %v2421
        %v3334 = vpack.c.b16 %v2430, %v2422
        %v3335 = vpack.c.b16 %v2439, %v2431
        %v3336 = vpack.c.b16 %v2440, %v2432
        %v3337 = vpack.c.b16 %v2441, %v2433
        %v3338 = vpack.c.b16 %v2442, %v2434
        %v3339 = vpack.c.b16 %v2443, %v2435
        %v3340 = vpack.c.b16 %v2444, %v2436
        %v3341 = vpack.c.b16 %v2445, %v2437
        %v3342 = vpack.c.b16 %v2446, %v2438
        %v3343 = vpack.c.b16 %v2455, %v2447
        %v3344 = vpack.c.b16 %v2456, %v2448
        %v3345 = vpack.c.b16 %v2457, %v2449
        %v3346 = vpack.c.b16 %v2458, %v2450
        %v3347 = vpack.c.b16 %v2459, %v2451
        %v3348 = vpack.c.b16 %v2460, %v2452
        %v3349 = vpack.c.b16 %v2461, %v2453
        %v3350 = vpack.c.b16 %v2462, %v2454
        %v3351 = vpack.c.b16 %v2471, %v2463
        %v3352 = vpack.c.b16 %v2472, %v2464
        %v3353 = vpack.c.b16 %v2473, %v2465
        %v3354 = vpack.c.b16 %v2474, %v2466
        %v3355 = vpack.c.b16 %v2475, %v2467
        %v3356 = vpack.c.b16 %v2476, %v2468
        %v3357 = vpack.c.b16 %v2477, %v2469
        %v3358 = vpack.c.b16 %v2478, %v2470
        %v3359 = vpack.c.b16 %v2487, %v2479
        %v3360 = vpack.c.b16 %v2488, %v2480
        %v3361 = vpack.c.b16 %v2489, %v2481
        %v3362 = vpack.c.b16 %v2490, %v2482
        %v3363 = vpack.c.b16 %v2491, %v2483
        %v3364 = vpack.c.b16 %v2492, %v2484
        %v3365 = vpack.c.b16 %v2493, %v2485
        %v3366 = vpack.c.b16 %v2494, %v2486
        %v3367 = vpack.c.b16 %v2503, %v2495
        %v3368 = vpack.c.b16 %v2504, %v2496
        %v3369 = vpack.c.b16 %v2505, %v2497
        %v3370 = vpack.c.b16 %v2506, %v2498
        %v3371 = vpack.c.b16 %v2507, %v2499
        %v3372 = vpack.c.b16 %v2508, %v2500
        %v3373 = vpack.c.b16 %v2509, %v2501
        %v3374 = vpack.c.b16 %v2510, %v2502
        %v3375 = vpack.c.b16 %v2519, %v2511
        %v3376 = vpack.c.b16 %v2520, %v2512
        %v3377 = vpack.c.b16 %v2521, %v2513
        %v3378 = vpack.c.b16 %v2522, %v2514
        %v3379 = vpack.c.b16 %v2523, %v2515
        %v3380 = vpack.c.b16 %v2524, %v2516
        %v3381 = vpack.c.b16 %v2525, %v2517
        %v3382 = vpack.c.b16 %v2526, %v2518
        %v3383 = vpack.c.b16 %v2535, %v2527
        %v3384 = vpack.c.b16 %v2536, %v2528
        %v3385 = vpack.c.b16 %v2537, %v2529
        %v3386 = vpack.c.b16 %v2538, %v2530
        %v3387 = vpack.c.b16 %v2539, %v2531
        %v3388 = vpack.c.b16 %v2540, %v2532
        %v3389 = vpack.c.b16 %v2541, %v2533
        %v3390 = vpack.c.b16 %v2542, %v2534
        %v3391 = vpack.c.b16 %v2551, %v2543
        %v3392 = vpack.c.b16 %v2552, %v2544
        %v3393 = vpack.c.b16 %v2553, %v2545
        %v3394 = vpack.c.b16 %v2554, %v2546
        %v3395 = vpack.c.b16 %v2555, %v2547
        %v3396 = vpack.c.b16 %v2556, %v2548
        %v3397 = vpack.c.b16 %v2557, %v2549
        %v3398 = vpack.c.b16 %v2558, %v2550
        %v3399 = vpack.c.b16 %v2567, %v2559
        %v3400 = vpack.c.b16 %v2568, %v2560
        %v3401 = vpack.c.b16 %v2569, %v2561
        %v3402 = vpack.c.b16 %v2570, %v2562
        %v3403 = vpack.c.b16 %v2571, %v2563
        %v3404 = vpack.c.b16 %v2572, %v2564
        %v3405 = vpack.c.b16 %v2573, %v2565
        %v3406 = vpack.c.b16 %v2574, %v2566
        %v3407 = vpack.c.b16 %v2583, %v2575
        %v3408 = vpack.c.b16 %v2584, %v2576
        %v3409 = vpack.c.b16 %v2585, %v2577
        %v3410 = vpack.c.b16 %v2586, %v2578
        %v3411 = vpack.c.b16 %v2587, %v2579
        %v3412 = vpack.c.b16 %v2588, %v2580
        %v3413 = vpack.c.b16 %v2589, %v2581
        %v3414 = vpack.c.b16 %v2590, %v2582
        %v3415 = vpack.c.b16 %v2599, %v2591
        %v3416 = vpack.c.b16 %v2600, %v2592
        %v3417 = vpack.c.b16 %v2601, %v2593
        %v3418 = vpack.c.b16 %v2602, %v2594
        %v3419 = vpack.c.b16 %v2603, %v2595
        %v3420 = vpack.c.b16 %v2604, %v2596
        %v3421 = vpack.c.b16 %v2605, %v2597
        %v3422 = vpack.c.b16 %v2606, %v2598
        %v3423 = vpack.c.b16 %v2615, %v2607
        %v3424 = vpack.c.b16 %v2616, %v2608
        %v3425 = vpack.c.b16 %v2617, %v2609
        %v3426 = vpack.c.b16 %v2618, %v2610
        %v3427 = vpack.c.b16 %v2619, %v2611
        %v3428 = vpack.c.b16 %v2620, %v2612
        %v3429 = vpack.c.b16 %v2621, %v2613
        %v3430 = vpack.c.b16 %v2622, %v2614
        %v3431 = vpack.c.b16 %v2631, %v2623
        %v3432 = vpack.c.b16 %v2632, %v2624
        %v3433 = vpack.c.b16 %v2633, %v2625
        %v3434 = vpack.c.b16 %v2634, %v2626
        %v3435 = vpack.c.b16 %v2635, %v2627
        %v3436 = vpack.c.b16 %v2636, %v2628
        %v3437 = vpack.c.b16 %v2637, %v2629
        %v3438 = vpack.c.b16 %v2638, %v2630
        %v3439 = vpack.c.b16 %v2647, %v2639
        %v3440 = vpack.c.b16 %v2648, %v2640
        %v3441 = vpack.c.b16 %v2649, %v2641
        %v3442 = vpack.c.b16 %v2650, %v2642
        %v3443 = vpack.c.b16 %v2651, %v2643
        %v3444 = vpack.c.b16 %v2652, %v2644
        %v3445 = vpack.c.b16 %v2653, %v2645
        %v3446 = vpack.c.b16 %v2654, %v2646
        %v3447 = vpack.c.b16 %v2663, %v2655
        %v3448 = vpack.c.b16 %v2664, %v2656
        %v3449 = vpack.c.b16 %v2665, %v2657
        %v3450 = vpack.c.b16 %v2666, %v2658
        %v3451 = vpack.c.b16 %v2667, %v2659
        %v3452 = vpack.c.b16 %v2668, %v2660
        %v3453 = vpack.c.b16 %v2669, %v2661
        %v3454 = vpack.c.b16 %v2670, %v2662
        %v3455 = vpack.c.b16 %v2679, %v2671
        %v3456 = vpack.c.b16 %v2680, %v2672
        %v3457 = vpack.c.b16 %v2681, %v2673
        %v3458 = vpack.c.b16 %v2682, %v2674
        %v3459 = vpack.c.b16 %v2683, %v2675
        %v3460 = vpack.c.b16 %v2684, %v2676
        %v3461 = vpack.c.b16 %v2685, %v2677
        %v3462 = vpack.c.b16 %v2686, %v2678
        %v3463 = vpack.c.b16 %v2695, %v2687
        %v3464 = vpack.c.b16 %v2696, %v2688
        %v3465 = vpack.c.b16 %v2697, %v2689
        %v3466 = vpack.c.b16 %v2698, %v2690
        %v3467 = vpack.c.b16 %v2699, %v2691
        %v3468 = vpack.c.b16 %v2700, %v2692
        %v3469 = vpack.c.b16 %v2701, %v2693
        %v3470 = vpack.c.b16 %v2702, %v2694
        %v3471 = vpack.c.b16 %v2711, %v2703
        %v3472 = vpack.c.b16 %v2712, %v2704
        %v3473 = vpack.c.b16 %v2713, %v2705
        %v3474 = vpack.c.b16 %v2714, %v2706
        %v3475 = vpack.c.b16 %v2715, %v2707
        %v3476 = vpack.c.b16 %v2716, %v2708
        %v3477 = vpack.c.b16 %v2717, %v2709
        %v3478 = vpack.c.b16 %v2718, %v2710
        %v3479 = vpack.c.b16 %v2727, %v2719
        %v3480 = vpack.c.b16 %v2728, %v2720
        %v3481 = vpack.c.b16 %v2729, %v2721
        %v3482 = vpack.c.b16 %v2730, %v2722
        %v3483 = vpack.c.b16 %v2731, %v2723
        %v3484 = vpack.c.b16 %v2732, %v2724
        %v3485 = vpack.c.b16 %v2733, %v2725
        %v3486 = vpack.c.b16 %v2734, %v2726
        %v3487 = vpack.c.b16 %v2743, %v2735
        %v3488 = vpack.c.b16 %v2744, %v2736
        %v3489 = vpack.c.b16 %v2745, %v2737
        %v3490 = vpack.c.b16 %v2746, %v2738
        %v3491 = vpack.c.b16 %v2747, %v2739
        %v3492 = vpack.c.b16 %v2748, %v2740
        %v3493 = vpack.c.b16 %v2749, %v2741
        %v3494 = vpack.c.b16 %v2750, %v2742
        %v3495 = vpack.c.b16 %v2759, %v2751
        %v3496 = vpack.c.b16 %v2760, %v2752
        %v3497 = vpack.c.b16 %v2761, %v2753
        %v3498 = vpack.c.b16 %v2762, %v2754
        %v3499 = vpack.c.b16 %v2763, %v2755
        %v3500 = vpack.c.b16 %v2764, %v2756
        %v3501 = vpack.c.b16 %v2765, %v2757
        %v3502 = vpack.c.b16 %v2766, %v2758
        %v3503 = vpack.c.b16 %v2775, %v2767
        %v3504 = vpack.c.b16 %v2776, %v2768
        %v3505 = vpack.c.b16 %v2777, %v2769
        %v3506 = vpack.c.b16 %v2778, %v2770
        %v3507 = vpack.c.b16 %v2779, %v2771
        %v3508 = vpack.c.b16 %v2780, %v2772
        %v3509 = vpack.c.b16 %v2781, %v2773
        %v3510 = vpack.c.b16 %v2782, %v2774
        %v3511 = vpack.c.b16 %v2791, %v2783
        %v3512 = vpack.c.b16 %v2792, %v2784
        %v3513 = vpack.c.b16 %v2793, %v2785
        %v3514 = vpack.c.b16 %v2794, %v2786
        %v3515 = vpack.c.b16 %v2795, %v2787
        %v3516 = vpack.c.b16 %v2796, %v2788
        %v3517 = vpack.c.b16 %v2797, %v2789
        %v3518 = vpack.c.b16 %v2798, %v2790
        %v3519 = vpack.c.b16 %v2807, %v2799
        %v3520 = vpack.c.b16 %v2808, %v2800
        %v3521 = vpack.c.b16 %v2809, %v2801
        %v3522 = vpack.c.b16 %v2810, %v2802
        %v3523 = vpack.c.b16 %v2811, %v2803
        %v3524 = vpack.c.b16 %v2812, %v2804
        %v3525 = vpack.c.b16 %v2813, %v2805
        %v3526 = vpack.c.b16 %v2814, %v2806
        %v3527 = vpack.c.b16 %v2823, %v2815
        %v3528 = vpack.c.b16 %v2824, %v2816
        %v3529 = vpack.c.b16 %v2825, %v2817
        %v3530 = vpack.c.b16 %v2826, %v2818
        %v3531 = vpack.c.b16 %v2827, %v2819
        %v3532 = vpack.c.b16 %v2828, %v2820
        %v3533 = vpack.c.b16 %v2829, %v2821
        %v3534 = vpack.c.b16 %v2830, %v2822
        %v3535 = vpack.c.b16 %v2839, %v2831
        %v3536 = vpack.c.b16 %v2840, %v2832
        %v3537 = vpack.c.b16 %v2841, %v2833
        %v3538 = vpack.c.b16 %v2842, %v2834
        %v3539 = vpack.c.b16 %v2843, %v2835
        %v3540 = vpack.c.b16 %v2844, %v2836
        %v3541 = vpack.c.b16 %v2845, %v2837
        %v3542 = vpack.c.b16 %v2846, %v2838
        %v3543 = vpack.c.b16 %v2855, %v2847
        %v3544 = vpack.c.b16 %v2856, %v2848
        %v3545 = vpack.c.b16 %v2857, %v2849
        %v3546 = vpack.c.b16 %v2858, %v2850
        %v3547 = vpack.c.b16 %v2859, %v2851
        %v3548 = vpack.c.b16 %v2860, %v2852
        %v3549 = vpack.c.b16 %v2861, %v2853
        %v3550 = vpack.c.b16 %v2862, %v2854
        %v3551 = vpack.c.b16 %v2871, %v2863
        %v3552 = vpack.c.b16 %v2872, %v2864
        %v3553 = vpack.c.b16 %v2873, %v2865
        %v3554 = vpack.c.b16 %v2874, %v2866
        %v3555 = vpack.c.b16 %v2875, %v2867
        %v3556 = vpack.c.b16 %v2876, %v2868
        %v3557 = vpack.c.b16 %v2877, %v2869
        %v3558 = vpack.c.b16 %v2878, %v2870
        %v3559 = vpack.c.b16 %v2887, %v2879
        %v3560 = vpack.c.b16 %v2888, %v2880
        %v3561 = vpack.c.b16 %v2889, %v2881
        %v3562 = vpack.c.b16 %v2890, %v2882
        %v3563 = vpack.c.b16 %v2891, %v2883
        %v3564 = vpack.c.b16 %v2892, %v2884
        %v3565 = vpack.c.b16 %v2893, %v2885
        %v3566 = vpack.c.b16 %v2894, %v2886
        %v3567 = vpack.c.b16 %v2903, %v2895
        %v3568 = vpack.c.b16 %v2904, %v2896
        %v3569 = vpack.c.b16 %v2905, %v2897
        %v3570 = vpack.c.b16 %v2906, %v2898
        %v3571 = vpack.c.b16 %v2907, %v2899
        %v3572 = vpack.c.b16 %v2908, %v2900
        %v3573 = vpack.c.b16 %v2909, %v2901
        %v3574 = vpack.c.b16 %v2910, %v2902
        %v3575 = vpack.c.b16 %v2919, %v2911
        %v3576 = vpack.c.b16 %v2920, %v2912
        %v3577 = vpack.c.b16 %v2921, %v2913
        %v3578 = vpack.c.b16 %v2922, %v2914
        %v3579 = vpack.c.b16 %v2923, %v2915
        %v3580 = vpack.c.b16 %v2924, %v2916
        %v3581 = vpack.c.b16 %v2925, %v2917
        %v3582 = vpack.c.b16 %v2926, %v2918
        %v3583 = vpack.c.b16 %v2935, %v2927
        %v3584 = vpack.c.b16 %v2936, %v2928
        %v3585 = vpack.c.b16 %v2937, %v2929
        %v3586 = vpack.c.b16 %v2938, %v2930
        %v3587 = vpack.c.b16 %v2939, %v2931
        %v3588 = vpack.c.b16 %v2940, %v2932
        %v3589 = vpack.c.b16 %v2941, %v2933
        %v3590 = vpack.c.b16 %v2942, %v2934
        %v3591 = vpack.c.b16 %v2951, %v2943
        %v3592 = vpack.c.b16 %v2952, %v2944
        %v3593 = vpack.c.b16 %v2953, %v2945
        %v3594 = vpack.c.b16 %v2954, %v2946
        %v3595 = vpack.c.b16 %v2955, %v2947
        %v3596 = vpack.c.b16 %v2956, %v2948
        %v3597 = vpack.c.b16 %v2957, %v2949
        %v3598 = vpack.c.b16 %v2958, %v2950
        %v3599 = vpack.c.b16 %v2967, %v2959
        %v3600 = vpack.c.b16 %v2968, %v2960
        %v3601 = vpack.c.b16 %v2969, %v2961
        %v3602 = vpack.c.b16 %v2970, %v2962
        %v3603 = vpack.c.b16 %v2971, %v2963
        %v3604 = vpack.c.b16 %v2972, %v2964
        %v3605 = vpack.c.b16 %v2973, %v2965
        %v3606 = vpack.c.b16 %v2974, %v2966
        %v3607 = vpack.c.b16 %v2983, %v2975
        %v3608 = vpack.c.b16 %v2984, %v2976
        %v3609 = vpack.c.b16 %v2985, %v2977
        %v3610 = vpack.c.b16 %v2986, %v2978
        %v3611 = vpack.c.b16 %v2987, %v2979
        %v3612 = vpack.c.b16 %v2988, %v2980
        %v3613 = vpack.c.b16 %v2989, %v2981
        %v3614 = vpack.c.b16 %v2990, %v2982
        %v3615 = vpack.c.b16 %v2999, %v2991
        %v3616 = vpack.c.b16 %v3000, %v2992
        %v3617 = vpack.c.b16 %v3001, %v2993
        %v3618 = vpack.c.b16 %v3002, %v2994
        %v3619 = vpack.c.b16 %v3003, %v2995
        %v3620 = vpack.c.b16 %v3004, %v2996
        %v3621 = vpack.c.b16 %v3005, %v2997
        %v3622 = vpack.c.b16 %v3006, %v2998
        %v3623 = vpack.c.b16 %v3015, %v3007
        %v3624 = vpack.c.b16 %v3016, %v3008
        %v3625 = vpack.c.b16 %v3017, %v3009
        %v3626 = vpack.c.b16 %v3018, %v3010
        %v3627 = vpack.c.b16 %v3019, %v3011
        %v3628 = vpack.c.b16 %v3020, %v3012
        %v3629 = vpack.c.b16 %v3021, %v3013
        %v3630 = vpack.c.b16 %v3022, %v3014
        %v3631 = vpack.c.b16 %v3031, %v3023
        %v3632 = vpack.c.b16 %v3032, %v3024
        %v3633 = vpack.c.b16 %v3033, %v3025
        %v3634 = vpack.c.b16 %v3034, %v3026
        %v3635 = vpack.c.b16 %v3035, %v3027
        %v3636 = vpack.c.b16 %v3036, %v3028
        %v3637 = vpack.c.b16 %v3037, %v3029
        %v3638 = vpack.c.b16 %v3038, %v3030
        %v3639 = vpack.c.b16 %v3047, %v3039
        %v3640 = vpack.c.b16 %v3048, %v3040
        %v3641 = vpack.c.b16 %v3049, %v3041
        %v3642 = vpack.c.b16 %v3050, %v3042
        %v3643 = vpack.c.b16 %v3051, %v3043
        %v3644 = vpack.c.b16 %v3052, %v3044
        %v3645 = vpack.c.b16 %v3053, %v3045
        %v3646 = vpack.c.b16 %v3054, %v3046
        %v3647 = vpack.c.b16 %v3063, %v3055
        %v3648 = vpack.c.b16 %v3064, %v3056
        %v3649 = vpack.c.b16 %v3065, %v3057
        %v3650 = vpack.c.b16 %v3066, %v3058
        %v3651 = vpack.c.b16 %v3067, %v3059
        %v3652 = vpack.c.b16 %v3068, %v3060
        %v3653 = vpack.c.b16 %v3069, %v3061
        %v3654 = vpack.c.b16 %v3070, %v3062
        %v3655 = vpack.c.b16 %v3079, %v3071
        %v3656 = vpack.c.b16 %v3080, %v3072
        %v3657 = vpack.c.b16 %v3081, %v3073
        %v3658 = vpack.c.b16 %v3082, %v3074
        %v3659 = vpack.c.b16 %v3083, %v3075
        %v3660 = vpack.c.b16 %v3084, %v3076
        %v3661 = vpack.c.b16 %v3085, %v3077
        %v3662 = vpack.c.b16 %v3086, %v3078
        %v3663 = vpack.c.b16 %v3095, %v3087
        %v3664 = vpack.c.b16 %v3096, %v3088
        %v3665 = vpack.c.b16 %v3097, %v3089
        %v3666 = vpack.c.b16 %v3098, %v3090
        %v3667 = vpack.c.b16 %v3099, %v3091
        %v3668 = vpack.c.b16 %v3100, %v3092
        %v3669 = vpack.c.b16 %v3101, %v3093
        %v3670 = vpack.c.b16 %v3102, %v3094
        %v3671 = vpack.c.b16 %v3111, %v3103
        %v3672 = vpack.c.b16 %v3112, %v3104
        %v3673 = vpack.c.b16 %v3113, %v3105
        %v3674 = vpack.c.b16 %v3114, %v3106
        %v3675 = vpack.c.b16 %v3115, %v3107
        %v3676 = vpack.c.b16 %v3116, %v3108
        %v3677 = vpack.c.b16 %v3117, %v3109
        %v3678 = vpack.c.b16 %v3118, %v3110
        %v3679 = vpack.c.b16 %v3127, %v3119
        %v3680 = vpack.c.b16 %v3128, %v3120
        %v3681 = vpack.c.b16 %v3129, %v3121
        %v3682 = vpack.c.b16 %v3130, %v3122
        %v3683 = vpack.c.b16 %v3131, %v3123
        %v3684 = vpack.c.b16 %v3132, %v3124
        %v3685 = vpack.c.b16 %v3133, %v3125
        %v3686 = vpack.c.b16 %v3134, %v3126
        %v3687 = vpack.c.b16 %v3143, %v3135
        %v3688 = vpack.c.b16 %v3144, %v3136
        %v3689 = vpack.c.b16 %v3145, %v3137
        %v3690 = vpack.c.b16 %v3146, %v3138
        %v3691 = vpack.c.b16 %v3147, %v3139
        %v3692 = vpack.c.b16 %v3148, %v3140
        %v3693 = vpack.c.b16 %v3149, %v3141
        %v3694 = vpack.c.b16 %v3150, %v3142
        %v3695 = vpack.c.b16 %v3159, %v3151
        %v3696 = vpack.c.b16 %v3160, %v3152
        %v3697 = vpack.c.b16 %v3161, %v3153
        %v3698 = vpack.c.b16 %v3162, %v3154
        %v3699 = vpack.c.b16 %v3163, %v3155
        %v3700 = vpack.c.b16 %v3164, %v3156
        %v3701 = vpack.c.b16 %v3165, %v3157
        %v3702 = vpack.c.b16 %v3166, %v3158
        %v3703 = vpack.c.b16 %v3175, %v3167
        %v3704 = vpack.c.b16 %v3176, %v3168
        %v3705 = vpack.c.b16 %v3177, %v3169
        %v3706 = vpack.c.b16 %v3178, %v3170
        %v3707 = vpack.c.b16 %v3179, %v3171
        %v3708 = vpack.c.b16 %v3180, %v3172
        %v3709 = vpack.c.b16 %v3181, %v3173
        %v3710 = vpack.c.b16 %v3182, %v3174
        %v3711 = vpack.c.b16 %v3191, %v3183
        %v3712 = vpack.c.b16 %v3192, %v3184
        %v3713 = vpack.c.b16 %v3193, %v3185
        %v3714 = vpack.c.b16 %v3194, %v3186
        %v3715 = vpack.c.b16 %v3195, %v3187
        %v3716 = vpack.c.b16 %v3196, %v3188
        %v3717 = vpack.c.b16 %v3197, %v3189
        %v3718 = vpack.c.b16 %v3198, %v3190
        %v3719 = vpack.c.b16 %v3207, %v3199
        %v3720 = vpack.c.b16 %v3208, %v3200
        %v3721 = vpack.c.b16 %v3209, %v3201
        %v3722 = vpack.c.b16 %v3210, %v3202
        %v3723 = vpack.c.b16 %v3211, %v3203
        %v3724 = vpack.c.b16 %v3212, %v3204
        %v3725 = vpack.c.b16 %v3213, %v3205
        %v3726 = vpack.c.b16 %v3214, %v3206
        %4239 = vmatprep.subr.bf16.mxu0 %v3272
        %4240 = vmatpush1.bf16.msra.mxu0 %v3271
        %4241 = vmatprep.subr.bf16.mxu0 %v3264
        %4242 = vmatpush1.bf16.msra.mxu0 %v3263
        %4243 = vmatprep.subr.bf16.mxu0 %v3256
        %4244 = vmatpush1.bf16.msra.mxu0 %v3255
        %4245 = vmatprep.subr.bf16.mxu0 %v3248
        %4246 = vmatpush1.bf16.msra.mxu0 %v3247
        %4247 = vmatprep.subr.bf16.mxu0 %v3240
        %4248 = vmatpush1.bf16.msra.mxu0 %v3239
        %4249 = vmatprep.subr.bf16.mxu0 %v3232
        %4250 = vmatpush1.bf16.msra.mxu0 %v3231
        %4251 = vmatprep.subr.bf16.mxu0 %v3224
        %4252 = vmatpush1.bf16.msra.mxu0 %v3223
        %4253 = vmatprep.subr.bf16.mxu0 %v3216
        %4254 = vmatpush1.bf16.msra.mxu0 %v3215
        %4255 = vmatprep.subr.bf16.mxu0 %v3336
        %4256 = vmatpush2.bf16.msra.mxu0 %v3335
        %4257 = vmatprep.subr.bf16.mxu0 %v3328
        %4258 = vmatpush2.bf16.msra.mxu0 %v3327
        %4259 = vmatprep.subr.bf16.mxu0 %v3320
        %4260 = vmatpush2.bf16.msra.mxu0 %v3319
        %4261 = vmatprep.subr.bf16.mxu0 %v3312
        %4262 = vmatpush2.bf16.msra.mxu0 %v3311
        %4263 = vmatprep.subr.bf16.mxu0 %v3304
        %4264 = vmatpush2.bf16.msra.mxu0 %v3303
        %4265 = vmatprep.subr.bf16.mxu0 %v3296
        %4266 = vmatpush2.bf16.msra.mxu0 %v3295
        %4267 = vmatprep.subr.bf16.mxu0 %v3288
        %4268 = vmatpush2.bf16.msra.mxu0 %v3287
        %4269 = vmatprep.subr.bf16.mxu0 %v3280
        %4270 = vmatpush2.bf16.msra.mxu0 %v3279
        %4271 = vmatprep.mubr.bf16.mxu0 %v1118
        %4272 = vmatmul.mubr.bf16.gmra.mxu0 %v1117
        %v4273 = vpop.f32.mrf.mxu0
        %v4274 = vadd.f32 %v1642, %v4273
        %v4275 = vpop.f32.mrf.mxu0
        %v4276 = vadd.f32 %v1646, %v4275
        %v4277 = vpop.f32.mrf.mxu0
        %v4278 = vpop.f32.mrf.mxu0
        %4279 = vdwg.mxu0
        %4280 = vmatprep.subr.bf16.mxu0 %v3400
        %4281 = vmatpush1.bf16.msra.mxu0 %v3399
        %4282 = vmatprep.subr.bf16.mxu0 %v3392
        %4283 = vmatpush1.bf16.msra.mxu0 %v3391
        %4284 = vmatprep.subr.bf16.mxu0 %v3384
        %4285 = vmatpush1.bf16.msra.mxu0 %v3383
        %4286 = vmatprep.subr.bf16.mxu0 %v3376
        %4287 = vmatpush1.bf16.msra.mxu0 %v3375
        %4288 = vmatprep.subr.bf16.mxu0 %v3368
        %4289 = vmatpush1.bf16.msra.mxu0 %v3367
        %4290 = vmatprep.subr.bf16.mxu0 %v3360
        %4291 = vmatpush1.bf16.msra.mxu0 %v3359
        %4292 = vmatprep.subr.bf16.mxu0 %v3352
        %4293 = vmatpush1.bf16.msra.mxu0 %v3351
        %4294 = vmatprep.subr.bf16.mxu0 %v3344
        %4295 = vmatpush1.bf16.msra.mxu0 %v3343
        %4296 = vmatprep.subr.bf16.mxu0 %v3464
        %4297 = vmatpush2.bf16.msra.mxu0 %v3463
        %4298 = vmatprep.subr.bf16.mxu0 %v3456
        %4299 = vmatpush2.bf16.msra.mxu0 %v3455
        %4300 = vmatprep.subr.bf16.mxu0 %v3448
        %4301 = vmatpush2.bf16.msra.mxu0 %v3447
        %4302 = vmatprep.subr.bf16.mxu0 %v3440
        %4303 = vmatpush2.bf16.msra.mxu0 %v3439
        %4304 = vmatprep.subr.bf16.mxu0 %v3432
        %4305 = vmatpush2.bf16.msra.mxu0 %v3431
        %4306 = vmatprep.subr.bf16.mxu0 %v3424
        %4307 = vmatpush2.bf16.msra.mxu0 %v3423
        %4308 = vmatprep.subr.bf16.mxu0 %v3416
        %4309 = vmatpush2.bf16.msra.mxu0 %v3415
        %4310 = vmatprep.subr.bf16.mxu0 %v3408
        %4311 = vmatpush2.bf16.msra.mxu0 %v3407
        %4312 = vmatprep.mubr.bf16.mxu0 %v1120
        %4313 = vmatmul.mubr.bf16.gmra.mxu0 %v1119
        %v4314 = vpop.f32.mrf.mxu0
        %v4315 = vadd.f32 %v4274, %v4314
        %v4316 = vpop.f32.mrf.mxu0
        %v4317 = vadd.f32 %v4276, %v4316
        %v4318 = vpop.f32.mrf.mxu0
        %v4319 = vpop.f32.mrf.mxu0
        %4320 = vdwg.mxu0
        %4321 = vmatprep.subr.bf16.mxu0 %v3528
        %4322 = vmatpush1.bf16.msra.mxu0 %v3527
        %4323 = vmatprep.subr.bf16.mxu0 %v3520
        %4324 = vmatpush1.bf16.msra.mxu0 %v3519
        %4325 = vmatprep.subr.bf16.mxu0 %v3512
        %4326 = vmatpush1.bf16.msra.mxu0 %v3511
        %4327 = vmatprep.subr.bf16.mxu0 %v3504
        %4328 = vmatpush1.bf16.msra.mxu0 %v3503
        %4329 = vmatprep.subr.bf16.mxu0 %v3496
        %4330 = vmatpush1.bf16.msra.mxu0 %v3495
        %4331 = vmatprep.subr.bf16.mxu0 %v3488
        %4332 = vmatpush1.bf16.msra.mxu0 %v3487
        %4333 = vmatprep.subr.bf16.mxu0 %v3480
        %4334 = vmatpush1.bf16.msra.mxu0 %v3479
        %4335 = vmatprep.subr.bf16.mxu0 %v3472
        %4336 = vmatpush1.bf16.msra.mxu0 %v3471
        %4337 = vmatprep.subr.bf16.mxu0 %v3592
        %4338 = vmatpush2.bf16.msra.mxu0 %v3591
        %4339 = vmatprep.subr.bf16.mxu0 %v3584
        %4340 = vmatpush2.bf16.msra.mxu0 %v3583
        %4341 = vmatprep.subr.bf16.mxu0 %v3576
        %4342 = vmatpush2.bf16.msra.mxu0 %v3575
        %4343 = vmatprep.subr.bf16.mxu0 %v3568
        %4344 = vmatpush2.bf16.msra.mxu0 %v3567
        %4345 = vmatprep.subr.bf16.mxu0 %v3560
        %4346 = vmatpush2.bf16.msra.mxu0 %v3559
        %4347 = vmatprep.subr.bf16.mxu0 %v3552
        %4348 = vmatpush2.bf16.msra.mxu0 %v3551
        %4349 = vmatprep.subr.bf16.mxu0 %v3544
        %4350 = vmatpush2.bf16.msra.mxu0 %v3543
        %4351 = vmatprep.subr.bf16.mxu0 %v3536
        %4352 = vmatpush2.bf16.msra.mxu0 %v3535
        %4353 = vmatprep.mubr.bf16.mxu0 %v1122
        %4354 = vmatmul.mubr.bf16.gmra.mxu0 %v1121
        %v4355 = vpop.f32.mrf.mxu0
        %v4356 = vadd.f32 %v4315, %v4355
        %v4357 = vpop.f32.mrf.mxu0
        %v4358 = vadd.f32 %v4317, %v4357
        %v4359 = vpop.f32.mrf.mxu0
        %v4360 = vpop.f32.mrf.mxu0
        %4361 = vdwg.mxu0
        %4362 = vmatprep.subr.bf16.mxu0 %v3656
        %4363 = vmatpush1.bf16.msra.mxu0 %v3655
        %4364 = vmatprep.subr.bf16.mxu0 %v3648
        %4365 = vmatpush1.bf16.msra.mxu0 %v3647
        %4366 = vmatprep.subr.bf16.mxu0 %v3640
        %4367 = vmatpush1.bf16.msra.mxu0 %v3639
        %4368 = vmatprep.subr.bf16.mxu0 %v3632
        %4369 = vmatpush1.bf16.msra.mxu0 %v3631
        %4370 = vmatprep.subr.bf16.mxu0 %v3624
        %4371 = vmatpush1.bf16.msra.mxu0 %v3623
        %4372 = vmatprep.subr.bf16.mxu0 %v3616
        %4373 = vmatpush1.bf16.msra.mxu0 %v3615
        %4374 = vmatprep.subr.bf16.mxu0 %v3608
        %4375 = vmatpush1.bf16.msra.mxu0 %v3607
        %4376 = vmatprep.subr.bf16.mxu0 %v3600
        %4377 = vmatpush1.bf16.msra.mxu0 %v3599
        %4378 = vmatprep.subr.bf16.mxu0 %v3720
        %4379 = vmatpush2.bf16.msra.mxu0 %v3719
        %4380 = vmatprep.subr.bf16.mxu0 %v3712
        %4381 = vmatpush2.bf16.msra.mxu0 %v3711
        %4382 = vmatprep.subr.bf16.mxu0 %v3704
        %4383 = vmatpush2.bf16.msra.mxu0 %v3703
        %4384 = vmatprep.subr.bf16.mxu0 %v3696
        %4385 = vmatpush2.bf16.msra.mxu0 %v3695
        %4386 = vmatprep.subr.bf16.mxu0 %v3688
        %4387 = vmatpush2.bf16.msra.mxu0 %v3687
        %4388 = vmatprep.subr.bf16.mxu0 %v3680
        %4389 = vmatpush2.bf16.msra.mxu0 %v3679
        %4390 = vmatprep.subr.bf16.mxu0 %v3672
        %4391 = vmatpush2.bf16.msra.mxu0 %v3671
        %4392 = vmatprep.subr.bf16.mxu0 %v3664
        %4393 = vmatpush2.bf16.msra.mxu0 %v3663
        %4394 = vmatprep.mubr.bf16.mxu0 %v1124
        %4395 = vmatmul.mubr.bf16.gmra.mxu0 %v1123
        %v4396 = vpop.f32.mrf.mxu0
        %v4397 = vadd.f32 %v4356, %v4396
        %v4398 = vpop.f32.mrf.mxu0
        %v4399 = vadd.f32 %v4358, %v4398
        %v4400 = vpop.f32.mrf.mxu0
        %v4401 = vpop.f32.mrf.mxu0
        %4402 = vdwg.mxu0
        %4403 = vmatprep.subr.bf16.mxu0 %v3274
        %4404 = vmatpush1.bf16.msra.mxu0 %v3273
        %4405 = vmatprep.subr.bf16.mxu0 %v3266
        %4406 = vmatpush1.bf16.msra.mxu0 %v3265
        %4407 = vmatprep.subr.bf16.mxu0 %v3258
        %4408 = vmatpush1.bf16.msra.mxu0 %v3257
        %4409 = vmatprep.subr.bf16.mxu0 %v3250
        %4410 = vmatpush1.bf16.msra.mxu0 %v3249
        %4411 = vmatprep.subr.bf16.mxu0 %v3242
        %4412 = vmatpush1.bf16.msra.mxu0 %v3241
        %4413 = vmatprep.subr.bf16.mxu0 %v3234
        %4414 = vmatpush1.bf16.msra.mxu0 %v3233
        %4415 = vmatprep.subr.bf16.mxu0 %v3226
        %4416 = vmatpush1.bf16.msra.mxu0 %v3225
        %4417 = vmatprep.subr.bf16.mxu0 %v3218
        %4418 = vmatpush1.bf16.msra.mxu0 %v3217
        %4419 = vmatprep.subr.bf16.mxu0 %v3338
        %4420 = vmatpush2.bf16.msra.mxu0 %v3337
        %4421 = vmatprep.subr.bf16.mxu0 %v3330
        %4422 = vmatpush2.bf16.msra.mxu0 %v3329
        %4423 = vmatprep.subr.bf16.mxu0 %v3322
        %4424 = vmatpush2.bf16.msra.mxu0 %v3321
        %4425 = vmatprep.subr.bf16.mxu0 %v3314
        %4426 = vmatpush2.bf16.msra.mxu0 %v3313
        %4427 = vmatprep.subr.bf16.mxu0 %v3306
        %4428 = vmatpush2.bf16.msra.mxu0 %v3305
        %4429 = vmatprep.subr.bf16.mxu0 %v3298
        %4430 = vmatpush2.bf16.msra.mxu0 %v3297
        %4431 = vmatprep.subr.bf16.mxu0 %v3290
        %4432 = vmatpush2.bf16.msra.mxu0 %v3289
        %4433 = vmatprep.subr.bf16.mxu0 %v3282
        %4434 = vmatpush2.bf16.msra.mxu0 %v3281
        %4435 = vmatprep.mubr.bf16.mxu0 %v1118
        %4436 = vmatmul.mubr.bf16.gmra.mxu0 %v1117
        %v4437 = vpop.f32.mrf.mxu0
        %v4438 = vadd.f32 %v1650, %v4437
        %v4439 = vpop.f32.mrf.mxu0
        %v4440 = vadd.f32 %v1654, %v4439
        %v4441 = vpop.f32.mrf.mxu0
        %v4442 = vpop.f32.mrf.mxu0
        %4443 = vdwg.mxu0
        %4444 = vmatprep.subr.bf16.mxu0 %v3402
        %4445 = vmatpush1.bf16.msra.mxu0 %v3401
        %4446 = vmatprep.subr.bf16.mxu0 %v3394
        %4447 = vmatpush1.bf16.msra.mxu0 %v3393
        %4448 = vmatprep.subr.bf16.mxu0 %v3386
        %4449 = vmatpush1.bf16.msra.mxu0 %v3385
        %4450 = vmatprep.subr.bf16.mxu0 %v3378
        %4451 = vmatpush1.bf16.msra.mxu0 %v3377
        %4452 = vmatprep.subr.bf16.mxu0 %v3370
        %4453 = vmatpush1.bf16.msra.mxu0 %v3369
        %4454 = vmatprep.subr.bf16.mxu0 %v3362
        %4455 = vmatpush1.bf16.msra.mxu0 %v3361
        %4456 = vmatprep.subr.bf16.mxu0 %v3354
        %4457 = vmatpush1.bf16.msra.mxu0 %v3353
        %4458 = vmatprep.subr.bf16.mxu0 %v3346
        %4459 = vmatpush1.bf16.msra.mxu0 %v3345
        %4460 = vmatprep.subr.bf16.mxu0 %v3466
        %4461 = vmatpush2.bf16.msra.mxu0 %v3465
        %4462 = vmatprep.subr.bf16.mxu0 %v3458
        %4463 = vmatpush2.bf16.msra.mxu0 %v3457
        %4464 = vmatprep.subr.bf16.mxu0 %v3450
        %4465 = vmatpush2.bf16.msra.mxu0 %v3449
        %4466 = vmatprep.subr.bf16.mxu0 %v3442
        %4467 = vmatpush2.bf16.msra.mxu0 %v3441
        %4468 = vmatprep.subr.bf16.mxu0 %v3434
        %4469 = vmatpush2.bf16.msra.mxu0 %v3433
        %4470 = vmatprep.subr.bf16.mxu0 %v3426
        %4471 = vmatpush2.bf16.msra.mxu0 %v3425
        %4472 = vmatprep.subr.bf16.mxu0 %v3418
        %4473 = vmatpush2.bf16.msra.mxu0 %v3417
        %4474 = vmatprep.subr.bf16.mxu0 %v3410
        %4475 = vmatpush2.bf16.msra.mxu0 %v3409
        %4476 = vmatprep.mubr.bf16.mxu0 %v1120
        %4477 = vmatmul.mubr.bf16.gmra.mxu0 %v1119
        %v4478 = vpop.f32.mrf.mxu0
        %v4479 = vadd.f32 %v4438, %v4478
        %v4480 = vpop.f32.mrf.mxu0
        %v4481 = vadd.f32 %v4440, %v4480
        %v4482 = vpop.f32.mrf.mxu0
        %v4483 = vpop.f32.mrf.mxu0
        %4484 = vdwg.mxu0
        %4485 = vmatprep.subr.bf16.mxu0 %v3530
        %4486 = vmatpush1.bf16.msra.mxu0 %v3529
        %4487 = vmatprep.subr.bf16.mxu0 %v3522
        %4488 = vmatpush1.bf16.msra.mxu0 %v3521
        %4489 = vmatprep.subr.bf16.mxu0 %v3514
        %4490 = vmatpush1.bf16.msra.mxu0 %v3513
        %4491 = vmatprep.subr.bf16.mxu0 %v3506
        %4492 = vmatpush1.bf16.msra.mxu0 %v3505
        %4493 = vmatprep.subr.bf16.mxu0 %v3498
        %4494 = vmatpush1.bf16.msra.mxu0 %v3497
        %4495 = vmatprep.subr.bf16.mxu0 %v3490
        %4496 = vmatpush1.bf16.msra.mxu0 %v3489
        %4497 = vmatprep.subr.bf16.mxu0 %v3482
        %4498 = vmatpush1.bf16.msra.mxu0 %v3481
        %4499 = vmatprep.subr.bf16.mxu0 %v3474
        %4500 = vmatpush1.bf16.msra.mxu0 %v3473
        %4501 = vmatprep.subr.bf16.mxu0 %v3594
        %4502 = vmatpush2.bf16.msra.mxu0 %v3593
        %4503 = vmatprep.subr.bf16.mxu0 %v3586
        %4504 = vmatpush2.bf16.msra.mxu0 %v3585
        %4505 = vmatprep.subr.bf16.mxu0 %v3578
        %4506 = vmatpush2.bf16.msra.mxu0 %v3577
        %4507 = vmatprep.subr.bf16.mxu0 %v3570
        %4508 = vmatpush2.bf16.msra.mxu0 %v3569
        %4509 = vmatprep.subr.bf16.mxu0 %v3562
        %4510 = vmatpush2.bf16.msra.mxu0 %v3561
        %4511 = vmatprep.subr.bf16.mxu0 %v3554
        %4512 = vmatpush2.bf16.msra.mxu0 %v3553
        %4513 = vmatprep.subr.bf16.mxu0 %v3546
        %4514 = vmatpush2.bf16.msra.mxu0 %v3545
        %4515 = vmatprep.subr.bf16.mxu0 %v3538
        %4516 = vmatpush2.bf16.msra.mxu0 %v3537
        %4517 = vmatprep.mubr.bf16.mxu0 %v1122
        %4518 = vmatmul.mubr.bf16.gmra.mxu0 %v1121
        %v4519 = vpop.f32.mrf.mxu0
        %v4520 = vadd.f32 %v4479, %v4519
        %v4521 = vpop.f32.mrf.mxu0
        %v4522 = vadd.f32 %v4481, %v4521
        %v4523 = vpop.f32.mrf.mxu0
        %v4524 = vpop.f32.mrf.mxu0
        %4525 = vdwg.mxu0
        %4526 = vmatprep.subr.bf16.mxu0 %v3658
        %4527 = vmatpush1.bf16.msra.mxu0 %v3657
        %4528 = vmatprep.subr.bf16.mxu0 %v3650
        %4529 = vmatpush1.bf16.msra.mxu0 %v3649
        %4530 = vmatprep.subr.bf16.mxu0 %v3642
        %4531 = vmatpush1.bf16.msra.mxu0 %v3641
        %4532 = vmatprep.subr.bf16.mxu0 %v3634
        %4533 = vmatpush1.bf16.msra.mxu0 %v3633
        %4534 = vmatprep.subr.bf16.mxu0 %v3626
        %4535 = vmatpush1.bf16.msra.mxu0 %v3625
        %4536 = vmatprep.subr.bf16.mxu0 %v3618
        %4537 = vmatpush1.bf16.msra.mxu0 %v3617
        %4538 = vmatprep.subr.bf16.mxu0 %v3610
        %4539 = vmatpush1.bf16.msra.mxu0 %v3609
        %4540 = vmatprep.subr.bf16.mxu0 %v3602
        %4541 = vmatpush1.bf16.msra.mxu0 %v3601
        %4542 = vmatprep.subr.bf16.mxu0 %v3722
        %4543 = vmatpush2.bf16.msra.mxu0 %v3721
        %4544 = vmatprep.subr.bf16.mxu0 %v3714
        %4545 = vmatpush2.bf16.msra.mxu0 %v3713
        %4546 = vmatprep.subr.bf16.mxu0 %v3706
        %4547 = vmatpush2.bf16.msra.mxu0 %v3705
        %4548 = vmatprep.subr.bf16.mxu0 %v3698
        %4549 = vmatpush2.bf16.msra.mxu0 %v3697
        %4550 = vmatprep.subr.bf16.mxu0 %v3690
        %4551 = vmatpush2.bf16.msra.mxu0 %v3689
        %4552 = vmatprep.subr.bf16.mxu0 %v3682
        %4553 = vmatpush2.bf16.msra.mxu0 %v3681
        %4554 = vmatprep.subr.bf16.mxu0 %v3674
        %4555 = vmatpush2.bf16.msra.mxu0 %v3673
        %4556 = vmatprep.subr.bf16.mxu0 %v3666
        %4557 = vmatpush2.bf16.msra.mxu0 %v3665
        %4558 = vmatprep.mubr.bf16.mxu0 %v1124
        %4559 = vmatmul.mubr.bf16.gmra.mxu0 %v1123
        %v4560 = vpop.f32.mrf.mxu0
        %v4561 = vadd.f32 %v4520, %v4560
        %v4562 = vpop.f32.mrf.mxu0
        %v4563 = vadd.f32 %v4522, %v4562
        %v4564 = vpop.f32.mrf.mxu0
        %v4565 = vpop.f32.mrf.mxu0
        %4566 = vdwg.mxu0
        %4567 = vmatprep.subr.bf16.mxu0 %v3276
        %4568 = vmatpush1.bf16.msra.mxu0 %v3275
        %4569 = vmatprep.subr.bf16.mxu0 %v3268
        %4570 = vmatpush1.bf16.msra.mxu0 %v3267
        %4571 = vmatprep.subr.bf16.mxu0 %v3260
        %4572 = vmatpush1.bf16.msra.mxu0 %v3259
        %4573 = vmatprep.subr.bf16.mxu0 %v3252
        %4574 = vmatpush1.bf16.msra.mxu0 %v3251
        %4575 = vmatprep.subr.bf16.mxu0 %v3244
        %4576 = vmatpush1.bf16.msra.mxu0 %v3243
        %4577 = vmatprep.subr.bf16.mxu0 %v3236
        %4578 = vmatpush1.bf16.msra.mxu0 %v3235
        %4579 = vmatprep.subr.bf16.mxu0 %v3228
        %4580 = vmatpush1.bf16.msra.mxu0 %v3227
        %4581 = vmatprep.subr.bf16.mxu0 %v3220
        %4582 = vmatpush1.bf16.msra.mxu0 %v3219
        %4583 = vmatprep.subr.bf16.mxu0 %v3340
        %4584 = vmatpush2.bf16.msra.mxu0 %v3339
        %4585 = vmatprep.subr.bf16.mxu0 %v3332
        %4586 = vmatpush2.bf16.msra.mxu0 %v3331
        %4587 = vmatprep.subr.bf16.mxu0 %v3324
        %4588 = vmatpush2.bf16.msra.mxu0 %v3323
        %4589 = vmatprep.subr.bf16.mxu0 %v3316
        %4590 = vmatpush2.bf16.msra.mxu0 %v3315
        %4591 = vmatprep.subr.bf16.mxu0 %v3308
        %4592 = vmatpush2.bf16.msra.mxu0 %v3307
        %4593 = vmatprep.subr.bf16.mxu0 %v3300
        %4594 = vmatpush2.bf16.msra.mxu0 %v3299
        %4595 = vmatprep.subr.bf16.mxu0 %v3292
        %4596 = vmatpush2.bf16.msra.mxu0 %v3291
        %4597 = vmatprep.subr.bf16.mxu0 %v3284
        %4598 = vmatpush2.bf16.msra.mxu0 %v3283
        %4599 = vmatprep.mubr.bf16.mxu0 %v1118
        %4600 = vmatmul.mubr.bf16.gmra.mxu0 %v1117
        %v4601 = vpop.f32.mrf.mxu0
        %v4602 = vadd.f32 %v1658, %v4601
        %v4603 = vpop.f32.mrf.mxu0
        %v4604 = vadd.f32 %v1662, %v4603
        %v4605 = vpop.f32.mrf.mxu0
        %v4606 = vpop.f32.mrf.mxu0
        %4607 = vdwg.mxu0
        %4608 = vmatprep.subr.bf16.mxu0 %v3404
        %4609 = vmatpush1.bf16.msra.mxu0 %v3403
        %4610 = vmatprep.subr.bf16.mxu0 %v3396
        %4611 = vmatpush1.bf16.msra.mxu0 %v3395
        %4612 = vmatprep.subr.bf16.mxu0 %v3388
        %4613 = vmatpush1.bf16.msra.mxu0 %v3387
        %4614 = vmatprep.subr.bf16.mxu0 %v3380
        %4615 = vmatpush1.bf16.msra.mxu0 %v3379
        %4616 = vmatprep.subr.bf16.mxu0 %v3372
        %4617 = vmatpush1.bf16.msra.mxu0 %v3371
        %4618 = vmatprep.subr.bf16.mxu0 %v3364
        %4619 = vmatpush1.bf16.msra.mxu0 %v3363
        %4620 = vmatprep.subr.bf16.mxu0 %v3356
        %4621 = vmatpush1.bf16.msra.mxu0 %v3355
        %4622 = vmatprep.subr.bf16.mxu0 %v3348
        %4623 = vmatpush1.bf16.msra.mxu0 %v3347
        %4624 = vmatprep.subr.bf16.mxu0 %v3468
        %4625 = vmatpush2.bf16.msra.mxu0 %v3467
        %4626 = vmatprep.subr.bf16.mxu0 %v3460
        %4627 = vmatpush2.bf16.msra.mxu0 %v3459
        %4628 = vmatprep.subr.bf16.mxu0 %v3452
        %4629 = vmatpush2.bf16.msra.mxu0 %v3451
        %4630 = vmatprep.subr.bf16.mxu0 %v3444
        %4631 = vmatpush2.bf16.msra.mxu0 %v3443
        %4632 = vmatprep.subr.bf16.mxu0 %v3436
        %4633 = vmatpush2.bf16.msra.mxu0 %v3435
        %4634 = vmatprep.subr.bf16.mxu0 %v3428
        %4635 = vmatpush2.bf16.msra.mxu0 %v3427
        %4636 = vmatprep.subr.bf16.mxu0 %v3420
        %4637 = vmatpush2.bf16.msra.mxu0 %v3419
        %4638 = vmatprep.subr.bf16.mxu0 %v3412
        %4639 = vmatpush2.bf16.msra.mxu0 %v3411
        %4640 = vmatprep.mubr.bf16.mxu0 %v1120
        %4641 = vmatmul.mubr.bf16.gmra.mxu0 %v1119
        %v4642 = vpop.f32.mrf.mxu0
        %v4643 = vadd.f32 %v4602, %v4642
        %v4644 = vpop.f32.mrf.mxu0
        %v4645 = vadd.f32 %v4604, %v4644
        %v4646 = vpop.f32.mrf.mxu0
        %v4647 = vpop.f32.mrf.mxu0
        %4648 = vdwg.mxu0
        %4649 = vmatprep.subr.bf16.mxu0 %v3532
        %4650 = vmatpush1.bf16.msra.mxu0 %v3531
        %4651 = vmatprep.subr.bf16.mxu0 %v3524
        %4652 = vmatpush1.bf16.msra.mxu0 %v3523
        %4653 = vmatprep.subr.bf16.mxu0 %v3516
        %4654 = vmatpush1.bf16.msra.mxu0 %v3515
        %4655 = vmatprep.subr.bf16.mxu0 %v3508
        %4656 = vmatpush1.bf16.msra.mxu0 %v3507
        %4657 = vmatprep.subr.bf16.mxu0 %v3500
        %4658 = vmatpush1.bf16.msra.mxu0 %v3499
        %4659 = vmatprep.subr.bf16.mxu0 %v3492
        %4660 = vmatpush1.bf16.msra.mxu0 %v3491
        %4661 = vmatprep.subr.bf16.mxu0 %v3484
        %4662 = vmatpush1.bf16.msra.mxu0 %v3483
        %4663 = vmatprep.subr.bf16.mxu0 %v3476
        %4664 = vmatpush1.bf16.msra.mxu0 %v3475
        %4665 = vmatprep.subr.bf16.mxu0 %v3596
        %4666 = vmatpush2.bf16.msra.mxu0 %v3595
        %4667 = vmatprep.subr.bf16.mxu0 %v3588
        %4668 = vmatpush2.bf16.msra.mxu0 %v3587
        %4669 = vmatprep.subr.bf16.mxu0 %v3580
        %4670 = vmatpush2.bf16.msra.mxu0 %v3579
        %4671 = vmatprep.subr.bf16.mxu0 %v3572
        %4672 = vmatpush2.bf16.msra.mxu0 %v3571
        %4673 = vmatprep.subr.bf16.mxu0 %v3564
        %4674 = vmatpush2.bf16.msra.mxu0 %v3563
        %4675 = vmatprep.subr.bf16.mxu0 %v3556
        %4676 = vmatpush2.bf16.msra.mxu0 %v3555
        %4677 = vmatprep.subr.bf16.mxu0 %v3548
        %4678 = vmatpush2.bf16.msra.mxu0 %v3547
        %4679 = vmatprep.subr.bf16.mxu0 %v3540
        %4680 = vmatpush2.bf16.msra.mxu0 %v3539
        %4681 = vmatprep.mubr.bf16.mxu0 %v1122
        %4682 = vmatmul.mubr.bf16.gmra.mxu0 %v1121
        %v4683 = vpop.f32.mrf.mxu0
        %v4684 = vadd.f32 %v4643, %v4683
        %v4685 = vpop.f32.mrf.mxu0
        %v4686 = vadd.f32 %v4645, %v4685
        %v4687 = vpop.f32.mrf.mxu0
        %v4688 = vpop.f32.mrf.mxu0
        %4689 = vdwg.mxu0
        %4690 = vmatprep.subr.bf16.mxu0 %v3660
        %4691 = vmatpush1.bf16.msra.mxu0 %v3659
        %4692 = vmatprep.subr.bf16.mxu0 %v3652
        %4693 = vmatpush1.bf16.msra.mxu0 %v3651
        %4694 = vmatprep.subr.bf16.mxu0 %v3644
        %4695 = vmatpush1.bf16.msra.mxu0 %v3643
        %4696 = vmatprep.subr.bf16.mxu0 %v3636
        %4697 = vmatpush1.bf16.msra.mxu0 %v3635
        %4698 = vmatprep.subr.bf16.mxu0 %v3628
        %4699 = vmatpush1.bf16.msra.mxu0 %v3627
        %4700 = vmatprep.subr.bf16.mxu0 %v3620
        %4701 = vmatpush1.bf16.msra.mxu0 %v3619
        %4702 = vmatprep.subr.bf16.mxu0 %v3612
        %4703 = vmatpush1.bf16.msra.mxu0 %v3611
        %4704 = vmatprep.subr.bf16.mxu0 %v3604
        %4705 = vmatpush1.bf16.msra.mxu0 %v3603
        %4706 = vmatprep.subr.bf16.mxu0 %v3724
        %4707 = vmatpush2.bf16.msra.mxu0 %v3723
        %4708 = vmatprep.subr.bf16.mxu0 %v3716
        %4709 = vmatpush2.bf16.msra.mxu0 %v3715
        %4710 = vmatprep.subr.bf16.mxu0 %v3708
        %4711 = vmatpush2.bf16.msra.mxu0 %v3707
        %4712 = vmatprep.subr.bf16.mxu0 %v3700
        %4713 = vmatpush2.bf16.msra.mxu0 %v3699
        %4714 = vmatprep.subr.bf16.mxu0 %v3692
        %4715 = vmatpush2.bf16.msra.mxu0 %v3691
        %4716 = vmatprep.subr.bf16.mxu0 %v3684
        %4717 = vmatpush2.bf16.msra.mxu0 %v3683
        %4718 = vmatprep.subr.bf16.mxu0 %v3676
        %4719 = vmatpush2.bf16.msra.mxu0 %v3675
        %4720 = vmatprep.subr.bf16.mxu0 %v3668
        %4721 = vmatpush2.bf16.msra.mxu0 %v3667
        %4722 = vmatprep.mubr.bf16.mxu0 %v1124
        %4723 = vmatmul.mubr.bf16.gmra.mxu0 %v1123
        %v4724 = vpop.f32.mrf.mxu0
        %v4725 = vadd.f32 %v4684, %v4724
        %v4726 = vpop.f32.mrf.mxu0
        %v4727 = vadd.f32 %v4686, %v4726
        %v4728 = vpop.f32.mrf.mxu0
        %v4729 = vpop.f32.mrf.mxu0
        %4730 = vdwg.mxu0
        %4731 = vmatprep.subr.bf16.mxu0 %v3278
        %4732 = vmatpush1.bf16.msra.mxu0 %v3277
        %4733 = vmatprep.subr.bf16.mxu0 %v3270
        %4734 = vmatpush1.bf16.msra.mxu0 %v3269
        %4735 = vmatprep.subr.bf16.mxu0 %v3262
        %4736 = vmatpush1.bf16.msra.mxu0 %v3261
        %4737 = vmatprep.subr.bf16.mxu0 %v3254
        %4738 = vmatpush1.bf16.msra.mxu0 %v3253
        %4739 = vmatprep.subr.bf16.mxu0 %v3246
        %4740 = vmatpush1.bf16.msra.mxu0 %v3245
        %4741 = vmatprep.subr.bf16.mxu0 %v3238
        %4742 = vmatpush1.bf16.msra.mxu0 %v3237
        %4743 = vmatprep.subr.bf16.mxu0 %v3230
        %4744 = vmatpush1.bf16.msra.mxu0 %v3229
        %4745 = vmatprep.subr.bf16.mxu0 %v3222
        %4746 = vmatpush1.bf16.msra.mxu0 %v3221
        %4747 = vmatprep.subr.bf16.mxu0 %v3342
        %4748 = vmatpush2.bf16.msra.mxu0 %v3341
        %4749 = vmatprep.subr.bf16.mxu0 %v3334
        %4750 = vmatpush2.bf16.msra.mxu0 %v3333
        %4751 = vmatprep.subr.bf16.mxu0 %v3326
        %4752 = vmatpush2.bf16.msra.mxu0 %v3325
        %4753 = vmatprep.subr.bf16.mxu0 %v3318
        %4754 = vmatpush2.bf16.msra.mxu0 %v3317
        %4755 = vmatprep.subr.bf16.mxu0 %v3310
        %4756 = vmatpush2.bf16.msra.mxu0 %v3309
        %4757 = vmatprep.subr.bf16.mxu0 %v3302
        %4758 = vmatpush2.bf16.msra.mxu0 %v3301
        %4759 = vmatprep.subr.bf16.mxu0 %v3294
        %4760 = vmatpush2.bf16.msra.mxu0 %v3293
        %4761 = vmatprep.subr.bf16.mxu0 %v3286
        %4762 = vmatpush2.bf16.msra.mxu0 %v3285
        %4763 = vmatprep.mubr.bf16.mxu0 %v1118
        %4764 = vmatmul.mubr.bf16.gmra.mxu0 %v1117
        %v4765 = vpop.f32.mrf.mxu0
        %v4766 = vadd.f32 %v1666, %v4765
        %v4767 = vpop.f32.mrf.mxu0
        %v4768 = vadd.f32 %v1670, %v4767
        %v4769 = vpop.f32.mrf.mxu0
        %v4770 = vpop.f32.mrf.mxu0
        %4771 = vdwg.mxu0
        %4772 = vmatprep.subr.bf16.mxu0 %v3406
        %4773 = vmatpush1.bf16.msra.mxu0 %v3405
        %4774 = vmatprep.subr.bf16.mxu0 %v3398
        %4775 = vmatpush1.bf16.msra.mxu0 %v3397
        %4776 = vmatprep.subr.bf16.mxu0 %v3390
        %4777 = vmatpush1.bf16.msra.mxu0 %v3389
        %4778 = vmatprep.subr.bf16.mxu0 %v3382
        %4779 = vmatpush1.bf16.msra.mxu0 %v3381
        %4780 = vmatprep.subr.bf16.mxu0 %v3374
        %4781 = vmatpush1.bf16.msra.mxu0 %v3373
        %4782 = vmatprep.subr.bf16.mxu0 %v3366
        %4783 = vmatpush1.bf16.msra.mxu0 %v3365
        %4784 = vmatprep.subr.bf16.mxu0 %v3358
        %4785 = vmatpush1.bf16.msra.mxu0 %v3357
        %4786 = vmatprep.subr.bf16.mxu0 %v3350
        %4787 = vmatpush1.bf16.msra.mxu0 %v3349
        %4788 = vmatprep.subr.bf16.mxu0 %v3470
        %4789 = vmatpush2.bf16.msra.mxu0 %v3469
        %4790 = vmatprep.subr.bf16.mxu0 %v3462
        %4791 = vmatpush2.bf16.msra.mxu0 %v3461
        %4792 = vmatprep.subr.bf16.mxu0 %v3454
        %4793 = vmatpush2.bf16.msra.mxu0 %v3453
        %4794 = vmatprep.subr.bf16.mxu0 %v3446
        %4795 = vmatpush2.bf16.msra.mxu0 %v3445
        %4796 = vmatprep.subr.bf16.mxu0 %v3438
        %4797 = vmatpush2.bf16.msra.mxu0 %v3437
        %4798 = vmatprep.subr.bf16.mxu0 %v3430
        %4799 = vmatpush2.bf16.msra.mxu0 %v3429
        %4800 = vmatprep.subr.bf16.mxu0 %v3422
        %4801 = vmatpush2.bf16.msra.mxu0 %v3421
        %4802 = vmatprep.subr.bf16.mxu0 %v3414
        %4803 = vmatpush2.bf16.msra.mxu0 %v3413
        %4804 = vmatprep.mubr.bf16.mxu0 %v1120
        %4805 = vmatmul.mubr.bf16.gmra.mxu0 %v1119
        %v4806 = vpop.f32.mrf.mxu0
        %v4807 = vadd.f32 %v4766, %v4806
        %v4808 = vpop.f32.mrf.mxu0
        %v4809 = vadd.f32 %v4768, %v4808
        %v4810 = vpop.f32.mrf.mxu0
        %v4811 = vpop.f32.mrf.mxu0
        %4812 = vdwg.mxu0
        %4813 = vmatprep.subr.bf16.mxu0 %v3534
        %4814 = vmatpush1.bf16.msra.mxu0 %v3533
        %4815 = vmatprep.subr.bf16.mxu0 %v3526
        %4816 = vmatpush1.bf16.msra.mxu0 %v3525
        %4817 = vmatprep.subr.bf16.mxu0 %v3518
        %4818 = vmatpush1.bf16.msra.mxu0 %v3517
        %4819 = vmatprep.subr.bf16.mxu0 %v3510
        %4820 = vmatpush1.bf16.msra.mxu0 %v3509
        %4821 = vmatprep.subr.bf16.mxu0 %v3502
        %4822 = vmatpush1.bf16.msra.mxu0 %v3501
        %4823 = vmatprep.subr.bf16.mxu0 %v3494
        %4824 = vmatpush1.bf16.msra.mxu0 %v3493
        %4825 = vmatprep.subr.bf16.mxu0 %v3486
        %4826 = vmatpush1.bf16.msra.mxu0 %v3485
        %4827 = vmatprep.subr.bf16.mxu0 %v3478
        %4828 = vmatpush1.bf16.msra.mxu0 %v3477
        %4829 = vmatprep.subr.bf16.mxu0 %v3598
        %4830 = vmatpush2.bf16.msra.mxu0 %v3597
        %4831 = vmatprep.subr.bf16.mxu0 %v3590
        %4832 = vmatpush2.bf16.msra.mxu0 %v3589
        %4833 = vmatprep.subr.bf16.mxu0 %v3582
        %4834 = vmatpush2.bf16.msra.mxu0 %v3581
        %4835 = vmatprep.subr.bf16.mxu0 %v3574
        %4836 = vmatpush2.bf16.msra.mxu0 %v3573
        %4837 = vmatprep.subr.bf16.mxu0 %v3566
        %4838 = vmatpush2.bf16.msra.mxu0 %v3565
        %4839 = vmatprep.subr.bf16.mxu0 %v3558
        %4840 = vmatpush2.bf16.msra.mxu0 %v3557
        %4841 = vmatprep.subr.bf16.mxu0 %v3550
        %4842 = vmatpush2.bf16.msra.mxu0 %v3549
        %4843 = vmatprep.subr.bf16.mxu0 %v3542
        %4844 = vmatpush2.bf16.msra.mxu0 %v3541
        %4845 = vmatprep.mubr.bf16.mxu0 %v1122
        %4846 = vmatmul.mubr.bf16.gmra.mxu0 %v1121
        %v4847 = vpop.f32.mrf.mxu0
        %v4848 = vadd.f32 %v4807, %v4847
        %v4849 = vpop.f32.mrf.mxu0
        %v4850 = vadd.f32 %v4809, %v4849
        %v4851 = vpop.f32.mrf.mxu0
        %v4852 = vpop.f32.mrf.mxu0
        %4853 = vdwg.mxu0
        %4854 = vmatprep.subr.bf16.mxu0 %v3662
        %4855 = vmatpush1.bf16.msra.mxu0 %v3661
        %4856 = vmatprep.subr.bf16.mxu0 %v3654
        %4857 = vmatpush1.bf16.msra.mxu0 %v3653
        %4858 = vmatprep.subr.bf16.mxu0 %v3646
        %4859 = vmatpush1.bf16.msra.mxu0 %v3645
        %4860 = vmatprep.subr.bf16.mxu0 %v3638
        %4861 = vmatpush1.bf16.msra.mxu0 %v3637
        %4862 = vmatprep.subr.bf16.mxu0 %v3630
        %4863 = vmatpush1.bf16.msra.mxu0 %v3629
        %4864 = vmatprep.subr.bf16.mxu0 %v3622
        %4865 = vmatpush1.bf16.msra.mxu0 %v3621
        %4866 = vmatprep.subr.bf16.mxu0 %v3614
        %4867 = vmatpush1.bf16.msra.mxu0 %v3613
        %4868 = vmatprep.subr.bf16.mxu0 %v3606
        %4869 = vmatpush1.bf16.msra.mxu0 %v3605
        %4870 = vmatprep.subr.bf16.mxu0 %v3726
        %4871 = vmatpush2.bf16.msra.mxu0 %v3725
        %4872 = vmatprep.subr.bf16.mxu0 %v3718
        %4873 = vmatpush2.bf16.msra.mxu0 %v3717
        %4874 = vmatprep.subr.bf16.mxu0 %v3710
        %4875 = vmatpush2.bf16.msra.mxu0 %v3709
        %4876 = vmatprep.subr.bf16.mxu0 %v3702
        %4877 = vmatpush2.bf16.msra.mxu0 %v3701
        %4878 = vmatprep.subr.bf16.mxu0 %v3694
        %4879 = vmatpush2.bf16.msra.mxu0 %v3693
        %4880 = vmatprep.subr.bf16.mxu0 %v3686
        %4881 = vmatpush2.bf16.msra.mxu0 %v3685
        %4882 = vmatprep.subr.bf16.mxu0 %v3678
        %4883 = vmatpush2.bf16.msra.mxu0 %v3677
        %4884 = vmatprep.subr.bf16.mxu0 %v3670
        %4885 = vmatpush2.bf16.msra.mxu0 %v3669
        %4886 = vmatprep.mubr.bf16.mxu0 %v1124
        %4887 = vmatmul.mubr.bf16.gmra.mxu0 %v1123
        %v4888 = vpop.f32.mrf.mxu0
        %v4889 = vadd.f32 %v4848, %v4888
        %v4890 = vpop.f32.mrf.mxu0
        %v4891 = vadd.f32 %v4850, %v4890
        %v4892 = vpop.f32.mrf.mxu0
        %v4893 = vpop.f32.mrf.mxu0
        %4894 = vdwg.mxu0
        %v4895 = vmax.f32 %v4397, 0.0
        %v4896 = vmax.f32 %v4399, 0.0
        %v4897 = vmax.f32 %v4561, 0.0
        %v4898 = vmax.f32 %v4563, 0.0
        %v4899 = vmax.f32 %v4725, 0.0
        %v4900 = vmax.f32 %v4727, 0.0
        %v4901 = vmax.f32 %v4889, 0.0
        %v4902 = vmax.f32 %v4891, 0.0
        %v4903 = vpack.c.bf16 %v4895, %v4895
        %v4904 = vpack.c.bf16 %v4896, %v4896
        %v4905 = vpack.c.bf16 %v4897, %v4897
        %v4906 = vpack.c.bf16 %v4898, %v4898
        %v4907 = vpack.c.bf16 %v4899, %v4899
        %v4908 = vpack.c.bf16 %v4900, %v4900
        %v4909 = vpack.c.bf16 %v4901, %v4901
        %v4910 = vpack.c.bf16 %v4902, %v4902
        %v4911 = vld [vmem:[%s704] sm:$0xff]
        %v4912 = vld [vmem:[%s704 + $0x8] sm:$0xff]
        %v4913 = vld [vmem:[%s704 + $0x10] sm:$0xff]
        %v4914 = vld [vmem:[%s704 + $0x18] sm:$0xff]
        %v4915 = vld [vmem:[%s704 + $0x20] sm:$0xff]
        %v4916 = vld [vmem:[%s704 + $0x28] sm:$0xff]
        %v4917 = vld [vmem:[%s704 + $0x30] sm:$0xff]
        %v4918 = vld [vmem:[%s704 + $0x38] sm:$0xff]
        %v4919 = vld [vmem:[%s704 + $0x40] sm:$0xff]
        %v4920 = vld [vmem:[%s704 + $0x48] sm:$0xff]
        %v4921 = vld [vmem:[%s704 + $0x50] sm:$0xff]
        %v4922 = vld [vmem:[%s704 + $0x58] sm:$0xff]
        %v4923 = vld [vmem:[%s704 + $0x60] sm:$0xff]
        %v4924 = vld [vmem:[%s704 + $0x68] sm:$0xff]
        %v4925 = vld [vmem:[%s704 + $0x70] sm:$0xff]
        %v4926 = vld [vmem:[%s704 + $0x78] sm:$0xff]
        %v4927 = vld [vmem:[%s704 + $0x80] sm:$0xff]
        %v4928 = vld [vmem:[%s704 + $0x88] sm:$0xff]
        %v4929 = vld [vmem:[%s704 + $0x90] sm:$0xff]
        %v4930 = vld [vmem:[%s704 + $0x98] sm:$0xff]
        %v4931 = vld [vmem:[%s704 + $0xa0] sm:$0xff]
        %v4932 = vld [vmem:[%s704 + $0xa8] sm:$0xff]
        %v4933 = vld [vmem:[%s704 + $0xb0] sm:$0xff]
        %v4934 = vld [vmem:[%s704 + $0xb8] sm:$0xff]
        %v4935 = vld [vmem:[%s704 + $0xc0] sm:$0xff]
        %v4936 = vld [vmem:[%s704 + $0xc8] sm:$0xff]
        %v4937 = vld [vmem:[%s704 + $0xd0] sm:$0xff]
        %v4938 = vld [vmem:[%s704 + $0xd8] sm:$0xff]
        %v4939 = vld [vmem:[%s704 + $0xe0] sm:$0xff]
        %v4940 = vld [vmem:[%s704 + $0xe8] sm:$0xff]
        %v4941 = vld [vmem:[%s704 + $0xf0] sm:$0xff]
        %v4942 = vld [vmem:[%s704 + $0xf8] sm:$0xff]
        %v4943 = vld [vmem:[%s704 + $0x100] sm:$0xff]
        %v4944 = vld [vmem:[%s704 + $0x108] sm:$0xff]
        %v4945 = vld [vmem:[%s704 + $0x110] sm:$0xff]
        %v4946 = vld [vmem:[%s704 + $0x118] sm:$0xff]
        %v4947 = vld [vmem:[%s704 + $0x120] sm:$0xff]
        %v4948 = vld [vmem:[%s704 + $0x128] sm:$0xff]
        %v4949 = vld [vmem:[%s704 + $0x130] sm:$0xff]
        %v4950 = vld [vmem:[%s704 + $0x138] sm:$0xff]
        %v4951 = vld [vmem:[%s704 + $0x140] sm:$0xff]
        %v4952 = vld [vmem:[%s704 + $0x148] sm:$0xff]
        %v4953 = vld [vmem:[%s704 + $0x150] sm:$0xff]
        %v4954 = vld [vmem:[%s704 + $0x158] sm:$0xff]
        %v4955 = vld [vmem:[%s704 + $0x160] sm:$0xff]
        %v4956 = vld [vmem:[%s704 + $0x168] sm:$0xff]
        %v4957 = vld [vmem:[%s704 + $0x170] sm:$0xff]
        %v4958 = vld [vmem:[%s704 + $0x178] sm:$0xff]
        %v4959 = vld [vmem:[%s704 + $0x180] sm:$0xff]
        %v4960 = vld [vmem:[%s704 + $0x188] sm:$0xff]
        %v4961 = vld [vmem:[%s704 + $0x190] sm:$0xff]
        %v4962 = vld [vmem:[%s704 + $0x198] sm:$0xff]
        %v4963 = vld [vmem:[%s704 + $0x1a0] sm:$0xff]
        %v4964 = vld [vmem:[%s704 + $0x1a8] sm:$0xff]
        %v4965 = vld [vmem:[%s704 + $0x1b0] sm:$0xff]
        %v4966 = vld [vmem:[%s704 + $0x1b8] sm:$0xff]
        %v4967 = vld [vmem:[%s704 + $0x1c0] sm:$0xff]
        %v4968 = vld [vmem:[%s704 + $0x1c8] sm:$0xff]
        %v4969 = vld [vmem:[%s704 + $0x1d0] sm:$0xff]
        %v4970 = vld [vmem:[%s704 + $0x1d8] sm:$0xff]
        %v4971 = vld [vmem:[%s704 + $0x1e0] sm:$0xff]
        %v4972 = vld [vmem:[%s704 + $0x1e8] sm:$0xff]
        %v4973 = vld [vmem:[%s704 + $0x1f0] sm:$0xff]
        %v4974 = vld [vmem:[%s704 + $0x1f8] sm:$0xff]
        %v4975 = vld [vmem:[%s704 + $0x200] sm:$0xff]
        %v4976 = vld [vmem:[%s704 + $0x208] sm:$0xff]
        %v4977 = vld [vmem:[%s704 + $0x210] sm:$0xff]
        %v4978 = vld [vmem:[%s704 + $0x218] sm:$0xff]
        %v4979 = vld [vmem:[%s704 + $0x220] sm:$0xff]
        %v4980 = vld [vmem:[%s704 + $0x228] sm:$0xff]
        %v4981 = vld [vmem:[%s704 + $0x230] sm:$0xff]
        %v4982 = vld [vmem:[%s704 + $0x238] sm:$0xff]
        %v4983 = vld [vmem:[%s704 + $0x240] sm:$0xff]
        %v4984 = vld [vmem:[%s704 + $0x248] sm:$0xff]
        %v4985 = vld [vmem:[%s704 + $0x250] sm:$0xff]
        %v4986 = vld [vmem:[%s704 + $0x258] sm:$0xff]
        %v4987 = vld [vmem:[%s704 + $0x260] sm:$0xff]
        %v4988 = vld [vmem:[%s704 + $0x268] sm:$0xff]
        %v4989 = vld [vmem:[%s704 + $0x270] sm:$0xff]
        %v4990 = vld [vmem:[%s704 + $0x278] sm:$0xff]
        %v4991 = vld [vmem:[%s704 + $0x280] sm:$0xff]
        %v4992 = vld [vmem:[%s704 + $0x288] sm:$0xff]
        %v4993 = vld [vmem:[%s704 + $0x290] sm:$0xff]
        %v4994 = vld [vmem:[%s704 + $0x298] sm:$0xff]
        %v4995 = vld [vmem:[%s704 + $0x2a0] sm:$0xff]
        %v4996 = vld [vmem:[%s704 + $0x2a8] sm:$0xff]
        %v4997 = vld [vmem:[%s704 + $0x2b0] sm:$0xff]
        %v4998 = vld [vmem:[%s704 + $0x2b8] sm:$0xff]
        %v4999 = vld [vmem:[%s704 + $0x2c0] sm:$0xff]
        %v5000 = vld [vmem:[%s704 + $0x2c8] sm:$0xff]
        %v5001 = vld [vmem:[%s704 + $0x2d0] sm:$0xff]
        %v5002 = vld [vmem:[%s704 + $0x2d8] sm:$0xff]
        %v5003 = vld [vmem:[%s704 + $0x2e0] sm:$0xff]
        %v5004 = vld [vmem:[%s704 + $0x2e8] sm:$0xff]
        %v5005 = vld [vmem:[%s704 + $0x2f0] sm:$0xff]
        %v5006 = vld [vmem:[%s704 + $0x2f8] sm:$0xff]
        %v5007 = vld [vmem:[%s704 + $0x300] sm:$0xff]
        %v5008 = vld [vmem:[%s704 + $0x308] sm:$0xff]
        %v5009 = vld [vmem:[%s704 + $0x310] sm:$0xff]
        %v5010 = vld [vmem:[%s704 + $0x318] sm:$0xff]
        %v5011 = vld [vmem:[%s704 + $0x320] sm:$0xff]
        %v5012 = vld [vmem:[%s704 + $0x328] sm:$0xff]
        %v5013 = vld [vmem:[%s704 + $0x330] sm:$0xff]
        %v5014 = vld [vmem:[%s704 + $0x338] sm:$0xff]
        %v5015 = vld [vmem:[%s704 + $0x340] sm:$0xff]
        %v5016 = vld [vmem:[%s704 + $0x348] sm:$0xff]
        %v5017 = vld [vmem:[%s704 + $0x350] sm:$0xff]
        %v5018 = vld [vmem:[%s704 + $0x358] sm:$0xff]
        %v5019 = vld [vmem:[%s704 + $0x360] sm:$0xff]
        %v5020 = vld [vmem:[%s704 + $0x368] sm:$0xff]
        %v5021 = vld [vmem:[%s704 + $0x370] sm:$0xff]
        %v5022 = vld [vmem:[%s704 + $0x378] sm:$0xff]
        %v5023 = vld [vmem:[%s704 + $0x380] sm:$0xff]
        %v5024 = vld [vmem:[%s704 + $0x388] sm:$0xff]
        %v5025 = vld [vmem:[%s704 + $0x390] sm:$0xff]
        %v5026 = vld [vmem:[%s704 + $0x398] sm:$0xff]
        %v5027 = vld [vmem:[%s704 + $0x3a0] sm:$0xff]
        %v5028 = vld [vmem:[%s704 + $0x3a8] sm:$0xff]
        %v5029 = vld [vmem:[%s704 + $0x3b0] sm:$0xff]
        %v5030 = vld [vmem:[%s704 + $0x3b8] sm:$0xff]
        %v5031 = vld [vmem:[%s704 + $0x3c0] sm:$0xff]
        %v5032 = vld [vmem:[%s704 + $0x3c8] sm:$0xff]
        %v5033 = vld [vmem:[%s704 + $0x3d0] sm:$0xff]
        %v5034 = vld [vmem:[%s704 + $0x3d8] sm:$0xff]
        %v5035 = vld [vmem:[%s704 + $0x3e0] sm:$0xff]
        %v5036 = vld [vmem:[%s704 + $0x3e8] sm:$0xff]
        %v5037 = vld [vmem:[%s704 + $0x3f0] sm:$0xff]
        %v5038 = vld [vmem:[%s704 + $0x3f8] sm:$0xff]
        %v5039 = vld [vmem:[%s704 + $0x400] sm:$0xff]
        %v5040 = vld [vmem:[%s704 + $0x408] sm:$0xff]
        %v5041 = vld [vmem:[%s704 + $0x410] sm:$0xff]
        %v5042 = vld [vmem:[%s704 + $0x418] sm:$0xff]
        %v5043 = vld [vmem:[%s704 + $0x420] sm:$0xff]
        %v5044 = vld [vmem:[%s704 + $0x428] sm:$0xff]
        %v5045 = vld [vmem:[%s704 + $0x430] sm:$0xff]
        %v5046 = vld [vmem:[%s704 + $0x438] sm:$0xff]
        %v5047 = vld [vmem:[%s704 + $0x440] sm:$0xff]
        %v5048 = vld [vmem:[%s704 + $0x448] sm:$0xff]
        %v5049 = vld [vmem:[%s704 + $0x450] sm:$0xff]
        %v5050 = vld [vmem:[%s704 + $0x458] sm:$0xff]
        %v5051 = vld [vmem:[%s704 + $0x460] sm:$0xff]
        %v5052 = vld [vmem:[%s704 + $0x468] sm:$0xff]
        %v5053 = vld [vmem:[%s704 + $0x470] sm:$0xff]
        %v5054 = vld [vmem:[%s704 + $0x478] sm:$0xff]
        %v5055 = vld [vmem:[%s704 + $0x480] sm:$0xff]
        %v5056 = vld [vmem:[%s704 + $0x488] sm:$0xff]
        %v5057 = vld [vmem:[%s704 + $0x490] sm:$0xff]
        %v5058 = vld [vmem:[%s704 + $0x498] sm:$0xff]
        %v5059 = vld [vmem:[%s704 + $0x4a0] sm:$0xff]
        %v5060 = vld [vmem:[%s704 + $0x4a8] sm:$0xff]
        %v5061 = vld [vmem:[%s704 + $0x4b0] sm:$0xff]
        %v5062 = vld [vmem:[%s704 + $0x4b8] sm:$0xff]
        %v5063 = vld [vmem:[%s704 + $0x4c0] sm:$0xff]
        %v5064 = vld [vmem:[%s704 + $0x4c8] sm:$0xff]
        %v5065 = vld [vmem:[%s704 + $0x4d0] sm:$0xff]
        %v5066 = vld [vmem:[%s704 + $0x4d8] sm:$0xff]
        %v5067 = vld [vmem:[%s704 + $0x4e0] sm:$0xff]
        %v5068 = vld [vmem:[%s704 + $0x4e8] sm:$0xff]
        %v5069 = vld [vmem:[%s704 + $0x4f0] sm:$0xff]
        %v5070 = vld [vmem:[%s704 + $0x4f8] sm:$0xff]
        %v5071 = vld [vmem:[%s704 + $0x500] sm:$0xff]
        %v5072 = vld [vmem:[%s704 + $0x508] sm:$0xff]
        %v5073 = vld [vmem:[%s704 + $0x510] sm:$0xff]
        %v5074 = vld [vmem:[%s704 + $0x518] sm:$0xff]
        %v5075 = vld [vmem:[%s704 + $0x520] sm:$0xff]
        %v5076 = vld [vmem:[%s704 + $0x528] sm:$0xff]
        %v5077 = vld [vmem:[%s704 + $0x530] sm:$0xff]
        %v5078 = vld [vmem:[%s704 + $0x538] sm:$0xff]
        %v5079 = vld [vmem:[%s704 + $0x540] sm:$0xff]
        %v5080 = vld [vmem:[%s704 + $0x548] sm:$0xff]
        %v5081 = vld [vmem:[%s704 + $0x550] sm:$0xff]
        %v5082 = vld [vmem:[%s704 + $0x558] sm:$0xff]
        %v5083 = vld [vmem:[%s704 + $0x560] sm:$0xff]
        %v5084 = vld [vmem:[%s704 + $0x568] sm:$0xff]
        %v5085 = vld [vmem:[%s704 + $0x570] sm:$0xff]
        %v5086 = vld [vmem:[%s704 + $0x578] sm:$0xff]
        %v5087 = vld [vmem:[%s704 + $0x580] sm:$0xff]
        %v5088 = vld [vmem:[%s704 + $0x588] sm:$0xff]
        %v5089 = vld [vmem:[%s704 + $0x590] sm:$0xff]
        %v5090 = vld [vmem:[%s704 + $0x598] sm:$0xff]
        %v5091 = vld [vmem:[%s704 + $0x5a0] sm:$0xff]
        %v5092 = vld [vmem:[%s704 + $0x5a8] sm:$0xff]
        %v5093 = vld [vmem:[%s704 + $0x5b0] sm:$0xff]
        %v5094 = vld [vmem:[%s704 + $0x5b8] sm:$0xff]
        %v5095 = vld [vmem:[%s704 + $0x5c0] sm:$0xff]
        %v5096 = vld [vmem:[%s704 + $0x5c8] sm:$0xff]
        %v5097 = vld [vmem:[%s704 + $0x5d0] sm:$0xff]
        %v5098 = vld [vmem:[%s704 + $0x5d8] sm:$0xff]
        %v5099 = vld [vmem:[%s704 + $0x5e0] sm:$0xff]
        %v5100 = vld [vmem:[%s704 + $0x5e8] sm:$0xff]
        %v5101 = vld [vmem:[%s704 + $0x5f0] sm:$0xff]
        %v5102 = vld [vmem:[%s704 + $0x5f8] sm:$0xff]
        %v5103 = vld [vmem:[%s704 + $0x600] sm:$0xff]
        %v5104 = vld [vmem:[%s704 + $0x608] sm:$0xff]
        %v5105 = vld [vmem:[%s704 + $0x610] sm:$0xff]
        %v5106 = vld [vmem:[%s704 + $0x618] sm:$0xff]
        %v5107 = vld [vmem:[%s704 + $0x620] sm:$0xff]
        %v5108 = vld [vmem:[%s704 + $0x628] sm:$0xff]
        %v5109 = vld [vmem:[%s704 + $0x630] sm:$0xff]
        %v5110 = vld [vmem:[%s704 + $0x638] sm:$0xff]
        %v5111 = vld [vmem:[%s704 + $0x640] sm:$0xff]
        %v5112 = vld [vmem:[%s704 + $0x648] sm:$0xff]
        %v5113 = vld [vmem:[%s704 + $0x650] sm:$0xff]
        %v5114 = vld [vmem:[%s704 + $0x658] sm:$0xff]
        %v5115 = vld [vmem:[%s704 + $0x660] sm:$0xff]
        %v5116 = vld [vmem:[%s704 + $0x668] sm:$0xff]
        %v5117 = vld [vmem:[%s704 + $0x670] sm:$0xff]
        %v5118 = vld [vmem:[%s704 + $0x678] sm:$0xff]
        %v5119 = vld [vmem:[%s704 + $0x680] sm:$0xff]
        %v5120 = vld [vmem:[%s704 + $0x688] sm:$0xff]
        %v5121 = vld [vmem:[%s704 + $0x690] sm:$0xff]
        %v5122 = vld [vmem:[%s704 + $0x698] sm:$0xff]
        %v5123 = vld [vmem:[%s704 + $0x6a0] sm:$0xff]
        %v5124 = vld [vmem:[%s704 + $0x6a8] sm:$0xff]
        %v5125 = vld [vmem:[%s704 + $0x6b0] sm:$0xff]
        %v5126 = vld [vmem:[%s704 + $0x6b8] sm:$0xff]
        %v5127 = vld [vmem:[%s704 + $0x6c0] sm:$0xff]
        %v5128 = vld [vmem:[%s704 + $0x6c8] sm:$0xff]
        %v5129 = vld [vmem:[%s704 + $0x6d0] sm:$0xff]
        %v5130 = vld [vmem:[%s704 + $0x6d8] sm:$0xff]
        %v5131 = vld [vmem:[%s704 + $0x6e0] sm:$0xff]
        %v5132 = vld [vmem:[%s704 + $0x6e8] sm:$0xff]
        %v5133 = vld [vmem:[%s704 + $0x6f0] sm:$0xff]
        %v5134 = vld [vmem:[%s704 + $0x6f8] sm:$0xff]
        %v5135 = vld [vmem:[%s704 + $0x700] sm:$0xff]
        %v5136 = vld [vmem:[%s704 + $0x708] sm:$0xff]
        %v5137 = vld [vmem:[%s704 + $0x710] sm:$0xff]
        %v5138 = vld [vmem:[%s704 + $0x718] sm:$0xff]
        %v5139 = vld [vmem:[%s704 + $0x720] sm:$0xff]
        %v5140 = vld [vmem:[%s704 + $0x728] sm:$0xff]
        %v5141 = vld [vmem:[%s704 + $0x730] sm:$0xff]
        %v5142 = vld [vmem:[%s704 + $0x738] sm:$0xff]
        %v5143 = vld [vmem:[%s704 + $0x740] sm:$0xff]
        %v5144 = vld [vmem:[%s704 + $0x748] sm:$0xff]
        %v5145 = vld [vmem:[%s704 + $0x750] sm:$0xff]
        %v5146 = vld [vmem:[%s704 + $0x758] sm:$0xff]
        %v5147 = vld [vmem:[%s704 + $0x760] sm:$0xff]
        %v5148 = vld [vmem:[%s704 + $0x768] sm:$0xff]
        %v5149 = vld [vmem:[%s704 + $0x770] sm:$0xff]
        %v5150 = vld [vmem:[%s704 + $0x778] sm:$0xff]
        %v5151 = vld [vmem:[%s704 + $0x780] sm:$0xff]
        %v5152 = vld [vmem:[%s704 + $0x788] sm:$0xff]
        %v5153 = vld [vmem:[%s704 + $0x790] sm:$0xff]
        %v5154 = vld [vmem:[%s704 + $0x798] sm:$0xff]
        %v5155 = vld [vmem:[%s704 + $0x7a0] sm:$0xff]
        %v5156 = vld [vmem:[%s704 + $0x7a8] sm:$0xff]
        %v5157 = vld [vmem:[%s704 + $0x7b0] sm:$0xff]
        %v5158 = vld [vmem:[%s704 + $0x7b8] sm:$0xff]
        %v5159 = vld [vmem:[%s704 + $0x7c0] sm:$0xff]
        %v5160 = vld [vmem:[%s704 + $0x7c8] sm:$0xff]
        %v5161 = vld [vmem:[%s704 + $0x7d0] sm:$0xff]
        %v5162 = vld [vmem:[%s704 + $0x7d8] sm:$0xff]
        %v5163 = vld [vmem:[%s704 + $0x7e0] sm:$0xff]
        %v5164 = vld [vmem:[%s704 + $0x7e8] sm:$0xff]
        %v5165 = vld [vmem:[%s704 + $0x7f0] sm:$0xff]
        %v5166 = vld [vmem:[%s704 + $0x7f8] sm:$0xff]
        %v5167 = vld [vmem:[%s842] sm:$0xf]
        %v5169 = vlaneseq
        %v5170 = vshrl.u32 %v5169, 7
        %v5171 = vsub.s32 0, %v5170
        %v5172 = vrot.slane %v5167, %v5171
        %v5173 = vlaneseq
        %v5174 = vshrl.u32 %v5173, 7
        %v5175 = vsub.s32 1, %v5174
        %v5176 = vrot.slane %v5167, %v5175
        %v5177 = vlaneseq
        %v5178 = vshrl.u32 %v5177, 7
        %v5179 = vsub.s32 2, %v5178
        %v5180 = vrot.slane %v5167, %v5179
        %v5181 = vlaneseq
        %v5182 = vshrl.u32 %v5181, 7
        %v5183 = vsub.s32 3, %v5182
        %v5184 = vrot.slane %v5167, %v5183
        %v5445 = vunpack.c.l.b16 %v4911
        %v5446 = vunpack.c.h.b16 %v4911
        %v5447 = vunpack.c.l.b16 %v4912
        %v5448 = vunpack.c.h.b16 %v4912
        %v5449 = vunpack.c.l.b16 %v4913
        %v5450 = vunpack.c.h.b16 %v4913
        %v5451 = vunpack.c.l.b16 %v4914
        %v5452 = vunpack.c.h.b16 %v4914
        %v5453 = vunpack.c.l.b16 %v4915
        %v5454 = vunpack.c.h.b16 %v4915
        %v5455 = vunpack.c.l.b16 %v4916
        %v5456 = vunpack.c.h.b16 %v4916
        %v5457 = vunpack.c.l.b16 %v4917
        %v5458 = vunpack.c.h.b16 %v4917
        %v5459 = vunpack.c.l.b16 %v4918
        %v5460 = vunpack.c.h.b16 %v4918
        %v5461 = vunpack.c.l.b16 %v4919
        %v5462 = vunpack.c.h.b16 %v4919
        %v5463 = vunpack.c.l.b16 %v4920
        %v5464 = vunpack.c.h.b16 %v4920
        %v5465 = vunpack.c.l.b16 %v4921
        %v5466 = vunpack.c.h.b16 %v4921
        %v5467 = vunpack.c.l.b16 %v4922
        %v5468 = vunpack.c.h.b16 %v4922
        %v5469 = vunpack.c.l.b16 %v4923
        %v5470 = vunpack.c.h.b16 %v4923
        %v5471 = vunpack.c.l.b16 %v4924
        %v5472 = vunpack.c.h.b16 %v4924
        %v5473 = vunpack.c.l.b16 %v4925
        %v5474 = vunpack.c.h.b16 %v4925
        %v5475 = vunpack.c.l.b16 %v4926
        %v5476 = vunpack.c.h.b16 %v4926
        %v5477 = vunpack.c.l.b16 %v4927
        %v5478 = vunpack.c.h.b16 %v4927
        %v5479 = vunpack.c.l.b16 %v4928
        %v5480 = vunpack.c.h.b16 %v4928
        %v5481 = vunpack.c.l.b16 %v4929
        %v5482 = vunpack.c.h.b16 %v4929
        %v5483 = vunpack.c.l.b16 %v4930
        %v5484 = vunpack.c.h.b16 %v4930
        %v5485 = vunpack.c.l.b16 %v4931
        %v5486 = vunpack.c.h.b16 %v4931
        %v5487 = vunpack.c.l.b16 %v4932
        %v5488 = vunpack.c.h.b16 %v4932
        %v5489 = vunpack.c.l.b16 %v4933
        %v5490 = vunpack.c.h.b16 %v4933
        %v5491 = vunpack.c.l.b16 %v4934
        %v5492 = vunpack.c.h.b16 %v4934
        %v5493 = vunpack.c.l.b16 %v4935
        %v5494 = vunpack.c.h.b16 %v4935
        %v5495 = vunpack.c.l.b16 %v4936
        %v5496 = vunpack.c.h.b16 %v4936
        %v5497 = vunpack.c.l.b16 %v4937
        %v5498 = vunpack.c.h.b16 %v4937
        %v5499 = vunpack.c.l.b16 %v4938
        %v5500 = vunpack.c.h.b16 %v4938
        %v5501 = vunpack.c.l.b16 %v4939
        %v5502 = vunpack.c.h.b16 %v4939
        %v5503 = vunpack.c.l.b16 %v4940
        %v5504 = vunpack.c.h.b16 %v4940
        %v5505 = vunpack.c.l.b16 %v4941
        %v5506 = vunpack.c.h.b16 %v4941
        %v5507 = vunpack.c.l.b16 %v4942
        %v5508 = vunpack.c.h.b16 %v4942
        %v5509 = vunpack.c.l.b16 %v4943
        %v5510 = vunpack.c.h.b16 %v4943
        %v5511 = vunpack.c.l.b16 %v4944
        %v5512 = vunpack.c.h.b16 %v4944
        %v5513 = vunpack.c.l.b16 %v4945
        %v5514 = vunpack.c.h.b16 %v4945
        %v5515 = vunpack.c.l.b16 %v4946
        %v5516 = vunpack.c.h.b16 %v4946
        %v5517 = vunpack.c.l.b16 %v4947
        %v5518 = vunpack.c.h.b16 %v4947
        %v5519 = vunpack.c.l.b16 %v4948
        %v5520 = vunpack.c.h.b16 %v4948
        %v5521 = vunpack.c.l.b16 %v4949
        %v5522 = vunpack.c.h.b16 %v4949
        %v5523 = vunpack.c.l.b16 %v4950
        %v5524 = vunpack.c.h.b16 %v4950
        %v5525 = vunpack.c.l.b16 %v4951
        %v5526 = vunpack.c.h.b16 %v4951
        %v5527 = vunpack.c.l.b16 %v4952
        %v5528 = vunpack.c.h.b16 %v4952
        %v5529 = vunpack.c.l.b16 %v4953
        %v5530 = vunpack.c.h.b16 %v4953
        %v5531 = vunpack.c.l.b16 %v4954
        %v5532 = vunpack.c.h.b16 %v4954
        %v5533 = vunpack.c.l.b16 %v4955
        %v5534 = vunpack.c.h.b16 %v4955
        %v5535 = vunpack.c.l.b16 %v4956
        %v5536 = vunpack.c.h.b16 %v4956
        %v5537 = vunpack.c.l.b16 %v4957
        %v5538 = vunpack.c.h.b16 %v4957
        %v5539 = vunpack.c.l.b16 %v4958
        %v5540 = vunpack.c.h.b16 %v4958
        %v5541 = vunpack.c.l.b16 %v4959
        %v5542 = vunpack.c.h.b16 %v4959
        %v5543 = vunpack.c.l.b16 %v4960
        %v5544 = vunpack.c.h.b16 %v4960
        %v5545 = vunpack.c.l.b16 %v4961
        %v5546 = vunpack.c.h.b16 %v4961
        %v5547 = vunpack.c.l.b16 %v4962
        %v5548 = vunpack.c.h.b16 %v4962
        %v5549 = vunpack.c.l.b16 %v4963
        %v5550 = vunpack.c.h.b16 %v4963
        %v5551 = vunpack.c.l.b16 %v4964
        %v5552 = vunpack.c.h.b16 %v4964
        %v5553 = vunpack.c.l.b16 %v4965
        %v5554 = vunpack.c.h.b16 %v4965
        %v5555 = vunpack.c.l.b16 %v4966
        %v5556 = vunpack.c.h.b16 %v4966
        %v5557 = vunpack.c.l.b16 %v4967
        %v5558 = vunpack.c.h.b16 %v4967
        %v5559 = vunpack.c.l.b16 %v4968
        %v5560 = vunpack.c.h.b16 %v4968
        %v5561 = vunpack.c.l.b16 %v4969
        %v5562 = vunpack.c.h.b16 %v4969
        %v5563 = vunpack.c.l.b16 %v4970
        %v5564 = vunpack.c.h.b16 %v4970
        %v5565 = vunpack.c.l.b16 %v4971
        %v5566 = vunpack.c.h.b16 %v4971
        %v5567 = vunpack.c.l.b16 %v4972
        %v5568 = vunpack.c.h.b16 %v4972
        %v5569 = vunpack.c.l.b16 %v4973
        %v5570 = vunpack.c.h.b16 %v4973
        %v5571 = vunpack.c.l.b16 %v4974
        %v5572 = vunpack.c.h.b16 %v4974
        %v5573 = vunpack.c.l.b16 %v4975
        %v5574 = vunpack.c.h.b16 %v4975
        %v5575 = vunpack.c.l.b16 %v4976
        %v5576 = vunpack.c.h.b16 %v4976
        %v5577 = vunpack.c.l.b16 %v4977
        %v5578 = vunpack.c.h.b16 %v4977
        %v5579 = vunpack.c.l.b16 %v4978
        %v5580 = vunpack.c.h.b16 %v4978
        %v5581 = vunpack.c.l.b16 %v4979
        %v5582 = vunpack.c.h.b16 %v4979
        %v5583 = vunpack.c.l.b16 %v4980
        %v5584 = vunpack.c.h.b16 %v4980
        %v5585 = vunpack.c.l.b16 %v4981
        %v5586 = vunpack.c.h.b16 %v4981
        %v5587 = vunpack.c.l.b16 %v4982
        %v5588 = vunpack.c.h.b16 %v4982
        %v5589 = vunpack.c.l.b16 %v4983
        %v5590 = vunpack.c.h.b16 %v4983
        %v5591 = vunpack.c.l.b16 %v4984
        %v5592 = vunpack.c.h.b16 %v4984
        %v5593 = vunpack.c.l.b16 %v4985
        %v5594 = vunpack.c.h.b16 %v4985
        %v5595 = vunpack.c.l.b16 %v4986
        %v5596 = vunpack.c.h.b16 %v4986
        %v5597 = vunpack.c.l.b16 %v4987
        %v5598 = vunpack.c.h.b16 %v4987
        %v5599 = vunpack.c.l.b16 %v4988
        %v5600 = vunpack.c.h.b16 %v4988
        %v5601 = vunpack.c.l.b16 %v4989
        %v5602 = vunpack.c.h.b16 %v4989
        %v5603 = vunpack.c.l.b16 %v4990
        %v5604 = vunpack.c.h.b16 %v4990
        %v5605 = vunpack.c.l.b16 %v4991
        %v5606 = vunpack.c.h.b16 %v4991
        %v5607 = vunpack.c.l.b16 %v4992
        %v5608 = vunpack.c.h.b16 %v4992
        %v5609 = vunpack.c.l.b16 %v4993
        %v5610 = vunpack.c.h.b16 %v4993
        %v5611 = vunpack.c.l.b16 %v4994
        %v5612 = vunpack.c.h.b16 %v4994
        %v5613 = vunpack.c.l.b16 %v4995
        %v5614 = vunpack.c.h.b16 %v4995
        %v5615 = vunpack.c.l.b16 %v4996
        %v5616 = vunpack.c.h.b16 %v4996
        %v5617 = vunpack.c.l.b16 %v4997
        %v5618 = vunpack.c.h.b16 %v4997
        %v5619 = vunpack.c.l.b16 %v4998
        %v5620 = vunpack.c.h.b16 %v4998
        %v5621 = vunpack.c.l.b16 %v4999
        %v5622 = vunpack.c.h.b16 %v4999
        %v5623 = vunpack.c.l.b16 %v5000
        %v5624 = vunpack.c.h.b16 %v5000
        %v5625 = vunpack.c.l.b16 %v5001
        %v5626 = vunpack.c.h.b16 %v5001
        %v5627 = vunpack.c.l.b16 %v5002
        %v5628 = vunpack.c.h.b16 %v5002
        %v5629 = vunpack.c.l.b16 %v5003
        %v5630 = vunpack.c.h.b16 %v5003
        %v5631 = vunpack.c.l.b16 %v5004
        %v5632 = vunpack.c.h.b16 %v5004
        %v5633 = vunpack.c.l.b16 %v5005
        %v5634 = vunpack.c.h.b16 %v5005
        %v5635 = vunpack.c.l.b16 %v5006
        %v5636 = vunpack.c.h.b16 %v5006
        %v5637 = vunpack.c.l.b16 %v5007
        %v5638 = vunpack.c.h.b16 %v5007
        %v5639 = vunpack.c.l.b16 %v5008
        %v5640 = vunpack.c.h.b16 %v5008
        %v5641 = vunpack.c.l.b16 %v5009
        %v5642 = vunpack.c.h.b16 %v5009
        %v5643 = vunpack.c.l.b16 %v5010
        %v5644 = vunpack.c.h.b16 %v5010
        %v5645 = vunpack.c.l.b16 %v5011
        %v5646 = vunpack.c.h.b16 %v5011
        %v5647 = vunpack.c.l.b16 %v5012
        %v5648 = vunpack.c.h.b16 %v5012
        %v5649 = vunpack.c.l.b16 %v5013
        %v5650 = vunpack.c.h.b16 %v5013
        %v5651 = vunpack.c.l.b16 %v5014
        %v5652 = vunpack.c.h.b16 %v5014
        %v5653 = vunpack.c.l.b16 %v5015
        %v5654 = vunpack.c.h.b16 %v5015
        %v5655 = vunpack.c.l.b16 %v5016
        %v5656 = vunpack.c.h.b16 %v5016
        %v5657 = vunpack.c.l.b16 %v5017
        %v5658 = vunpack.c.h.b16 %v5017
        %v5659 = vunpack.c.l.b16 %v5018
        %v5660 = vunpack.c.h.b16 %v5018
        %v5661 = vunpack.c.l.b16 %v5019
        %v5662 = vunpack.c.h.b16 %v5019
        %v5663 = vunpack.c.l.b16 %v5020
        %v5664 = vunpack.c.h.b16 %v5020
        %v5665 = vunpack.c.l.b16 %v5021
        %v5666 = vunpack.c.h.b16 %v5021
        %v5667 = vunpack.c.l.b16 %v5022
        %v5668 = vunpack.c.h.b16 %v5022
        %v5669 = vunpack.c.l.b16 %v5023
        %v5670 = vunpack.c.h.b16 %v5023
        %v5671 = vunpack.c.l.b16 %v5024
        %v5672 = vunpack.c.h.b16 %v5024
        %v5673 = vunpack.c.l.b16 %v5025
        %v5674 = vunpack.c.h.b16 %v5025
        %v5675 = vunpack.c.l.b16 %v5026
        %v5676 = vunpack.c.h.b16 %v5026
        %v5677 = vunpack.c.l.b16 %v5027
        %v5678 = vunpack.c.h.b16 %v5027
        %v5679 = vunpack.c.l.b16 %v5028
        %v5680 = vunpack.c.h.b16 %v5028
        %v5681 = vunpack.c.l.b16 %v5029
        %v5682 = vunpack.c.h.b16 %v5029
        %v5683 = vunpack.c.l.b16 %v5030
        %v5684 = vunpack.c.h.b16 %v5030
        %v5685 = vunpack.c.l.b16 %v5031
        %v5686 = vunpack.c.h.b16 %v5031
        %v5687 = vunpack.c.l.b16 %v5032
        %v5688 = vunpack.c.h.b16 %v5032
        %v5689 = vunpack.c.l.b16 %v5033
        %v5690 = vunpack.c.h.b16 %v5033
        %v5691 = vunpack.c.l.b16 %v5034
        %v5692 = vunpack.c.h.b16 %v5034
        %v5693 = vunpack.c.l.b16 %v5035
        %v5694 = vunpack.c.h.b16 %v5035
        %v5695 = vunpack.c.l.b16 %v5036
        %v5696 = vunpack.c.h.b16 %v5036
        %v5697 = vunpack.c.l.b16 %v5037
        %v5698 = vunpack.c.h.b16 %v5037
        %v5699 = vunpack.c.l.b16 %v5038
        %v5700 = vunpack.c.h.b16 %v5038
        %v5701 = vunpack.c.l.b16 %v5039
        %v5702 = vunpack.c.h.b16 %v5039
        %v5703 = vunpack.c.l.b16 %v5040
        %v5704 = vunpack.c.h.b16 %v5040
        %v5705 = vunpack.c.l.b16 %v5041
        %v5706 = vunpack.c.h.b16 %v5041
        %v5707 = vunpack.c.l.b16 %v5042
        %v5708 = vunpack.c.h.b16 %v5042
        %v5709 = vunpack.c.l.b16 %v5043
        %v5710 = vunpack.c.h.b16 %v5043
        %v5711 = vunpack.c.l.b16 %v5044
        %v5712 = vunpack.c.h.b16 %v5044
        %v5713 = vunpack.c.l.b16 %v5045
        %v5714 = vunpack.c.h.b16 %v5045
        %v5715 = vunpack.c.l.b16 %v5046
        %v5716 = vunpack.c.h.b16 %v5046
        %v5717 = vunpack.c.l.b16 %v5047
        %v5718 = vunpack.c.h.b16 %v5047
        %v5719 = vunpack.c.l.b16 %v5048
        %v5720 = vunpack.c.h.b16 %v5048
        %v5721 = vunpack.c.l.b16 %v5049
        %v5722 = vunpack.c.h.b16 %v5049
        %v5723 = vunpack.c.l.b16 %v5050
        %v5724 = vunpack.c.h.b16 %v5050
        %v5725 = vunpack.c.l.b16 %v5051
        %v5726 = vunpack.c.h.b16 %v5051
        %v5727 = vunpack.c.l.b16 %v5052
        %v5728 = vunpack.c.h.b16 %v5052
        %v5729 = vunpack.c.l.b16 %v5053
        %v5730 = vunpack.c.h.b16 %v5053
        %v5731 = vunpack.c.l.b16 %v5054
        %v5732 = vunpack.c.h.b16 %v5054
        %v5733 = vunpack.c.l.b16 %v5055
        %v5734 = vunpack.c.h.b16 %v5055
        %v5735 = vunpack.c.l.b16 %v5056
        %v5736 = vunpack.c.h.b16 %v5056
        %v5737 = vunpack.c.l.b16 %v5057
        %v5738 = vunpack.c.h.b16 %v5057
        %v5739 = vunpack.c.l.b16 %v5058
        %v5740 = vunpack.c.h.b16 %v5058
        %v5741 = vunpack.c.l.b16 %v5059
        %v5742 = vunpack.c.h.b16 %v5059
        %v5743 = vunpack.c.l.b16 %v5060
        %v5744 = vunpack.c.h.b16 %v5060
        %v5745 = vunpack.c.l.b16 %v5061
        %v5746 = vunpack.c.h.b16 %v5061
        %v5747 = vunpack.c.l.b16 %v5062
        %v5748 = vunpack.c.h.b16 %v5062
        %v5749 = vunpack.c.l.b16 %v5063
        %v5750 = vunpack.c.h.b16 %v5063
        %v5751 = vunpack.c.l.b16 %v5064
        %v5752 = vunpack.c.h.b16 %v5064
        %v5753 = vunpack.c.l.b16 %v5065
        %v5754 = vunpack.c.h.b16 %v5065
        %v5755 = vunpack.c.l.b16 %v5066
        %v5756 = vunpack.c.h.b16 %v5066
        %v5757 = vunpack.c.l.b16 %v5067
        %v5758 = vunpack.c.h.b16 %v5067
        %v5759 = vunpack.c.l.b16 %v5068
        %v5760 = vunpack.c.h.b16 %v5068
        %v5761 = vunpack.c.l.b16 %v5069
        %v5762 = vunpack.c.h.b16 %v5069
        %v5763 = vunpack.c.l.b16 %v5070
        %v5764 = vunpack.c.h.b16 %v5070
        %v5765 = vunpack.c.l.b16 %v5071
        %v5766 = vunpack.c.h.b16 %v5071
        %v5767 = vunpack.c.l.b16 %v5072
        %v5768 = vunpack.c.h.b16 %v5072
        %v5769 = vunpack.c.l.b16 %v5073
        %v5770 = vunpack.c.h.b16 %v5073
        %v5771 = vunpack.c.l.b16 %v5074
        %v5772 = vunpack.c.h.b16 %v5074
        %v5773 = vunpack.c.l.b16 %v5075
        %v5774 = vunpack.c.h.b16 %v5075
        %v5775 = vunpack.c.l.b16 %v5076
        %v5776 = vunpack.c.h.b16 %v5076
        %v5777 = vunpack.c.l.b16 %v5077
        %v5778 = vunpack.c.h.b16 %v5077
        %v5779 = vunpack.c.l.b16 %v5078
        %v5780 = vunpack.c.h.b16 %v5078
        %v5781 = vunpack.c.l.b16 %v5079
        %v5782 = vunpack.c.h.b16 %v5079
        %v5783 = vunpack.c.l.b16 %v5080
        %v5784 = vunpack.c.h.b16 %v5080
        %v5785 = vunpack.c.l.b16 %v5081
        %v5786 = vunpack.c.h.b16 %v5081
        %v5787 = vunpack.c.l.b16 %v5082
        %v5788 = vunpack.c.h.b16 %v5082
        %v5789 = vunpack.c.l.b16 %v5083
        %v5790 = vunpack.c.h.b16 %v5083
        %v5791 = vunpack.c.l.b16 %v5084
        %v5792 = vunpack.c.h.b16 %v5084
        %v5793 = vunpack.c.l.b16 %v5085
        %v5794 = vunpack.c.h.b16 %v5085
        %v5795 = vunpack.c.l.b16 %v5086
        %v5796 = vunpack.c.h.b16 %v5086
        %v5797 = vunpack.c.l.b16 %v5087
        %v5798 = vunpack.c.h.b16 %v5087
        %v5799 = vunpack.c.l.b16 %v5088
        %v5800 = vunpack.c.h.b16 %v5088
        %v5801 = vunpack.c.l.b16 %v5089
        %v5802 = vunpack.c.h.b16 %v5089
        %v5803 = vunpack.c.l.b16 %v5090
        %v5804 = vunpack.c.h.b16 %v5090
        %v5805 = vunpack.c.l.b16 %v5091
        %v5806 = vunpack.c.h.b16 %v5091
        %v5807 = vunpack.c.l.b16 %v5092
        %v5808 = vunpack.c.h.b16 %v5092
        %v5809 = vunpack.c.l.b16 %v5093
        %v5810 = vunpack.c.h.b16 %v5093
        %v5811 = vunpack.c.l.b16 %v5094
        %v5812 = vunpack.c.h.b16 %v5094
        %v5813 = vunpack.c.l.b16 %v5095
        %v5814 = vunpack.c.h.b16 %v5095
        %v5815 = vunpack.c.l.b16 %v5096
        %v5816 = vunpack.c.h.b16 %v5096
        %v5817 = vunpack.c.l.b16 %v5097
        %v5818 = vunpack.c.h.b16 %v5097
        %v5819 = vunpack.c.l.b16 %v5098
        %v5820 = vunpack.c.h.b16 %v5098
        %v5821 = vunpack.c.l.b16 %v5099
        %v5822 = vunpack.c.h.b16 %v5099
        %v5823 = vunpack.c.l.b16 %v5100
        %v5824 = vunpack.c.h.b16 %v5100
        %v5825 = vunpack.c.l.b16 %v5101
        %v5826 = vunpack.c.h.b16 %v5101
        %v5827 = vunpack.c.l.b16 %v5102
        %v5828 = vunpack.c.h.b16 %v5102
        %v5829 = vunpack.c.l.b16 %v5103
        %v5830 = vunpack.c.h.b16 %v5103
        %v5831 = vunpack.c.l.b16 %v5104
        %v5832 = vunpack.c.h.b16 %v5104
        %v5833 = vunpack.c.l.b16 %v5105
        %v5834 = vunpack.c.h.b16 %v5105
        %v5835 = vunpack.c.l.b16 %v5106
        %v5836 = vunpack.c.h.b16 %v5106
        %v5837 = vunpack.c.l.b16 %v5107
        %v5838 = vunpack.c.h.b16 %v5107
        %v5839 = vunpack.c.l.b16 %v5108
        %v5840 = vunpack.c.h.b16 %v5108
        %v5841 = vunpack.c.l.b16 %v5109
        %v5842 = vunpack.c.h.b16 %v5109
        %v5843 = vunpack.c.l.b16 %v5110
        %v5844 = vunpack.c.h.b16 %v5110
        %v5845 = vunpack.c.l.b16 %v5111
        %v5846 = vunpack.c.h.b16 %v5111
        %v5847 = vunpack.c.l.b16 %v5112
        %v5848 = vunpack.c.h.b16 %v5112
        %v5849 = vunpack.c.l.b16 %v5113
        %v5850 = vunpack.c.h.b16 %v5113
        %v5851 = vunpack.c.l.b16 %v5114
        %v5852 = vunpack.c.h.b16 %v5114
        %v5853 = vunpack.c.l.b16 %v5115
        %v5854 = vunpack.c.h.b16 %v5115
        %v5855 = vunpack.c.l.b16 %v5116
        %v5856 = vunpack.c.h.b16 %v5116
        %v5857 = vunpack.c.l.b16 %v5117
        %v5858 = vunpack.c.h.b16 %v5117
        %v5859 = vunpack.c.l.b16 %v5118
        %v5860 = vunpack.c.h.b16 %v5118
        %v5861 = vunpack.c.l.b16 %v5119
        %v5862 = vunpack.c.h.b16 %v5119
        %v5863 = vunpack.c.l.b16 %v5120
        %v5864 = vunpack.c.h.b16 %v5120
        %v5865 = vunpack.c.l.b16 %v5121
        %v5866 = vunpack.c.h.b16 %v5121
        %v5867 = vunpack.c.l.b16 %v5122
        %v5868 = vunpack.c.h.b16 %v5122
        %v5869 = vunpack.c.l.b16 %v5123
        %v5870 = vunpack.c.h.b16 %v5123
        %v5871 = vunpack.c.l.b16 %v5124
        %v5872 = vunpack.c.h.b16 %v5124
        %v5873 = vunpack.c.l.b16 %v5125
        %v5874 = vunpack.c.h.b16 %v5125
        %v5875 = vunpack.c.l.b16 %v5126
        %v5876 = vunpack.c.h.b16 %v5126
        %v5877 = vunpack.c.l.b16 %v5127
        %v5878 = vunpack.c.h.b16 %v5127
        %v5879 = vunpack.c.l.b16 %v5128
        %v5880 = vunpack.c.h.b16 %v5128
        %v5881 = vunpack.c.l.b16 %v5129
        %v5882 = vunpack.c.h.b16 %v5129
        %v5883 = vunpack.c.l.b16 %v5130
        %v5884 = vunpack.c.h.b16 %v5130
        %v5885 = vunpack.c.l.b16 %v5131
        %v5886 = vunpack.c.h.b16 %v5131
        %v5887 = vunpack.c.l.b16 %v5132
        %v5888 = vunpack.c.h.b16 %v5132
        %v5889 = vunpack.c.l.b16 %v5133
        %v5890 = vunpack.c.h.b16 %v5133
        %v5891 = vunpack.c.l.b16 %v5134
        %v5892 = vunpack.c.h.b16 %v5134
        %v5893 = vunpack.c.l.b16 %v5135
        %v5894 = vunpack.c.h.b16 %v5135
        %v5895 = vunpack.c.l.b16 %v5136
        %v5896 = vunpack.c.h.b16 %v5136
        %v5897 = vunpack.c.l.b16 %v5137
        %v5898 = vunpack.c.h.b16 %v5137
        %v5899 = vunpack.c.l.b16 %v5138
        %v5900 = vunpack.c.h.b16 %v5138
        %v5901 = vunpack.c.l.b16 %v5139
        %v5902 = vunpack.c.h.b16 %v5139
        %v5903 = vunpack.c.l.b16 %v5140
        %v5904 = vunpack.c.h.b16 %v5140
        %v5905 = vunpack.c.l.b16 %v5141
        %v5906 = vunpack.c.h.b16 %v5141
        %v5907 = vunpack.c.l.b16 %v5142
        %v5908 = vunpack.c.h.b16 %v5142
        %v5909 = vunpack.c.l.b16 %v5143
        %v5910 = vunpack.c.h.b16 %v5143
        %v5911 = vunpack.c.l.b16 %v5144
        %v5912 = vunpack.c.h.b16 %v5144
        %v5913 = vunpack.c.l.b16 %v5145
        %v5914 = vunpack.c.h.b16 %v5145
        %v5915 = vunpack.c.l.b16 %v5146
        %v5916 = vunpack.c.h.b16 %v5146
        %v5917 = vunpack.c.l.b16 %v5147
        %v5918 = vunpack.c.h.b16 %v5147
        %v5919 = vunpack.c.l.b16 %v5148
        %v5920 = vunpack.c.h.b16 %v5148
        %v5921 = vunpack.c.l.b16 %v5149
        %v5922 = vunpack.c.h.b16 %v5149
        %v5923 = vunpack.c.l.b16 %v5150
        %v5924 = vunpack.c.h.b16 %v5150
        %v5925 = vunpack.c.l.b16 %v5151
        %v5926 = vunpack.c.h.b16 %v5151
        %v5927 = vunpack.c.l.b16 %v5152
        %v5928 = vunpack.c.h.b16 %v5152
        %v5929 = vunpack.c.l.b16 %v5153
        %v5930 = vunpack.c.h.b16 %v5153
        %v5931 = vunpack.c.l.b16 %v5154
        %v5932 = vunpack.c.h.b16 %v5154
        %v5933 = vunpack.c.l.b16 %v5155
        %v5934 = vunpack.c.h.b16 %v5155
        %v5935 = vunpack.c.l.b16 %v5156
        %v5936 = vunpack.c.h.b16 %v5156
        %v5937 = vunpack.c.l.b16 %v5157
        %v5938 = vunpack.c.h.b16 %v5157
        %v5939 = vunpack.c.l.b16 %v5158
        %v5940 = vunpack.c.h.b16 %v5158
        %v5941 = vunpack.c.l.b16 %v5159
        %v5942 = vunpack.c.h.b16 %v5159
        %v5943 = vunpack.c.l.b16 %v5160
        %v5944 = vunpack.c.h.b16 %v5160
        %v5945 = vunpack.c.l.b16 %v5161
        %v5946 = vunpack.c.h.b16 %v5161
        %v5947 = vunpack.c.l.b16 %v5162
        %v5948 = vunpack.c.h.b16 %v5162
        %v5949 = vunpack.c.l.b16 %v5163
        %v5950 = vunpack.c.h.b16 %v5163
        %v5951 = vunpack.c.l.b16 %v5164
        %v5952 = vunpack.c.h.b16 %v5164
        %v5953 = vunpack.c.l.b16 %v5165
        %v5954 = vunpack.c.h.b16 %v5165
        %v5955 = vunpack.c.l.b16 %v5166
        %v5956 = vunpack.c.h.b16 %v5166
        %v5957 = vpack.c.b16 %v5449, %v5445
        %v5958 = vpack.c.b16 %v5450, %v5446
        %v5959 = vpack.c.b16 %v5451, %v5447
        %v5960 = vpack.c.b16 %v5452, %v5448
        %v5961 = vpack.c.b16 %v5457, %v5453
        %v5962 = vpack.c.b16 %v5458, %v5454
        %v5963 = vpack.c.b16 %v5459, %v5455
        %v5964 = vpack.c.b16 %v5460, %v5456
        %v5965 = vpack.c.b16 %v5465, %v5461
        %v5966 = vpack.c.b16 %v5466, %v5462
        %v5967 = vpack.c.b16 %v5467, %v5463
        %v5968 = vpack.c.b16 %v5468, %v5464
        %v5969 = vpack.c.b16 %v5473, %v5469
        %v5970 = vpack.c.b16 %v5474, %v5470
        %v5971 = vpack.c.b16 %v5475, %v5471
        %v5972 = vpack.c.b16 %v5476, %v5472
        %v5973 = vpack.c.b16 %v5481, %v5477
        %v5974 = vpack.c.b16 %v5482, %v5478
        %v5975 = vpack.c.b16 %v5483, %v5479
        %v5976 = vpack.c.b16 %v5484, %v5480
        %v5977 = vpack.c.b16 %v5489, %v5485
        %v5978 = vpack.c.b16 %v5490, %v5486
        %v5979 = vpack.c.b16 %v5491, %v5487
        %v5980 = vpack.c.b16 %v5492, %v5488
        %v5981 = vpack.c.b16 %v5497, %v5493
        %v5982 = vpack.c.b16 %v5498, %v5494
        %v5983 = vpack.c.b16 %v5499, %v5495
        %v5984 = vpack.c.b16 %v5500, %v5496
        %v5985 = vpack.c.b16 %v5505, %v5501
        %v5986 = vpack.c.b16 %v5506, %v5502
        %v5987 = vpack.c.b16 %v5507, %v5503
        %v5988 = vpack.c.b16 %v5508, %v5504
        %v5989 = vpack.c.b16 %v5513, %v5509
        %v5990 = vpack.c.b16 %v5514, %v5510
        %v5991 = vpack.c.b16 %v5515, %v5511
        %v5992 = vpack.c.b16 %v5516, %v5512
        %v5993 = vpack.c.b16 %v5521, %v5517
        %v5994 = vpack.c.b16 %v5522, %v5518
        %v5995 = vpack.c.b16 %v5523, %v5519
        %v5996 = vpack.c.b16 %v5524, %v5520
        %v5997 = vpack.c.b16 %v5529, %v5525
        %v5998 = vpack.c.b16 %v5530, %v5526
        %v5999 = vpack.c.b16 %v5531, %v5527
        %v6000 = vpack.c.b16 %v5532, %v5528
        %v6001 = vpack.c.b16 %v5537, %v5533
        %v6002 = vpack.c.b16 %v5538, %v5534
        %v6003 = vpack.c.b16 %v5539, %v5535
        %v6004 = vpack.c.b16 %v5540, %v5536
        %v6005 = vpack.c.b16 %v5545, %v5541
        %v6006 = vpack.c.b16 %v5546, %v5542
        %v6007 = vpack.c.b16 %v5547, %v5543
        %v6008 = vpack.c.b16 %v5548, %v5544
        %v6009 = vpack.c.b16 %v5553, %v5549
        %v6010 = vpack.c.b16 %v5554, %v5550
        %v6011 = vpack.c.b16 %v5555, %v5551
        %v6012 = vpack.c.b16 %v5556, %v5552
        %v6013 = vpack.c.b16 %v5561, %v5557
        %v6014 = vpack.c.b16 %v5562, %v5558
        %v6015 = vpack.c.b16 %v5563, %v5559
        %v6016 = vpack.c.b16 %v5564, %v5560
        %v6017 = vpack.c.b16 %v5569, %v5565
        %v6018 = vpack.c.b16 %v5570, %v5566
        %v6019 = vpack.c.b16 %v5571, %v5567
        %v6020 = vpack.c.b16 %v5572, %v5568
        %v6021 = vpack.c.b16 %v5577, %v5573
        %v6022 = vpack.c.b16 %v5578, %v5574
        %v6023 = vpack.c.b16 %v5579, %v5575
        %v6024 = vpack.c.b16 %v5580, %v5576
        %v6025 = vpack.c.b16 %v5585, %v5581
        %v6026 = vpack.c.b16 %v5586, %v5582
        %v6027 = vpack.c.b16 %v5587, %v5583
        %v6028 = vpack.c.b16 %v5588, %v5584
        %v6029 = vpack.c.b16 %v5593, %v5589
        %v6030 = vpack.c.b16 %v5594, %v5590
        %v6031 = vpack.c.b16 %v5595, %v5591
        %v6032 = vpack.c.b16 %v5596, %v5592
        %v6033 = vpack.c.b16 %v5601, %v5597
        %v6034 = vpack.c.b16 %v5602, %v5598
        %v6035 = vpack.c.b16 %v5603, %v5599
        %v6036 = vpack.c.b16 %v5604, %v5600
        %v6037 = vpack.c.b16 %v5609, %v5605
        %v6038 = vpack.c.b16 %v5610, %v5606
        %v6039 = vpack.c.b16 %v5611, %v5607
        %v6040 = vpack.c.b16 %v5612, %v5608
        %v6041 = vpack.c.b16 %v5617, %v5613
        %v6042 = vpack.c.b16 %v5618, %v5614
        %v6043 = vpack.c.b16 %v5619, %v5615
        %v6044 = vpack.c.b16 %v5620, %v5616
        %v6045 = vpack.c.b16 %v5625, %v5621
        %v6046 = vpack.c.b16 %v5626, %v5622
        %v6047 = vpack.c.b16 %v5627, %v5623
        %v6048 = vpack.c.b16 %v5628, %v5624
        %v6049 = vpack.c.b16 %v5633, %v5629
        %v6050 = vpack.c.b16 %v5634, %v5630
        %v6051 = vpack.c.b16 %v5635, %v5631
        %v6052 = vpack.c.b16 %v5636, %v5632
        %v6053 = vpack.c.b16 %v5641, %v5637
        %v6054 = vpack.c.b16 %v5642, %v5638
        %v6055 = vpack.c.b16 %v5643, %v5639
        %v6056 = vpack.c.b16 %v5644, %v5640
        %v6057 = vpack.c.b16 %v5649, %v5645
        %v6058 = vpack.c.b16 %v5650, %v5646
        %v6059 = vpack.c.b16 %v5651, %v5647
        %v6060 = vpack.c.b16 %v5652, %v5648
        %v6061 = vpack.c.b16 %v5657, %v5653
        %v6062 = vpack.c.b16 %v5658, %v5654
        %v6063 = vpack.c.b16 %v5659, %v5655
        %v6064 = vpack.c.b16 %v5660, %v5656
        %v6065 = vpack.c.b16 %v5665, %v5661
        %v6066 = vpack.c.b16 %v5666, %v5662
        %v6067 = vpack.c.b16 %v5667, %v5663
        %v6068 = vpack.c.b16 %v5668, %v5664
        %v6069 = vpack.c.b16 %v5673, %v5669
        %v6070 = vpack.c.b16 %v5674, %v5670
        %v6071 = vpack.c.b16 %v5675, %v5671
        %v6072 = vpack.c.b16 %v5676, %v5672
        %v6073 = vpack.c.b16 %v5681, %v5677
        %v6074 = vpack.c.b16 %v5682, %v5678
        %v6075 = vpack.c.b16 %v5683, %v5679
        %v6076 = vpack.c.b16 %v5684, %v5680
        %v6077 = vpack.c.b16 %v5689, %v5685
        %v6078 = vpack.c.b16 %v5690, %v5686
        %v6079 = vpack.c.b16 %v5691, %v5687
        %v6080 = vpack.c.b16 %v5692, %v5688
        %v6081 = vpack.c.b16 %v5697, %v5693
        %v6082 = vpack.c.b16 %v5698, %v5694
        %v6083 = vpack.c.b16 %v5699, %v5695
        %v6084 = vpack.c.b16 %v5700, %v5696
        %v6085 = vpack.c.b16 %v5705, %v5701
        %v6086 = vpack.c.b16 %v5706, %v5702
        %v6087 = vpack.c.b16 %v5707, %v5703
        %v6088 = vpack.c.b16 %v5708, %v5704
        %v6089 = vpack.c.b16 %v5713, %v5709
        %v6090 = vpack.c.b16 %v5714, %v5710
        %v6091 = vpack.c.b16 %v5715, %v5711
        %v6092 = vpack.c.b16 %v5716, %v5712
        %v6093 = vpack.c.b16 %v5721, %v5717
        %v6094 = vpack.c.b16 %v5722, %v5718
        %v6095 = vpack.c.b16 %v5723, %v5719
        %v6096 = vpack.c.b16 %v5724, %v5720
        %v6097 = vpack.c.b16 %v5729, %v5725
        %v6098 = vpack.c.b16 %v5730, %v5726
        %v6099 = vpack.c.b16 %v5731, %v5727
        %v6100 = vpack.c.b16 %v5732, %v5728
        %v6101 = vpack.c.b16 %v5737, %v5733
        %v6102 = vpack.c.b16 %v5738, %v5734
        %v6103 = vpack.c.b16 %v5739, %v5735
        %v6104 = vpack.c.b16 %v5740, %v5736
        %v6105 = vpack.c.b16 %v5745, %v5741
        %v6106 = vpack.c.b16 %v5746, %v5742
        %v6107 = vpack.c.b16 %v5747, %v5743
        %v6108 = vpack.c.b16 %v5748, %v5744
        %v6109 = vpack.c.b16 %v5753, %v5749
        %v6110 = vpack.c.b16 %v5754, %v5750
        %v6111 = vpack.c.b16 %v5755, %v5751
        %v6112 = vpack.c.b16 %v5756, %v5752
        %v6113 = vpack.c.b16 %v5761, %v5757
        %v6114 = vpack.c.b16 %v5762, %v5758
        %v6115 = vpack.c.b16 %v5763, %v5759
        %v6116 = vpack.c.b16 %v5764, %v5760
        %v6117 = vpack.c.b16 %v5769, %v5765
        %v6118 = vpack.c.b16 %v5770, %v5766
        %v6119 = vpack.c.b16 %v5771, %v5767
        %v6120 = vpack.c.b16 %v5772, %v5768
        %v6121 = vpack.c.b16 %v5777, %v5773
        %v6122 = vpack.c.b16 %v5778, %v5774
        %v6123 = vpack.c.b16 %v5779, %v5775
        %v6124 = vpack.c.b16 %v5780, %v5776
        %v6125 = vpack.c.b16 %v5785, %v5781
        %v6126 = vpack.c.b16 %v5786, %v5782
        %v6127 = vpack.c.b16 %v5787, %v5783
        %v6128 = vpack.c.b16 %v5788, %v5784
        %v6129 = vpack.c.b16 %v5793, %v5789
        %v6130 = vpack.c.b16 %v5794, %v5790
        %v6131 = vpack.c.b16 %v5795, %v5791
        %v6132 = vpack.c.b16 %v5796, %v5792
        %v6133 = vpack.c.b16 %v5801, %v5797
        %v6134 = vpack.c.b16 %v5802, %v5798
        %v6135 = vpack.c.b16 %v5803, %v5799
        %v6136 = vpack.c.b16 %v5804, %v5800
        %v6137 = vpack.c.b16 %v5809, %v5805
        %v6138 = vpack.c.b16 %v5810, %v5806
        %v6139 = vpack.c.b16 %v5811, %v5807
        %v6140 = vpack.c.b16 %v5812, %v5808
        %v6141 = vpack.c.b16 %v5817, %v5813
        %v6142 = vpack.c.b16 %v5818, %v5814
        %v6143 = vpack.c.b16 %v5819, %v5815
        %v6144 = vpack.c.b16 %v5820, %v5816
        %v6145 = vpack.c.b16 %v5825, %v5821
        %v6146 = vpack.c.b16 %v5826, %v5822
        %v6147 = vpack.c.b16 %v5827, %v5823
        %v6148 = vpack.c.b16 %v5828, %v5824
        %v6149 = vpack.c.b16 %v5833, %v5829
        %v6150 = vpack.c.b16 %v5834, %v5830
        %v6151 = vpack.c.b16 %v5835, %v5831
        %v6152 = vpack.c.b16 %v5836, %v5832
        %v6153 = vpack.c.b16 %v5841, %v5837
        %v6154 = vpack.c.b16 %v5842, %v5838
        %v6155 = vpack.c.b16 %v5843, %v5839
        %v6156 = vpack.c.b16 %v5844, %v5840
        %v6157 = vpack.c.b16 %v5849, %v5845
        %v6158 = vpack.c.b16 %v5850, %v5846
        %v6159 = vpack.c.b16 %v5851, %v5847
        %v6160 = vpack.c.b16 %v5852, %v5848
        %v6161 = vpack.c.b16 %v5857, %v5853
        %v6162 = vpack.c.b16 %v5858, %v5854
        %v6163 = vpack.c.b16 %v5859, %v5855
        %v6164 = vpack.c.b16 %v5860, %v5856
        %v6165 = vpack.c.b16 %v5865, %v5861
        %v6166 = vpack.c.b16 %v5866, %v5862
        %v6167 = vpack.c.b16 %v5867, %v5863
        %v6168 = vpack.c.b16 %v5868, %v5864
        %v6169 = vpack.c.b16 %v5873, %v5869
        %v6170 = vpack.c.b16 %v5874, %v5870
        %v6171 = vpack.c.b16 %v5875, %v5871
        %v6172 = vpack.c.b16 %v5876, %v5872
        %v6173 = vpack.c.b16 %v5881, %v5877
        %v6174 = vpack.c.b16 %v5882, %v5878
        %v6175 = vpack.c.b16 %v5883, %v5879
        %v6176 = vpack.c.b16 %v5884, %v5880
        %v6177 = vpack.c.b16 %v5889, %v5885
        %v6178 = vpack.c.b16 %v5890, %v5886
        %v6179 = vpack.c.b16 %v5891, %v5887
        %v6180 = vpack.c.b16 %v5892, %v5888
        %v6181 = vpack.c.b16 %v5897, %v5893
        %v6182 = vpack.c.b16 %v5898, %v5894
        %v6183 = vpack.c.b16 %v5899, %v5895
        %v6184 = vpack.c.b16 %v5900, %v5896
        %v6185 = vpack.c.b16 %v5905, %v5901
        %v6186 = vpack.c.b16 %v5906, %v5902
        %v6187 = vpack.c.b16 %v5907, %v5903
        %v6188 = vpack.c.b16 %v5908, %v5904
        %v6189 = vpack.c.b16 %v5913, %v5909
        %v6190 = vpack.c.b16 %v5914, %v5910
        %v6191 = vpack.c.b16 %v5915, %v5911
        %v6192 = vpack.c.b16 %v5916, %v5912
        %v6193 = vpack.c.b16 %v5921, %v5917
        %v6194 = vpack.c.b16 %v5922, %v5918
        %v6195 = vpack.c.b16 %v5923, %v5919
        %v6196 = vpack.c.b16 %v5924, %v5920
        %v6197 = vpack.c.b16 %v5929, %v5925
        %v6198 = vpack.c.b16 %v5930, %v5926
        %v6199 = vpack.c.b16 %v5931, %v5927
        %v6200 = vpack.c.b16 %v5932, %v5928
        %v6201 = vpack.c.b16 %v5937, %v5933
        %v6202 = vpack.c.b16 %v5938, %v5934
        %v6203 = vpack.c.b16 %v5939, %v5935
        %v6204 = vpack.c.b16 %v5940, %v5936
        %v6205 = vpack.c.b16 %v5945, %v5941
        %v6206 = vpack.c.b16 %v5946, %v5942
        %v6207 = vpack.c.b16 %v5947, %v5943
        %v6208 = vpack.c.b16 %v5948, %v5944
        %v6209 = vpack.c.b16 %v5953, %v5949
        %v6210 = vpack.c.b16 %v5954, %v5950
        %v6211 = vpack.c.b16 %v5955, %v5951
        %v6212 = vpack.c.b16 %v5956, %v5952
        %6469 = vmatprep.subr.bf16.mxu0 %v5986
        %6470 = vmatpush1.bf16.msra.mxu0 %v5985
        %6471 = vmatprep.subr.bf16.mxu0 %v5982
        %6472 = vmatpush1.bf16.msra.mxu0 %v5981
        %6473 = vmatprep.subr.bf16.mxu0 %v5978
        %6474 = vmatpush1.bf16.msra.mxu0 %v5977
        %6475 = vmatprep.subr.bf16.mxu0 %v5974
        %6476 = vmatpush1.bf16.msra.mxu0 %v5973
        %6477 = vmatprep.subr.bf16.mxu0 %v5970
        %6478 = vmatpush1.bf16.msra.mxu0 %v5969
        %6479 = vmatprep.subr.bf16.mxu0 %v5966
        %6480 = vmatpush1.bf16.msra.mxu0 %v5965
        %6481 = vmatprep.subr.bf16.mxu0 %v5962
        %6482 = vmatpush1.bf16.msra.mxu0 %v5961
        %6483 = vmatprep.subr.bf16.mxu0 %v5958
        %6484 = vmatpush1.bf16.msra.mxu0 %v5957
        %6485 = vmatprep.subr.bf16.mxu0 %v6018
        %6486 = vmatpush2.bf16.msra.mxu0 %v6017
        %6487 = vmatprep.subr.bf16.mxu0 %v6014
        %6488 = vmatpush2.bf16.msra.mxu0 %v6013
        %6489 = vmatprep.subr.bf16.mxu0 %v6010
        %6490 = vmatpush2.bf16.msra.mxu0 %v6009
        %6491 = vmatprep.subr.bf16.mxu0 %v6006
        %6492 = vmatpush2.bf16.msra.mxu0 %v6005
        %6493 = vmatprep.subr.bf16.mxu0 %v6002
        %6494 = vmatpush2.bf16.msra.mxu0 %v6001
        %6495 = vmatprep.subr.bf16.mxu0 %v5998
        %6496 = vmatpush2.bf16.msra.mxu0 %v5997
        %6497 = vmatprep.subr.bf16.mxu0 %v5994
        %6498 = vmatpush2.bf16.msra.mxu0 %v5993
        %6499 = vmatprep.subr.bf16.mxu0 %v5990
        %6500 = vmatpush2.bf16.msra.mxu0 %v5989
        %6501 = vmatprep.mubr.bf16.mxu0 %v4904
        %6502 = vmatmul.mubr.bf16.gmra.mxu0 %v4903
        %v6503 = vpop.f32.mrf.mxu0
        %v6504 = vadd.f32 %v5172, %v6503
        %v6505 = vpop.f32.mrf.mxu0
        %v6506 = vadd.f32 %v5176, %v6505
        %v6507 = vpop.f32.mrf.mxu0
        %v6508 = vpop.f32.mrf.mxu0
        %6509 = vdwg.mxu0
        %6510 = vmatprep.subr.bf16.mxu0 %v6050
        %6511 = vmatpush1.bf16.msra.mxu0 %v6049
        %6512 = vmatprep.subr.bf16.mxu0 %v6046
        %6513 = vmatpush1.bf16.msra.mxu0 %v6045
        %6514 = vmatprep.subr.bf16.mxu0 %v6042
        %6515 = vmatpush1.bf16.msra.mxu0 %v6041
        %6516 = vmatprep.subr.bf16.mxu0 %v6038
        %6517 = vmatpush1.bf16.msra.mxu0 %v6037
        %6518 = vmatprep.subr.bf16.mxu0 %v6034
        %6519 = vmatpush1.bf16.msra.mxu0 %v6033
        %6520 = vmatprep.subr.bf16.mxu0 %v6030
        %6521 = vmatpush1.bf16.msra.mxu0 %v6029
        %6522 = vmatprep.subr.bf16.mxu0 %v6026
        %6523 = vmatpush1.bf16.msra.mxu0 %v6025
        %6524 = vmatprep.subr.bf16.mxu0 %v6022
        %6525 = vmatpush1.bf16.msra.mxu0 %v6021
        %6526 = vmatprep.subr.bf16.mxu0 %v6082
        %6527 = vmatpush2.bf16.msra.mxu0 %v6081
        %6528 = vmatprep.subr.bf16.mxu0 %v6078
        %6529 = vmatpush2.bf16.msra.mxu0 %v6077
        %6530 = vmatprep.subr.bf16.mxu0 %v6074
        %6531 = vmatpush2.bf16.msra.mxu0 %v6073
        %6532 = vmatprep.subr.bf16.mxu0 %v6070
        %6533 = vmatpush2.bf16.msra.mxu0 %v6069
        %6534 = vmatprep.subr.bf16.mxu0 %v6066
        %6535 = vmatpush2.bf16.msra.mxu0 %v6065
        %6536 = vmatprep.subr.bf16.mxu0 %v6062
        %6537 = vmatpush2.bf16.msra.mxu0 %v6061
        %6538 = vmatprep.subr.bf16.mxu0 %v6058
        %6539 = vmatpush2.bf16.msra.mxu0 %v6057
        %6540 = vmatprep.subr.bf16.mxu0 %v6054
        %6541 = vmatpush2.bf16.msra.mxu0 %v6053
        %6542 = vmatprep.mubr.bf16.mxu0 %v4906
        %6543 = vmatmul.mubr.bf16.gmra.mxu0 %v4905
        %v6544 = vpop.f32.mrf.mxu0
        %v6545 = vadd.f32 %v6504, %v6544
        %v6546 = vpop.f32.mrf.mxu0
        %v6547 = vadd.f32 %v6506, %v6546
        %v6548 = vpop.f32.mrf.mxu0
        %v6549 = vpop.f32.mrf.mxu0
        %6550 = vdwg.mxu0
        %6551 = vmatprep.subr.bf16.mxu0 %v6114
        %6552 = vmatpush1.bf16.msra.mxu0 %v6113
        %6553 = vmatprep.subr.bf16.mxu0 %v6110
        %6554 = vmatpush1.bf16.msra.mxu0 %v6109
        %6555 = vmatprep.subr.bf16.mxu0 %v6106
        %6556 = vmatpush1.bf16.msra.mxu0 %v6105
        %6557 = vmatprep.subr.bf16.mxu0 %v6102
        %6558 = vmatpush1.bf16.msra.mxu0 %v6101
        %6559 = vmatprep.subr.bf16.mxu0 %v6098
        %6560 = vmatpush1.bf16.msra.mxu0 %v6097
        %6561 = vmatprep.subr.bf16.mxu0 %v6094
        %6562 = vmatpush1.bf16.msra.mxu0 %v6093
        %6563 = vmatprep.subr.bf16.mxu0 %v6090
        %6564 = vmatpush1.bf16.msra.mxu0 %v6089
        %6565 = vmatprep.subr.bf16.mxu0 %v6086
        %6566 = vmatpush1.bf16.msra.mxu0 %v6085
        %6567 = vmatprep.subr.bf16.mxu0 %v6146
        %6568 = vmatpush2.bf16.msra.mxu0 %v6145
        %6569 = vmatprep.subr.bf16.mxu0 %v6142
        %6570 = vmatpush2.bf16.msra.mxu0 %v6141
        %6571 = vmatprep.subr.bf16.mxu0 %v6138
        %6572 = vmatpush2.bf16.msra.mxu0 %v6137
        %6573 = vmatprep.subr.bf16.mxu0 %v6134
        %6574 = vmatpush2.bf16.msra.mxu0 %v6133
        %6575 = vmatprep.subr.bf16.mxu0 %v6130
        %6576 = vmatpush2.bf16.msra.mxu0 %v6129
        %6577 = vmatprep.subr.bf16.mxu0 %v6126
        %6578 = vmatpush2.bf16.msra.mxu0 %v6125
        %6579 = vmatprep.subr.bf16.mxu0 %v6122
        %6580 = vmatpush2.bf16.msra.mxu0 %v6121
        %6581 = vmatprep.subr.bf16.mxu0 %v6118
        %6582 = vmatpush2.bf16.msra.mxu0 %v6117
        %6583 = vmatprep.mubr.bf16.mxu0 %v4908
        %6584 = vmatmul.mubr.bf16.gmra.mxu0 %v4907
        %v6585 = vpop.f32.mrf.mxu0
        %v6586 = vadd.f32 %v6545, %v6585
        %v6587 = vpop.f32.mrf.mxu0
        %v6588 = vadd.f32 %v6547, %v6587
        %v6589 = vpop.f32.mrf.mxu0
        %v6590 = vpop.f32.mrf.mxu0
        %6591 = vdwg.mxu0
        %6592 = vmatprep.subr.bf16.mxu0 %v6178
        %6593 = vmatpush1.bf16.msra.mxu0 %v6177
        %6594 = vmatprep.subr.bf16.mxu0 %v6174
        %6595 = vmatpush1.bf16.msra.mxu0 %v6173
        %6596 = vmatprep.subr.bf16.mxu0 %v6170
        %6597 = vmatpush1.bf16.msra.mxu0 %v6169
        %6598 = vmatprep.subr.bf16.mxu0 %v6166
        %6599 = vmatpush1.bf16.msra.mxu0 %v6165
        %6600 = vmatprep.subr.bf16.mxu0 %v6162
        %6601 = vmatpush1.bf16.msra.mxu0 %v6161
        %6602 = vmatprep.subr.bf16.mxu0 %v6158
        %6603 = vmatpush1.bf16.msra.mxu0 %v6157
        %6604 = vmatprep.subr.bf16.mxu0 %v6154
        %6605 = vmatpush1.bf16.msra.mxu0 %v6153
        %6606 = vmatprep.subr.bf16.mxu0 %v6150
        %6607 = vmatpush1.bf16.msra.mxu0 %v6149
        %6608 = vmatprep.subr.bf16.mxu0 %v6210
        %6609 = vmatpush2.bf16.msra.mxu0 %v6209
        %6610 = vmatprep.subr.bf16.mxu0 %v6206
        %6611 = vmatpush2.bf16.msra.mxu0 %v6205
        %6612 = vmatprep.subr.bf16.mxu0 %v6202
        %6613 = vmatpush2.bf16.msra.mxu0 %v6201
        %6614 = vmatprep.subr.bf16.mxu0 %v6198
        %6615 = vmatpush2.bf16.msra.mxu0 %v6197
        %6616 = vmatprep.subr.bf16.mxu0 %v6194
        %6617 = vmatpush2.bf16.msra.mxu0 %v6193
        %6618 = vmatprep.subr.bf16.mxu0 %v6190
        %6619 = vmatpush2.bf16.msra.mxu0 %v6189
        %6620 = vmatprep.subr.bf16.mxu0 %v6186
        %6621 = vmatpush2.bf16.msra.mxu0 %v6185
        %6622 = vmatprep.subr.bf16.mxu0 %v6182
        %6623 = vmatpush2.bf16.msra.mxu0 %v6181
        %6624 = vmatprep.mubr.bf16.mxu0 %v4910
        %6625 = vmatmul.mubr.bf16.gmra.mxu0 %v4909
        %v6626 = vpop.f32.mrf.mxu0
        %v6627 = vadd.f32 %v6586, %v6626
        %v6628 = vpop.f32.mrf.mxu0
        %v6629 = vadd.f32 %v6588, %v6628
        %v6630 = vpop.f32.mrf.mxu0
        %v6631 = vpop.f32.mrf.mxu0
        %6632 = vdwg.mxu0
        %6633 = vmatprep.subr.bf16.mxu0 %v5988
        %6634 = vmatpush1.bf16.msra.mxu0 %v5987
        %6635 = vmatprep.subr.bf16.mxu0 %v5984
        %6636 = vmatpush1.bf16.msra.mxu0 %v5983
        %6637 = vmatprep.subr.bf16.mxu0 %v5980
        %6638 = vmatpush1.bf16.msra.mxu0 %v5979
        %6639 = vmatprep.subr.bf16.mxu0 %v5976
        %6640 = vmatpush1.bf16.msra.mxu0 %v5975
        %6641 = vmatprep.subr.bf16.mxu0 %v5972
        %6642 = vmatpush1.bf16.msra.mxu0 %v5971
        %6643 = vmatprep.subr.bf16.mxu0 %v5968
        %6644 = vmatpush1.bf16.msra.mxu0 %v5967
        %6645 = vmatprep.subr.bf16.mxu0 %v5964
        %6646 = vmatpush1.bf16.msra.mxu0 %v5963
        %6647 = vmatprep.subr.bf16.mxu0 %v5960
        %6648 = vmatpush1.bf16.msra.mxu0 %v5959
        %6649 = vmatprep.subr.bf16.mxu0 %v6020
        %6650 = vmatpush2.bf16.msra.mxu0 %v6019
        %6651 = vmatprep.subr.bf16.mxu0 %v6016
        %6652 = vmatpush2.bf16.msra.mxu0 %v6015
        %6653 = vmatprep.subr.bf16.mxu0 %v6012
        %6654 = vmatpush2.bf16.msra.mxu0 %v6011
        %6655 = vmatprep.subr.bf16.mxu0 %v6008
        %6656 = vmatpush2.bf16.msra.mxu0 %v6007
        %6657 = vmatprep.subr.bf16.mxu0 %v6004
        %6658 = vmatpush2.bf16.msra.mxu0 %v6003
        %6659 = vmatprep.subr.bf16.mxu0 %v6000
        %6660 = vmatpush2.bf16.msra.mxu0 %v5999
        %6661 = vmatprep.subr.bf16.mxu0 %v5996
        %6662 = vmatpush2.bf16.msra.mxu0 %v5995
        %6663 = vmatprep.subr.bf16.mxu0 %v5992
        %6664 = vmatpush2.bf16.msra.mxu0 %v5991
        %6665 = vmatprep.mubr.bf16.mxu0 %v4904
        %6666 = vmatmul.mubr.bf16.gmra.mxu0 %v4903
        %v6667 = vpop.f32.mrf.mxu0
        %v6668 = vadd.f32 %v5180, %v6667
        %v6669 = vpop.f32.mrf.mxu0
        %v6670 = vadd.f32 %v5184, %v6669
        %v6671 = vpop.f32.mrf.mxu0
        %v6672 = vpop.f32.mrf.mxu0
        %6673 = vdwg.mxu0
        %6674 = vmatprep.subr.bf16.mxu0 %v6052
        %6675 = vmatpush1.bf16.msra.mxu0 %v6051
        %6676 = vmatprep.subr.bf16.mxu0 %v6048
        %6677 = vmatpush1.bf16.msra.mxu0 %v6047
        %6678 = vmatprep.subr.bf16.mxu0 %v6044
        %6679 = vmatpush1.bf16.msra.mxu0 %v6043
        %6680 = vmatprep.subr.bf16.mxu0 %v6040
        %6681 = vmatpush1.bf16.msra.mxu0 %v6039
        %6682 = vmatprep.subr.bf16.mxu0 %v6036
        %6683 = vmatpush1.bf16.msra.mxu0 %v6035
        %6684 = vmatprep.subr.bf16.mxu0 %v6032
        %6685 = vmatpush1.bf16.msra.mxu0 %v6031
        %6686 = vmatprep.subr.bf16.mxu0 %v6028
        %6687 = vmatpush1.bf16.msra.mxu0 %v6027
        %6688 = vmatprep.subr.bf16.mxu0 %v6024
        %6689 = vmatpush1.bf16.msra.mxu0 %v6023
        %6690 = vmatprep.subr.bf16.mxu0 %v6084
        %6691 = vmatpush2.bf16.msra.mxu0 %v6083
        %6692 = vmatprep.subr.bf16.mxu0 %v6080
        %6693 = vmatpush2.bf16.msra.mxu0 %v6079
        %6694 = vmatprep.subr.bf16.mxu0 %v6076
        %6695 = vmatpush2.bf16.msra.mxu0 %v6075
        %6696 = vmatprep.subr.bf16.mxu0 %v6072
        %6697 = vmatpush2.bf16.msra.mxu0 %v6071
        %6698 = vmatprep.subr.bf16.mxu0 %v6068
        %6699 = vmatpush2.bf16.msra.mxu0 %v6067
        %6700 = vmatprep.subr.bf16.mxu0 %v6064
        %6701 = vmatpush2.bf16.msra.mxu0 %v6063
        %6702 = vmatprep.subr.bf16.mxu0 %v6060
        %6703 = vmatpush2.bf16.msra.mxu0 %v6059
        %6704 = vmatprep.subr.bf16.mxu0 %v6056
        %6705 = vmatpush2.bf16.msra.mxu0 %v6055
        %6706 = vmatprep.mubr.bf16.mxu0 %v4906
        %6707 = vmatmul.mubr.bf16.gmra.mxu0 %v4905
        %v6708 = vpop.f32.mrf.mxu0
        %v6709 = vadd.f32 %v6668, %v6708
        %v6710 = vpop.f32.mrf.mxu0
        %v6711 = vadd.f32 %v6670, %v6710
        %v6712 = vpop.f32.mrf.mxu0
        %v6713 = vpop.f32.mrf.mxu0
        %6714 = vdwg.mxu0
        %6715 = vmatprep.subr.bf16.mxu0 %v6116
        %6716 = vmatpush1.bf16.msra.mxu0 %v6115
        %6717 = vmatprep.subr.bf16.mxu0 %v6112
        %6718 = vmatpush1.bf16.msra.mxu0 %v6111
        %6719 = vmatprep.subr.bf16.mxu0 %v6108
        %6720 = vmatpush1.bf16.msra.mxu0 %v6107
        %6721 = vmatprep.subr.bf16.mxu0 %v6104
        %6722 = vmatpush1.bf16.msra.mxu0 %v6103
        %6723 = vmatprep.subr.bf16.mxu0 %v6100
        %6724 = vmatpush1.bf16.msra.mxu0 %v6099
        %6725 = vmatprep.subr.bf16.mxu0 %v6096
        %6726 = vmatpush1.bf16.msra.mxu0 %v6095
        %6727 = vmatprep.subr.bf16.mxu0 %v6092
        %6728 = vmatpush1.bf16.msra.mxu0 %v6091
        %6729 = vmatprep.subr.bf16.mxu0 %v6088
        %6730 = vmatpush1.bf16.msra.mxu0 %v6087
        %6731 = vmatprep.subr.bf16.mxu0 %v6148
        %6732 = vmatpush2.bf16.msra.mxu0 %v6147
        %6733 = vmatprep.subr.bf16.mxu0 %v6144
        %6734 = vmatpush2.bf16.msra.mxu0 %v6143
        %6735 = vmatprep.subr.bf16.mxu0 %v6140
        %6736 = vmatpush2.bf16.msra.mxu0 %v6139
        %6737 = vmatprep.subr.bf16.mxu0 %v6136
        %6738 = vmatpush2.bf16.msra.mxu0 %v6135
        %6739 = vmatprep.subr.bf16.mxu0 %v6132
        %6740 = vmatpush2.bf16.msra.mxu0 %v6131
        %6741 = vmatprep.subr.bf16.mxu0 %v6128
        %6742 = vmatpush2.bf16.msra.mxu0 %v6127
        %6743 = vmatprep.subr.bf16.mxu0 %v6124
        %6744 = vmatpush2.bf16.msra.mxu0 %v6123
        %6745 = vmatprep.subr.bf16.mxu0 %v6120
        %6746 = vmatpush2.bf16.msra.mxu0 %v6119
        %6747 = vmatprep.mubr.bf16.mxu0 %v4908
        %6748 = vmatmul.mubr.bf16.gmra.mxu0 %v4907
        %v6749 = vpop.f32.mrf.mxu0
        %v6750 = vadd.f32 %v6709, %v6749
        %v6751 = vpop.f32.mrf.mxu0
        %v6752 = vadd.f32 %v6711, %v6751
        %v6753 = vpop.f32.mrf.mxu0
        %v6754 = vpop.f32.mrf.mxu0
        %6755 = vdwg.mxu0
        %6756 = vmatprep.subr.bf16.mxu0 %v6180
        %6757 = vmatpush1.bf16.msra.mxu0 %v6179
        %6758 = vmatprep.subr.bf16.mxu0 %v6176
        %6759 = vmatpush1.bf16.msra.mxu0 %v6175
        %6760 = vmatprep.subr.bf16.mxu0 %v6172
        %6761 = vmatpush1.bf16.msra.mxu0 %v6171
        %6762 = vmatprep.subr.bf16.mxu0 %v6168
        %6763 = vmatpush1.bf16.msra.mxu0 %v6167
        %6764 = vmatprep.subr.bf16.mxu0 %v6164
        %6765 = vmatpush1.bf16.msra.mxu0 %v6163
        %6766 = vmatprep.subr.bf16.mxu0 %v6160
        %6767 = vmatpush1.bf16.msra.mxu0 %v6159
        %6768 = vmatprep.subr.bf16.mxu0 %v6156
        %6769 = vmatpush1.bf16.msra.mxu0 %v6155
        %6770 = vmatprep.subr.bf16.mxu0 %v6152
        %6771 = vmatpush1.bf16.msra.mxu0 %v6151
        %6772 = vmatprep.subr.bf16.mxu0 %v6212
        %6773 = vmatpush2.bf16.msra.mxu0 %v6211
        %6774 = vmatprep.subr.bf16.mxu0 %v6208
        %6775 = vmatpush2.bf16.msra.mxu0 %v6207
        %6776 = vmatprep.subr.bf16.mxu0 %v6204
        %6777 = vmatpush2.bf16.msra.mxu0 %v6203
        %6778 = vmatprep.subr.bf16.mxu0 %v6200
        %6779 = vmatpush2.bf16.msra.mxu0 %v6199
        %6780 = vmatprep.subr.bf16.mxu0 %v6196
        %6781 = vmatpush2.bf16.msra.mxu0 %v6195
        %6782 = vmatprep.subr.bf16.mxu0 %v6192
        %6783 = vmatpush2.bf16.msra.mxu0 %v6191
        %6784 = vmatprep.subr.bf16.mxu0 %v6188
        %6785 = vmatpush2.bf16.msra.mxu0 %v6187
        %6786 = vmatprep.subr.bf16.mxu0 %v6184
        %6787 = vmatpush2.bf16.msra.mxu0 %v6183
        %6788 = vmatprep.mubr.bf16.mxu0 %v4910
        %6789 = vmatmul.mubr.bf16.gmra.mxu0 %v4909
        %v6790 = vpop.f32.mrf.mxu0
        %v6791 = vadd.f32 %v6750, %v6790
        %v6792 = vpop.f32.mrf.mxu0
        %v6793 = vadd.f32 %v6752, %v6792
        %v6794 = vpop.f32.mrf.mxu0
        %v6795 = vpop.f32.mrf.mxu0
        %6796 = vdwg.mxu0
        %v6797 = vmax.f32 %v6627, 0.0
        %v6798 = vmax.f32 %v6629, 0.0
        %v6799 = vmax.f32 %v6791, 0.0
        %v6800 = vmax.f32 %v6793, 0.0
        %v6801 = vpack.c.bf16 %v6797, %v6797
        %v6802 = vpack.c.bf16 %v6798, %v6798
        %v6803 = vpack.c.bf16 %v6799, %v6799
        %v6804 = vpack.c.bf16 %v6800, %v6800
        %v6805 = vld [vmem:[%s847] sm:$0xff]
        %v6806 = vld [vmem:[%s847 + $0x8] sm:$0xff]
        %v6807 = vld [vmem:[%s847 + $0x10] sm:$0xff]
        %v6808 = vld [vmem:[%s847 + $0x18] sm:$0xff]
        %v6809 = vld [vmem:[%s847 + $0x20] sm:$0xff]
        %v6810 = vld [vmem:[%s847 + $0x28] sm:$0xff]
        %v6811 = vld [vmem:[%s847 + $0x30] sm:$0xff]
        %v6812 = vld [vmem:[%s847 + $0x38] sm:$0xff]
        %v6813 = vld [vmem:[%s847 + $0x40] sm:$0xff]
        %v6814 = vld [vmem:[%s847 + $0x48] sm:$0xff]
        %v6815 = vld [vmem:[%s847 + $0x50] sm:$0xff]
        %v6816 = vld [vmem:[%s847 + $0x58] sm:$0xff]
        %v6817 = vld [vmem:[%s847 + $0x60] sm:$0xff]
        %v6818 = vld [vmem:[%s847 + $0x68] sm:$0xff]
        %v6819 = vld [vmem:[%s847 + $0x70] sm:$0xff]
        %v6820 = vld [vmem:[%s847 + $0x78] sm:$0xff]
        %v6821 = vld [vmem:[%s847 + $0x80] sm:$0xff]
        %v6822 = vld [vmem:[%s847 + $0x88] sm:$0xff]
        %v6823 = vld [vmem:[%s847 + $0x90] sm:$0xff]
        %v6824 = vld [vmem:[%s847 + $0x98] sm:$0xff]
        %v6825 = vld [vmem:[%s847 + $0xa0] sm:$0xff]
        %v6826 = vld [vmem:[%s847 + $0xa8] sm:$0xff]
        %v6827 = vld [vmem:[%s847 + $0xb0] sm:$0xff]
        %v6828 = vld [vmem:[%s847 + $0xb8] sm:$0xff]
        %v6829 = vld [vmem:[%s847 + $0xc0] sm:$0xff]
        %v6830 = vld [vmem:[%s847 + $0xc8] sm:$0xff]
        %v6831 = vld [vmem:[%s847 + $0xd0] sm:$0xff]
        %v6832 = vld [vmem:[%s847 + $0xd8] sm:$0xff]
        %v6833 = vld [vmem:[%s847 + $0xe0] sm:$0xff]
        %v6834 = vld [vmem:[%s847 + $0xe8] sm:$0xff]
        %v6835 = vld [vmem:[%s847 + $0xf0] sm:$0xff]
        %v6836 = vld [vmem:[%s847 + $0xf8] sm:$0xff]
        %v6837 = vld [vmem:[%s847 + $0x100] sm:$0xff]
        %v6838 = vld [vmem:[%s847 + $0x108] sm:$0xff]
        %v6839 = vld [vmem:[%s847 + $0x110] sm:$0xff]
        %v6840 = vld [vmem:[%s847 + $0x118] sm:$0xff]
        %v6841 = vld [vmem:[%s847 + $0x120] sm:$0xff]
        %v6842 = vld [vmem:[%s847 + $0x128] sm:$0xff]
        %v6843 = vld [vmem:[%s847 + $0x130] sm:$0xff]
        %v6844 = vld [vmem:[%s847 + $0x138] sm:$0xff]
        %v6845 = vld [vmem:[%s847 + $0x140] sm:$0xff]
        %v6846 = vld [vmem:[%s847 + $0x148] sm:$0xff]
        %v6847 = vld [vmem:[%s847 + $0x150] sm:$0xff]
        %v6848 = vld [vmem:[%s847 + $0x158] sm:$0xff]
        %v6849 = vld [vmem:[%s847 + $0x160] sm:$0xff]
        %v6850 = vld [vmem:[%s847 + $0x168] sm:$0xff]
        %v6851 = vld [vmem:[%s847 + $0x170] sm:$0xff]
        %v6852 = vld [vmem:[%s847 + $0x178] sm:$0xff]
        %v6853 = vld [vmem:[%s847 + $0x180] sm:$0xff]
        %v6854 = vld [vmem:[%s847 + $0x188] sm:$0xff]
        %v6855 = vld [vmem:[%s847 + $0x190] sm:$0xff]
        %v6856 = vld [vmem:[%s847 + $0x198] sm:$0xff]
        %v6857 = vld [vmem:[%s847 + $0x1a0] sm:$0xff]
        %v6858 = vld [vmem:[%s847 + $0x1a8] sm:$0xff]
        %v6859 = vld [vmem:[%s847 + $0x1b0] sm:$0xff]
        %v6860 = vld [vmem:[%s847 + $0x1b8] sm:$0xff]
        %v6861 = vld [vmem:[%s847 + $0x1c0] sm:$0xff]
        %v6862 = vld [vmem:[%s847 + $0x1c8] sm:$0xff]
        %v6863 = vld [vmem:[%s847 + $0x1d0] sm:$0xff]
        %v6864 = vld [vmem:[%s847 + $0x1d8] sm:$0xff]
        %v6865 = vld [vmem:[%s847 + $0x1e0] sm:$0xff]
        %v6866 = vld [vmem:[%s847 + $0x1e8] sm:$0xff]
        %v6867 = vld [vmem:[%s847 + $0x1f0] sm:$0xff]
        %v6868 = vld [vmem:[%s847 + $0x1f8] sm:$0xff]
        %v6869 = vld [vmem:[%s847 + $0x200] sm:$0xff]
        %v6870 = vld [vmem:[%s847 + $0x208] sm:$0xff]
        %v6871 = vld [vmem:[%s847 + $0x210] sm:$0xff]
        %v6872 = vld [vmem:[%s847 + $0x218] sm:$0xff]
        %v6873 = vld [vmem:[%s847 + $0x220] sm:$0xff]
        %v6874 = vld [vmem:[%s847 + $0x228] sm:$0xff]
        %v6875 = vld [vmem:[%s847 + $0x230] sm:$0xff]
        %v6876 = vld [vmem:[%s847 + $0x238] sm:$0xff]
        %v6877 = vld [vmem:[%s847 + $0x240] sm:$0xff]
        %v6878 = vld [vmem:[%s847 + $0x248] sm:$0xff]
        %v6879 = vld [vmem:[%s847 + $0x250] sm:$0xff]
        %v6880 = vld [vmem:[%s847 + $0x258] sm:$0xff]
        %v6881 = vld [vmem:[%s847 + $0x260] sm:$0xff]
        %v6882 = vld [vmem:[%s847 + $0x268] sm:$0xff]
        %v6883 = vld [vmem:[%s847 + $0x270] sm:$0xff]
        %v6884 = vld [vmem:[%s847 + $0x278] sm:$0xff]
        %v6885 = vld [vmem:[%s847 + $0x280] sm:$0xff]
        %v6886 = vld [vmem:[%s847 + $0x288] sm:$0xff]
        %v6887 = vld [vmem:[%s847 + $0x290] sm:$0xff]
        %v6888 = vld [vmem:[%s847 + $0x298] sm:$0xff]
        %v6889 = vld [vmem:[%s847 + $0x2a0] sm:$0xff]
        %v6890 = vld [vmem:[%s847 + $0x2a8] sm:$0xff]
        %v6891 = vld [vmem:[%s847 + $0x2b0] sm:$0xff]
        %v6892 = vld [vmem:[%s847 + $0x2b8] sm:$0xff]
        %v6893 = vld [vmem:[%s847 + $0x2c0] sm:$0xff]
        %v6894 = vld [vmem:[%s847 + $0x2c8] sm:$0xff]
        %v6895 = vld [vmem:[%s847 + $0x2d0] sm:$0xff]
        %v6896 = vld [vmem:[%s847 + $0x2d8] sm:$0xff]
        %v6897 = vld [vmem:[%s847 + $0x2e0] sm:$0xff]
        %v6898 = vld [vmem:[%s847 + $0x2e8] sm:$0xff]
        %v6899 = vld [vmem:[%s847 + $0x2f0] sm:$0xff]
        %v6900 = vld [vmem:[%s847 + $0x2f8] sm:$0xff]
        %v6901 = vld [vmem:[%s847 + $0x300] sm:$0xff]
        %v6902 = vld [vmem:[%s847 + $0x308] sm:$0xff]
        %v6903 = vld [vmem:[%s847 + $0x310] sm:$0xff]
        %v6904 = vld [vmem:[%s847 + $0x318] sm:$0xff]
        %v6905 = vld [vmem:[%s847 + $0x320] sm:$0xff]
        %v6906 = vld [vmem:[%s847 + $0x328] sm:$0xff]
        %v6907 = vld [vmem:[%s847 + $0x330] sm:$0xff]
        %v6908 = vld [vmem:[%s847 + $0x338] sm:$0xff]
        %v6909 = vld [vmem:[%s847 + $0x340] sm:$0xff]
        %v6910 = vld [vmem:[%s847 + $0x348] sm:$0xff]
        %v6911 = vld [vmem:[%s847 + $0x350] sm:$0xff]
        %v6912 = vld [vmem:[%s847 + $0x358] sm:$0xff]
        %v6913 = vld [vmem:[%s847 + $0x360] sm:$0xff]
        %v6914 = vld [vmem:[%s847 + $0x368] sm:$0xff]
        %v6915 = vld [vmem:[%s847 + $0x370] sm:$0xff]
        %v6916 = vld [vmem:[%s847 + $0x378] sm:$0xff]
        %v6917 = vld [vmem:[%s847 + $0x380] sm:$0xff]
        %v6918 = vld [vmem:[%s847 + $0x388] sm:$0xff]
        %v6919 = vld [vmem:[%s847 + $0x390] sm:$0xff]
        %v6920 = vld [vmem:[%s847 + $0x398] sm:$0xff]
        %v6921 = vld [vmem:[%s847 + $0x3a0] sm:$0xff]
        %v6922 = vld [vmem:[%s847 + $0x3a8] sm:$0xff]
        %v6923 = vld [vmem:[%s847 + $0x3b0] sm:$0xff]
        %v6924 = vld [vmem:[%s847 + $0x3b8] sm:$0xff]
        %v6925 = vld [vmem:[%s847 + $0x3c0] sm:$0xff]
        %v6926 = vld [vmem:[%s847 + $0x3c8] sm:$0xff]
        %v6927 = vld [vmem:[%s847 + $0x3d0] sm:$0xff]
        %v6928 = vld [vmem:[%s847 + $0x3d8] sm:$0xff]
        %v6929 = vld [vmem:[%s847 + $0x3e0] sm:$0xff]
        %v6930 = vld [vmem:[%s847 + $0x3e8] sm:$0xff]
        %v6931 = vld [vmem:[%s847 + $0x3f0] sm:$0xff]
        %v6932 = vld [vmem:[%s847 + $0x3f8] sm:$0xff]
        %v6933 = vld [vmem:[%s713] sm:$0xf]
        %v6935 = vlaneseq
        %v6936 = vshrl.u32 %v6935, 7
        %v6937 = vsub.s32 0, %v6936
        %v6938 = vrot.slane %v6933, %v6937
        %v6939 = vlaneseq
        %v6940 = vshrl.u32 %v6939, 7
        %v6941 = vsub.s32 1, %v6940
        %v6942 = vrot.slane %v6933, %v6941
        %v6943 = vlaneseq
        %v6944 = vshrl.u32 %v6943, 7
        %v6945 = vsub.s32 2, %v6944
        %v6946 = vrot.slane %v6933, %v6945
        %v6947 = vlaneseq
        %v6948 = vshrl.u32 %v6947, 7
        %v6949 = vsub.s32 3, %v6948
        %v6950 = vrot.slane %v6933, %v6949
        %v7083 = vunpack.c.l.b16 %v6805
        %v7084 = vunpack.c.h.b16 %v6805
        %v7085 = vunpack.c.l.b16 %v6806
        %v7086 = vunpack.c.h.b16 %v6806
        %v7087 = vunpack.c.l.b16 %v6807
        %v7088 = vunpack.c.h.b16 %v6807
        %v7089 = vunpack.c.l.b16 %v6808
        %v7090 = vunpack.c.h.b16 %v6808
        %v7091 = vunpack.c.l.b16 %v6809
        %v7092 = vunpack.c.h.b16 %v6809
        %v7093 = vunpack.c.l.b16 %v6810
        %v7094 = vunpack.c.h.b16 %v6810
        %v7095 = vunpack.c.l.b16 %v6811
        %v7096 = vunpack.c.h.b16 %v6811
        %v7097 = vunpack.c.l.b16 %v6812
        %v7098 = vunpack.c.h.b16 %v6812
        %v7099 = vunpack.c.l.b16 %v6813
        %v7100 = vunpack.c.h.b16 %v6813
        %v7101 = vunpack.c.l.b16 %v6814
        %v7102 = vunpack.c.h.b16 %v6814
        %v7103 = vunpack.c.l.b16 %v6815
        %v7104 = vunpack.c.h.b16 %v6815
        %v7105 = vunpack.c.l.b16 %v6816
        %v7106 = vunpack.c.h.b16 %v6816
        %v7107 = vunpack.c.l.b16 %v6817
        %v7108 = vunpack.c.h.b16 %v6817
        %v7109 = vunpack.c.l.b16 %v6818
        %v7110 = vunpack.c.h.b16 %v6818
        %v7111 = vunpack.c.l.b16 %v6819
        %v7112 = vunpack.c.h.b16 %v6819
        %v7113 = vunpack.c.l.b16 %v6820
        %v7114 = vunpack.c.h.b16 %v6820
        %v7115 = vunpack.c.l.b16 %v6821
        %v7116 = vunpack.c.h.b16 %v6821
        %v7117 = vunpack.c.l.b16 %v6822
        %v7118 = vunpack.c.h.b16 %v6822
        %v7119 = vunpack.c.l.b16 %v6823
        %v7120 = vunpack.c.h.b16 %v6823
        %v7121 = vunpack.c.l.b16 %v6824
        %v7122 = vunpack.c.h.b16 %v6824
        %v7123 = vunpack.c.l.b16 %v6825
        %v7124 = vunpack.c.h.b16 %v6825
        %v7125 = vunpack.c.l.b16 %v6826
        %v7126 = vunpack.c.h.b16 %v6826
        %v7127 = vunpack.c.l.b16 %v6827
        %v7128 = vunpack.c.h.b16 %v6827
        %v7129 = vunpack.c.l.b16 %v6828
        %v7130 = vunpack.c.h.b16 %v6828
        %v7131 = vunpack.c.l.b16 %v6829
        %v7132 = vunpack.c.h.b16 %v6829
        %v7133 = vunpack.c.l.b16 %v6830
        %v7134 = vunpack.c.h.b16 %v6830
        %v7135 = vunpack.c.l.b16 %v6831
        %v7136 = vunpack.c.h.b16 %v6831
        %v7137 = vunpack.c.l.b16 %v6832
        %v7138 = vunpack.c.h.b16 %v6832
        %v7139 = vunpack.c.l.b16 %v6833
        %v7140 = vunpack.c.h.b16 %v6833
        %v7141 = vunpack.c.l.b16 %v6834
        %v7142 = vunpack.c.h.b16 %v6834
        %v7143 = vunpack.c.l.b16 %v6835
        %v7144 = vunpack.c.h.b16 %v6835
        %v7145 = vunpack.c.l.b16 %v6836
        %v7146 = vunpack.c.h.b16 %v6836
        %v7147 = vunpack.c.l.b16 %v6837
        %v7148 = vunpack.c.h.b16 %v6837
        %v7149 = vunpack.c.l.b16 %v6838
        %v7150 = vunpack.c.h.b16 %v6838
        %v7151 = vunpack.c.l.b16 %v6839
        %v7152 = vunpack.c.h.b16 %v6839
        %v7153 = vunpack.c.l.b16 %v6840
        %v7154 = vunpack.c.h.b16 %v6840
        %v7155 = vunpack.c.l.b16 %v6841
        %v7156 = vunpack.c.h.b16 %v6841
        %v7157 = vunpack.c.l.b16 %v6842
        %v7158 = vunpack.c.h.b16 %v6842
        %v7159 = vunpack.c.l.b16 %v6843
        %v7160 = vunpack.c.h.b16 %v6843
        %v7161 = vunpack.c.l.b16 %v6844
        %v7162 = vunpack.c.h.b16 %v6844
        %v7163 = vunpack.c.l.b16 %v6845
        %v7164 = vunpack.c.h.b16 %v6845
        %v7165 = vunpack.c.l.b16 %v6846
        %v7166 = vunpack.c.h.b16 %v6846
        %v7167 = vunpack.c.l.b16 %v6847
        %v7168 = vunpack.c.h.b16 %v6847
        %v7169 = vunpack.c.l.b16 %v6848
        %v7170 = vunpack.c.h.b16 %v6848
        %v7171 = vunpack.c.l.b16 %v6849
        %v7172 = vunpack.c.h.b16 %v6849
        %v7173 = vunpack.c.l.b16 %v6850
        %v7174 = vunpack.c.h.b16 %v6850
        %v7175 = vunpack.c.l.b16 %v6851
        %v7176 = vunpack.c.h.b16 %v6851
        %v7177 = vunpack.c.l.b16 %v6852
        %v7178 = vunpack.c.h.b16 %v6852
        %v7179 = vunpack.c.l.b16 %v6853
        %v7180 = vunpack.c.h.b16 %v6853
        %v7181 = vunpack.c.l.b16 %v6854
        %v7182 = vunpack.c.h.b16 %v6854
        %v7183 = vunpack.c.l.b16 %v6855
        %v7184 = vunpack.c.h.b16 %v6855
        %v7185 = vunpack.c.l.b16 %v6856
        %v7186 = vunpack.c.h.b16 %v6856
        %v7187 = vunpack.c.l.b16 %v6857
        %v7188 = vunpack.c.h.b16 %v6857
        %v7189 = vunpack.c.l.b16 %v6858
        %v7190 = vunpack.c.h.b16 %v6858
        %v7191 = vunpack.c.l.b16 %v6859
        %v7192 = vunpack.c.h.b16 %v6859
        %v7193 = vunpack.c.l.b16 %v6860
        %v7194 = vunpack.c.h.b16 %v6860
        %v7195 = vunpack.c.l.b16 %v6861
        %v7196 = vunpack.c.h.b16 %v6861
        %v7197 = vunpack.c.l.b16 %v6862
        %v7198 = vunpack.c.h.b16 %v6862
        %v7199 = vunpack.c.l.b16 %v6863
        %v7200 = vunpack.c.h.b16 %v6863
        %v7201 = vunpack.c.l.b16 %v6864
        %v7202 = vunpack.c.h.b16 %v6864
        %v7203 = vunpack.c.l.b16 %v6865
        %v7204 = vunpack.c.h.b16 %v6865
        %v7205 = vunpack.c.l.b16 %v6866
        %v7206 = vunpack.c.h.b16 %v6866
        %v7207 = vunpack.c.l.b16 %v6867
        %v7208 = vunpack.c.h.b16 %v6867
        %v7209 = vunpack.c.l.b16 %v6868
        %v7210 = vunpack.c.h.b16 %v6868
        %v7211 = vunpack.c.l.b16 %v6869
        %v7212 = vunpack.c.h.b16 %v6869
        %v7213 = vunpack.c.l.b16 %v6870
        %v7214 = vunpack.c.h.b16 %v6870
        %v7215 = vunpack.c.l.b16 %v6871
        %v7216 = vunpack.c.h.b16 %v6871
        %v7217 = vunpack.c.l.b16 %v6872
        %v7218 = vunpack.c.h.b16 %v6872
        %v7219 = vunpack.c.l.b16 %v6873
        %v7220 = vunpack.c.h.b16 %v6873
        %v7221 = vunpack.c.l.b16 %v6874
        %v7222 = vunpack.c.h.b16 %v6874
        %v7223 = vunpack.c.l.b16 %v6875
        %v7224 = vunpack.c.h.b16 %v6875
        %v7225 = vunpack.c.l.b16 %v6876
        %v7226 = vunpack.c.h.b16 %v6876
        %v7227 = vunpack.c.l.b16 %v6877
        %v7228 = vunpack.c.h.b16 %v6877
        %v7229 = vunpack.c.l.b16 %v6878
        %v7230 = vunpack.c.h.b16 %v6878
        %v7231 = vunpack.c.l.b16 %v6879
        %v7232 = vunpack.c.h.b16 %v6879
        %v7233 = vunpack.c.l.b16 %v6880
        %v7234 = vunpack.c.h.b16 %v6880
        %v7235 = vunpack.c.l.b16 %v6881
        %v7236 = vunpack.c.h.b16 %v6881
        %v7237 = vunpack.c.l.b16 %v6882
        %v7238 = vunpack.c.h.b16 %v6882
        %v7239 = vunpack.c.l.b16 %v6883
        %v7240 = vunpack.c.h.b16 %v6883
        %v7241 = vunpack.c.l.b16 %v6884
        %v7242 = vunpack.c.h.b16 %v6884
        %v7243 = vunpack.c.l.b16 %v6885
        %v7244 = vunpack.c.h.b16 %v6885
        %v7245 = vunpack.c.l.b16 %v6886
        %v7246 = vunpack.c.h.b16 %v6886
        %v7247 = vunpack.c.l.b16 %v6887
        %v7248 = vunpack.c.h.b16 %v6887
        %v7249 = vunpack.c.l.b16 %v6888
        %v7250 = vunpack.c.h.b16 %v6888
        %v7251 = vunpack.c.l.b16 %v6889
        %v7252 = vunpack.c.h.b16 %v6889
        %v7253 = vunpack.c.l.b16 %v6890
        %v7254 = vunpack.c.h.b16 %v6890
        %v7255 = vunpack.c.l.b16 %v6891
        %v7256 = vunpack.c.h.b16 %v6891
        %v7257 = vunpack.c.l.b16 %v6892
        %v7258 = vunpack.c.h.b16 %v6892
        %v7259 = vunpack.c.l.b16 %v6893
        %v7260 = vunpack.c.h.b16 %v6893
        %v7261 = vunpack.c.l.b16 %v6894
        %v7262 = vunpack.c.h.b16 %v6894
        %v7263 = vunpack.c.l.b16 %v6895
        %v7264 = vunpack.c.h.b16 %v6895
        %v7265 = vunpack.c.l.b16 %v6896
        %v7266 = vunpack.c.h.b16 %v6896
        %v7267 = vunpack.c.l.b16 %v6897
        %v7268 = vunpack.c.h.b16 %v6897
        %v7269 = vunpack.c.l.b16 %v6898
        %v7270 = vunpack.c.h.b16 %v6898
        %v7271 = vunpack.c.l.b16 %v6899
        %v7272 = vunpack.c.h.b16 %v6899
        %v7273 = vunpack.c.l.b16 %v6900
        %v7274 = vunpack.c.h.b16 %v6900
        %v7275 = vunpack.c.l.b16 %v6901
        %v7276 = vunpack.c.h.b16 %v6901
        %v7277 = vunpack.c.l.b16 %v6902
        %v7278 = vunpack.c.h.b16 %v6902
        %v7279 = vunpack.c.l.b16 %v6903
        %v7280 = vunpack.c.h.b16 %v6903
        %v7281 = vunpack.c.l.b16 %v6904
        %v7282 = vunpack.c.h.b16 %v6904
        %v7283 = vunpack.c.l.b16 %v6905
        %v7284 = vunpack.c.h.b16 %v6905
        %v7285 = vunpack.c.l.b16 %v6906
        %v7286 = vunpack.c.h.b16 %v6906
        %v7287 = vunpack.c.l.b16 %v6907
        %v7288 = vunpack.c.h.b16 %v6907
        %v7289 = vunpack.c.l.b16 %v6908
        %v7290 = vunpack.c.h.b16 %v6908
        %v7291 = vunpack.c.l.b16 %v6909
        %v7292 = vunpack.c.h.b16 %v6909
        %v7293 = vunpack.c.l.b16 %v6910
        %v7294 = vunpack.c.h.b16 %v6910
        %v7295 = vunpack.c.l.b16 %v6911
        %v7296 = vunpack.c.h.b16 %v6911
        %v7297 = vunpack.c.l.b16 %v6912
        %v7298 = vunpack.c.h.b16 %v6912
        %v7299 = vunpack.c.l.b16 %v6913
        %v7300 = vunpack.c.h.b16 %v6913
        %v7301 = vunpack.c.l.b16 %v6914
        %v7302 = vunpack.c.h.b16 %v6914
        %v7303 = vunpack.c.l.b16 %v6915
        %v7304 = vunpack.c.h.b16 %v6915
        %v7305 = vunpack.c.l.b16 %v6916
        %v7306 = vunpack.c.h.b16 %v6916
        %v7307 = vunpack.c.l.b16 %v6917
        %v7308 = vunpack.c.h.b16 %v6917
        %v7309 = vunpack.c.l.b16 %v6918
        %v7310 = vunpack.c.h.b16 %v6918
        %v7311 = vunpack.c.l.b16 %v6919
        %v7312 = vunpack.c.h.b16 %v6919
        %v7313 = vunpack.c.l.b16 %v6920
        %v7314 = vunpack.c.h.b16 %v6920
        %v7315 = vunpack.c.l.b16 %v6921
        %v7316 = vunpack.c.h.b16 %v6921
        %v7317 = vunpack.c.l.b16 %v6922
        %v7318 = vunpack.c.h.b16 %v6922
        %v7319 = vunpack.c.l.b16 %v6923
        %v7320 = vunpack.c.h.b16 %v6923
        %v7321 = vunpack.c.l.b16 %v6924
        %v7322 = vunpack.c.h.b16 %v6924
        %v7323 = vunpack.c.l.b16 %v6925
        %v7324 = vunpack.c.h.b16 %v6925
        %v7325 = vunpack.c.l.b16 %v6926
        %v7326 = vunpack.c.h.b16 %v6926
        %v7327 = vunpack.c.l.b16 %v6927
        %v7328 = vunpack.c.h.b16 %v6927
        %v7329 = vunpack.c.l.b16 %v6928
        %v7330 = vunpack.c.h.b16 %v6928
        %v7331 = vunpack.c.l.b16 %v6929
        %v7332 = vunpack.c.h.b16 %v6929
        %v7333 = vunpack.c.l.b16 %v6930
        %v7334 = vunpack.c.h.b16 %v6930
        %v7335 = vunpack.c.l.b16 %v6931
        %v7336 = vunpack.c.h.b16 %v6931
        %v7337 = vunpack.c.l.b16 %v6932
        %v7338 = vunpack.c.h.b16 %v6932
        %v7339 = vpack.c.b16 %v7087, %v7083
        %v7340 = vpack.c.b16 %v7088, %v7084
        %v7341 = vpack.c.b16 %v7089, %v7085
        %v7342 = vpack.c.b16 %v7090, %v7086
        %v7343 = vpack.c.b16 %v7095, %v7091
        %v7344 = vpack.c.b16 %v7096, %v7092
        %v7345 = vpack.c.b16 %v7097, %v7093
        %v7346 = vpack.c.b16 %v7098, %v7094
        %v7347 = vpack.c.b16 %v7103, %v7099
        %v7348 = vpack.c.b16 %v7104, %v7100
        %v7349 = vpack.c.b16 %v7105, %v7101
        %v7350 = vpack.c.b16 %v7106, %v7102
        %v7351 = vpack.c.b16 %v7111, %v7107
        %v7352 = vpack.c.b16 %v7112, %v7108
        %v7353 = vpack.c.b16 %v7113, %v7109
        %v7354 = vpack.c.b16 %v7114, %v7110
        %v7355 = vpack.c.b16 %v7119, %v7115
        %v7356 = vpack.c.b16 %v7120, %v7116
        %v7357 = vpack.c.b16 %v7121, %v7117
        %v7358 = vpack.c.b16 %v7122, %v7118
        %v7359 = vpack.c.b16 %v7127, %v7123
        %v7360 = vpack.c.b16 %v7128, %v7124
        %v7361 = vpack.c.b16 %v7129, %v7125
        %v7362 = vpack.c.b16 %v7130, %v7126
        %v7363 = vpack.c.b16 %v7135, %v7131
        %v7364 = vpack.c.b16 %v7136, %v7132
        %v7365 = vpack.c.b16 %v7137, %v7133
        %v7366 = vpack.c.b16 %v7138, %v7134
        %v7367 = vpack.c.b16 %v7143, %v7139
        %v7368 = vpack.c.b16 %v7144, %v7140
        %v7369 = vpack.c.b16 %v7145, %v7141
        %v7370 = vpack.c.b16 %v7146, %v7142
        %v7371 = vpack.c.b16 %v7151, %v7147
        %v7372 = vpack.c.b16 %v7152, %v7148
        %v7373 = vpack.c.b16 %v7153, %v7149
        %v7374 = vpack.c.b16 %v7154, %v7150
        %v7375 = vpack.c.b16 %v7159, %v7155
        %v7376 = vpack.c.b16 %v7160, %v7156
        %v7377 = vpack.c.b16 %v7161, %v7157
        %v7378 = vpack.c.b16 %v7162, %v7158
        %v7379 = vpack.c.b16 %v7167, %v7163
        %v7380 = vpack.c.b16 %v7168, %v7164
        %v7381 = vpack.c.b16 %v7169, %v7165
        %v7382 = vpack.c.b16 %v7170, %v7166
        %v7383 = vpack.c.b16 %v7175, %v7171
        %v7384 = vpack.c.b16 %v7176, %v7172
        %v7385 = vpack.c.b16 %v7177, %v7173
        %v7386 = vpack.c.b16 %v7178, %v7174
        %v7387 = vpack.c.b16 %v7183, %v7179
        %v7388 = vpack.c.b16 %v7184, %v7180
        %v7389 = vpack.c.b16 %v7185, %v7181
        %v7390 = vpack.c.b16 %v7186, %v7182
        %v7391 = vpack.c.b16 %v7191, %v7187
        %v7392 = vpack.c.b16 %v7192, %v7188
        %v7393 = vpack.c.b16 %v7193, %v7189
        %v7394 = vpack.c.b16 %v7194, %v7190
        %v7395 = vpack.c.b16 %v7199, %v7195
        %v7396 = vpack.c.b16 %v7200, %v7196
        %v7397 = vpack.c.b16 %v7201, %v7197
        %v7398 = vpack.c.b16 %v7202, %v7198
        %v7399 = vpack.c.b16 %v7207, %v7203
        %v7400 = vpack.c.b16 %v7208, %v7204
        %v7401 = vpack.c.b16 %v7209, %v7205
        %v7402 = vpack.c.b16 %v7210, %v7206
        %v7403 = vpack.c.b16 %v7215, %v7211
        %v7404 = vpack.c.b16 %v7216, %v7212
        %v7405 = vpack.c.b16 %v7217, %v7213
        %v7406 = vpack.c.b16 %v7218, %v7214
        %v7407 = vpack.c.b16 %v7223, %v7219
        %v7408 = vpack.c.b16 %v7224, %v7220
        %v7409 = vpack.c.b16 %v7225, %v7221
        %v7410 = vpack.c.b16 %v7226, %v7222
        %v7411 = vpack.c.b16 %v7231, %v7227
        %v7412 = vpack.c.b16 %v7232, %v7228
        %v7413 = vpack.c.b16 %v7233, %v7229
        %v7414 = vpack.c.b16 %v7234, %v7230
        %v7415 = vpack.c.b16 %v7239, %v7235
        %v7416 = vpack.c.b16 %v7240, %v7236
        %v7417 = vpack.c.b16 %v7241, %v7237
        %v7418 = vpack.c.b16 %v7242, %v7238
        %v7419 = vpack.c.b16 %v7247, %v7243
        %v7420 = vpack.c.b16 %v7248, %v7244
        %v7421 = vpack.c.b16 %v7249, %v7245
        %v7422 = vpack.c.b16 %v7250, %v7246
        %v7423 = vpack.c.b16 %v7255, %v7251
        %v7424 = vpack.c.b16 %v7256, %v7252
        %v7425 = vpack.c.b16 %v7257, %v7253
        %v7426 = vpack.c.b16 %v7258, %v7254
        %v7427 = vpack.c.b16 %v7263, %v7259
        %v7428 = vpack.c.b16 %v7264, %v7260
        %v7429 = vpack.c.b16 %v7265, %v7261
        %v7430 = vpack.c.b16 %v7266, %v7262
        %v7431 = vpack.c.b16 %v7271, %v7267
        %v7432 = vpack.c.b16 %v7272, %v7268
        %v7433 = vpack.c.b16 %v7273, %v7269
        %v7434 = vpack.c.b16 %v7274, %v7270
        %v7435 = vpack.c.b16 %v7279, %v7275
        %v7436 = vpack.c.b16 %v7280, %v7276
        %v7437 = vpack.c.b16 %v7281, %v7277
        %v7438 = vpack.c.b16 %v7282, %v7278
        %v7439 = vpack.c.b16 %v7287, %v7283
        %v7440 = vpack.c.b16 %v7288, %v7284
        %v7441 = vpack.c.b16 %v7289, %v7285
        %v7442 = vpack.c.b16 %v7290, %v7286
        %v7443 = vpack.c.b16 %v7295, %v7291
        %v7444 = vpack.c.b16 %v7296, %v7292
        %v7445 = vpack.c.b16 %v7297, %v7293
        %v7446 = vpack.c.b16 %v7298, %v7294
        %v7447 = vpack.c.b16 %v7303, %v7299
        %v7448 = vpack.c.b16 %v7304, %v7300
        %v7449 = vpack.c.b16 %v7305, %v7301
        %v7450 = vpack.c.b16 %v7306, %v7302
        %v7451 = vpack.c.b16 %v7311, %v7307
        %v7452 = vpack.c.b16 %v7312, %v7308
        %v7453 = vpack.c.b16 %v7313, %v7309
        %v7454 = vpack.c.b16 %v7314, %v7310
        %v7455 = vpack.c.b16 %v7319, %v7315
        %v7456 = vpack.c.b16 %v7320, %v7316
        %v7457 = vpack.c.b16 %v7321, %v7317
        %v7458 = vpack.c.b16 %v7322, %v7318
        %v7459 = vpack.c.b16 %v7327, %v7323
        %v7460 = vpack.c.b16 %v7328, %v7324
        %v7461 = vpack.c.b16 %v7329, %v7325
        %v7462 = vpack.c.b16 %v7330, %v7326
        %v7463 = vpack.c.b16 %v7335, %v7331
        %v7464 = vpack.c.b16 %v7336, %v7332
        %v7465 = vpack.c.b16 %v7337, %v7333
        %v7466 = vpack.c.b16 %v7338, %v7334
        %7595 = vmatprep.subr.bf16.mxu0 %v7368
        %7596 = vmatpush1.bf16.msra.mxu0 %v7367
        %7597 = vmatprep.subr.bf16.mxu0 %v7364
        %7598 = vmatpush1.bf16.msra.mxu0 %v7363
        %7599 = vmatprep.subr.bf16.mxu0 %v7360
        %7600 = vmatpush1.bf16.msra.mxu0 %v7359
        %7601 = vmatprep.subr.bf16.mxu0 %v7356
        %7602 = vmatpush1.bf16.msra.mxu0 %v7355
        %7603 = vmatprep.subr.bf16.mxu0 %v7352
        %7604 = vmatpush1.bf16.msra.mxu0 %v7351
        %7605 = vmatprep.subr.bf16.mxu0 %v7348
        %7606 = vmatpush1.bf16.msra.mxu0 %v7347
        %7607 = vmatprep.subr.bf16.mxu0 %v7344
        %7608 = vmatpush1.bf16.msra.mxu0 %v7343
        %7609 = vmatprep.subr.bf16.mxu0 %v7340
        %7610 = vmatpush1.bf16.msra.mxu0 %v7339
        %7611 = vmatprep.subr.bf16.mxu0 %v7400
        %7612 = vmatpush2.bf16.msra.mxu0 %v7399
        %7613 = vmatprep.subr.bf16.mxu0 %v7396
        %7614 = vmatpush2.bf16.msra.mxu0 %v7395
        %7615 = vmatprep.subr.bf16.mxu0 %v7392
        %7616 = vmatpush2.bf16.msra.mxu0 %v7391
        %7617 = vmatprep.subr.bf16.mxu0 %v7388
        %7618 = vmatpush2.bf16.msra.mxu0 %v7387
        %7619 = vmatprep.subr.bf16.mxu0 %v7384
        %7620 = vmatpush2.bf16.msra.mxu0 %v7383
        %7621 = vmatprep.subr.bf16.mxu0 %v7380
        %7622 = vmatpush2.bf16.msra.mxu0 %v7379
        %7623 = vmatprep.subr.bf16.mxu0 %v7376
        %7624 = vmatpush2.bf16.msra.mxu0 %v7375
        %7625 = vmatprep.subr.bf16.mxu0 %v7372
        %7626 = vmatpush2.bf16.msra.mxu0 %v7371
        %7627 = vmatprep.mubr.bf16.mxu0 %v6802
        %7628 = vmatmul.mubr.bf16.gmra.mxu0 %v6801
        %v7629 = vpop.f32.mrf.mxu0
        %v7630 = vadd.f32 %v6938, %v7629
        %v7631 = vpop.f32.mrf.mxu0
        %v7632 = vadd.f32 %v6942, %v7631
        %v7633 = vpop.f32.mrf.mxu0
        %v7634 = vpop.f32.mrf.mxu0
        %7635 = vdwg.mxu0
        %7636 = vmatprep.subr.bf16.mxu0 %v7432
        %7637 = vmatpush1.bf16.msra.mxu0 %v7431
        %7638 = vmatprep.subr.bf16.mxu0 %v7428
        %7639 = vmatpush1.bf16.msra.mxu0 %v7427
        %7640 = vmatprep.subr.bf16.mxu0 %v7424
        %7641 = vmatpush1.bf16.msra.mxu0 %v7423
        %7642 = vmatprep.subr.bf16.mxu0 %v7420
        %7643 = vmatpush1.bf16.msra.mxu0 %v7419
        %7644 = vmatprep.subr.bf16.mxu0 %v7416
        %7645 = vmatpush1.bf16.msra.mxu0 %v7415
        %7646 = vmatprep.subr.bf16.mxu0 %v7412
        %7647 = vmatpush1.bf16.msra.mxu0 %v7411
        %7648 = vmatprep.subr.bf16.mxu0 %v7408
        %7649 = vmatpush1.bf16.msra.mxu0 %v7407
        %7650 = vmatprep.subr.bf16.mxu0 %v7404
        %7651 = vmatpush1.bf16.msra.mxu0 %v7403
        %7652 = vmatprep.subr.bf16.mxu0 %v7464
        %7653 = vmatpush2.bf16.msra.mxu0 %v7463
        %7654 = vmatprep.subr.bf16.mxu0 %v7460
        %7655 = vmatpush2.bf16.msra.mxu0 %v7459
        %7656 = vmatprep.subr.bf16.mxu0 %v7456
        %7657 = vmatpush2.bf16.msra.mxu0 %v7455
        %7658 = vmatprep.subr.bf16.mxu0 %v7452
        %7659 = vmatpush2.bf16.msra.mxu0 %v7451
        %7660 = vmatprep.subr.bf16.mxu0 %v7448
        %7661 = vmatpush2.bf16.msra.mxu0 %v7447
        %7662 = vmatprep.subr.bf16.mxu0 %v7444
        %7663 = vmatpush2.bf16.msra.mxu0 %v7443
        %7664 = vmatprep.subr.bf16.mxu0 %v7440
        %7665 = vmatpush2.bf16.msra.mxu0 %v7439
        %7666 = vmatprep.subr.bf16.mxu0 %v7436
        %7667 = vmatpush2.bf16.msra.mxu0 %v7435
        %7668 = vmatprep.mubr.bf16.mxu0 %v6804
        %7669 = vmatmul.mubr.bf16.gmra.mxu0 %v6803
        %v7670 = vpop.f32.mrf.mxu0
        %v7671 = vadd.f32 %v7630, %v7670
        %v7672 = vpop.f32.mrf.mxu0
        %v7673 = vadd.f32 %v7632, %v7672
        %v7674 = vpop.f32.mrf.mxu0
        %v7675 = vpop.f32.mrf.mxu0
        %7676 = vdwg.mxu0
        %7677 = vmatprep.subr.bf16.mxu0 %v7370
        %7678 = vmatpush1.bf16.msra.mxu0 %v7369
        %7679 = vmatprep.subr.bf16.mxu0 %v7366
        %7680 = vmatpush1.bf16.msra.mxu0 %v7365
        %7681 = vmatprep.subr.bf16.mxu0 %v7362
        %7682 = vmatpush1.bf16.msra.mxu0 %v7361
        %7683 = vmatprep.subr.bf16.mxu0 %v7358
        %7684 = vmatpush1.bf16.msra.mxu0 %v7357
        %7685 = vmatprep.subr.bf16.mxu0 %v7354
        %7686 = vmatpush1.bf16.msra.mxu0 %v7353
        %7687 = vmatprep.subr.bf16.mxu0 %v7350
        %7688 = vmatpush1.bf16.msra.mxu0 %v7349
        %7689 = vmatprep.subr.bf16.mxu0 %v7346
        %7690 = vmatpush1.bf16.msra.mxu0 %v7345
        %7691 = vmatprep.subr.bf16.mxu0 %v7342
        %7692 = vmatpush1.bf16.msra.mxu0 %v7341
        %7693 = vmatprep.subr.bf16.mxu0 %v7402
        %7694 = vmatpush2.bf16.msra.mxu0 %v7401
        %7695 = vmatprep.subr.bf16.mxu0 %v7398
        %7696 = vmatpush2.bf16.msra.mxu0 %v7397
        %7697 = vmatprep.subr.bf16.mxu0 %v7394
        %7698 = vmatpush2.bf16.msra.mxu0 %v7393
        %7699 = vmatprep.subr.bf16.mxu0 %v7390
        %7700 = vmatpush2.bf16.msra.mxu0 %v7389
        %7701 = vmatprep.subr.bf16.mxu0 %v7386
        %7702 = vmatpush2.bf16.msra.mxu0 %v7385
        %7703 = vmatprep.subr.bf16.mxu0 %v7382
        %7704 = vmatpush2.bf16.msra.mxu0 %v7381
        %7705 = vmatprep.subr.bf16.mxu0 %v7378
        %7706 = vmatpush2.bf16.msra.mxu0 %v7377
        %7707 = vmatprep.subr.bf16.mxu0 %v7374
        %7708 = vmatpush2.bf16.msra.mxu0 %v7373
        %7709 = vmatprep.mubr.bf16.mxu0 %v6802
        %7710 = vmatmul.mubr.bf16.gmra.mxu0 %v6801
        %v7711 = vpop.f32.mrf.mxu0
        %v7712 = vadd.f32 %v6946, %v7711
        %v7713 = vpop.f32.mrf.mxu0
        %v7714 = vadd.f32 %v6950, %v7713
        %v7715 = vpop.f32.mrf.mxu0
        %v7716 = vpop.f32.mrf.mxu0
        %7717 = vdwg.mxu0
        %7718 = vmatprep.subr.bf16.mxu0 %v7434
        %7719 = vmatpush1.bf16.msra.mxu0 %v7433
        %7720 = vmatprep.subr.bf16.mxu0 %v7430
        %7721 = vmatpush1.bf16.msra.mxu0 %v7429
        %7722 = vmatprep.subr.bf16.mxu0 %v7426
        %7723 = vmatpush1.bf16.msra.mxu0 %v7425
        %7724 = vmatprep.subr.bf16.mxu0 %v7422
        %7725 = vmatpush1.bf16.msra.mxu0 %v7421
        %7726 = vmatprep.subr.bf16.mxu0 %v7418
        %7727 = vmatpush1.bf16.msra.mxu0 %v7417
        %7728 = vmatprep.subr.bf16.mxu0 %v7414
        %7729 = vmatpush1.bf16.msra.mxu0 %v7413
        %7730 = vmatprep.subr.bf16.mxu0 %v7410
        %7731 = vmatpush1.bf16.msra.mxu0 %v7409
        %7732 = vmatprep.subr.bf16.mxu0 %v7406
        %7733 = vmatpush1.bf16.msra.mxu0 %v7405
        %7734 = vmatprep.subr.bf16.mxu0 %v7466
        %7735 = vmatpush2.bf16.msra.mxu0 %v7465
        %7736 = vmatprep.subr.bf16.mxu0 %v7462
        %7737 = vmatpush2.bf16.msra.mxu0 %v7461
        %7738 = vmatprep.subr.bf16.mxu0 %v7458
        %7739 = vmatpush2.bf16.msra.mxu0 %v7457
        %7740 = vmatprep.subr.bf16.mxu0 %v7454
        %7741 = vmatpush2.bf16.msra.mxu0 %v7453
        %7742 = vmatprep.subr.bf16.mxu0 %v7450
        %7743 = vmatpush2.bf16.msra.mxu0 %v7449
        %7744 = vmatprep.subr.bf16.mxu0 %v7446
        %7745 = vmatpush2.bf16.msra.mxu0 %v7445
        %7746 = vmatprep.subr.bf16.mxu0 %v7442
        %7747 = vmatpush2.bf16.msra.mxu0 %v7441
        %7748 = vmatprep.subr.bf16.mxu0 %v7438
        %7749 = vmatpush2.bf16.msra.mxu0 %v7437
        %7750 = vmatprep.mubr.bf16.mxu0 %v6804
        %7751 = vmatmul.mubr.bf16.gmra.mxu0 %v6803
        %v7752 = vpop.f32.mrf.mxu0
        %v7753 = vadd.f32 %v7712, %v7752
        %v7754 = vpop.f32.mrf.mxu0
        %v7755 = vadd.f32 %v7714, %v7754
        %v7756 = vpop.f32.mrf.mxu0
        %v7757 = vpop.f32.mrf.mxu0
        %7758 = vdwg.mxu0
        %v7759 = vpack.c.bf16 %v7671, %v7671
        %v7760 = vpack.c.bf16 %v7673, %v7673
        %v7761 = vpack.c.bf16 %v7753, %v7753
        %v7762 = vpack.c.bf16 %v7755, %v7755
        %p7763 = scmp.eq.s32.totalorder %s40, 0
        // Predicated region
        $region125: #{multimodal_forward.5} parent=87 // pred_check
          %p7764 = pneg %p7763
        $region126: #{multimodal_forward.5} parent=87 // pred_check_branch
          %7766 = sbr.rel (%p7764) target = $region128
        $region127: #{multimodal_forward.5} parent=87 // pred_region
          %7767 = vst [vmem:[#allocation2] sm:$0xff] 0.0
        $region128: #{multimodal_forward.5} parent=87 // pred_fallthru
          _
        %v7768 = vld [vmem:[#allocation2] sm:$0xff]
        %v7769 = vld [vmem:[%s722] sm:$0xff]
        %v7770 = vld [vmem:[%s722 + $0x8] sm:$0xff]
        %v7771 = vld [vmem:[%s722 + $0x10] sm:$0xff]
        %v7772 = vld [vmem:[%s722 + $0x18] sm:$0xff]
        %v7773 = vld [vmem:[%s722 + $0x20] sm:$0xff]
        %v7774 = vld [vmem:[%s722 + $0x28] sm:$0xff]
        %v7775 = vld [vmem:[%s722 + $0x30] sm:$0xff]
        %v7776 = vld [vmem:[%s722 + $0x38] sm:$0xff]
        %v7777 = vld [vmem:[%s722 + $0x40] sm:$0xff]
        %v7778 = vld [vmem:[%s722 + $0x48] sm:$0xff]
        %v7779 = vld [vmem:[%s722 + $0x50] sm:$0xff]
        %v7780 = vld [vmem:[%s722 + $0x58] sm:$0xff]
        %v7781 = vld [vmem:[%s722 + $0x60] sm:$0xff]
        %v7782 = vld [vmem:[%s722 + $0x68] sm:$0xff]
        %v7783 = vld [vmem:[%s722 + $0x70] sm:$0xff]
        %v7784 = vld [vmem:[%s722 + $0x78] sm:$0xff]
        %v7785 = vld [vmem:[%s722 + $0x80] sm:$0xff]
        %v7786 = vld [vmem:[%s722 + $0x88] sm:$0xff]
        %v7787 = vld [vmem:[%s722 + $0x90] sm:$0xff]
        %v7788 = vld [vmem:[%s722 + $0x98] sm:$0xff]
        %v7789 = vld [vmem:[%s722 + $0xa0] sm:$0xff]
        %v7790 = vld [vmem:[%s722 + $0xa8] sm:$0xff]
        %v7791 = vld [vmem:[%s722 + $0xb0] sm:$0xff]
        %v7792 = vld [vmem:[%s722 + $0xb8] sm:$0xff]
        %v7793 = vld [vmem:[%s722 + $0xc0] sm:$0xff]
        %v7794 = vld [vmem:[%s722 + $0xc8] sm:$0xff]
        %v7795 = vld [vmem:[%s722 + $0xd0] sm:$0xff]
        %v7796 = vld [vmem:[%s722 + $0xd8] sm:$0xff]
        %v7797 = vld [vmem:[%s722 + $0xe0] sm:$0xff]
        %v7798 = vld [vmem:[%s722 + $0xe8] sm:$0xff]
        %v7799 = vld [vmem:[%s722 + $0xf0] sm:$0xff]
        %v7800 = vld [vmem:[%s722 + $0xf8] sm:$0xff]
        %v7801 = vld [vmem:[%s722 + $0x100] sm:$0xff]
        %v7802 = vld [vmem:[%s722 + $0x108] sm:$0xff]
        %v7803 = vld [vmem:[%s722 + $0x110] sm:$0xff]
        %v7804 = vld [vmem:[%s722 + $0x118] sm:$0xff]
        %v7805 = vld [vmem:[%s722 + $0x120] sm:$0xff]
        %v7806 = vld [vmem:[%s722 + $0x128] sm:$0xff]
        %v7807 = vld [vmem:[%s722 + $0x130] sm:$0xff]
        %v7808 = vld [vmem:[%s722 + $0x138] sm:$0xff]
        %v7809 = vld [vmem:[%s722 + $0x140] sm:$0xff]
        %v7810 = vld [vmem:[%s722 + $0x148] sm:$0xff]
        %v7811 = vld [vmem:[%s722 + $0x150] sm:$0xff]
        %v7812 = vld [vmem:[%s722 + $0x158] sm:$0xff]
        %v7813 = vld [vmem:[%s722 + $0x160] sm:$0xff]
        %v7814 = vld [vmem:[%s722 + $0x168] sm:$0xff]
        %v7815 = vld [vmem:[%s722 + $0x170] sm:$0xff]
        %v7816 = vld [vmem:[%s722 + $0x178] sm:$0xff]
        %v7817 = vld [vmem:[%s722 + $0x180] sm:$0xff]
        %v7818 = vld [vmem:[%s722 + $0x188] sm:$0xff]
        %v7819 = vld [vmem:[%s722 + $0x190] sm:$0xff]
        %v7820 = vld [vmem:[%s722 + $0x198] sm:$0xff]
        %v7821 = vld [vmem:[%s722 + $0x1a0] sm:$0xff]
        %v7822 = vld [vmem:[%s722 + $0x1a8] sm:$0xff]
        %v7823 = vld [vmem:[%s722 + $0x1b0] sm:$0xff]
        %v7824 = vld [vmem:[%s722 + $0x1b8] sm:$0xff]
        %v7825 = vld [vmem:[%s722 + $0x1c0] sm:$0xff]
        %v7826 = vld [vmem:[%s722 + $0x1c8] sm:$0xff]
        %v7827 = vld [vmem:[%s722 + $0x1d0] sm:$0xff]
        %v7828 = vld [vmem:[%s722 + $0x1d8] sm:$0xff]
        %v7829 = vld [vmem:[%s722 + $0x1e0] sm:$0xff]
        %v7830 = vld [vmem:[%s722 + $0x1e8] sm:$0xff]
        %v7831 = vld [vmem:[%s722 + $0x1f0] sm:$0xff]
        %v7832 = vld [vmem:[%s722 + $0x1f8] sm:$0xff]
        %v7833 = vld [vmem:[%s722 + $0x200] sm:$0xff]
        %v7834 = vld [vmem:[%s722 + $0x208] sm:$0xff]
        %v7835 = vld [vmem:[%s722 + $0x210] sm:$0xff]
        %v7836 = vld [vmem:[%s722 + $0x218] sm:$0xff]
        %v7837 = vld [vmem:[%s722 + $0x220] sm:$0xff]
        %v7838 = vld [vmem:[%s722 + $0x228] sm:$0xff]
        %v7839 = vld [vmem:[%s722 + $0x230] sm:$0xff]
        %v7840 = vld [vmem:[%s722 + $0x238] sm:$0xff]
        %v7841 = vld [vmem:[%s722 + $0x240] sm:$0xff]
        %v7842 = vld [vmem:[%s722 + $0x248] sm:$0xff]
        %v7843 = vld [vmem:[%s722 + $0x250] sm:$0xff]
        %v7844 = vld [vmem:[%s722 + $0x258] sm:$0xff]
        %v7845 = vld [vmem:[%s722 + $0x260] sm:$0xff]
        %v7846 = vld [vmem:[%s722 + $0x268] sm:$0xff]
        %v7847 = vld [vmem:[%s722 + $0x270] sm:$0xff]
        %v7848 = vld [vmem:[%s722 + $0x278] sm:$0xff]
        %v7849 = vld [vmem:[%s722 + $0x280] sm:$0xff]
        %v7850 = vld [vmem:[%s722 + $0x288] sm:$0xff]
        %v7851 = vld [vmem:[%s722 + $0x290] sm:$0xff]
        %v7852 = vld [vmem:[%s722 + $0x298] sm:$0xff]
        %v7853 = vld [vmem:[%s722 + $0x2a0] sm:$0xff]
        %v7854 = vld [vmem:[%s722 + $0x2a8] sm:$0xff]
        %v7855 = vld [vmem:[%s722 + $0x2b0] sm:$0xff]
        %v7856 = vld [vmem:[%s722 + $0x2b8] sm:$0xff]
        %v7857 = vld [vmem:[%s722 + $0x2c0] sm:$0xff]
        %v7858 = vld [vmem:[%s722 + $0x2c8] sm:$0xff]
        %v7859 = vld [vmem:[%s722 + $0x2d0] sm:$0xff]
        %v7860 = vld [vmem:[%s722 + $0x2d8] sm:$0xff]
        %v7861 = vld [vmem:[%s722 + $0x2e0] sm:$0xff]
        %v7862 = vld [vmem:[%s722 + $0x2e8] sm:$0xff]
        %v7863 = vld [vmem:[%s722 + $0x2f0] sm:$0xff]
        %v7864 = vld [vmem:[%s722 + $0x2f8] sm:$0xff]
        %v7865 = vld [vmem:[%s722 + $0x300] sm:$0xff]
        %v7866 = vld [vmem:[%s722 + $0x308] sm:$0xff]
        %v7867 = vld [vmem:[%s722 + $0x310] sm:$0xff]
        %v7868 = vld [vmem:[%s722 + $0x318] sm:$0xff]
        %v7869 = vld [vmem:[%s722 + $0x320] sm:$0xff]
        %v7870 = vld [vmem:[%s722 + $0x328] sm:$0xff]
        %v7871 = vld [vmem:[%s722 + $0x330] sm:$0xff]
        %v7872 = vld [vmem:[%s722 + $0x338] sm:$0xff]
        %v7873 = vld [vmem:[%s722 + $0x340] sm:$0xff]
        %v7874 = vld [vmem:[%s722 + $0x348] sm:$0xff]
        %v7875 = vld [vmem:[%s722 + $0x350] sm:$0xff]
        %v7876 = vld [vmem:[%s722 + $0x358] sm:$0xff]
        %v7877 = vld [vmem:[%s722 + $0x360] sm:$0xff]
        %v7878 = vld [vmem:[%s722 + $0x368] sm:$0xff]
        %v7879 = vld [vmem:[%s722 + $0x370] sm:$0xff]
        %v7880 = vld [vmem:[%s722 + $0x378] sm:$0xff]
        %v7881 = vld [vmem:[%s722 + $0x380] sm:$0xff]
        %v7882 = vld [vmem:[%s722 + $0x388] sm:$0xff]
        %v7883 = vld [vmem:[%s722 + $0x390] sm:$0xff]
        %v7884 = vld [vmem:[%s722 + $0x398] sm:$0xff]
        %v7885 = vld [vmem:[%s722 + $0x3a0] sm:$0xff]
        %v7886 = vld [vmem:[%s722 + $0x3a8] sm:$0xff]
        %v7887 = vld [vmem:[%s722 + $0x3b0] sm:$0xff]
        %v7888 = vld [vmem:[%s722 + $0x3b8] sm:$0xff]
        %v7889 = vld [vmem:[%s722 + $0x3c0] sm:$0xff]
        %v7890 = vld [vmem:[%s722 + $0x3c8] sm:$0xff]
        %v7891 = vld [vmem:[%s722 + $0x3d0] sm:$0xff]
        %v7892 = vld [vmem:[%s722 + $0x3d8] sm:$0xff]
        %v7893 = vld [vmem:[%s722 + $0x3e0] sm:$0xff]
        %v7894 = vld [vmem:[%s722 + $0x3e8] sm:$0xff]
        %v7895 = vld [vmem:[%s722 + $0x3f0] sm:$0xff]
        %v7896 = vld [vmem:[%s722 + $0x3f8] sm:$0xff]
        %v8025 = vunpack.c.l.b16 %v7769
        %v8026 = vunpack.c.h.b16 %v7769
        %v8027 = vunpack.c.l.b16 %v7770
        %v8028 = vunpack.c.h.b16 %v7770
        %v8029 = vunpack.c.l.b16 %v7771
        %v8030 = vunpack.c.h.b16 %v7771
        %v8031 = vunpack.c.l.b16 %v7772
        %v8032 = vunpack.c.h.b16 %v7772
        %v8033 = vunpack.c.l.b16 %v7773
        %v8034 = vunpack.c.h.b16 %v7773
        %v8035 = vunpack.c.l.b16 %v7774
        %v8036 = vunpack.c.h.b16 %v7774
        %v8037 = vunpack.c.l.b16 %v7775
        %v8038 = vunpack.c.h.b16 %v7775
        %v8039 = vunpack.c.l.b16 %v7776
        %v8040 = vunpack.c.h.b16 %v7776
        %v8041 = vunpack.c.l.b16 %v7777
        %v8042 = vunpack.c.h.b16 %v7777
        %v8043 = vunpack.c.l.b16 %v7778
        %v8044 = vunpack.c.h.b16 %v7778
        %v8045 = vunpack.c.l.b16 %v7779
        %v8046 = vunpack.c.h.b16 %v7779
        %v8047 = vunpack.c.l.b16 %v7780
        %v8048 = vunpack.c.h.b16 %v7780
        %v8049 = vunpack.c.l.b16 %v7781
        %v8050 = vunpack.c.h.b16 %v7781
        %v8051 = vunpack.c.l.b16 %v7782
        %v8052 = vunpack.c.h.b16 %v7782
        %v8053 = vunpack.c.l.b16 %v7783
        %v8054 = vunpack.c.h.b16 %v7783
        %v8055 = vunpack.c.l.b16 %v7784
        %v8056 = vunpack.c.h.b16 %v7784
        %v8057 = vunpack.c.l.b16 %v7785
        %v8058 = vunpack.c.h.b16 %v7785
        %v8059 = vunpack.c.l.b16 %v7786
        %v8060 = vunpack.c.h.b16 %v7786
        %v8061 = vunpack.c.l.b16 %v7787
        %v8062 = vunpack.c.h.b16 %v7787
        %v8063 = vunpack.c.l.b16 %v7788
        %v8064 = vunpack.c.h.b16 %v7788
        %v8065 = vunpack.c.l.b16 %v7789
        %v8066 = vunpack.c.h.b16 %v7789
        %v8067 = vunpack.c.l.b16 %v7790
        %v8068 = vunpack.c.h.b16 %v7790
        %v8069 = vunpack.c.l.b16 %v7791
        %v8070 = vunpack.c.h.b16 %v7791
        %v8071 = vunpack.c.l.b16 %v7792
        %v8072 = vunpack.c.h.b16 %v7792
        %v8073 = vunpack.c.l.b16 %v7793
        %v8074 = vunpack.c.h.b16 %v7793
        %v8075 = vunpack.c.l.b16 %v7794
        %v8076 = vunpack.c.h.b16 %v7794
        %v8077 = vunpack.c.l.b16 %v7795
        %v8078 = vunpack.c.h.b16 %v7795
        %v8079 = vunpack.c.l.b16 %v7796
        %v8080 = vunpack.c.h.b16 %v7796
        %v8081 = vunpack.c.l.b16 %v7797
        %v8082 = vunpack.c.h.b16 %v7797
        %v8083 = vunpack.c.l.b16 %v7798
        %v8084 = vunpack.c.h.b16 %v7798
        %v8085 = vunpack.c.l.b16 %v7799
        %v8086 = vunpack.c.h.b16 %v7799
        %v8087 = vunpack.c.l.b16 %v7800
        %v8088 = vunpack.c.h.b16 %v7800
        %v8089 = vunpack.c.l.b16 %v7801
        %v8090 = vunpack.c.h.b16 %v7801
        %v8091 = vunpack.c.l.b16 %v7802
        %v8092 = vunpack.c.h.b16 %v7802
        %v8093 = vunpack.c.l.b16 %v7803
        %v8094 = vunpack.c.h.b16 %v7803
        %v8095 = vunpack.c.l.b16 %v7804
        %v8096 = vunpack.c.h.b16 %v7804
        %v8097 = vunpack.c.l.b16 %v7805
        %v8098 = vunpack.c.h.b16 %v7805
        %v8099 = vunpack.c.l.b16 %v7806
        %v8100 = vunpack.c.h.b16 %v7806
        %v8101 = vunpack.c.l.b16 %v7807
        %v8102 = vunpack.c.h.b16 %v7807
        %v8103 = vunpack.c.l.b16 %v7808
        %v8104 = vunpack.c.h.b16 %v7808
        %v8105 = vunpack.c.l.b16 %v7809
        %v8106 = vunpack.c.h.b16 %v7809
        %v8107 = vunpack.c.l.b16 %v7810
        %v8108 = vunpack.c.h.b16 %v7810
        %v8109 = vunpack.c.l.b16 %v7811
        %v8110 = vunpack.c.h.b16 %v7811
        %v8111 = vunpack.c.l.b16 %v7812
        %v8112 = vunpack.c.h.b16 %v7812
        %v8113 = vunpack.c.l.b16 %v7813
        %v8114 = vunpack.c.h.b16 %v7813
        %v8115 = vunpack.c.l.b16 %v7814
        %v8116 = vunpack.c.h.b16 %v7814
        %v8117 = vunpack.c.l.b16 %v7815
        %v8118 = vunpack.c.h.b16 %v7815
        %v8119 = vunpack.c.l.b16 %v7816
        %v8120 = vunpack.c.h.b16 %v7816
        %v8121 = vunpack.c.l.b16 %v7817
        %v8122 = vunpack.c.h.b16 %v7817
        %v8123 = vunpack.c.l.b16 %v7818
        %v8124 = vunpack.c.h.b16 %v7818
        %v8125 = vunpack.c.l.b16 %v7819
        %v8126 = vunpack.c.h.b16 %v7819
        %v8127 = vunpack.c.l.b16 %v7820
        %v8128 = vunpack.c.h.b16 %v7820
        %v8129 = vunpack.c.l.b16 %v7821
        %v8130 = vunpack.c.h.b16 %v7821
        %v8131 = vunpack.c.l.b16 %v7822
        %v8132 = vunpack.c.h.b16 %v7822
        %v8133 = vunpack.c.l.b16 %v7823
        %v8134 = vunpack.c.h.b16 %v7823
        %v8135 = vunpack.c.l.b16 %v7824
        %v8136 = vunpack.c.h.b16 %v7824
        %v8137 = vunpack.c.l.b16 %v7825
        %v8138 = vunpack.c.h.b16 %v7825
        %v8139 = vunpack.c.l.b16 %v7826
        %v8140 = vunpack.c.h.b16 %v7826
        %v8141 = vunpack.c.l.b16 %v7827
        %v8142 = vunpack.c.h.b16 %v7827
        %v8143 = vunpack.c.l.b16 %v7828
        %v8144 = vunpack.c.h.b16 %v7828
        %v8145 = vunpack.c.l.b16 %v7829
        %v8146 = vunpack.c.h.b16 %v7829
        %v8147 = vunpack.c.l.b16 %v7830
        %v8148 = vunpack.c.h.b16 %v7830
        %v8149 = vunpack.c.l.b16 %v7831
        %v8150 = vunpack.c.h.b16 %v7831
        %v8151 = vunpack.c.l.b16 %v7832
        %v8152 = vunpack.c.h.b16 %v7832
        %v8153 = vunpack.c.l.b16 %v7833
        %v8154 = vunpack.c.h.b16 %v7833
        %v8155 = vunpack.c.l.b16 %v7834
        %v8156 = vunpack.c.h.b16 %v7834
        %v8157 = vunpack.c.l.b16 %v7835
        %v8158 = vunpack.c.h.b16 %v7835
        %v8159 = vunpack.c.l.b16 %v7836
        %v8160 = vunpack.c.h.b16 %v7836
        %v8161 = vunpack.c.l.b16 %v7837
        %v8162 = vunpack.c.h.b16 %v7837
        %v8163 = vunpack.c.l.b16 %v7838
        %v8164 = vunpack.c.h.b16 %v7838
        %v8165 = vunpack.c.l.b16 %v7839
        %v8166 = vunpack.c.h.b16 %v7839
        %v8167 = vunpack.c.l.b16 %v7840
        %v8168 = vunpack.c.h.b16 %v7840
        %v8169 = vunpack.c.l.b16 %v7841
        %v8170 = vunpack.c.h.b16 %v7841
        %v8171 = vunpack.c.l.b16 %v7842
        %v8172 = vunpack.c.h.b16 %v7842
        %v8173 = vunpack.c.l.b16 %v7843
        %v8174 = vunpack.c.h.b16 %v7843
        %v8175 = vunpack.c.l.b16 %v7844
        %v8176 = vunpack.c.h.b16 %v7844
        %v8177 = vunpack.c.l.b16 %v7845
        %v8178 = vunpack.c.h.b16 %v7845
        %v8179 = vunpack.c.l.b16 %v7846
        %v8180 = vunpack.c.h.b16 %v7846
        %v8181 = vunpack.c.l.b16 %v7847
        %v8182 = vunpack.c.h.b16 %v7847
        %v8183 = vunpack.c.l.b16 %v7848
        %v8184 = vunpack.c.h.b16 %v7848
        %v8185 = vunpack.c.l.b16 %v7849
        %v8186 = vunpack.c.h.b16 %v7849
        %v8187 = vunpack.c.l.b16 %v7850
        %v8188 = vunpack.c.h.b16 %v7850
        %v8189 = vunpack.c.l.b16 %v7851
        %v8190 = vunpack.c.h.b16 %v7851
        %v8191 = vunpack.c.l.b16 %v7852
        %v8192 = vunpack.c.h.b16 %v7852
        %v8193 = vunpack.c.l.b16 %v7853
        %v8194 = vunpack.c.h.b16 %v7853
        %v8195 = vunpack.c.l.b16 %v7854
        %v8196 = vunpack.c.h.b16 %v7854
        %v8197 = vunpack.c.l.b16 %v7855
        %v8198 = vunpack.c.h.b16 %v7855
        %v8199 = vunpack.c.l.b16 %v7856
        %v8200 = vunpack.c.h.b16 %v7856
        %v8201 = vunpack.c.l.b16 %v7857
        %v8202 = vunpack.c.h.b16 %v7857
        %v8203 = vunpack.c.l.b16 %v7858
        %v8204 = vunpack.c.h.b16 %v7858
        %v8205 = vunpack.c.l.b16 %v7859
        %v8206 = vunpack.c.h.b16 %v7859
        %v8207 = vunpack.c.l.b16 %v7860
        %v8208 = vunpack.c.h.b16 %v7860
        %v8209 = vunpack.c.l.b16 %v7861
        %v8210 = vunpack.c.h.b16 %v7861
        %v8211 = vunpack.c.l.b16 %v7862
        %v8212 = vunpack.c.h.b16 %v7862
        %v8213 = vunpack.c.l.b16 %v7863
        %v8214 = vunpack.c.h.b16 %v7863
        %v8215 = vunpack.c.l.b16 %v7864
        %v8216 = vunpack.c.h.b16 %v7864
        %v8217 = vunpack.c.l.b16 %v7865
        %v8218 = vunpack.c.h.b16 %v7865
        %v8219 = vunpack.c.l.b16 %v7866
        %v8220 = vunpack.c.h.b16 %v7866
        %v8221 = vunpack.c.l.b16 %v7867
        %v8222 = vunpack.c.h.b16 %v7867
        %v8223 = vunpack.c.l.b16 %v7868
        %v8224 = vunpack.c.h.b16 %v7868
        %v8225 = vunpack.c.l.b16 %v7869
        %v8226 = vunpack.c.h.b16 %v7869
        %v8227 = vunpack.c.l.b16 %v7870
        %v8228 = vunpack.c.h.b16 %v7870
        %v8229 = vunpack.c.l.b16 %v7871
        %v8230 = vunpack.c.h.b16 %v7871
        %v8231 = vunpack.c.l.b16 %v7872
        %v8232 = vunpack.c.h.b16 %v7872
        %v8233 = vunpack.c.l.b16 %v7873
        %v8234 = vunpack.c.h.b16 %v7873
        %v8235 = vunpack.c.l.b16 %v7874
        %v8236 = vunpack.c.h.b16 %v7874
        %v8237 = vunpack.c.l.b16 %v7875
        %v8238 = vunpack.c.h.b16 %v7875
        %v8239 = vunpack.c.l.b16 %v7876
        %v8240 = vunpack.c.h.b16 %v7876
        %v8241 = vunpack.c.l.b16 %v7877
        %v8242 = vunpack.c.h.b16 %v7877
        %v8243 = vunpack.c.l.b16 %v7878
        %v8244 = vunpack.c.h.b16 %v7878
        %v8245 = vunpack.c.l.b16 %v7879
        %v8246 = vunpack.c.h.b16 %v7879
        %v8247 = vunpack.c.l.b16 %v7880
        %v8248 = vunpack.c.h.b16 %v7880
        %v8249 = vunpack.c.l.b16 %v7881
        %v8250 = vunpack.c.h.b16 %v7881
        %v8251 = vunpack.c.l.b16 %v7882
        %v8252 = vunpack.c.h.b16 %v7882
        %v8253 = vunpack.c.l.b16 %v7883
        %v8254 = vunpack.c.h.b16 %v7883
        %v8255 = vunpack.c.l.b16 %v7884
        %v8256 = vunpack.c.h.b16 %v7884
        %v8257 = vunpack.c.l.b16 %v7885
        %v8258 = vunpack.c.h.b16 %v7885
        %v8259 = vunpack.c.l.b16 %v7886
        %v8260 = vunpack.c.h.b16 %v7886
        %v8261 = vunpack.c.l.b16 %v7887
        %v8262 = vunpack.c.h.b16 %v7887
        %v8263 = vunpack.c.l.b16 %v7888
        %v8264 = vunpack.c.h.b16 %v7888
        %v8265 = vunpack.c.l.b16 %v7889
        %v8266 = vunpack.c.h.b16 %v7889
        %v8267 = vunpack.c.l.b16 %v7890
        %v8268 = vunpack.c.h.b16 %v7890
        %v8269 = vunpack.c.l.b16 %v7891
        %v8270 = vunpack.c.h.b16 %v7891
        %v8271 = vunpack.c.l.b16 %v7892
        %v8272 = vunpack.c.h.b16 %v7892
        %v8273 = vunpack.c.l.b16 %v7893
        %v8274 = vunpack.c.h.b16 %v7893
        %v8275 = vunpack.c.l.b16 %v7894
        %v8276 = vunpack.c.h.b16 %v7894
        %v8277 = vunpack.c.l.b16 %v7895
        %v8278 = vunpack.c.h.b16 %v7895
        %v8279 = vunpack.c.l.b16 %v7896
        %v8280 = vunpack.c.h.b16 %v7896
        %v8281 = vpack.c.b16 %v8029, %v8025
        %v8282 = vpack.c.b16 %v8030, %v8026
        %v8283 = vpack.c.b16 %v8031, %v8027
        %v8284 = vpack.c.b16 %v8032, %v8028
        %v8285 = vpack.c.b16 %v8037, %v8033
        %v8286 = vpack.c.b16 %v8038, %v8034
        %v8287 = vpack.c.b16 %v8039, %v8035
        %v8288 = vpack.c.b16 %v8040, %v8036
        %v8289 = vpack.c.b16 %v8045, %v8041
        %v8290 = vpack.c.b16 %v8046, %v8042
        %v8291 = vpack.c.b16 %v8047, %v8043
        %v8292 = vpack.c.b16 %v8048, %v8044
        %v8293 = vpack.c.b16 %v8053, %v8049
        %v8294 = vpack.c.b16 %v8054, %v8050
        %v8295 = vpack.c.b16 %v8055, %v8051
        %v8296 = vpack.c.b16 %v8056, %v8052
        %v8297 = vpack.c.b16 %v8061, %v8057
        %v8298 = vpack.c.b16 %v8062, %v8058
        %v8299 = vpack.c.b16 %v8063, %v8059
        %v8300 = vpack.c.b16 %v8064, %v8060
        %v8301 = vpack.c.b16 %v8069, %v8065
        %v8302 = vpack.c.b16 %v8070, %v8066
        %v8303 = vpack.c.b16 %v8071, %v8067
        %v8304 = vpack.c.b16 %v8072, %v8068
        %v8305 = vpack.c.b16 %v8077, %v8073
        %v8306 = vpack.c.b16 %v8078, %v8074
        %v8307 = vpack.c.b16 %v8079, %v8075
        %v8308 = vpack.c.b16 %v8080, %v8076
        %v8309 = vpack.c.b16 %v8085, %v8081
        %v8310 = vpack.c.b16 %v8086, %v8082
        %v8311 = vpack.c.b16 %v8087, %v8083
        %v8312 = vpack.c.b16 %v8088, %v8084
        %v8313 = vpack.c.b16 %v8093, %v8089
        %v8314 = vpack.c.b16 %v8094, %v8090
        %v8315 = vpack.c.b16 %v8095, %v8091
        %v8316 = vpack.c.b16 %v8096, %v8092
        %v8317 = vpack.c.b16 %v8101, %v8097
        %v8318 = vpack.c.b16 %v8102, %v8098
        %v8319 = vpack.c.b16 %v8103, %v8099
        %v8320 = vpack.c.b16 %v8104, %v8100
        %v8321 = vpack.c.b16 %v8109, %v8105
        %v8322 = vpack.c.b16 %v8110, %v8106
        %v8323 = vpack.c.b16 %v8111, %v8107
        %v8324 = vpack.c.b16 %v8112, %v8108
        %v8325 = vpack.c.b16 %v8117, %v8113
        %v8326 = vpack.c.b16 %v8118, %v8114
        %v8327 = vpack.c.b16 %v8119, %v8115
        %v8328 = vpack.c.b16 %v8120, %v8116
        %v8329 = vpack.c.b16 %v8125, %v8121
        %v8330 = vpack.c.b16 %v8126, %v8122
        %v8331 = vpack.c.b16 %v8127, %v8123
        %v8332 = vpack.c.b16 %v8128, %v8124
        %v8333 = vpack.c.b16 %v8133, %v8129
        %v8334 = vpack.c.b16 %v8134, %v8130
        %v8335 = vpack.c.b16 %v8135, %v8131
        %v8336 = vpack.c.b16 %v8136, %v8132
        %v8337 = vpack.c.b16 %v8141, %v8137
        %v8338 = vpack.c.b16 %v8142, %v8138
        %v8339 = vpack.c.b16 %v8143, %v8139
        %v8340 = vpack.c.b16 %v8144, %v8140
        %v8341 = vpack.c.b16 %v8149, %v8145
        %v8342 = vpack.c.b16 %v8150, %v8146
        %v8343 = vpack.c.b16 %v8151, %v8147
        %v8344 = vpack.c.b16 %v8152, %v8148
        %v8345 = vpack.c.b16 %v8157, %v8153
        %v8346 = vpack.c.b16 %v8158, %v8154
        %v8347 = vpack.c.b16 %v8159, %v8155
        %v8348 = vpack.c.b16 %v8160, %v8156
        %v8349 = vpack.c.b16 %v8165, %v8161
        %v8350 = vpack.c.b16 %v8166, %v8162
        %v8351 = vpack.c.b16 %v8167, %v8163
        %v8352 = vpack.c.b16 %v8168, %v8164
        %v8353 = vpack.c.b16 %v8173, %v8169
        %v8354 = vpack.c.b16 %v8174, %v8170
        %v8355 = vpack.c.b16 %v8175, %v8171
        %v8356 = vpack.c.b16 %v8176, %v8172
        %v8357 = vpack.c.b16 %v8181, %v8177
        %v8358 = vpack.c.b16 %v8182, %v8178
        %v8359 = vpack.c.b16 %v8183, %v8179
        %v8360 = vpack.c.b16 %v8184, %v8180
        %v8361 = vpack.c.b16 %v8189, %v8185
        %v8362 = vpack.c.b16 %v8190, %v8186
        %v8363 = vpack.c.b16 %v8191, %v8187
        %v8364 = vpack.c.b16 %v8192, %v8188
        %v8365 = vpack.c.b16 %v8197, %v8193
        %v8366 = vpack.c.b16 %v8198, %v8194
        %v8367 = vpack.c.b16 %v8199, %v8195
        %v8368 = vpack.c.b16 %v8200, %v8196
        %v8369 = vpack.c.b16 %v8205, %v8201
        %v8370 = vpack.c.b16 %v8206, %v8202
        %v8371 = vpack.c.b16 %v8207, %v8203
        %v8372 = vpack.c.b16 %v8208, %v8204
        %v8373 = vpack.c.b16 %v8213, %v8209
        %v8374 = vpack.c.b16 %v8214, %v8210
        %v8375 = vpack.c.b16 %v8215, %v8211
        %v8376 = vpack.c.b16 %v8216, %v8212
        %v8377 = vpack.c.b16 %v8221, %v8217
        %v8378 = vpack.c.b16 %v8222, %v8218
        %v8379 = vpack.c.b16 %v8223, %v8219
        %v8380 = vpack.c.b16 %v8224, %v8220
        %v8381 = vpack.c.b16 %v8229, %v8225
        %v8382 = vpack.c.b16 %v8230, %v8226
        %v8383 = vpack.c.b16 %v8231, %v8227
        %v8384 = vpack.c.b16 %v8232, %v8228
        %v8385 = vpack.c.b16 %v8237, %v8233
        %v8386 = vpack.c.b16 %v8238, %v8234
        %v8387 = vpack.c.b16 %v8239, %v8235
        %v8388 = vpack.c.b16 %v8240, %v8236
        %v8389 = vpack.c.b16 %v8245, %v8241
        %v8390 = vpack.c.b16 %v8246, %v8242
        %v8391 = vpack.c.b16 %v8247, %v8243
        %v8392 = vpack.c.b16 %v8248, %v8244
        %v8393 = vpack.c.b16 %v8253, %v8249
        %v8394 = vpack.c.b16 %v8254, %v8250
        %v8395 = vpack.c.b16 %v8255, %v8251
        %v8396 = vpack.c.b16 %v8256, %v8252
        %v8397 = vpack.c.b16 %v8261, %v8257
        %v8398 = vpack.c.b16 %v8262, %v8258
        %v8399 = vpack.c.b16 %v8263, %v8259
        %v8400 = vpack.c.b16 %v8264, %v8260
        %v8401 = vpack.c.b16 %v8269, %v8265
        %v8402 = vpack.c.b16 %v8270, %v8266
        %v8403 = vpack.c.b16 %v8271, %v8267
        %v8404 = vpack.c.b16 %v8272, %v8268
        %v8405 = vpack.c.b16 %v8277, %v8273
        %v8406 = vpack.c.b16 %v8278, %v8274
        %v8407 = vpack.c.b16 %v8279, %v8275
        %v8408 = vpack.c.b16 %v8280, %v8276
        %8537 = vmatprep.subr.bf16.mxu0 %v8310
        %8538 = vmatpush1.bf16.msra.mxu0 %v8309
        %8539 = vmatprep.subr.bf16.mxu0 %v8306
        %8540 = vmatpush1.bf16.msra.mxu0 %v8305
        %8541 = vmatprep.subr.bf16.mxu0 %v8302
        %8542 = vmatpush1.bf16.msra.mxu0 %v8301
        %8543 = vmatprep.subr.bf16.mxu0 %v8298
        %8544 = vmatpush1.bf16.msra.mxu0 %v8297
        %8545 = vmatprep.subr.bf16.mxu0 %v8294
        %8546 = vmatpush1.bf16.msra.mxu0 %v8293
        %8547 = vmatprep.subr.bf16.mxu0 %v8290
        %8548 = vmatpush1.bf16.msra.mxu0 %v8289
        %8549 = vmatprep.subr.bf16.mxu0 %v8286
        %8550 = vmatpush1.bf16.msra.mxu0 %v8285
        %8551 = vmatprep.subr.bf16.mxu0 %v8282
        %8552 = vmatpush1.bf16.msra.mxu0 %v8281
        %8553 = vmatprep.subr.bf16.mxu0 %v8342
        %8554 = vmatpush2.bf16.msra.mxu0 %v8341
        %8555 = vmatprep.subr.bf16.mxu0 %v8338
        %8556 = vmatpush2.bf16.msra.mxu0 %v8337
        %8557 = vmatprep.subr.bf16.mxu0 %v8334
        %8558 = vmatpush2.bf16.msra.mxu0 %v8333
        %8559 = vmatprep.subr.bf16.mxu0 %v8330
        %8560 = vmatpush2.bf16.msra.mxu0 %v8329
        %8561 = vmatprep.subr.bf16.mxu0 %v8326
        %8562 = vmatpush2.bf16.msra.mxu0 %v8325
        %8563 = vmatprep.subr.bf16.mxu0 %v8322
        %8564 = vmatpush2.bf16.msra.mxu0 %v8321
        %8565 = vmatprep.subr.bf16.mxu0 %v8318
        %8566 = vmatpush2.bf16.msra.mxu0 %v8317
        %8567 = vmatprep.subr.bf16.mxu0 %v8314
        %8568 = vmatpush2.bf16.msra.mxu0 %v8313
        %8569 = vmatprep.mubr.bf16.mxu0 %v7760
        %8570 = vmatmul.mubr.bf16.gmra.mxu0 %v7759
        %v8571 = vpop.f32.mrf.mxu0
        %v8572 = vadd.f32 0.0, %v8571
        %v8573 = vpop.f32.mrf.mxu0
        %v8574 = vadd.f32 0.0, %v8573
        %v8575 = vpop.f32.mrf.mxu0
        %v8576 = vpop.f32.mrf.mxu0
        %8577 = vdwg.mxu0
        %8578 = vmatprep.subr.bf16.mxu0 %v8374
        %8579 = vmatpush1.bf16.msra.mxu0 %v8373
        %8580 = vmatprep.subr.bf16.mxu0 %v8370
        %8581 = vmatpush1.bf16.msra.mxu0 %v8369
        %8582 = vmatprep.subr.bf16.mxu0 %v8366
        %8583 = vmatpush1.bf16.msra.mxu0 %v8365
        %8584 = vmatprep.subr.bf16.mxu0 %v8362
        %8585 = vmatpush1.bf16.msra.mxu0 %v8361
        %8586 = vmatprep.subr.bf16.mxu0 %v8358
        %8587 = vmatpush1.bf16.msra.mxu0 %v8357
        %8588 = vmatprep.subr.bf16.mxu0 %v8354
        %8589 = vmatpush1.bf16.msra.mxu0 %v8353
        %8590 = vmatprep.subr.bf16.mxu0 %v8350
        %8591 = vmatpush1.bf16.msra.mxu0 %v8349
        %8592 = vmatprep.subr.bf16.mxu0 %v8346
        %8593 = vmatpush1.bf16.msra.mxu0 %v8345
        %8594 = vmatprep.subr.bf16.mxu0 %v8406
        %8595 = vmatpush2.bf16.msra.mxu0 %v8405
        %8596 = vmatprep.subr.bf16.mxu0 %v8402
        %8597 = vmatpush2.bf16.msra.mxu0 %v8401
        %8598 = vmatprep.subr.bf16.mxu0 %v8398
        %8599 = vmatpush2.bf16.msra.mxu0 %v8397
        %8600 = vmatprep.subr.bf16.mxu0 %v8394
        %8601 = vmatpush2.bf16.msra.mxu0 %v8393
        %8602 = vmatprep.subr.bf16.mxu0 %v8390
        %8603 = vmatpush2.bf16.msra.mxu0 %v8389
        %8604 = vmatprep.subr.bf16.mxu0 %v8386
        %8605 = vmatpush2.bf16.msra.mxu0 %v8385
        %8606 = vmatprep.subr.bf16.mxu0 %v8382
        %8607 = vmatpush2.bf16.msra.mxu0 %v8381
        %8608 = vmatprep.subr.bf16.mxu0 %v8378
        %8609 = vmatpush2.bf16.msra.mxu0 %v8377
        %8610 = vmatprep.mubr.bf16.mxu0 %v7762
        %8611 = vmatmul.mubr.bf16.gmra.mxu0 %v7761
        %v8612 = vpop.f32.mrf.mxu0
        %v8613 = vadd.f32 %v8572, %v8612
        %v8614 = vpop.f32.mrf.mxu0
        %v8615 = vadd.f32 %v8574, %v8614
        %v8616 = vpop.f32.mrf.mxu0
        %v8617 = vpop.f32.mrf.mxu0
        %8618 = vdwg.mxu0
        %8619 = vmatprep.subr.bf16.mxu0 %v8312
        %8620 = vmatpush1.bf16.msra.mxu0 %v8311
        %8621 = vmatprep.subr.bf16.mxu0 %v8308
        %8622 = vmatpush1.bf16.msra.mxu0 %v8307
        %8623 = vmatprep.subr.bf16.mxu0 %v8304
        %8624 = vmatpush1.bf16.msra.mxu0 %v8303
        %8625 = vmatprep.subr.bf16.mxu0 %v8300
        %8626 = vmatpush1.bf16.msra.mxu0 %v8299
        %8627 = vmatprep.subr.bf16.mxu0 %v8296
        %8628 = vmatpush1.bf16.msra.mxu0 %v8295
        %8629 = vmatprep.subr.bf16.mxu0 %v8292
        %8630 = vmatpush1.bf16.msra.mxu0 %v8291
        %8631 = vmatprep.subr.bf16.mxu0 %v8288
        %8632 = vmatpush1.bf16.msra.mxu0 %v8287
        %8633 = vmatprep.subr.bf16.mxu0 %v8284
        %8634 = vmatpush1.bf16.msra.mxu0 %v8283
        %8635 = vmatprep.subr.bf16.mxu0 %v8344
        %8636 = vmatpush2.bf16.msra.mxu0 %v8343
        %8637 = vmatprep.subr.bf16.mxu0 %v8340
        %8638 = vmatpush2.bf16.msra.mxu0 %v8339
        %8639 = vmatprep.subr.bf16.mxu0 %v8336
        %8640 = vmatpush2.bf16.msra.mxu0 %v8335
        %8641 = vmatprep.subr.bf16.mxu0 %v8332
        %8642 = vmatpush2.bf16.msra.mxu0 %v8331
        %8643 = vmatprep.subr.bf16.mxu0 %v8328
        %8644 = vmatpush2.bf16.msra.mxu0 %v8327
        %8645 = vmatprep.subr.bf16.mxu0 %v8324
        %8646 = vmatpush2.bf16.msra.mxu0 %v8323
        %8647 = vmatprep.subr.bf16.mxu0 %v8320
        %8648 = vmatpush2.bf16.msra.mxu0 %v8319
        %8649 = vmatprep.subr.bf16.mxu0 %v8316
        %8650 = vmatpush2.bf16.msra.mxu0 %v8315
        %8651 = vmatprep.mubr.bf16.mxu0 %v7760
        %8652 = vmatmul.mubr.bf16.gmra.mxu0 %v7759
        %v8653 = vpop.f32.mrf.mxu0
        %v8654 = vadd.f32 0.0, %v8653
        %v8655 = vpop.f32.mrf.mxu0
        %v8656 = vadd.f32 0.0, %v8655
        %v8657 = vpop.f32.mrf.mxu0
        %v8658 = vpop.f32.mrf.mxu0
        %8659 = vdwg.mxu0
        %8660 = vmatprep.subr.bf16.mxu0 %v8376
        %8661 = vmatpush1.bf16.msra.mxu0 %v8375
        %8662 = vmatprep.subr.bf16.mxu0 %v8372
        %8663 = vmatpush1.bf16.msra.mxu0 %v8371
        %8664 = vmatprep.subr.bf16.mxu0 %v8368
        %8665 = vmatpush1.bf16.msra.mxu0 %v8367
        %8666 = vmatprep.subr.bf16.mxu0 %v8364
        %8667 = vmatpush1.bf16.msra.mxu0 %v8363
        %8668 = vmatprep.subr.bf16.mxu0 %v8360
        %8669 = vmatpush1.bf16.msra.mxu0 %v8359
        %8670 = vmatprep.subr.bf16.mxu0 %v8356
        %8671 = vmatpush1.bf16.msra.mxu0 %v8355
        %8672 = vmatprep.subr.bf16.mxu0 %v8352
        %8673 = vmatpush1.bf16.msra.mxu0 %v8351
        %8674 = vmatprep.subr.bf16.mxu0 %v8348
        %8675 = vmatpush1.bf16.msra.mxu0 %v8347
        %8676 = vmatprep.subr.bf16.mxu0 %v8408
        %8677 = vmatpush2.bf16.msra.mxu0 %v8407
        %8678 = vmatprep.subr.bf16.mxu0 %v8404
        %8679 = vmatpush2.bf16.msra.mxu0 %v8403
        %8680 = vmatprep.subr.bf16.mxu0 %v8400
        %8681 = vmatpush2.bf16.msra.mxu0 %v8399
        %8682 = vmatprep.subr.bf16.mxu0 %v8396
        %8683 = vmatpush2.bf16.msra.mxu0 %v8395
        %8684 = vmatprep.subr.bf16.mxu0 %v8392
        %8685 = vmatpush2.bf16.msra.mxu0 %v8391
        %8686 = vmatprep.subr.bf16.mxu0 %v8388
        %8687 = vmatpush2.bf16.msra.mxu0 %v8387
        %8688 = vmatprep.subr.bf16.mxu0 %v8384
        %8689 = vmatpush2.bf16.msra.mxu0 %v8383
        %8690 = vmatprep.subr.bf16.mxu0 %v8380
        %8691 = vmatpush2.bf16.msra.mxu0 %v8379
        %8692 = vmatprep.mubr.bf16.mxu0 %v7762
        %8693 = vmatmul.mubr.bf16.gmra.mxu0 %v7761
        %v8694 = vpop.f32.mrf.mxu0
        %v8695 = vadd.f32 %v8654, %v8694
        %v8696 = vpop.f32.mrf.mxu0
        %v8697 = vadd.f32 %v8656, %v8696
        %v8698 = vpop.f32.mrf.mxu0
        %v8699 = vpop.f32.mrf.mxu0
        %8700 = vdwg.mxu0
        %v8705 = vcombine.low %v8613, %v8615
        %v8706 = vcombine.low %v8695, %v8697
        %v8708 = vunpack.c.l.s4 1983009808
        %v8709 = vunpack.c.0.s8 %v8708
        %v8710 = vlaneseq
        %v8711 = vshrl.u32 %v8710, 7
        %v8712 = vsub.s32 %v8709, %v8711
        %v8713 = vrot.slane %v8705, %v8712
        %v8715 = vunpack.c.l.s4 1983009808
        %v8716 = vunpack.c.0.s8 %v8715
        %v8717 = vlaneseq
        %v8718 = vshrl.u32 %v8717, 7
        %v8719 = vsub.s32 %v8716, %v8718
        %v8720 = vrot.slane %v8706, %v8719
        %v8721 = vcombine.low %v8713, %v8720
        %v8723 = vadd.f32 %v7768, %v8721
        %8724 = vst [vmem:[#allocation2] sm:$0xff] %v8723
        %p8725 = scmp.eq.s32.totalorder %s40, 2
        // Predicated region
        $region129: #{multimodal_forward.5} parent=87 // pred_check
          %p8726 = pneg %p8725
        $region130: #{multimodal_forward.5} parent=87 // pred_check_branch
          %8728 = sbr.rel (%p8726) target = $region132
        $region131: #{multimodal_forward.5} parent=87 // pred_region
          %v8729 = vld [vmem:[#allocation2] sm:$0xff]
          %v8730 = vld [vmem:[%s10] sm:$0xf]
          %v8732 = vlaneseq
          %v8733 = vshrl.u32 %v8732, 7
          %v8734 = vsub.s32 0, %v8733
          %v8735 = vrot.slane %v8730, %v8734
          %v8736 = vlaneseq
          %v8737 = vshrl.u32 %v8736, 7
          %v8738 = vsub.s32 1, %v8737
          %v8739 = vrot.slane %v8730, %v8738
          %v8740 = vlaneseq
          %v8741 = vshrl.u32 %v8740, 7
          %v8742 = vsub.s32 2, %v8741
          %v8743 = vrot.slane %v8730, %v8742
          %v8744 = vlaneseq
          %v8745 = vshrl.u32 %v8744, 7
          %v8746 = vsub.s32 3, %v8745
          %v8747 = vrot.slane %v8730, %v8746
          %v8748 = vcombine.low %v8735, %v8739
          %v8749 = vcombine.low %v8743, %v8747
          %v8751 = vunpack.c.l.s4 1983009808
          %v8752 = vunpack.c.0.s8 %v8751
          %v8753 = vlaneseq
          %v8754 = vshrl.u32 %v8753, 7
          %v8755 = vsub.s32 %v8752, %v8754
          %v8756 = vrot.slane %v8748, %v8755
          %v8758 = vunpack.c.l.s4 1983009808
          %v8759 = vunpack.c.0.s8 %v8758
          %v8760 = vlaneseq
          %v8761 = vshrl.u32 %v8760, 7
          %v8762 = vsub.s32 %v8759, %v8761
          %v8763 = vrot.slane %v8749, %v8762
          %v8764 = vcombine.low %v8756, %v8763
          %v8766 = vadd.f32 %v8729, %v8764
          %v8767 = vmax.f32 %v8766, 0.0
          %v8769 = vcombine.high %v8767, %v8767
          %v8771 = vunpack.c.l.s4 1983009808
          %v8772 = vunpack.c.0.s8 %v8771
          %v8773 = vlaneseq
          %v8774 = vshrl.u32 %v8773, 7
          %v8775 = vsub.s32 %v8772, %v8774
          %v8776 = vrot.slane %v8767, %v8775
          %v8778 = vunpack.c.l.s4 1983009808
          %v8779 = vunpack.c.0.s8 %v8778
          %v8780 = vlaneseq
          %v8781 = vshrl.u32 %v8780, 7
          %v8782 = vsub.s32 %v8779, %v8781
          %v8783 = vrot.slane %v8769, %v8782
          %v8784 = vcombine.high %v8776, %v8776
          %v8785 = vcombine.high %v8783, %v8783
          %v8790 = vpack.c.bf16 %v8776, %v8776
          %v8791 = vpack.c.bf16 %v8784, %v8784
          %v8792 = vpack.c.bf16 %v8783, %v8783
          %v8793 = vpack.c.bf16 %v8785, %v8785
          %v8794 = vld [vmem:[#allocation12] sm:$0xff]
          %v8795 = vld [vmem:[#allocation12 + $0x8] sm:$0xff]
          %v8796 = vld [vmem:[#allocation12 + $0x10] sm:$0xff]
          %v8797 = vld [vmem:[#allocation12 + $0x18] sm:$0xff]
          %v8798 = vld [vmem:[#allocation12 + $0x20] sm:$0xff]
          %v8799 = vld [vmem:[#allocation12 + $0x28] sm:$0xff]
          %v8800 = vld [vmem:[#allocation12 + $0x30] sm:$0xff]
          %v8801 = vld [vmem:[#allocation12 + $0x38] sm:$0xff]
          %v8802 = vld [vmem:[#allocation12 + $0x40] sm:$0xff]
          %v8803 = vld [vmem:[#allocation12 + $0x48] sm:$0xff]
          %v8804 = vld [vmem:[#allocation12 + $0x50] sm:$0xff]
          %v8805 = vld [vmem:[#allocation12 + $0x58] sm:$0xff]
          %v8806 = vld [vmem:[#allocation12 + $0x60] sm:$0xff]
          %v8807 = vld [vmem:[#allocation12 + $0x68] sm:$0xff]
          %v8808 = vld [vmem:[#allocation12 + $0x70] sm:$0xff]
          %v8809 = vld [vmem:[#allocation12 + $0x78] sm:$0xff]
          %v8810 = vld [vmem:[#allocation12 + $0x80] sm:$0xff]
          %v8811 = vld [vmem:[#allocation12 + $0x88] sm:$0xff]
          %v8812 = vld [vmem:[#allocation12 + $0x90] sm:$0xff]
          %v8813 = vld [vmem:[#allocation12 + $0x98] sm:$0xff]
          %v8814 = vld [vmem:[#allocation12 + $0xa0] sm:$0xff]
          %v8815 = vld [vmem:[#allocation12 + $0xa8] sm:$0xff]
          %v8816 = vld [vmem:[#allocation12 + $0xb0] sm:$0xff]
          %v8817 = vld [vmem:[#allocation12 + $0xb8] sm:$0xff]
          %v8818 = vld [vmem:[#allocation12 + $0xc0] sm:$0xff]
          %v8819 = vld [vmem:[#allocation12 + $0xc8] sm:$0xff]
          %v8820 = vld [vmem:[#allocation12 + $0xd0] sm:$0xff]
          %v8821 = vld [vmem:[#allocation12 + $0xd8] sm:$0xff]
          %v8822 = vld [vmem:[#allocation12 + $0xe0] sm:$0xff]
          %v8823 = vld [vmem:[#allocation12 + $0xe8] sm:$0xff]
          %v8824 = vld [vmem:[#allocation12 + $0xf0] sm:$0xff]
          %v8825 = vld [vmem:[#allocation12 + $0xf8] sm:$0xff]
          %v8826 = vld [vmem:[#allocation12 + $0x100] sm:$0xff]
          %v8827 = vld [vmem:[#allocation12 + $0x108] sm:$0xff]
          %v8828 = vld [vmem:[#allocation12 + $0x110] sm:$0xff]
          %v8829 = vld [vmem:[#allocation12 + $0x118] sm:$0xff]
          %v8830 = vld [vmem:[#allocation12 + $0x120] sm:$0xff]
          %v8831 = vld [vmem:[#allocation12 + $0x128] sm:$0xff]
          %v8832 = vld [vmem:[#allocation12 + $0x130] sm:$0xff]
          %v8833 = vld [vmem:[#allocation12 + $0x138] sm:$0xff]
          %v8834 = vld [vmem:[#allocation12 + $0x140] sm:$0xff]
          %v8835 = vld [vmem:[#allocation12 + $0x148] sm:$0xff]
          %v8836 = vld [vmem:[#allocation12 + $0x150] sm:$0xff]
          %v8837 = vld [vmem:[#allocation12 + $0x158] sm:$0xff]
          %v8838 = vld [vmem:[#allocation12 + $0x160] sm:$0xff]
          %v8839 = vld [vmem:[#allocation12 + $0x168] sm:$0xff]
          %v8840 = vld [vmem:[#allocation12 + $0x170] sm:$0xff]
          %v8841 = vld [vmem:[#allocation12 + $0x178] sm:$0xff]
          %v8842 = vld [vmem:[#allocation12 + $0x180] sm:$0xff]
          %v8843 = vld [vmem:[#allocation12 + $0x188] sm:$0xff]
          %v8844 = vld [vmem:[#allocation12 + $0x190] sm:$0xff]
          %v8845 = vld [vmem:[#allocation12 + $0x198] sm:$0xff]
          %v8846 = vld [vmem:[#allocation12 + $0x1a0] sm:$0xff]
          %v8847 = vld [vmem:[#allocation12 + $0x1a8] sm:$0xff]
          %v8848 = vld [vmem:[#allocation12 + $0x1b0] sm:$0xff]
          %v8849 = vld [vmem:[#allocation12 + $0x1b8] sm:$0xff]
          %v8850 = vld [vmem:[#allocation12 + $0x1c0] sm:$0xff]
          %v8851 = vld [vmem:[#allocation12 + $0x1c8] sm:$0xff]
          %v8852 = vld [vmem:[#allocation12 + $0x1d0] sm:$0xff]
          %v8853 = vld [vmem:[#allocation12 + $0x1d8] sm:$0xff]
          %v8854 = vld [vmem:[#allocation12 + $0x1e0] sm:$0xff]
          %v8855 = vld [vmem:[#allocation12 + $0x1e8] sm:$0xff]
          %v8856 = vld [vmem:[#allocation12 + $0x1f0] sm:$0xff]
          %v8857 = vld [vmem:[#allocation12 + $0x1f8] sm:$0xff]
          %v8858 = vld [vmem:[#allocation14] sm:$0x3]
          %v8860 = vlaneseq
          %v8861 = vshrl.u32 %v8860, 7
          %v8862 = vsub.s32 0, %v8861
          %v8863 = vrot.slane %v8858, %v8862
          %v8864 = vlaneseq
          %v8865 = vshrl.u32 %v8864, 7
          %v8866 = vsub.s32 1, %v8865
          %v8867 = vrot.slane %v8858, %v8866
          %v8934 = vunpack.c.l.b16 %v8794
          %v8935 = vunpack.c.h.b16 %v8794
          %v8936 = vunpack.c.l.b16 %v8795
          %v8937 = vunpack.c.h.b16 %v8795
          %v8938 = vunpack.c.l.b16 %v8796
          %v8939 = vunpack.c.h.b16 %v8796
          %v8940 = vunpack.c.l.b16 %v8797
          %v8941 = vunpack.c.h.b16 %v8797
          %v8942 = vunpack.c.l.b16 %v8798
          %v8943 = vunpack.c.h.b16 %v8798
          %v8944 = vunpack.c.l.b16 %v8799
          %v8945 = vunpack.c.h.b16 %v8799
          %v8946 = vunpack.c.l.b16 %v8800
          %v8947 = vunpack.c.h.b16 %v8800
          %v8948 = vunpack.c.l.b16 %v8801
          %v8949 = vunpack.c.h.b16 %v8801
          %v8950 = vunpack.c.l.b16 %v8802
          %v8951 = vunpack.c.h.b16 %v8802
          %v8952 = vunpack.c.l.b16 %v8803
          %v8953 = vunpack.c.h.b16 %v8803
          %v8954 = vunpack.c.l.b16 %v8804
          %v8955 = vunpack.c.h.b16 %v8804
          %v8956 = vunpack.c.l.b16 %v8805
          %v8957 = vunpack.c.h.b16 %v8805
          %v8958 = vunpack.c.l.b16 %v8806
          %v8959 = vunpack.c.h.b16 %v8806
          %v8960 = vunpack.c.l.b16 %v8807
          %v8961 = vunpack.c.h.b16 %v8807
          %v8962 = vunpack.c.l.b16 %v8808
          %v8963 = vunpack.c.h.b16 %v8808
          %v8964 = vunpack.c.l.b16 %v8809
          %v8965 = vunpack.c.h.b16 %v8809
          %v8966 = vunpack.c.l.b16 %v8810
          %v8967 = vunpack.c.h.b16 %v8810
          %v8968 = vunpack.c.l.b16 %v8811
          %v8969 = vunpack.c.h.b16 %v8811
          %v8970 = vunpack.c.l.b16 %v8812
          %v8971 = vunpack.c.h.b16 %v8812
          %v8972 = vunpack.c.l.b16 %v8813
          %v8973 = vunpack.c.h.b16 %v8813
          %v8974 = vunpack.c.l.b16 %v8814
          %v8975 = vunpack.c.h.b16 %v8814
          %v8976 = vunpack.c.l.b16 %v8815
          %v8977 = vunpack.c.h.b16 %v8815
          %v8978 = vunpack.c.l.b16 %v8816
          %v8979 = vunpack.c.h.b16 %v8816
          %v8980 = vunpack.c.l.b16 %v8817
          %v8981 = vunpack.c.h.b16 %v8817
          %v8982 = vunpack.c.l.b16 %v8818
          %v8983 = vunpack.c.h.b16 %v8818
          %v8984 = vunpack.c.l.b16 %v8819
          %v8985 = vunpack.c.h.b16 %v8819
          %v8986 = vunpack.c.l.b16 %v8820
          %v8987 = vunpack.c.h.b16 %v8820
          %v8988 = vunpack.c.l.b16 %v8821
          %v8989 = vunpack.c.h.b16 %v8821
          %v8990 = vunpack.c.l.b16 %v8822
          %v8991 = vunpack.c.h.b16 %v8822
          %v8992 = vunpack.c.l.b16 %v8823
          %v8993 = vunpack.c.h.b16 %v8823
          %v8994 = vunpack.c.l.b16 %v8824
          %v8995 = vunpack.c.h.b16 %v8824
          %v8996 = vunpack.c.l.b16 %v8825
          %v8997 = vunpack.c.h.b16 %v8825
          %v8998 = vunpack.c.l.b16 %v8826
          %v8999 = vunpack.c.h.b16 %v8826
          %v9000 = vunpack.c.l.b16 %v8827
          %v9001 = vunpack.c.h.b16 %v8827
          %v9002 = vunpack.c.l.b16 %v8828
          %v9003 = vunpack.c.h.b16 %v8828
          %v9004 = vunpack.c.l.b16 %v8829
          %v9005 = vunpack.c.h.b16 %v8829
          %v9006 = vunpack.c.l.b16 %v8830
          %v9007 = vunpack.c.h.b16 %v8830
          %v9008 = vunpack.c.l.b16 %v8831
          %v9009 = vunpack.c.h.b16 %v8831
          %v9010 = vunpack.c.l.b16 %v8832
          %v9011 = vunpack.c.h.b16 %v8832
          %v9012 = vunpack.c.l.b16 %v8833
          %v9013 = vunpack.c.h.b16 %v8833
          %v9014 = vunpack.c.l.b16 %v8834
          %v9015 = vunpack.c.h.b16 %v8834
          %v9016 = vunpack.c.l.b16 %v8835
          %v9017 = vunpack.c.h.b16 %v8835
          %v9018 = vunpack.c.l.b16 %v8836
          %v9019 = vunpack.c.h.b16 %v8836
          %v9020 = vunpack.c.l.b16 %v8837
          %v9021 = vunpack.c.h.b16 %v8837
          %v9022 = vunpack.c.l.b16 %v8838
          %v9023 = vunpack.c.h.b16 %v8838
          %v9024 = vunpack.c.l.b16 %v8839
          %v9025 = vunpack.c.h.b16 %v8839
          %v9026 = vunpack.c.l.b16 %v8840
          %v9027 = vunpack.c.h.b16 %v8840
          %v9028 = vunpack.c.l.b16 %v8841
          %v9029 = vunpack.c.h.b16 %v8841
          %v9030 = vunpack.c.l.b16 %v8842
          %v9031 = vunpack.c.h.b16 %v8842
          %v9032 = vunpack.c.l.b16 %v8843
          %v9033 = vunpack.c.h.b16 %v8843
          %v9034 = vunpack.c.l.b16 %v8844
          %v9035 = vunpack.c.h.b16 %v8844
          %v9036 = vunpack.c.l.b16 %v8845
          %v9037 = vunpack.c.h.b16 %v8845
          %v9038 = vunpack.c.l.b16 %v8846
          %v9039 = vunpack.c.h.b16 %v8846
          %v9040 = vunpack.c.l.b16 %v8847
          %v9041 = vunpack.c.h.b16 %v8847
          %v9042 = vunpack.c.l.b16 %v8848
          %v9043 = vunpack.c.h.b16 %v8848
          %v9044 = vunpack.c.l.b16 %v8849
          %v9045 = vunpack.c.h.b16 %v8849
          %v9046 = vunpack.c.l.b16 %v8850
          %v9047 = vunpack.c.h.b16 %v8850
          %v9048 = vunpack.c.l.b16 %v8851
          %v9049 = vunpack.c.h.b16 %v8851
          %v9050 = vunpack.c.l.b16 %v8852
          %v9051 = vunpack.c.h.b16 %v8852
          %v9052 = vunpack.c.l.b16 %v8853
          %v9053 = vunpack.c.h.b16 %v8853
          %v9054 = vunpack.c.l.b16 %v8854
          %v9055 = vunpack.c.h.b16 %v8854
          %v9056 = vunpack.c.l.b16 %v8855
          %v9057 = vunpack.c.h.b16 %v8855
          %v9058 = vunpack.c.l.b16 %v8856
          %v9059 = vunpack.c.h.b16 %v8856
          %v9060 = vunpack.c.l.b16 %v8857
          %v9061 = vunpack.c.h.b16 %v8857
          %v9062 = vpack.c.b16 %v8936, %v8934
          %v9063 = vpack.c.b16 %v8937, %v8935
          %v9064 = vpack.c.b16 %v8940, %v8938
          %v9065 = vpack.c.b16 %v8941, %v8939
          %v9066 = vpack.c.b16 %v8944, %v8942
          %v9067 = vpack.c.b16 %v8945, %v8943
          %v9068 = vpack.c.b16 %v8948, %v8946
          %v9069 = vpack.c.b16 %v8949, %v8947
          %v9070 = vpack.c.b16 %v8952, %v8950
          %v9071 = vpack.c.b16 %v8953, %v8951
          %v9072 = vpack.c.b16 %v8956, %v8954
          %v9073 = vpack.c.b16 %v8957, %v8955
          %v9074 = vpack.c.b16 %v8960, %v8958
          %v9075 = vpack.c.b16 %v8961, %v8959
          %v9076 = vpack.c.b16 %v8964, %v8962
          %v9077 = vpack.c.b16 %v8965, %v8963
          %v9078 = vpack.c.b16 %v8968, %v8966
          %v9079 = vpack.c.b16 %v8969, %v8967
          %v9080 = vpack.c.b16 %v8972, %v8970
          %v9081 = vpack.c.b16 %v8973, %v8971
          %v9082 = vpack.c.b16 %v8976, %v8974
          %v9083 = vpack.c.b16 %v8977, %v8975
          %v9084 = vpack.c.b16 %v8980, %v8978
          %v9085 = vpack.c.b16 %v8981, %v8979
          %v9086 = vpack.c.b16 %v8984, %v8982
          %v9087 = vpack.c.b16 %v8985, %v8983
          %v9088 = vpack.c.b16 %v8988, %v8986
          %v9089 = vpack.c.b16 %v8989, %v8987
          %v9090 = vpack.c.b16 %v8992, %v8990
          %v9091 = vpack.c.b16 %v8993, %v8991
          %v9092 = vpack.c.b16 %v8996, %v8994
          %v9093 = vpack.c.b16 %v8997, %v8995
          %v9094 = vpack.c.b16 %v9000, %v8998
          %v9095 = vpack.c.b16 %v9001, %v8999
          %v9096 = vpack.c.b16 %v9004, %v9002
          %v9097 = vpack.c.b16 %v9005, %v9003
          %v9098 = vpack.c.b16 %v9008, %v9006
          %v9099 = vpack.c.b16 %v9009, %v9007
          %v9100 = vpack.c.b16 %v9012, %v9010
          %v9101 = vpack.c.b16 %v9013, %v9011
          %v9102 = vpack.c.b16 %v9016, %v9014
          %v9103 = vpack.c.b16 %v9017, %v9015
          %v9104 = vpack.c.b16 %v9020, %v9018
          %v9105 = vpack.c.b16 %v9021, %v9019
          %v9106 = vpack.c.b16 %v9024, %v9022
          %v9107 = vpack.c.b16 %v9025, %v9023
          %v9108 = vpack.c.b16 %v9028, %v9026
          %v9109 = vpack.c.b16 %v9029, %v9027
          %v9110 = vpack.c.b16 %v9032, %v9030
          %v9111 = vpack.c.b16 %v9033, %v9031
          %v9112 = vpack.c.b16 %v9036, %v9034
          %v9113 = vpack.c.b16 %v9037, %v9035
          %v9114 = vpack.c.b16 %v9040, %v9038
          %v9115 = vpack.c.b16 %v9041, %v9039
          %v9116 = vpack.c.b16 %v9044, %v9042
          %v9117 = vpack.c.b16 %v9045, %v9043
          %v9118 = vpack.c.b16 %v9048, %v9046
          %v9119 = vpack.c.b16 %v9049, %v9047
          %v9120 = vpack.c.b16 %v9052, %v9050
          %v9121 = vpack.c.b16 %v9053, %v9051
          %v9122 = vpack.c.b16 %v9056, %v9054
          %v9123 = vpack.c.b16 %v9057, %v9055
          %v9124 = vpack.c.b16 %v9060, %v9058
          %v9125 = vpack.c.b16 %v9061, %v9059
          %9190 = vmatprep.subr.bf16.mxu0 %v9077
          %9191 = vmatpush1.bf16.msra.mxu0 %v9076
          %9192 = vmatprep.subr.bf16.mxu0 %v9075
          %9193 = vmatpush1.bf16.msra.mxu0 %v9074
          %9194 = vmatprep.subr.bf16.mxu0 %v9073
          %9195 = vmatpush1.bf16.msra.mxu0 %v9072
          %9196 = vmatprep.subr.bf16.mxu0 %v9071
          %9197 = vmatpush1.bf16.msra.mxu0 %v9070
          %9198 = vmatprep.subr.bf16.mxu0 %v9069
          %9199 = vmatpush1.bf16.msra.mxu0 %v9068
          %9200 = vmatprep.subr.bf16.mxu0 %v9067
          %9201 = vmatpush1.bf16.msra.mxu0 %v9066
          %9202 = vmatprep.subr.bf16.mxu0 %v9065
          %9203 = vmatpush1.bf16.msra.mxu0 %v9064
          %9204 = vmatprep.subr.bf16.mxu0 %v9063
          %9205 = vmatpush1.bf16.msra.mxu0 %v9062
          %9206 = vmatprep.subr.bf16.mxu0 %v9093
          %9207 = vmatpush2.bf16.msra.mxu0 %v9092
          %9208 = vmatprep.subr.bf16.mxu0 %v9091
          %9209 = vmatpush2.bf16.msra.mxu0 %v9090
          %9210 = vmatprep.subr.bf16.mxu0 %v9089
          %9211 = vmatpush2.bf16.msra.mxu0 %v9088
          %9212 = vmatprep.subr.bf16.mxu0 %v9087
          %9213 = vmatpush2.bf16.msra.mxu0 %v9086
          %9214 = vmatprep.subr.bf16.mxu0 %v9085
          %9215 = vmatpush2.bf16.msra.mxu0 %v9084
          %9216 = vmatprep.subr.bf16.mxu0 %v9083
          %9217 = vmatpush2.bf16.msra.mxu0 %v9082
          %9218 = vmatprep.subr.bf16.mxu0 %v9081
          %9219 = vmatpush2.bf16.msra.mxu0 %v9080
          %9220 = vmatprep.subr.bf16.mxu0 %v9079
          %9221 = vmatpush2.bf16.msra.mxu0 %v9078
          %9222 = vmatprep.mubr.bf16.mxu0 %v8791
          %9223 = vmatmul.mubr.bf16.gmra.mxu0 %v8790
          %v9224 = vpop.f32.mrf.mxu0
          %v9225 = vadd.f32 %v8863, %v9224
          %v9226 = vpop.f32.mrf.mxu0
          %v9227 = vadd.f32 %v8867, %v9226
          %v9228 = vpop.f32.mrf.mxu0
          %v9229 = vpop.f32.mrf.mxu0
          %9230 = vdwg.mxu0
          %9231 = vmatprep.subr.bf16.mxu0 %v9109
          %9232 = vmatpush1.bf16.msra.mxu0 %v9108
          %9233 = vmatprep.subr.bf16.mxu0 %v9107
          %9234 = vmatpush1.bf16.msra.mxu0 %v9106
          %9235 = vmatprep.subr.bf16.mxu0 %v9105
          %9236 = vmatpush1.bf16.msra.mxu0 %v9104
          %9237 = vmatprep.subr.bf16.mxu0 %v9103
          %9238 = vmatpush1.bf16.msra.mxu0 %v9102
          %9239 = vmatprep.subr.bf16.mxu0 %v9101
          %9240 = vmatpush1.bf16.msra.mxu0 %v9100
          %9241 = vmatprep.subr.bf16.mxu0 %v9099
          %9242 = vmatpush1.bf16.msra.mxu0 %v9098
          %9243 = vmatprep.subr.bf16.mxu0 %v9097
          %9244 = vmatpush1.bf16.msra.mxu0 %v9096
          %9245 = vmatprep.subr.bf16.mxu0 %v9095
          %9246 = vmatpush1.bf16.msra.mxu0 %v9094
          %9247 = vmatprep.subr.bf16.mxu0 %v9125
          %9248 = vmatpush2.bf16.msra.mxu0 %v9124
          %9249 = vmatprep.subr.bf16.mxu0 %v9123
          %9250 = vmatpush2.bf16.msra.mxu0 %v9122
          %9251 = vmatprep.subr.bf16.mxu0 %v9121
          %9252 = vmatpush2.bf16.msra.mxu0 %v9120
          %9253 = vmatprep.subr.bf16.mxu0 %v9119
          %9254 = vmatpush2.bf16.msra.mxu0 %v9118
          %9255 = vmatprep.subr.bf16.mxu0 %v9117
          %9256 = vmatpush2.bf16.msra.mxu0 %v9116
          %9257 = vmatprep.subr.bf16.mxu0 %v9115
          %9258 = vmatpush2.bf16.msra.mxu0 %v9114
          %9259 = vmatprep.subr.bf16.mxu0 %v9113
          %9260 = vmatpush2.bf16.msra.mxu0 %v9112
          %9261 = vmatprep.subr.bf16.mxu0 %v9111
          %9262 = vmatpush2.bf16.msra.mxu0 %v9110
          %9263 = vmatprep.mubr.bf16.mxu0 %v8793
          %9264 = vmatmul.mubr.bf16.gmra.mxu0 %v8792
          %v9265 = vpop.f32.mrf.mxu0
          %v9266 = vadd.f32 %v9225, %v9265
          %v9267 = vpop.f32.mrf.mxu0
          %v9268 = vadd.f32 %v9227, %v9267
          %v9269 = vpop.f32.mrf.mxu0
          %v9270 = vpop.f32.mrf.mxu0
          %9271 = vdwg.mxu0
          %v9272 = vmax.f32 %v9266, 0.0
          %v9273 = vmax.f32 %v9268, 0.0
          %v9274 = vpack.c.bf16 %v9272, %v9272
          %v9275 = vpack.c.bf16 %v9273, %v9273
          %v9276 = vld [vmem:[%s13] sm:$0xf]
          %v9277 = vld [vmem:[%s13 + $0x4] sm:$0xf]
          %v9278 = vld [vmem:[%s13 + $0x8] sm:$0xf]
          %v9279 = vld [vmem:[%s13 + $0xc] sm:$0xf]
          %v9280 = vld [vmem:[%s13 + $0x10] sm:$0xf]
          %v9281 = vld [vmem:[%s13 + $0x14] sm:$0xf]
          %v9282 = vld [vmem:[%s13 + $0x18] sm:$0xf]
          %v9283 = vld [vmem:[%s13 + $0x1c] sm:$0xf]
          %v9284 = vld [vmem:[%s13 + $0x20] sm:$0xf]
          %v9285 = vld [vmem:[%s13 + $0x24] sm:$0xf]
          %v9286 = vld [vmem:[%s13 + $0x28] sm:$0xf]
          %v9287 = vld [vmem:[%s13 + $0x2c] sm:$0xf]
          %v9288 = vld [vmem:[%s13 + $0x30] sm:$0xf]
          %v9289 = vld [vmem:[%s13 + $0x34] sm:$0xf]
          %v9290 = vld [vmem:[%s13 + $0x38] sm:$0xf]
          %v9291 = vld [vmem:[%s13 + $0x3c] sm:$0xf]
          %v9292 = vld [vmem:[%s13 + $0x40] sm:$0xf]
          %v9293 = vld [vmem:[%s13 + $0x44] sm:$0xf]
          %v9294 = vld [vmem:[%s13 + $0x48] sm:$0xf]
          %v9295 = vld [vmem:[%s13 + $0x4c] sm:$0xf]
          %v9296 = vld [vmem:[%s13 + $0x50] sm:$0xf]
          %v9297 = vld [vmem:[%s13 + $0x54] sm:$0xf]
          %v9298 = vld [vmem:[%s13 + $0x58] sm:$0xf]
          %v9299 = vld [vmem:[%s13 + $0x5c] sm:$0xf]
          %v9300 = vld [vmem:[%s13 + $0x60] sm:$0xf]
          %v9301 = vld [vmem:[%s13 + $0x64] sm:$0xf]
          %v9302 = vld [vmem:[%s13 + $0x68] sm:$0xf]
          %v9303 = vld [vmem:[%s13 + $0x6c] sm:$0xf]
          %v9304 = vld [vmem:[%s13 + $0x70] sm:$0xf]
          %v9305 = vld [vmem:[%s13 + $0x74] sm:$0xf]
          %v9306 = vld [vmem:[%s13 + $0x78] sm:$0xf]
          %v9307 = vld [vmem:[%s13 + $0x7c] sm:$0xf]
          %v9308 = vld [vmem:[#allocation15] sm:$0x1]
          %v9310 = vlaneseq
          %v9311 = vshrl.u32 %v9310, 7
          %v9312 = vsub.s32 0, %v9311
          %v9313 = vrot.slane %v9308, %v9312
          %v9347 = vunpack.c.l.b16 %v9276
          %v9348 = vunpack.c.l.b16 %v9277
          %v9349 = vunpack.c.l.b16 %v9278
          %v9350 = vunpack.c.l.b16 %v9279
          %v9351 = vunpack.c.l.b16 %v9280
          %v9352 = vunpack.c.l.b16 %v9281
          %v9353 = vunpack.c.l.b16 %v9282
          %v9354 = vunpack.c.l.b16 %v9283
          %v9355 = vunpack.c.l.b16 %v9284
          %v9356 = vunpack.c.l.b16 %v9285
          %v9357 = vunpack.c.l.b16 %v9286
          %v9358 = vunpack.c.l.b16 %v9287
          %v9359 = vunpack.c.l.b16 %v9288
          %v9360 = vunpack.c.l.b16 %v9289
          %v9361 = vunpack.c.l.b16 %v9290
          %v9362 = vunpack.c.l.b16 %v9291
          %v9363 = vunpack.c.l.b16 %v9292
          %v9364 = vunpack.c.l.b16 %v9293
          %v9365 = vunpack.c.l.b16 %v9294
          %v9366 = vunpack.c.l.b16 %v9295
          %v9367 = vunpack.c.l.b16 %v9296
          %v9368 = vunpack.c.l.b16 %v9297
          %v9369 = vunpack.c.l.b16 %v9298
          %v9370 = vunpack.c.l.b16 %v9299
          %v9371 = vunpack.c.l.b16 %v9300
          %v9372 = vunpack.c.l.b16 %v9301
          %v9373 = vunpack.c.l.b16 %v9302
          %v9374 = vunpack.c.l.b16 %v9303
          %v9375 = vunpack.c.l.b16 %v9304
          %v9376 = vunpack.c.l.b16 %v9305
          %v9377 = vunpack.c.l.b16 %v9306
          %v9378 = vunpack.c.l.b16 %v9307
          %v9379 = vpack.c.b16 %v9348, %v9347
          %v9380 = vpack.c.b16 %v9350, %v9349
          %v9381 = vpack.c.b16 %v9352, %v9351
          %v9382 = vpack.c.b16 %v9354, %v9353
          %v9383 = vpack.c.b16 %v9356, %v9355
          %v9384 = vpack.c.b16 %v9358, %v9357
          %v9385 = vpack.c.b16 %v9360, %v9359
          %v9386 = vpack.c.b16 %v9362, %v9361
          %v9387 = vpack.c.b16 %v9364, %v9363
          %v9388 = vpack.c.b16 %v9366, %v9365
          %v9389 = vpack.c.b16 %v9368, %v9367
          %v9390 = vpack.c.b16 %v9370, %v9369
          %v9391 = vpack.c.b16 %v9372, %v9371
          %v9392 = vpack.c.b16 %v9374, %v9373
          %v9393 = vpack.c.b16 %v9376, %v9375
          %v9394 = vpack.c.b16 %v9378, %v9377
          %9411 = vmatprep.subr.bf16.mxu0 0
          %9412 = vmatpush1.bf16.msra.mxu0 %v9386
          %9413 = vmatprep.subr.bf16.mxu0 0
          %9414 = vmatpush1.bf16.msra.mxu0 %v9385
          %9415 = vmatprep.subr.bf16.mxu0 0
          %9416 = vmatpush1.bf16.msra.mxu0 %v9384
          %9417 = vmatprep.subr.bf16.mxu0 0
          %9418 = vmatpush1.bf16.msra.mxu0 %v9383
          %9419 = vmatprep.subr.bf16.mxu0 0
          %9420 = vmatpush1.bf16.msra.mxu0 %v9382
          %9421 = vmatprep.subr.bf16.mxu0 0
          %9422 = vmatpush1.bf16.msra.mxu0 %v9381
          %9423 = vmatprep.subr.bf16.mxu0 0
          %9424 = vmatpush1.bf16.msra.mxu0 %v9380
          %9425 = vmatprep.subr.bf16.mxu0 0
          %9426 = vmatpush1.bf16.msra.mxu0 %v9379
          %9427 = vmatprep.subr.bf16.mxu0 0
          %9428 = vmatpush2.bf16.msra.mxu0 %v9394
          %9429 = vmatprep.subr.bf16.mxu0 0
          %9430 = vmatpush2.bf16.msra.mxu0 %v9393
          %9431 = vmatprep.subr.bf16.mxu0 0
          %9432 = vmatpush2.bf16.msra.mxu0 %v9392
          %9433 = vmatprep.subr.bf16.mxu0 0
          %9434 = vmatpush2.bf16.msra.mxu0 %v9391
          %9435 = vmatprep.subr.bf16.mxu0 0
          %9436 = vmatpush2.bf16.msra.mxu0 %v9390
          %9437 = vmatprep.subr.bf16.mxu0 0
          %9438 = vmatpush2.bf16.msra.mxu0 %v9389
          %9439 = vmatprep.subr.bf16.mxu0 0
          %9440 = vmatpush2.bf16.msra.mxu0 %v9388
          %9441 = vmatprep.subr.bf16.mxu0 0
          %9442 = vmatpush2.bf16.msra.mxu0 %v9387
          %9443 = vmatprep.mubr.bf16.mxu0 %v9275
          %9444 = vmatmul.mubr.bf16.gmra.mxu0 %v9274
          %v9445 = vpop.f32.mrf.mxu0
          %v9446 = vadd.f32 %v9313, %v9445
          %v9447 = vpop.f32.mrf.mxu0
          %v9448 = vpop.f32.mrf.mxu0
          %v9449 = vpop.f32.mrf.mxu0
          %9450 = vdwg.mxu0
          %v9451 = vmax.f32 %v9446, 0.0
          %v9452 = vpack.c.bf16 %v9451, %v9451
          %v9453 = vld [vmem:[%s15] sm:$0xf]
          %v9454 = vld [vmem:[%s15 + $0x4] sm:$0xf]
          %v9455 = vld [vmem:[%s15 + $0x8] sm:$0xf]
          %v9456 = vld [vmem:[%s15 + $0xc] sm:$0xf]
          %v9457 = vld [vmem:[%s15 + $0x10] sm:$0xf]
          %v9458 = vld [vmem:[%s15 + $0x14] sm:$0xf]
          %v9459 = vld [vmem:[%s15 + $0x18] sm:$0xf]
          %v9460 = vld [vmem:[%s15 + $0x1c] sm:$0xf]
          %v9461 = vld [vmem:[%s15 + $0x20] sm:$0xf]
          %v9462 = vld [vmem:[%s15 + $0x24] sm:$0xf]
          %v9463 = vld [vmem:[%s15 + $0x28] sm:$0x3]
          %v9464 = vld [vmem:[#allocation17] sm:$0x1]
          %v9466 = vlaneseq
          %v9467 = vshrl.u32 %v9466, 7
          %v9468 = vsub.s32 0, %v9467
          %v9469 = vrot.slane %v9464, %v9468
          %v9482 = vunpack.c.l.b16 %v9453
          %v9483 = vunpack.c.l.b16 %v9454
          %v9484 = vunpack.c.l.b16 %v9455
          %v9485 = vunpack.c.l.b16 %v9456
          %v9486 = vunpack.c.l.b16 %v9457
          %v9487 = vunpack.c.l.b16 %v9458
          %v9488 = vunpack.c.l.b16 %v9459
          %v9489 = vunpack.c.l.b16 %v9460
          %v9490 = vunpack.c.l.b16 %v9461
          %v9491 = vunpack.c.l.b16 %v9462
          %v9492 = vunpack.c.l.b16 %v9463
          %v9493 = vpack.c.b16 %v9483, %v9482
          %v9494 = vpack.c.b16 %v9485, %v9484
          %v9495 = vpack.c.b16 %v9487, %v9486
          %v9496 = vpack.c.b16 %v9489, %v9488
          %v9497 = vpack.c.b16 %v9491, %v9490
          %v9498 = vpack.c.b16 %v9492, %v9492
          %vm9504 = vcmask 687104
          %v9506 = vsel %vm9504, %v9452, 0
          %vm9508 = vcmask 1041408
          %v9510 = vsel %vm9508, %v9498, 0
          %9512 = vmatprep.subr.bf16.mxu0 0
          %9513 = vmatpush1.bf16.msra.mxu0 0
          %9514 = vmatprep.subr.bf16.mxu0 0
          %9515 = vmatpush1.bf16.msra.mxu0 0
          %9516 = vmatprep.subr.bf16.mxu0 0
          %9517 = vmatpush1.bf16.msra.mxu0 %v9510
          %9518 = vmatprep.subr.bf16.mxu0 0
          %9519 = vmatpush1.bf16.msra.mxu0 %v9497
          %9520 = vmatprep.subr.bf16.mxu0 0
          %9521 = vmatpush1.bf16.msra.mxu0 %v9496
          %9522 = vmatprep.subr.bf16.mxu0 0
          %9523 = vmatpush1.bf16.msra.mxu0 %v9495
          %9524 = vmatprep.subr.bf16.mxu0 0
          %9525 = vmatpush1.bf16.msra.mxu0 %v9494
          %9526 = vmatprep.subr.bf16.mxu0 0
          %9527 = vmatpush1.bf16.msra.mxu0 %v9493
          %9528 = vmatprep.subr.bf16.mxu0 0
          %9529 = vmatpush2.bf16.msra.mxu0 0
          %9530 = vmatprep.subr.bf16.mxu0 0
          %9531 = vmatpush2.bf16.msra.mxu0 0
          %9532 = vmatprep.subr.bf16.mxu0 0
          %9533 = vmatpush2.bf16.msra.mxu0 0
          %9534 = vmatprep.subr.bf16.mxu0 0
          %9535 = vmatpush2.bf16.msra.mxu0 0
          %9536 = vmatprep.subr.bf16.mxu0 0
          %9537 = vmatpush2.bf16.msra.mxu0 0
          %9538 = vmatprep.subr.bf16.mxu0 0
          %9539 = vmatpush2.bf16.msra.mxu0 0
          %9540 = vmatprep.subr.bf16.mxu0 0
          %9541 = vmatpush2.bf16.msra.mxu0 0
          %9542 = vmatprep.subr.bf16.mxu0 0
          %9543 = vmatpush2.bf16.msra.mxu0 0
          %9544 = vmatprep.mubr.bf16.mxu0 0
          %9545 = vmatmul.mubr.bf16.gmra.mxu0 %v9506
          %v9546 = vpop.f32.mrf.mxu0
          %v9547 = vadd.f32 %v9469, %v9546
          %v9548 = vpop.f32.mrf.mxu0
          %v9549 = vpop.f32.mrf.mxu0
          %v9550 = vpop.f32.mrf.mxu0
          %9551 = vdwg.mxu0
          %v9552 = vsub.f32 0.0, %v9547
          %v9553 = vmul.f32 %v9552, 1.442695
          %v9554 = vpow.pop %v9553
          %v9555 = vadd.f32 %v9554, 1.0
          %v9556 = vrcp.pop %v9555
          %v9557 = vmul.f32 1.0, %v9556
          %vm9558 = vcmask 41984
          %9559 = vst.msk [vmem:[#allocation18] sm:$0x3] %vm9558, %v9557
        $region132: #{multimodal_forward.5} parent=87 // pred_fallthru
          _
        // Predicated region
        $region133: #{multimodal_forward.5} parent=87 // pred_check
          %p9560 = pneg %p460
        $region134: #{multimodal_forward.5} parent=87 // pred_check_branch
          %9562 = sbr.rel (%p9560) target = $region136
        $region135: #{multimodal_forward.5} parent=87 // pred_region
          %s9564 = ssub.s32 32, 32
          %9565 = vsyncadd [#allocation5], %s9564
          %s9567 = sshll.u32 [#allocation18], 4
          %s9568 = int_to_ptr.vmem [resolvable:$true] %s9567
          %9570 = dma.vmem_to_hbm [thread:$0]  %s9568, 32, %s17, [#allocation5]
        $region136: #{multimodal_forward.5} parent=87 // pred_fallthru
          _
        // Predicated region
        $region137: #{multimodal_forward.5} parent=87 // pred_check
          %p9571 = pneg %p460
        $region138: #{multimodal_forward.5} parent=87 // pred_check_branch
          %9573 = sbr.rel (%p9571) target = $region140
        $region139: #{multimodal_forward.5} parent=87 // pred_region
          %9574 = dma.done [#allocation5], 32
        $region140: #{multimodal_forward.5} parent=87 // pred_fallthru
          _
      $region88: #{multimodal_forward.5} parent=5 // pred_fallthru
        _
      %p9575 = scmp.le.s32.totalorder 2, %s35
      // Predicated region
      $region141: #{multimodal_forward.5} parent=5 // pred_check
        %p9576 = pneg %p9575
      $region142: #{multimodal_forward.5} parent=5 // pred_check_branch
        %9578 = sbr.rel (%p9576) target = $region144
      $region143: #{multimodal_forward.5} parent=5 // pred_region
        %s9579 = ssub.s32 %s35, 2
      $region144: #{multimodal_forward.5} parent=5 // pred_fallthru
        _
    $region6: #{multimodal_forward.5} parent=1 // loop_footer
      %s39 = sadd.s32 1, %s35
    $region7: #{multimodal_forward.5} parent=1 // loop_footer_branch
      %34 = sbr.rel target = $region3
    $region8: #{multimodal_forward.5} parent=1 // loop_exit
      _
    %9580 = vsyncpa [#allocation4], 1
    %s9581 = scalar_lea.sflag [#allocation4], 1
    %9582 = vsyncpa %s9581, 1
    %9583 = vsyncpa [#allocation7], 1
    %s9584 = scalar_lea.sflag [#allocation7], 1
    %9585 = vsyncpa %s9584, 1
    %9586 = vsyncpa [#allocation10], 1
    %s9587 = scalar_lea.sflag [#allocation10], 1
    %9588 = vsyncpa %s9587, 1
    %9589 = vsyncpa [#allocation13], 1
    %9590 = vsyncpa [#allocation16], 1
    %9591 = vsyncpa [#allocation5], 1
    %s9592 = scalar_lea.sflag [#allocation5], 1
    %9593 = vsyncpa %s9592, 1

</llo_original>
